<compile_context>
chip_gen: v6e
topology: v6e:2x2x1
jax: 0.10.0
libtpu: 0.0.40
codegen_flags: <defaults>
</compile_context>

<pallas_src>
import functools
import math

import jax
import jax.numpy as jnp
from jax.experimental import pallas as pl
from jax.experimental.pallas import tpu as pltpu


def _round_up(x, m):
    return ((x + m - 1) // m) * m


# ----------------------------------------------------------------------------
# Fused MLP kernel: out = (relu(x @ W1 + b1) [dropout]) @ W2 + b2
# ----------------------------------------------------------------------------
def _mlp_kernel(seed_ref, x_ref, w1_ref, b1_ref, w2_ref, b2_ref, o_ref, *,
                training, keep_prob):
    # x_ref:  (tm, K)  input dtype   w1_ref: (K, H)  bf16   b1_ref: (1, H)  f32
    # w2_ref: (H, Np)  bf16          b2_ref: (1, Np) f32    o_ref:  (tm, Np) f32
    x = x_ref[...].astype(jnp.bfloat16)                       # cast in VMEM
    h = jnp.dot(x, w1_ref[...], preferred_element_type=jnp.float32)
    h = jnp.maximum(h + b1_ref[...], 0.0)

    apply_dropout = training and keep_prob < 1.0
    if apply_dropout:
        # Per-tile seed so different row tiles get independent masks.
        pltpu.prng_seed(seed_ref[0] + pl.program_id(0))
        bits = pltpu.bitcast(pltpu.prng_random_bits(h.shape), jnp.uint32)
        thr = jnp.array(min(int(keep_prob * (1 << 32)), (1 << 32) - 1),
                        dtype=jnp.uint32)
        h = jnp.where(bits < thr, h, 0.0)     # 1/keep_prob folded into output

    y = jnp.dot(h.astype(jnp.bfloat16), w2_ref[...],
                preferred_element_type=jnp.float32)
    if apply_dropout:
        y = y * (1.0 / keep_prob)             # scalar scale on the narrow tile
    o_ref[...] = y + b2_ref[...]


# ----------------------------------------------------------------------------
# Parameter init (PyTorch nn.Linear default init) and one-time prep
# ----------------------------------------------------------------------------
def init_regressor_params(key, feature_size=2048, hidden=1024, out=4):
    k1, k2, k3, k4 = jax.random.split(key, 4)
    b1 = 1.0 / math.sqrt(feature_size)
    b2 = 1.0 / math.sqrt(hidden)
    return {
        'w1': jax.random.uniform(k1, (hidden, feature_size), jnp.float32, -b1, b1),
        'b1': jax.random.uniform(k2, (hidden,), jnp.float32, -b1, b1),
        'w2': jax.random.uniform(k3, (out, hidden), jnp.float32, -b2, b2),
        'b2': jax.random.uniform(k4, (out,), jnp.float32, -b2, b2),
    }


def prepare_params(params):
    """Transpose / pad / bf16-cast weights ONCE (outside the jitted forward)."""
    w1, b1, w2, b2 = params['w1'], params['b1'], params['w2'], params['b2']
    hidden, feat = w1.shape
    out = w2.shape[0]
    assert feat % 128 == 0 and hidden % 128 == 0, \
        "feature_size and hidden must be multiples of 128"
    n_pad = _round_up(out, 128)   # lane-dense output width (keep at 128)

    w1_t = jnp.asarray(w1.T, jnp.bfloat16)                       # (K, H)
    b1_r = jnp.asarray(b1, jnp.float32).reshape(1, hidden)       # (1, H)
    w2_t = jnp.zeros((hidden, n_pad), jnp.bfloat16)
    w2_t = w2_t.at[:, :out].set(jnp.asarray(w2.T, jnp.bfloat16)) # (H, Np)
    b2_r = jnp.zeros((1, n_pad), jnp.float32)
    b2_r = b2_r.at[:, :out].set(jnp.asarray(b2, jnp.float32))    # (1, Np)
    return {'w1': w1_t, 'b1': b1_r, 'w2': w2_t, 'b2': b2_r}


# ----------------------------------------------------------------------------
# Forward wrapper
# ----------------------------------------------------------------------------
def regressor_forward(prep, x, *, out_dim, training=False, keep_prob=0.5,
                      seed=0):
    M, K = x.shape
    H = prep['w1'].shape[1]
    Np = prep['w2'].shape[1]
    assert prep['w1'].shape[0] == K

    # Row tiling: 256-row tiles for large batches (amortize per-step overhead,
    # fill the 256-wide MXU); small batches use one 8-aligned tile. Boundary
    # tiles are handled by Pallas (masked writeback), so x is NOT padded and
    # NOT pre-cast in the wrapper — no extra HBM passes before the kernel.
    tm = 256 if M >= 256 else _round_up(max(M, 1), 8)
    grid_m = pl.cdiv(M, tm)

    seed_arr = jnp.asarray([seed], jnp.int32)

    flops = 2 * M * (K * H + H * Np)
    bytes_accessed = (M * K * x.dtype.itemsize          # x read
                      + K * H * 2 + H * Np * 2          # bf16 weights
                      + (H + Np) * 4                    # biases
                      + M * Np * 4)                     # output write

    out = pl.pallas_call(
        functools.partial(_mlp_kernel, training=training, keep_prob=keep_prob),
        out_shape=jax.ShapeDtypeStruct((M, Np), jnp.float32),
        grid_spec=pltpu.PrefetchScalarGridSpec(
            num_scalar_prefetch=1,
            grid=(grid_m,),
            in_specs=[
                pl.BlockSpec((tm, K), lambda i, s: (i, 0)),   # x tile
                pl.BlockSpec((K, H), lambda i, s: (0, 0)),    # W1 (resident)
                pl.BlockSpec((1, H), lambda i, s: (0, 0)),    # b1
                pl.BlockSpec((H, Np), lambda i, s: (0, 0)),   # W2 (resident)
                pl.BlockSpec((1, Np), lambda i, s: (0, 0)),   # b2
            ],
            out_specs=pl.BlockSpec((tm, Np), lambda i, s: (i, 0)),
        ),
        compiler_params=pltpu.CompilerParams(
            dimension_semantics=("parallel",),
            vmem_limit_bytes=32 * 1024 * 1024),
        cost_estimate=pl.CostEstimate(flops=flops, transcendentals=0,
                                      bytes_accessed=bytes_accessed),
    )(seed_arr, x, prep['w1'], prep['b1'], prep['w2'], prep['b2'])

    # Only the first out_dim lanes are real; padded lanes / padded rows are
    # never observed.
    return out[:, :out_dim]


def regressor_reference(params, x):
    """Pure-JAX f32 reference (eval mode: dropout = identity)."""
    h = jnp.maximum(x @ params['w1'].T + params['b1'], 0.0)
    return h @ params['w2'].T + params['b2']


# ----------------------------------------------------------------------------
if __name__ == "__main__":
    key = jax.random.PRNGKey(0)
    pkey, xkey = jax.random.split(key)

    feature_size, hidden, out_dim = 2048, 1024, 4
    params = init_regressor_params(pkey, feature_size, hidden, out_dim)
    prep = prepare_params(params)

    x = jax.random.normal(xkey, (2, feature_size), jnp.float32)  # batch = 2

    fwd = jax.jit(functools.partial(regressor_forward,
                                    out_dim=out_dim, training=False))
    y = jax.block_until_ready(fwd(prep, x))

    assert y.shape == (2, out_dim), y.shape
    assert y.dtype == jnp.float32
    assert bool(jnp.all(jnp.isfinite(y)))

    y_ref = regressor_reference(params, x)
    # bf16 weight cast -> ~1e-2 relative difference vs f32 reference (intended).
    assert jnp.allclose(y, y_ref, atol=5e-2, rtol=5e-2), (y, y_ref)

    print("KERNEL_OK")
</pallas_src>

<mosaic_0001>
module attributes {stable_mosaic.version = 11 : i64} {
  func.func @_mlp_kernel(%arg0: i32, %arg1: memref<1xi32, #tpu.memory_space<smem>>, %arg2: memref<8x2048xf32, #tpu.memory_space<vmem>>, %arg3: memref<2048x1024xbf16, #tpu.memory_space<vmem>>, %arg4: memref<1x1024xf32, #tpu.memory_space<vmem>>, %arg5: memref<1024x128xbf16, #tpu.memory_space<vmem>>, %arg6: memref<1x128xf32, #tpu.memory_space<vmem>>, %arg7: memref<8x128xf32, #tpu.memory_space<vmem>>) attributes {dimension_semantics = [#tpu.dimension_semantics<parallel>], iteration_bounds = array<i64: 1>, scalar_prefetch = 1 : i64, scratch_operands = 0 : i64, tpu.core_type = #tpu.core_type<tc>, window_params = [{transform_indices = @transform_0, window_bounds = array<i64: 8, 2048>}, {pipeline_mode = #tpu.pipeline_mode<synchronous>, transform_indices = @transform_1, window_bounds = array<i64: 2048, 1024>}, {pipeline_mode = #tpu.pipeline_mode<synchronous>, transform_indices = @transform_2, window_bounds = array<i64: 1, 1024>}, {pipeline_mode = #tpu.pipeline_mode<synchronous>, transform_indices = @transform_3, window_bounds = array<i64: 1024, 128>}, {pipeline_mode = #tpu.pipeline_mode<synchronous>, transform_indices = @transform_4, window_bounds = array<i64: 1, 128>}, {transform_indices = @transform_5, window_bounds = array<i64: 8, 128>}]} {
    %c0 = arith.constant 0 : index
    %c0_0 = arith.constant 0 : index
    %0 = vector.load %arg2[%c0, %c0_0] : memref<8x2048xf32, #tpu.memory_space<vmem>>, vector<8x2048xf32>
    %1 = arith.truncf %0 : vector<8x2048xf32> to vector<8x2048xbf16>
    %c0_1 = arith.constant 0 : index
    %c0_2 = arith.constant 0 : index
    %2 = vector.load %arg3[%c0_1, %c0_2] : memref<2048x1024xbf16, #tpu.memory_space<vmem>>, vector<2048x1024xbf16>
    %cst = arith.constant dense<0.000000e+00> : vector<8x1024xf32>
    %3 = tpu.matmul %1, %2, %cst {dimension_numbers = #tpu.dot_dimension_numbers<[1], [0], [0], [1], [0, 0, 1, 1], [], []>} : vector<8x2048xbf16>, vector<2048x1024xbf16>, vector<8x1024xf32> -> vector<8x1024xf32>
    %c0_3 = arith.constant 0 : index
    %c0_4 = arith.constant 0 : index
    %4 = vector.load %arg4[%c0_3, %c0_4] : memref<1x1024xf32, #tpu.memory_space<vmem>>, vector<1x1024xf32>
    %5 = vector.broadcast %4 : vector<1x1024xf32> to vector<8x1024xf32>
    %6 = arith.addf %3, %5 : vector<8x1024xf32>
    %cst_5 = arith.constant 0.000000e+00 : f32
    %7 = vector.broadcast %cst_5 : f32 to vector<8x1024xf32>
    %8 = arith.maximumf %6, %7 : vector<8x1024xf32>
    %9 = arith.truncf %8 : vector<8x1024xf32> to vector<8x1024xbf16>
    %c0_6 = arith.constant 0 : index
    %c0_7 = arith.constant 0 : index
    %10 = vector.load %arg5[%c0_6, %c0_7] : memref<1024x128xbf16, #tpu.memory_space<vmem>>, vector<1024x128xbf16>
    %cst_8 = arith.constant dense<0.000000e+00> : vector<8x128xf32>
    %11 = tpu.matmul %9, %10, %cst_8 {dimension_numbers = #tpu.dot_dimension_numbers<[1], [0], [0], [1], [0, 0, 1, 1], [], []>} : vector<8x1024xbf16>, vector<1024x128xbf16>, vector<8x128xf32> -> vector<8x128xf32>
    %c0_9 = arith.constant 0 : index
    %c0_10 = arith.constant 0 : index
    %12 = vector.load %arg6[%c0_9, %c0_10] : memref<1x128xf32, #tpu.memory_space<vmem>>, vector<1x128xf32>
    %13 = vector.broadcast %12 : vector<1x128xf32> to vector<8x128xf32>
    %14 = arith.addf %11, %13 : vector<8x128xf32>
    %c0_11 = arith.constant 0 : index
    %c0_12 = arith.constant 0 : index
    %15 = vector.load %arg7[%c0_11, %c0_12] : memref<8x128xf32, #tpu.memory_space<vmem>>, vector<8x128xf32>
    tpu.vector_store %arg7[%c0_11, %c0_12], %14 {strides = array<i32>} : memref<8x128xf32, #tpu.memory_space<vmem>>, vector<8x128xf32>,
    return
  }
  func.func @transform_0(%arg0: i32, %arg1: memref<1xi32, #tpu.memory_space<smem>>) -> (i32, i32) {
    %c0_i32 = arith.constant 0 : i32
    %c0_i32_0 = arith.constant 0 : i32
    return %arg0, %c0_i32 : i32, i32
  }
  func.func @transform_1(%arg0: i32, %arg1: memref<1xi32, #tpu.memory_space<smem>>) -> (i32, i32) {
    %c0_i32 = arith.constant 0 : i32
    %c0_i32_0 = arith.constant 0 : i32
    %c0_i32_1 = arith.constant 0 : i32
    return %c0_i32, %c0_i32_0 : i32, i32
  }
  func.func @transform_2(%arg0: i32, %arg1: memref<1xi32, #tpu.memory_space<smem>>) -> (i32, i32) {
    %c0_i32 = arith.constant 0 : i32
    %c0_i32_0 = arith.constant 0 : i32
    %c0_i32_1 = arith.constant 0 : i32
    return %c0_i32, %c0_i32_0 : i32, i32
  }
  func.func @transform_3(%arg0: i32, %arg1: memref<1xi32, #tpu.memory_space<smem>>) -> (i32, i32) {
    %c0_i32 = arith.constant 0 : i32
    %c0_i32_0 = arith.constant 0 : i32
    %c0_i32_1 = arith.constant 0 : i32
    return %c0_i32, %c0_i32_0 : i32, i32
  }
  func.func @transform_4(%arg0: i32, %arg1: memref<1xi32, #tpu.memory_space<smem>>) -> (i32, i32) {
    %c0_i32 = arith.constant 0 : i32
    %c0_i32_0 = arith.constant 0 : i32
    %c0_i32_1 = arith.constant 0 : i32
    return %c0_i32, %c0_i32_0 : i32, i32
  }
  func.func @transform_5(%arg0: i32, %arg1: memref<1xi32, #tpu.memory_space<smem>>) -> (i32, i32) {
    %c0_i32 = arith.constant 0 : i32
    %c0_i32_0 = arith.constant 0 : i32
    return %arg0, %c0_i32 : i32, i32
  }
}

</mosaic_0001>

<llo_original>
// kernel: regressor_forward.1
$region0: #{regressor_forward.1}
  #allocation0 [shape = 'u32[]', space=smem, size = 0x4, offset = 0x4, fixed_abs, tag = 'smem constant byte address 0x4 - core index']
  #allocation1 [shape = 'u32[144,128]{1,0:T(1,128)}', space=vmem, size = 0x12000, scoped, tag = 'internal scratch']
  #allocation2 [shape = 's32[1]{0}', space=sflag, size = 0x4, scoped, tag = 'scoped memory for regressor_forward.1']
  #allocation3 [shape = 's32[1]{0:T(128)S(6)}', space=smem, size = 0x200, scoped, tag = 'prefetched SMEM operand 0']
  %s0 = inlined_call_operand.<no memory space> [shape: s32[1], index: 0, kind: input, shape index: {}]
  %s1 = inlined_call_operand.hbm [shape: f32[2,2048], index: 1, kind: input, shape index: {}]
  %s2 = inlined_call_operand.hbm [shape: bf16[2048,1024], index: 2, kind: input, shape index: {}]
  %s3 = inlined_call_operand.hbm [shape: f32[1,1024], index: 3, kind: input, shape index: {}]
  %s4 = inlined_call_operand.hbm [shape: bf16[1024,128], index: 4, kind: input, shape index: {}]
  %s5 = inlined_call_operand.hbm [shape: f32[1,128], index: 5, kind: input, shape index: {}]
  %s6 = inlined_call_operand.hbm [shape: f32[2,128], index: 6, kind: output, shape index: {}]
  %s7 = sld [smem:[#allocation0]]
  $region50: #{regressor_forward.1} parent=0
    _
  %s9 = ssub.s32 1, %s7
  %s10 = scalar_select 0, %s9, %s7
  %11 = sst [smem:[#allocation3]] %s0
  $region1: #{regressor_forward.1} parent=0
    #allocation4 [shape = 'u8[65536]{0}', space=vmem, size = 0x10000, scoped, tag = 'input window, operand 1, single buffered']
    #allocation5 [shape = 's32[1]{0}', space=sflag, size = 0x4, scoped, tag = 'scoped memory for regressor_forward.1']
    #allocation6 [shape = 's32[1]{0}', space=sflag, size = 0x4, scoped, tag = 'scoped memory for regressor_forward.1']
    #allocation7 [shape = 'u8[4194304]{0}', space=vmem, size = 0x400000, scoped, tag = 'input window, operand 2, single buffered']
    #allocation8 [shape = 's32[1]{0}', space=sflag, size = 0x4, scoped, tag = 'scoped memory for regressor_forward.1']
    #allocation9 [shape = 'u8[4096]{0}', space=vmem, size = 0x1000, scoped, tag = 'input window, operand 3, single buffered']
    #allocation10 [shape = 'u8[262144]{0}', space=vmem, size = 0x40000, scoped, tag = 'input window, operand 4, single buffered']
    #allocation11 [shape = 's32[1]{0}', space=sflag, size = 0x4, scoped, tag = 'scoped memory for regressor_forward.1']
    #allocation12 [shape = 'u8[512]{0}', space=vmem, size = 0x400, scoped, tag = 'input window, operand 5, single buffered']
    #allocation13 [shape = 'u8[4096]{0}', space=vmem, size = 0x1000, scoped, tag = 'output window, operand 0, single buffered']
    %12 = vsyncpa [#allocation5], 0
    %13 = vsyncpa [#allocation8], 0
    %14 = vsyncpa [#allocation11], 0
    %15 = vsyncpa [#allocation6], 0
    // Predicated region
    $region2: #{regressor_forward.1} parent=1 // pred_check
      _
    $region3: #{regressor_forward.1} parent=1 // pred_check_branch
      %17 = sbr.rel (0) target = $region5
    $region4: #{regressor_forward.1} parent=1 // pred_region
      %s19 = ssub.s32 2048, 512
      %20 = vsyncadd [#allocation5], %s19
      %s21 = sshll.u32 [#allocation4], 4
      %s22 = int_to_ptr.vmem [resolvable:$true] %s21
      %27 = dma.hbm_to_vmem [thread:$0]  %s1, 512, %s22, [#allocation5], 512, 512, 32
    $region5: #{regressor_forward.1} parent=1 // pred_fallthru
      _
    // Predicated region
    $region6: #{regressor_forward.1} parent=1 // pred_check
      _
    $region7: #{regressor_forward.1} parent=1 // pred_check_branch
      %29 = sbr.rel (0) target = $region9
    $region8: #{regressor_forward.1} parent=1 // pred_region
      %s31 = ssub.s32 131072, 131072
      %32 = vsyncadd [#allocation8], %s31
      %s33 = sshll.u32 [#allocation7], 4
      %s34 = int_to_ptr.vmem [resolvable:$true] %s33
      %39 = dma.hbm_to_vmem [thread:$0]  %s2, 131072, %s34, [#allocation8], 512, 512, 32
    $region9: #{regressor_forward.1} parent=1 // pred_fallthru
      _
    // Predicated region
    $region10: #{regressor_forward.1} parent=1 // pred_check
      _
    $region11: #{regressor_forward.1} parent=1 // pred_check_branch
      %41 = sbr.rel (0) target = $region13
    $region12: #{regressor_forward.1} parent=1 // pred_region
      %s43 = ssub.s32 128, 128
      %44 = vsyncadd [#allocation8], %s43
      %s46 = sshll.u32 [#allocation9], 4
      %s47 = int_to_ptr.vmem [resolvable:$true] %s46
      %49 = dma.hbm_to_vmem [thread:$0]  %s3, 128, %s47, [#allocation8]
    $region13: #{regressor_forward.1} parent=1 // pred_fallthru
      _
    // Predicated region
    $region14: #{regressor_forward.1} parent=1 // pred_check
      _
    $region15: #{regressor_forward.1} parent=1 // pred_check_branch
      %51 = sbr.rel (0) target = $region17
    $region16: #{regressor_forward.1} parent=1 // pred_region
      %s53 = ssub.s32 8192, 8192
      %54 = vsyncadd [#allocation11], %s53
      %s55 = sshll.u32 [#allocation10], 4
      %s56 = int_to_ptr.vmem [resolvable:$true] %s55
      %61 = dma.hbm_to_vmem [thread:$0]  %s4, 8192, %s56, [#allocation11], 64, 64, 4
    $region17: #{regressor_forward.1} parent=1 // pred_fallthru
      _
    // Predicated region
    $region18: #{regressor_forward.1} parent=1 // pred_check
      _
    $region19: #{regressor_forward.1} parent=1 // pred_check_branch
      %63 = sbr.rel (0) target = $region21
    $region20: #{regressor_forward.1} parent=1 // pred_region
      %s65 = ssub.s32 16, 16
      %66 = vsyncadd [#allocation11], %s65
      %s68 = sshll.u32 [#allocation12], 4
      %s69 = int_to_ptr.vmem [resolvable:$true] %s68
      %71 = dma.hbm_to_vmem [thread:$0]  %s5, 16, %s69, [#allocation11]
    $region21: #{regressor_forward.1} parent=1 // pred_fallthru
      _
    // Predicated region
    $region22: #{regressor_forward.1} parent=1 // pred_check
      _
    $region23: #{regressor_forward.1} parent=1 // pred_check_branch
      %73 = sbr.rel (0) target = $region25
    $region24: #{regressor_forward.1} parent=1 // pred_region
      %74 = dma.done [#allocation5], 2048
    $region25: #{regressor_forward.1} parent=1 // pred_fallthru
      _
    // Predicated region
    $region26: #{regressor_forward.1} parent=1 // pred_check
      _
    $region27: #{regressor_forward.1} parent=1 // pred_check_branch
      %76 = sbr.rel (0) target = $region29
    $region28: #{regressor_forward.1} parent=1 // pred_region
      %77 = dma.done [#allocation8], 131072
    $region29: #{regressor_forward.1} parent=1 // pred_fallthru
      _
    // Predicated region
    $region30: #{regressor_forward.1} parent=1 // pred_check
      _
    $region31: #{regressor_forward.1} parent=1 // pred_check_branch
      %79 = sbr.rel (0) target = $region33
    $region32: #{regressor_forward.1} parent=1 // pred_region
      %80 = dma.done [#allocation8], 128
    $region33: #{regressor_forward.1} parent=1 // pred_fallthru
      _
    // Predicated region
    $region34: #{regressor_forward.1} parent=1 // pred_check
      _
    $region35: #{regressor_forward.1} parent=1 // pred_check_branch
      %82 = sbr.rel (0) target = $region37
    $region36: #{regressor_forward.1} parent=1 // pred_region
      %83 = dma.done [#allocation11], 8192
    $region37: #{regressor_forward.1} parent=1 // pred_fallthru
      _
    // Predicated region
    $region38: #{regressor_forward.1} parent=1 // pred_check
      _
    $region39: #{regressor_forward.1} parent=1 // pred_check_branch
      %85 = sbr.rel (0) target = $region41
    $region40: #{regressor_forward.1} parent=1 // pred_region
      %86 = dma.done [#allocation11], 16
    $region41: #{regressor_forward.1} parent=1 // pred_fallthru
      _
    %v88 = vld [vmem:[#allocation4] sm:$0xff]
    %v89 = vld [vmem:[#allocation4 + $0x8] sm:$0xff]
    %v90 = vld [vmem:[#allocation4 + $0x10] sm:$0xff]
    %v91 = vld [vmem:[#allocation4 + $0x18] sm:$0xff]
    %v92 = vld [vmem:[#allocation4 + $0x20] sm:$0xff]
    %v93 = vld [vmem:[#allocation4 + $0x28] sm:$0xff]
    %v94 = vld [vmem:[#allocation4 + $0x30] sm:$0xff]
    %v95 = vld [vmem:[#allocation4 + $0x38] sm:$0xff]
    %v96 = vld [vmem:[#allocation4 + $0x40] sm:$0xff]
    %v97 = vld [vmem:[#allocation4 + $0x48] sm:$0xff]
    %v98 = vld [vmem:[#allocation4 + $0x50] sm:$0xff]
    %v99 = vld [vmem:[#allocation4 + $0x58] sm:$0xff]
    %v100 = vld [vmem:[#allocation4 + $0x60] sm:$0xff]
    %v101 = vld [vmem:[#allocation4 + $0x68] sm:$0xff]
    %v102 = vld [vmem:[#allocation4 + $0x70] sm:$0xff]
    %v103 = vld [vmem:[#allocation4 + $0x78] sm:$0xff]
    %v120 = vcombine.low %v88, %v92
    %v121 = vcombine.high %v88, %v92
    %v122 = vcombine.low %v96, %v100
    %v123 = vcombine.high %v96, %v100
    %v125 = vunpack.c.l.s4 1983009808
    %v126 = vunpack.c.0.s8 %v125
    %v127 = vlaneseq
    %v128 = vshrl.u32 %v127, 7
    %v129 = vsub.s32 %v126, %v128
    %v130 = vrot.slane %v120, %v129
    %v132 = vunpack.c.l.s4 1983009808
    %v133 = vunpack.c.0.s8 %v132
    %v134 = vlaneseq
    %v135 = vshrl.u32 %v134, 7
    %v136 = vsub.s32 %v133, %v135
    %v137 = vrot.slane %v121, %v136
    %v139 = vunpack.c.l.s4 1983009808
    %v140 = vunpack.c.0.s8 %v139
    %v141 = vlaneseq
    %v142 = vshrl.u32 %v141, 7
    %v143 = vsub.s32 %v140, %v142
    %v144 = vrot.slane %v122, %v143
    %v146 = vunpack.c.l.s4 1983009808
    %v147 = vunpack.c.0.s8 %v146
    %v148 = vlaneseq
    %v149 = vshrl.u32 %v148, 7
    %v150 = vsub.s32 %v147, %v149
    %v151 = vrot.slane %v123, %v150
    %v152 = vcombine.low %v130, %v144
    %v153 = vcombine.high %v130, %v144
    %v154 = vcombine.low %v137, %v151
    %v155 = vcombine.high %v137, %v151
    %v156 = vcombine.low %v89, %v93
    %v157 = vcombine.high %v89, %v93
    %v158 = vcombine.low %v97, %v101
    %v159 = vcombine.high %v97, %v101
    %v161 = vunpack.c.l.s4 1983009808
    %v162 = vunpack.c.0.s8 %v161
    %v163 = vlaneseq
    %v164 = vshrl.u32 %v163, 7
    %v165 = vsub.s32 %v162, %v164
    %v166 = vrot.slane %v156, %v165
    %v168 = vunpack.c.l.s4 1983009808
    %v169 = vunpack.c.0.s8 %v168
    %v170 = vlaneseq
    %v171 = vshrl.u32 %v170, 7
    %v172 = vsub.s32 %v169, %v171
    %v173 = vrot.slane %v157, %v172
    %v175 = vunpack.c.l.s4 1983009808
    %v176 = vunpack.c.0.s8 %v175
    %v177 = vlaneseq
    %v178 = vshrl.u32 %v177, 7
    %v179 = vsub.s32 %v176, %v178
    %v180 = vrot.slane %v158, %v179
    %v182 = vunpack.c.l.s4 1983009808
    %v183 = vunpack.c.0.s8 %v182
    %v184 = vlaneseq
    %v185 = vshrl.u32 %v184, 7
    %v186 = vsub.s32 %v183, %v185
    %v187 = vrot.slane %v159, %v186
    %v188 = vcombine.low %v166, %v180
    %v189 = vcombine.high %v166, %v180
    %v190 = vcombine.low %v173, %v187
    %v191 = vcombine.high %v173, %v187
    %v192 = vcombine.low %v90, %v94
    %v193 = vcombine.high %v90, %v94
    %v194 = vcombine.low %v98, %v102
    %v195 = vcombine.high %v98, %v102
    %v197 = vunpack.c.l.s4 1983009808
    %v198 = vunpack.c.0.s8 %v197
    %v199 = vlaneseq
    %v200 = vshrl.u32 %v199, 7
    %v201 = vsub.s32 %v198, %v200
    %v202 = vrot.slane %v192, %v201
    %v204 = vunpack.c.l.s4 1983009808
    %v205 = vunpack.c.0.s8 %v204
    %v206 = vlaneseq
    %v207 = vshrl.u32 %v206, 7
    %v208 = vsub.s32 %v205, %v207
    %v209 = vrot.slane %v193, %v208
    %v211 = vunpack.c.l.s4 1983009808
    %v212 = vunpack.c.0.s8 %v211
    %v213 = vlaneseq
    %v214 = vshrl.u32 %v213, 7
    %v215 = vsub.s32 %v212, %v214
    %v216 = vrot.slane %v194, %v215
    %v218 = vunpack.c.l.s4 1983009808
    %v219 = vunpack.c.0.s8 %v218
    %v220 = vlaneseq
    %v221 = vshrl.u32 %v220, 7
    %v222 = vsub.s32 %v219, %v221
    %v223 = vrot.slane %v195, %v222
    %v224 = vcombine.low %v202, %v216
    %v225 = vcombine.high %v202, %v216
    %v226 = vcombine.low %v209, %v223
    %v227 = vcombine.high %v209, %v223
    %v228 = vcombine.low %v91, %v95
    %v229 = vcombine.high %v91, %v95
    %v230 = vcombine.low %v99, %v103
    %v231 = vcombine.high %v99, %v103
    %v233 = vunpack.c.l.s4 1983009808
    %v234 = vunpack.c.0.s8 %v233
    %v235 = vlaneseq
    %v236 = vshrl.u32 %v235, 7
    %v237 = vsub.s32 %v234, %v236
    %v238 = vrot.slane %v228, %v237
    %v240 = vunpack.c.l.s4 1983009808
    %v241 = vunpack.c.0.s8 %v240
    %v242 = vlaneseq
    %v243 = vshrl.u32 %v242, 7
    %v244 = vsub.s32 %v241, %v243
    %v245 = vrot.slane %v229, %v244
    %v247 = vunpack.c.l.s4 1983009808
    %v248 = vunpack.c.0.s8 %v247
    %v249 = vlaneseq
    %v250 = vshrl.u32 %v249, 7
    %v251 = vsub.s32 %v248, %v250
    %v252 = vrot.slane %v230, %v251
    %v254 = vunpack.c.l.s4 1983009808
    %v255 = vunpack.c.0.s8 %v254
    %v256 = vlaneseq
    %v257 = vshrl.u32 %v256, 7
    %v258 = vsub.s32 %v255, %v257
    %v259 = vrot.slane %v231, %v258
    %v260 = vcombine.low %v238, %v252
    %v261 = vcombine.high %v238, %v252
    %v262 = vcombine.low %v245, %v259
    %v263 = vcombine.high %v245, %v259
    %v280 = vpack.c.bf16 %v152, %v152
    %v281 = vpack.c.bf16 %v153, %v153
    %v282 = vpack.c.bf16 %v154, %v154
    %v283 = vpack.c.bf16 %v155, %v155
    %v284 = vpack.c.bf16 %v188, %v188
    %v285 = vpack.c.bf16 %v189, %v189
    %v286 = vpack.c.bf16 %v190, %v190
    %v287 = vpack.c.bf16 %v191, %v191
    %v288 = vpack.c.bf16 %v224, %v224
    %v289 = vpack.c.bf16 %v225, %v225
    %v290 = vpack.c.bf16 %v226, %v226
    %v291 = vpack.c.bf16 %v227, %v227
    %v292 = vpack.c.bf16 %v260, %v260
    %v293 = vpack.c.bf16 %v261, %v261
    %v294 = vpack.c.bf16 %v262, %v262
    %v295 = vpack.c.bf16 %v263, %v263
    %v296 = vld [vmem:[#allocation7] sm:$0xff]
    %v297 = vld [vmem:[#allocation7 + $0x8] sm:$0xff]
    %v298 = vld [vmem:[#allocation7 + $0x10] sm:$0xff]
    %v299 = vld [vmem:[#allocation7 + $0x18] sm:$0xff]
    %v300 = vld [vmem:[#allocation7 + $0x20] sm:$0xff]
    %v301 = vld [vmem:[#allocation7 + $0x28] sm:$0xff]
    %v302 = vld [vmem:[#allocation7 + $0x30] sm:$0xff]
    %v303 = vld [vmem:[#allocation7 + $0x38] sm:$0xff]
    %v304 = vld [vmem:[#allocation7 + $0x40] sm:$0xff]
    %v305 = vld [vmem:[#allocation7 + $0x48] sm:$0xff]
    %v306 = vld [vmem:[#allocation7 + $0x50] sm:$0xff]
    %v307 = vld [vmem:[#allocation7 + $0x58] sm:$0xff]
    %v308 = vld [vmem:[#allocation7 + $0x60] sm:$0xff]
    %v309 = vld [vmem:[#allocation7 + $0x68] sm:$0xff]
    %v310 = vld [vmem:[#allocation7 + $0x70] sm:$0xff]
    %v311 = vld [vmem:[#allocation7 + $0x78] sm:$0xff]
    %v312 = vld [vmem:[#allocation7 + $0x80] sm:$0xff]
    %v313 = vld [vmem:[#allocation7 + $0x88] sm:$0xff]
    %v314 = vld [vmem:[#allocation7 + $0x90] sm:$0xff]
    %v315 = vld [vmem:[#allocation7 + $0x98] sm:$0xff]
    %v316 = vld [vmem:[#allocation7 + $0xa0] sm:$0xff]
    %v317 = vld [vmem:[#allocation7 + $0xa8] sm:$0xff]
    %v318 = vld [vmem:[#allocation7 + $0xb0] sm:$0xff]
    %v319 = vld [vmem:[#allocation7 + $0xb8] sm:$0xff]
    %v320 = vld [vmem:[#allocation7 + $0xc0] sm:$0xff]
    %v321 = vld [vmem:[#allocation7 + $0xc8] sm:$0xff]
    %v322 = vld [vmem:[#allocation7 + $0xd0] sm:$0xff]
    %v323 = vld [vmem:[#allocation7 + $0xd8] sm:$0xff]
    %v324 = vld [vmem:[#allocation7 + $0xe0] sm:$0xff]
    %v325 = vld [vmem:[#allocation7 + $0xe8] sm:$0xff]
    %v326 = vld [vmem:[#allocation7 + $0xf0] sm:$0xff]
    %v327 = vld [vmem:[#allocation7 + $0xf8] sm:$0xff]
    %v328 = vld [vmem:[#allocation7 + $0x100] sm:$0xff]
    %v329 = vld [vmem:[#allocation7 + $0x108] sm:$0xff]
    %v330 = vld [vmem:[#allocation7 + $0x110] sm:$0xff]
    %v331 = vld [vmem:[#allocation7 + $0x118] sm:$0xff]
    %v332 = vld [vmem:[#allocation7 + $0x120] sm:$0xff]
    %v333 = vld [vmem:[#allocation7 + $0x128] sm:$0xff]
    %v334 = vld [vmem:[#allocation7 + $0x130] sm:$0xff]
    %v335 = vld [vmem:[#allocation7 + $0x138] sm:$0xff]
    %v336 = vld [vmem:[#allocation7 + $0x140] sm:$0xff]
    %v337 = vld [vmem:[#allocation7 + $0x148] sm:$0xff]
    %v338 = vld [vmem:[#allocation7 + $0x150] sm:$0xff]
    %v339 = vld [vmem:[#allocation7 + $0x158] sm:$0xff]
    %v340 = vld [vmem:[#allocation7 + $0x160] sm:$0xff]
    %v341 = vld [vmem:[#allocation7 + $0x168] sm:$0xff]
    %v342 = vld [vmem:[#allocation7 + $0x170] sm:$0xff]
    %v343 = vld [vmem:[#allocation7 + $0x178] sm:$0xff]
    %v344 = vld [vmem:[#allocation7 + $0x180] sm:$0xff]
    %v345 = vld [vmem:[#allocation7 + $0x188] sm:$0xff]
    %v346 = vld [vmem:[#allocation7 + $0x190] sm:$0xff]
    %v347 = vld [vmem:[#allocation7 + $0x198] sm:$0xff]
    %v348 = vld [vmem:[#allocation7 + $0x1a0] sm:$0xff]
    %v349 = vld [vmem:[#allocation7 + $0x1a8] sm:$0xff]
    %v350 = vld [vmem:[#allocation7 + $0x1b0] sm:$0xff]
    %v351 = vld [vmem:[#allocation7 + $0x1b8] sm:$0xff]
    %v352 = vld [vmem:[#allocation7 + $0x1c0] sm:$0xff]
    %v353 = vld [vmem:[#allocation7 + $0x1c8] sm:$0xff]
    %v354 = vld [vmem:[#allocation7 + $0x1d0] sm:$0xff]
    %v355 = vld [vmem:[#allocation7 + $0x1d8] sm:$0xff]
    %v356 = vld [vmem:[#allocation7 + $0x1e0] sm:$0xff]
    %v357 = vld [vmem:[#allocation7 + $0x1e8] sm:$0xff]
    %v358 = vld [vmem:[#allocation7 + $0x1f0] sm:$0xff]
    %v359 = vld [vmem:[#allocation7 + $0x1f8] sm:$0xff]
    %v360 = vld [vmem:[#allocation7 + $0x200] sm:$0xff]
    %v361 = vld [vmem:[#allocation7 + $0x208] sm:$0xff]
    %v362 = vld [vmem:[#allocation7 + $0x210] sm:$0xff]
    %v363 = vld [vmem:[#allocation7 + $0x218] sm:$0xff]
    %v364 = vld [vmem:[#allocation7 + $0x220] sm:$0xff]
    %v365 = vld [vmem:[#allocation7 + $0x228] sm:$0xff]
    %v366 = vld [vmem:[#allocation7 + $0x230] sm:$0xff]
    %v367 = vld [vmem:[#allocation7 + $0x238] sm:$0xff]
    %v368 = vld [vmem:[#allocation7 + $0x240] sm:$0xff]
    %v369 = vld [vmem:[#allocation7 + $0x248] sm:$0xff]
    %v370 = vld [vmem:[#allocation7 + $0x250] sm:$0xff]
    %v371 = vld [vmem:[#allocation7 + $0x258] sm:$0xff]
    %v372 = vld [vmem:[#allocation7 + $0x260] sm:$0xff]
    %v373 = vld [vmem:[#allocation7 + $0x268] sm:$0xff]
    %v374 = vld [vmem:[#allocation7 + $0x270] sm:$0xff]
    %v375 = vld [vmem:[#allocation7 + $0x278] sm:$0xff]
    %v376 = vld [vmem:[#allocation7 + $0x280] sm:$0xff]
    %v377 = vld [vmem:[#allocation7 + $0x288] sm:$0xff]
    %v378 = vld [vmem:[#allocation7 + $0x290] sm:$0xff]
    %v379 = vld [vmem:[#allocation7 + $0x298] sm:$0xff]
    %v380 = vld [vmem:[#allocation7 + $0x2a0] sm:$0xff]
    %v381 = vld [vmem:[#allocation7 + $0x2a8] sm:$0xff]
    %v382 = vld [vmem:[#allocation7 + $0x2b0] sm:$0xff]
    %v383 = vld [vmem:[#allocation7 + $0x2b8] sm:$0xff]
    %v384 = vld [vmem:[#allocation7 + $0x2c0] sm:$0xff]
    %v385 = vld [vmem:[#allocation7 + $0x2c8] sm:$0xff]
    %v386 = vld [vmem:[#allocation7 + $0x2d0] sm:$0xff]
    %v387 = vld [vmem:[#allocation7 + $0x2d8] sm:$0xff]
    %v388 = vld [vmem:[#allocation7 + $0x2e0] sm:$0xff]
    %v389 = vld [vmem:[#allocation7 + $0x2e8] sm:$0xff]
    %v390 = vld [vmem:[#allocation7 + $0x2f0] sm:$0xff]
    %v391 = vld [vmem:[#allocation7 + $0x2f8] sm:$0xff]
    %v392 = vld [vmem:[#allocation7 + $0x300] sm:$0xff]
    %v393 = vld [vmem:[#allocation7 + $0x308] sm:$0xff]
    %v394 = vld [vmem:[#allocation7 + $0x310] sm:$0xff]
    %v395 = vld [vmem:[#allocation7 + $0x318] sm:$0xff]
    %v396 = vld [vmem:[#allocation7 + $0x320] sm:$0xff]
    %v397 = vld [vmem:[#allocation7 + $0x328] sm:$0xff]
    %v398 = vld [vmem:[#allocation7 + $0x330] sm:$0xff]
    %v399 = vld [vmem:[#allocation7 + $0x338] sm:$0xff]
    %v400 = vld [vmem:[#allocation7 + $0x340] sm:$0xff]
    %v401 = vld [vmem:[#allocation7 + $0x348] sm:$0xff]
    %v402 = vld [vmem:[#allocation7 + $0x350] sm:$0xff]
    %v403 = vld [vmem:[#allocation7 + $0x358] sm:$0xff]
    %v404 = vld [vmem:[#allocation7 + $0x360] sm:$0xff]
    %v405 = vld [vmem:[#allocation7 + $0x368] sm:$0xff]
    %v406 = vld [vmem:[#allocation7 + $0x370] sm:$0xff]
    %v407 = vld [vmem:[#allocation7 + $0x378] sm:$0xff]
    %v408 = vld [vmem:[#allocation7 + $0x380] sm:$0xff]
    %v409 = vld [vmem:[#allocation7 + $0x388] sm:$0xff]
    %v410 = vld [vmem:[#allocation7 + $0x390] sm:$0xff]
    %v411 = vld [vmem:[#allocation7 + $0x398] sm:$0xff]
    %v412 = vld [vmem:[#allocation7 + $0x3a0] sm:$0xff]
    %v413 = vld [vmem:[#allocation7 + $0x3a8] sm:$0xff]
    %v414 = vld [vmem:[#allocation7 + $0x3b0] sm:$0xff]
    %v415 = vld [vmem:[#allocation7 + $0x3b8] sm:$0xff]
    %v416 = vld [vmem:[#allocation7 + $0x3c0] sm:$0xff]
    %v417 = vld [vmem:[#allocation7 + $0x3c8] sm:$0xff]
    %v418 = vld [vmem:[#allocation7 + $0x3d0] sm:$0xff]
    %v419 = vld [vmem:[#allocation7 + $0x3d8] sm:$0xff]
    %v420 = vld [vmem:[#allocation7 + $0x3e0] sm:$0xff]
    %v421 = vld [vmem:[#allocation7 + $0x3e8] sm:$0xff]
    %v422 = vld [vmem:[#allocation7 + $0x3f0] sm:$0xff]
    %v423 = vld [vmem:[#allocation7 + $0x3f8] sm:$0xff]
    %v424 = vld [vmem:[#allocation7 + $0x400] sm:$0xff]
    %v425 = vld [vmem:[#allocation7 + $0x408] sm:$0xff]
    %v426 = vld [vmem:[#allocation7 + $0x410] sm:$0xff]
    %v427 = vld [vmem:[#allocation7 + $0x418] sm:$0xff]
    %v428 = vld [vmem:[#allocation7 + $0x420] sm:$0xff]
    %v429 = vld [vmem:[#allocation7 + $0x428] sm:$0xff]
    %v430 = vld [vmem:[#allocation7 + $0x430] sm:$0xff]
    %v431 = vld [vmem:[#allocation7 + $0x438] sm:$0xff]
    %v432 = vld [vmem:[#allocation7 + $0x440] sm:$0xff]
    %v433 = vld [vmem:[#allocation7 + $0x448] sm:$0xff]
    %v434 = vld [vmem:[#allocation7 + $0x450] sm:$0xff]
    %v435 = vld [vmem:[#allocation7 + $0x458] sm:$0xff]
    %v436 = vld [vmem:[#allocation7 + $0x460] sm:$0xff]
    %v437 = vld [vmem:[#allocation7 + $0x468] sm:$0xff]
    %v438 = vld [vmem:[#allocation7 + $0x470] sm:$0xff]
    %v439 = vld [vmem:[#allocation7 + $0x478] sm:$0xff]
    %v440 = vld [vmem:[#allocation7 + $0x480] sm:$0xff]
    %v441 = vld [vmem:[#allocation7 + $0x488] sm:$0xff]
    %v442 = vld [vmem:[#allocation7 + $0x490] sm:$0xff]
    %v443 = vld [vmem:[#allocation7 + $0x498] sm:$0xff]
    %v444 = vld [vmem:[#allocation7 + $0x4a0] sm:$0xff]
    %v445 = vld [vmem:[#allocation7 + $0x4a8] sm:$0xff]
    %v446 = vld [vmem:[#allocation7 + $0x4b0] sm:$0xff]
    %v447 = vld [vmem:[#allocation7 + $0x4b8] sm:$0xff]
    %v448 = vld [vmem:[#allocation7 + $0x4c0] sm:$0xff]
    %v449 = vld [vmem:[#allocation7 + $0x4c8] sm:$0xff]
    %v450 = vld [vmem:[#allocation7 + $0x4d0] sm:$0xff]
    %v451 = vld [vmem:[#allocation7 + $0x4d8] sm:$0xff]
    %v452 = vld [vmem:[#allocation7 + $0x4e0] sm:$0xff]
    %v453 = vld [vmem:[#allocation7 + $0x4e8] sm:$0xff]
    %v454 = vld [vmem:[#allocation7 + $0x4f0] sm:$0xff]
    %v455 = vld [vmem:[#allocation7 + $0x4f8] sm:$0xff]
    %v456 = vld [vmem:[#allocation7 + $0x500] sm:$0xff]
    %v457 = vld [vmem:[#allocation7 + $0x508] sm:$0xff]
    %v458 = vld [vmem:[#allocation7 + $0x510] sm:$0xff]
    %v459 = vld [vmem:[#allocation7 + $0x518] sm:$0xff]
    %v460 = vld [vmem:[#allocation7 + $0x520] sm:$0xff]
    %v461 = vld [vmem:[#allocation7 + $0x528] sm:$0xff]
    %v462 = vld [vmem:[#allocation7 + $0x530] sm:$0xff]
    %v463 = vld [vmem:[#allocation7 + $0x538] sm:$0xff]
    %v464 = vld [vmem:[#allocation7 + $0x540] sm:$0xff]
    %v465 = vld [vmem:[#allocation7 + $0x548] sm:$0xff]
    %v466 = vld [vmem:[#allocation7 + $0x550] sm:$0xff]
    %v467 = vld [vmem:[#allocation7 + $0x558] sm:$0xff]
    %v468 = vld [vmem:[#allocation7 + $0x560] sm:$0xff]
    %v469 = vld [vmem:[#allocation7 + $0x568] sm:$0xff]
    %v470 = vld [vmem:[#allocation7 + $0x570] sm:$0xff]
    %v471 = vld [vmem:[#allocation7 + $0x578] sm:$0xff]
    %v472 = vld [vmem:[#allocation7 + $0x580] sm:$0xff]
    %v473 = vld [vmem:[#allocation7 + $0x588] sm:$0xff]
    %v474 = vld [vmem:[#allocation7 + $0x590] sm:$0xff]
    %v475 = vld [vmem:[#allocation7 + $0x598] sm:$0xff]
    %v476 = vld [vmem:[#allocation7 + $0x5a0] sm:$0xff]
    %v477 = vld [vmem:[#allocation7 + $0x5a8] sm:$0xff]
    %v478 = vld [vmem:[#allocation7 + $0x5b0] sm:$0xff]
    %v479 = vld [vmem:[#allocation7 + $0x5b8] sm:$0xff]
    %v480 = vld [vmem:[#allocation7 + $0x5c0] sm:$0xff]
    %v481 = vld [vmem:[#allocation7 + $0x5c8] sm:$0xff]
    %v482 = vld [vmem:[#allocation7 + $0x5d0] sm:$0xff]
    %v483 = vld [vmem:[#allocation7 + $0x5d8] sm:$0xff]
    %v484 = vld [vmem:[#allocation7 + $0x5e0] sm:$0xff]
    %v485 = vld [vmem:[#allocation7 + $0x5e8] sm:$0xff]
    %v486 = vld [vmem:[#allocation7 + $0x5f0] sm:$0xff]
    %v487 = vld [vmem:[#allocation7 + $0x5f8] sm:$0xff]
    %v488 = vld [vmem:[#allocation7 + $0x600] sm:$0xff]
    %v489 = vld [vmem:[#allocation7 + $0x608] sm:$0xff]
    %v490 = vld [vmem:[#allocation7 + $0x610] sm:$0xff]
    %v491 = vld [vmem:[#allocation7 + $0x618] sm:$0xff]
    %v492 = vld [vmem:[#allocation7 + $0x620] sm:$0xff]
    %v493 = vld [vmem:[#allocation7 + $0x628] sm:$0xff]
    %v494 = vld [vmem:[#allocation7 + $0x630] sm:$0xff]
    %v495 = vld [vmem:[#allocation7 + $0x638] sm:$0xff]
    %v496 = vld [vmem:[#allocation7 + $0x640] sm:$0xff]
    %v497 = vld [vmem:[#allocation7 + $0x648] sm:$0xff]
    %v498 = vld [vmem:[#allocation7 + $0x650] sm:$0xff]
    %v499 = vld [vmem:[#allocation7 + $0x658] sm:$0xff]
    %v500 = vld [vmem:[#allocation7 + $0x660] sm:$0xff]
    %v501 = vld [vmem:[#allocation7 + $0x668] sm:$0xff]
    %v502 = vld [vmem:[#allocation7 + $0x670] sm:$0xff]
    %v503 = vld [vmem:[#allocation7 + $0x678] sm:$0xff]
    %v504 = vld [vmem:[#allocation7 + $0x680] sm:$0xff]
    %v505 = vld [vmem:[#allocation7 + $0x688] sm:$0xff]
    %v506 = vld [vmem:[#allocation7 + $0x690] sm:$0xff]
    %v507 = vld [vmem:[#allocation7 + $0x698] sm:$0xff]
    %v508 = vld [vmem:[#allocation7 + $0x6a0] sm:$0xff]
    %v509 = vld [vmem:[#allocation7 + $0x6a8] sm:$0xff]
    %v510 = vld [vmem:[#allocation7 + $0x6b0] sm:$0xff]
    %v511 = vld [vmem:[#allocation7 + $0x6b8] sm:$0xff]
    %v512 = vld [vmem:[#allocation7 + $0x6c0] sm:$0xff]
    %v513 = vld [vmem:[#allocation7 + $0x6c8] sm:$0xff]
    %v514 = vld [vmem:[#allocation7 + $0x6d0] sm:$0xff]
    %v515 = vld [vmem:[#allocation7 + $0x6d8] sm:$0xff]
    %v516 = vld [vmem:[#allocation7 + $0x6e0] sm:$0xff]
    %v517 = vld [vmem:[#allocation7 + $0x6e8] sm:$0xff]
    %v518 = vld [vmem:[#allocation7 + $0x6f0] sm:$0xff]
    %v519 = vld [vmem:[#allocation7 + $0x6f8] sm:$0xff]
    %v520 = vld [vmem:[#allocation7 + $0x700] sm:$0xff]
    %v521 = vld [vmem:[#allocation7 + $0x708] sm:$0xff]
    %v522 = vld [vmem:[#allocation7 + $0x710] sm:$0xff]
    %v523 = vld [vmem:[#allocation7 + $0x718] sm:$0xff]
    %v524 = vld [vmem:[#allocation7 + $0x720] sm:$0xff]
    %v525 = vld [vmem:[#allocation7 + $0x728] sm:$0xff]
    %v526 = vld [vmem:[#allocation7 + $0x730] sm:$0xff]
    %v527 = vld [vmem:[#allocation7 + $0x738] sm:$0xff]
    %v528 = vld [vmem:[#allocation7 + $0x740] sm:$0xff]
    %v529 = vld [vmem:[#allocation7 + $0x748] sm:$0xff]
    %v530 = vld [vmem:[#allocation7 + $0x750] sm:$0xff]
    %v531 = vld [vmem:[#allocation7 + $0x758] sm:$0xff]
    %v532 = vld [vmem:[#allocation7 + $0x760] sm:$0xff]
    %v533 = vld [vmem:[#allocation7 + $0x768] sm:$0xff]
    %v534 = vld [vmem:[#allocation7 + $0x770] sm:$0xff]
    %v535 = vld [vmem:[#allocation7 + $0x778] sm:$0xff]
    %v536 = vld [vmem:[#allocation7 + $0x780] sm:$0xff]
    %v537 = vld [vmem:[#allocation7 + $0x788] sm:$0xff]
    %v538 = vld [vmem:[#allocation7 + $0x790] sm:$0xff]
    %v539 = vld [vmem:[#allocation7 + $0x798] sm:$0xff]
    %v540 = vld [vmem:[#allocation7 + $0x7a0] sm:$0xff]
    %v541 = vld [vmem:[#allocation7 + $0x7a8] sm:$0xff]
    %v542 = vld [vmem:[#allocation7 + $0x7b0] sm:$0xff]
    %v543 = vld [vmem:[#allocation7 + $0x7b8] sm:$0xff]
    %v544 = vld [vmem:[#allocation7 + $0x7c0] sm:$0xff]
    %v545 = vld [vmem:[#allocation7 + $0x7c8] sm:$0xff]
    %v546 = vld [vmem:[#allocation7 + $0x7d0] sm:$0xff]
    %v547 = vld [vmem:[#allocation7 + $0x7d8] sm:$0xff]
    %v548 = vld [vmem:[#allocation7 + $0x7e0] sm:$0xff]
    %v549 = vld [vmem:[#allocation7 + $0x7e8] sm:$0xff]
    %v550 = vld [vmem:[#allocation7 + $0x7f0] sm:$0xff]
    %v551 = vld [vmem:[#allocation7 + $0x7f8] sm:$0xff]
    %v552 = vld [vmem:[#allocation7 + $0x800] sm:$0xff]
    %v553 = vld [vmem:[#allocation7 + $0x808] sm:$0xff]
    %v554 = vld [vmem:[#allocation7 + $0x810] sm:$0xff]
    %v555 = vld [vmem:[#allocation7 + $0x818] sm:$0xff]
    %v556 = vld [vmem:[#allocation7 + $0x820] sm:$0xff]
    %v557 = vld [vmem:[#allocation7 + $0x828] sm:$0xff]
    %v558 = vld [vmem:[#allocation7 + $0x830] sm:$0xff]
    %v559 = vld [vmem:[#allocation7 + $0x838] sm:$0xff]
    %v560 = vld [vmem:[#allocation7 + $0x840] sm:$0xff]
    %v561 = vld [vmem:[#allocation7 + $0x848] sm:$0xff]
    %v562 = vld [vmem:[#allocation7 + $0x850] sm:$0xff]
    %v563 = vld [vmem:[#allocation7 + $0x858] sm:$0xff]
    %v564 = vld [vmem:[#allocation7 + $0x860] sm:$0xff]
    %v565 = vld [vmem:[#allocation7 + $0x868] sm:$0xff]
    %v566 = vld [vmem:[#allocation7 + $0x870] sm:$0xff]
    %v567 = vld [vmem:[#allocation7 + $0x878] sm:$0xff]
    %v568 = vld [vmem:[#allocation7 + $0x880] sm:$0xff]
    %v569 = vld [vmem:[#allocation7 + $0x888] sm:$0xff]
    %v570 = vld [vmem:[#allocation7 + $0x890] sm:$0xff]
    %v571 = vld [vmem:[#allocation7 + $0x898] sm:$0xff]
    %v572 = vld [vmem:[#allocation7 + $0x8a0] sm:$0xff]
    %v573 = vld [vmem:[#allocation7 + $0x8a8] sm:$0xff]
    %v574 = vld [vmem:[#allocation7 + $0x8b0] sm:$0xff]
    %v575 = vld [vmem:[#allocation7 + $0x8b8] sm:$0xff]
    %v576 = vld [vmem:[#allocation7 + $0x8c0] sm:$0xff]
    %v577 = vld [vmem:[#allocation7 + $0x8c8] sm:$0xff]
    %v578 = vld [vmem:[#allocation7 + $0x8d0] sm:$0xff]
    %v579 = vld [vmem:[#allocation7 + $0x8d8] sm:$0xff]
    %v580 = vld [vmem:[#allocation7 + $0x8e0] sm:$0xff]
    %v581 = vld [vmem:[#allocation7 + $0x8e8] sm:$0xff]
    %v582 = vld [vmem:[#allocation7 + $0x8f0] sm:$0xff]
    %v583 = vld [vmem:[#allocation7 + $0x8f8] sm:$0xff]
    %v584 = vld [vmem:[#allocation7 + $0x900] sm:$0xff]
    %v585 = vld [vmem:[#allocation7 + $0x908] sm:$0xff]
    %v586 = vld [vmem:[#allocation7 + $0x910] sm:$0xff]
    %v587 = vld [vmem:[#allocation7 + $0x918] sm:$0xff]
    %v588 = vld [vmem:[#allocation7 + $0x920] sm:$0xff]
    %v589 = vld [vmem:[#allocation7 + $0x928] sm:$0xff]
    %v590 = vld [vmem:[#allocation7 + $0x930] sm:$0xff]
    %v591 = vld [vmem:[#allocation7 + $0x938] sm:$0xff]
    %v592 = vld [vmem:[#allocation7 + $0x940] sm:$0xff]
    %v593 = vld [vmem:[#allocation7 + $0x948] sm:$0xff]
    %v594 = vld [vmem:[#allocation7 + $0x950] sm:$0xff]
    %v595 = vld [vmem:[#allocation7 + $0x958] sm:$0xff]
    %v596 = vld [vmem:[#allocation7 + $0x960] sm:$0xff]
    %v597 = vld [vmem:[#allocation7 + $0x968] sm:$0xff]
    %v598 = vld [vmem:[#allocation7 + $0x970] sm:$0xff]
    %v599 = vld [vmem:[#allocation7 + $0x978] sm:$0xff]
    %v600 = vld [vmem:[#allocation7 + $0x980] sm:$0xff]
    %v601 = vld [vmem:[#allocation7 + $0x988] sm:$0xff]
    %v602 = vld [vmem:[#allocation7 + $0x990] sm:$0xff]
    %v603 = vld [vmem:[#allocation7 + $0x998] sm:$0xff]
    %v604 = vld [vmem:[#allocation7 + $0x9a0] sm:$0xff]
    %v605 = vld [vmem:[#allocation7 + $0x9a8] sm:$0xff]
    %v606 = vld [vmem:[#allocation7 + $0x9b0] sm:$0xff]
    %v607 = vld [vmem:[#allocation7 + $0x9b8] sm:$0xff]
    %v608 = vld [vmem:[#allocation7 + $0x9c0] sm:$0xff]
    %v609 = vld [vmem:[#allocation7 + $0x9c8] sm:$0xff]
    %v610 = vld [vmem:[#allocation7 + $0x9d0] sm:$0xff]
    %v611 = vld [vmem:[#allocation7 + $0x9d8] sm:$0xff]
    %v612 = vld [vmem:[#allocation7 + $0x9e0] sm:$0xff]
    %v613 = vld [vmem:[#allocation7 + $0x9e8] sm:$0xff]
    %v614 = vld [vmem:[#allocation7 + $0x9f0] sm:$0xff]
    %v615 = vld [vmem:[#allocation7 + $0x9f8] sm:$0xff]
    %v616 = vld [vmem:[#allocation7 + $0xa00] sm:$0xff]
    %v617 = vld [vmem:[#allocation7 + $0xa08] sm:$0xff]
    %v618 = vld [vmem:[#allocation7 + $0xa10] sm:$0xff]
    %v619 = vld [vmem:[#allocation7 + $0xa18] sm:$0xff]
    %v620 = vld [vmem:[#allocation7 + $0xa20] sm:$0xff]
    %v621 = vld [vmem:[#allocation7 + $0xa28] sm:$0xff]
    %v622 = vld [vmem:[#allocation7 + $0xa30] sm:$0xff]
    %v623 = vld [vmem:[#allocation7 + $0xa38] sm:$0xff]
    %v624 = vld [vmem:[#allocation7 + $0xa40] sm:$0xff]
    %v625 = vld [vmem:[#allocation7 + $0xa48] sm:$0xff]
    %v626 = vld [vmem:[#allocation7 + $0xa50] sm:$0xff]
    %v627 = vld [vmem:[#allocation7 + $0xa58] sm:$0xff]
    %v628 = vld [vmem:[#allocation7 + $0xa60] sm:$0xff]
    %v629 = vld [vmem:[#allocation7 + $0xa68] sm:$0xff]
    %v630 = vld [vmem:[#allocation7 + $0xa70] sm:$0xff]
    %v631 = vld [vmem:[#allocation7 + $0xa78] sm:$0xff]
    %v632 = vld [vmem:[#allocation7 + $0xa80] sm:$0xff]
    %v633 = vld [vmem:[#allocation7 + $0xa88] sm:$0xff]
    %v634 = vld [vmem:[#allocation7 + $0xa90] sm:$0xff]
    %v635 = vld [vmem:[#allocation7 + $0xa98] sm:$0xff]
    %v636 = vld [vmem:[#allocation7 + $0xaa0] sm:$0xff]
    %v637 = vld [vmem:[#allocation7 + $0xaa8] sm:$0xff]
    %v638 = vld [vmem:[#allocation7 + $0xab0] sm:$0xff]
    %v639 = vld [vmem:[#allocation7 + $0xab8] sm:$0xff]
    %v640 = vld [vmem:[#allocation7 + $0xac0] sm:$0xff]
    %v641 = vld [vmem:[#allocation7 + $0xac8] sm:$0xff]
    %v642 = vld [vmem:[#allocation7 + $0xad0] sm:$0xff]
    %v643 = vld [vmem:[#allocation7 + $0xad8] sm:$0xff]
    %v644 = vld [vmem:[#allocation7 + $0xae0] sm:$0xff]
    %v645 = vld [vmem:[#allocation7 + $0xae8] sm:$0xff]
    %v646 = vld [vmem:[#allocation7 + $0xaf0] sm:$0xff]
    %v647 = vld [vmem:[#allocation7 + $0xaf8] sm:$0xff]
    %v648 = vld [vmem:[#allocation7 + $0xb00] sm:$0xff]
    %v649 = vld [vmem:[#allocation7 + $0xb08] sm:$0xff]
    %v650 = vld [vmem:[#allocation7 + $0xb10] sm:$0xff]
    %v651 = vld [vmem:[#allocation7 + $0xb18] sm:$0xff]
    %v652 = vld [vmem:[#allocation7 + $0xb20] sm:$0xff]
    %v653 = vld [vmem:[#allocation7 + $0xb28] sm:$0xff]
    %v654 = vld [vmem:[#allocation7 + $0xb30] sm:$0xff]
    %v655 = vld [vmem:[#allocation7 + $0xb38] sm:$0xff]
    %v656 = vld [vmem:[#allocation7 + $0xb40] sm:$0xff]
    %v657 = vld [vmem:[#allocation7 + $0xb48] sm:$0xff]
    %v658 = vld [vmem:[#allocation7 + $0xb50] sm:$0xff]
    %v659 = vld [vmem:[#allocation7 + $0xb58] sm:$0xff]
    %v660 = vld [vmem:[#allocation7 + $0xb60] sm:$0xff]
    %v661 = vld [vmem:[#allocation7 + $0xb68] sm:$0xff]
    %v662 = vld [vmem:[#allocation7 + $0xb70] sm:$0xff]
    %v663 = vld [vmem:[#allocation7 + $0xb78] sm:$0xff]
    %v664 = vld [vmem:[#allocation7 + $0xb80] sm:$0xff]
    %v665 = vld [vmem:[#allocation7 + $0xb88] sm:$0xff]
    %v666 = vld [vmem:[#allocation7 + $0xb90] sm:$0xff]
    %v667 = vld [vmem:[#allocation7 + $0xb98] sm:$0xff]
    %v668 = vld [vmem:[#allocation7 + $0xba0] sm:$0xff]
    %v669 = vld [vmem:[#allocation7 + $0xba8] sm:$0xff]
    %v670 = vld [vmem:[#allocation7 + $0xbb0] sm:$0xff]
    %v671 = vld [vmem:[#allocation7 + $0xbb8] sm:$0xff]
    %v672 = vld [vmem:[#allocation7 + $0xbc0] sm:$0xff]
    %v673 = vld [vmem:[#allocation7 + $0xbc8] sm:$0xff]
    %v674 = vld [vmem:[#allocation7 + $0xbd0] sm:$0xff]
    %v675 = vld [vmem:[#allocation7 + $0xbd8] sm:$0xff]
    %v676 = vld [vmem:[#allocation7 + $0xbe0] sm:$0xff]
    %v677 = vld [vmem:[#allocation7 + $0xbe8] sm:$0xff]
    %v678 = vld [vmem:[#allocation7 + $0xbf0] sm:$0xff]
    %v679 = vld [vmem:[#allocation7 + $0xbf8] sm:$0xff]
    %v680 = vld [vmem:[#allocation7 + $0xc00] sm:$0xff]
    %v681 = vld [vmem:[#allocation7 + $0xc08] sm:$0xff]
    %v682 = vld [vmem:[#allocation7 + $0xc10] sm:$0xff]
    %v683 = vld [vmem:[#allocation7 + $0xc18] sm:$0xff]
    %v684 = vld [vmem:[#allocation7 + $0xc20] sm:$0xff]
    %v685 = vld [vmem:[#allocation7 + $0xc28] sm:$0xff]
    %v686 = vld [vmem:[#allocation7 + $0xc30] sm:$0xff]
    %v687 = vld [vmem:[#allocation7 + $0xc38] sm:$0xff]
    %v688 = vld [vmem:[#allocation7 + $0xc40] sm:$0xff]
    %v689 = vld [vmem:[#allocation7 + $0xc48] sm:$0xff]
    %v690 = vld [vmem:[#allocation7 + $0xc50] sm:$0xff]
    %v691 = vld [vmem:[#allocation7 + $0xc58] sm:$0xff]
    %v692 = vld [vmem:[#allocation7 + $0xc60] sm:$0xff]
    %v693 = vld [vmem:[#allocation7 + $0xc68] sm:$0xff]
    %v694 = vld [vmem:[#allocation7 + $0xc70] sm:$0xff]
    %v695 = vld [vmem:[#allocation7 + $0xc78] sm:$0xff]
    %v696 = vld [vmem:[#allocation7 + $0xc80] sm:$0xff]
    %v697 = vld [vmem:[#allocation7 + $0xc88] sm:$0xff]
    %v698 = vld [vmem:[#allocation7 + $0xc90] sm:$0xff]
    %v699 = vld [vmem:[#allocation7 + $0xc98] sm:$0xff]
    %v700 = vld [vmem:[#allocation7 + $0xca0] sm:$0xff]
    %v701 = vld [vmem:[#allocation7 + $0xca8] sm:$0xff]
    %v702 = vld [vmem:[#allocation7 + $0xcb0] sm:$0xff]
    %v703 = vld [vmem:[#allocation7 + $0xcb8] sm:$0xff]
    %v704 = vld [vmem:[#allocation7 + $0xcc0] sm:$0xff]
    %v705 = vld [vmem:[#allocation7 + $0xcc8] sm:$0xff]
    %v706 = vld [vmem:[#allocation7 + $0xcd0] sm:$0xff]
    %v707 = vld [vmem:[#allocation7 + $0xcd8] sm:$0xff]
    %v708 = vld [vmem:[#allocation7 + $0xce0] sm:$0xff]
    %v709 = vld [vmem:[#allocation7 + $0xce8] sm:$0xff]
    %v710 = vld [vmem:[#allocation7 + $0xcf0] sm:$0xff]
    %v711 = vld [vmem:[#allocation7 + $0xcf8] sm:$0xff]
    %v712 = vld [vmem:[#allocation7 + $0xd00] sm:$0xff]
    %v713 = vld [vmem:[#allocation7 + $0xd08] sm:$0xff]
    %v714 = vld [vmem:[#allocation7 + $0xd10] sm:$0xff]
    %v715 = vld [vmem:[#allocation7 + $0xd18] sm:$0xff]
    %v716 = vld [vmem:[#allocation7 + $0xd20] sm:$0xff]
    %v717 = vld [vmem:[#allocation7 + $0xd28] sm:$0xff]
    %v718 = vld [vmem:[#allocation7 + $0xd30] sm:$0xff]
    %v719 = vld [vmem:[#allocation7 + $0xd38] sm:$0xff]
    %v720 = vld [vmem:[#allocation7 + $0xd40] sm:$0xff]
    %v721 = vld [vmem:[#allocation7 + $0xd48] sm:$0xff]
    %v722 = vld [vmem:[#allocation7 + $0xd50] sm:$0xff]
    %v723 = vld [vmem:[#allocation7 + $0xd58] sm:$0xff]
    %v724 = vld [vmem:[#allocation7 + $0xd60] sm:$0xff]
    %v725 = vld [vmem:[#allocation7 + $0xd68] sm:$0xff]
    %v726 = vld [vmem:[#allocation7 + $0xd70] sm:$0xff]
    %v727 = vld [vmem:[#allocation7 + $0xd78] sm:$0xff]
    %v728 = vld [vmem:[#allocation7 + $0xd80] sm:$0xff]
    %v729 = vld [vmem:[#allocation7 + $0xd88] sm:$0xff]
    %v730 = vld [vmem:[#allocation7 + $0xd90] sm:$0xff]
    %v731 = vld [vmem:[#allocation7 + $0xd98] sm:$0xff]
    %v732 = vld [vmem:[#allocation7 + $0xda0] sm:$0xff]
    %v733 = vld [vmem:[#allocation7 + $0xda8] sm:$0xff]
    %v734 = vld [vmem:[#allocation7 + $0xdb0] sm:$0xff]
    %v735 = vld [vmem:[#allocation7 + $0xdb8] sm:$0xff]
    %v736 = vld [vmem:[#allocation7 + $0xdc0] sm:$0xff]
    %v737 = vld [vmem:[#allocation7 + $0xdc8] sm:$0xff]
    %v738 = vld [vmem:[#allocation7 + $0xdd0] sm:$0xff]
    %v739 = vld [vmem:[#allocation7 + $0xdd8] sm:$0xff]
    %v740 = vld [vmem:[#allocation7 + $0xde0] sm:$0xff]
    %v741 = vld [vmem:[#allocation7 + $0xde8] sm:$0xff]
    %v742 = vld [vmem:[#allocation7 + $0xdf0] sm:$0xff]
    %v743 = vld [vmem:[#allocation7 + $0xdf8] sm:$0xff]
    %v744 = vld [vmem:[#allocation7 + $0xe00] sm:$0xff]
    %v745 = vld [vmem:[#allocation7 + $0xe08] sm:$0xff]
    %v746 = vld [vmem:[#allocation7 + $0xe10] sm:$0xff]
    %v747 = vld [vmem:[#allocation7 + $0xe18] sm:$0xff]
    %v748 = vld [vmem:[#allocation7 + $0xe20] sm:$0xff]
    %v749 = vld [vmem:[#allocation7 + $0xe28] sm:$0xff]
    %v750 = vld [vmem:[#allocation7 + $0xe30] sm:$0xff]
    %v751 = vld [vmem:[#allocation7 + $0xe38] sm:$0xff]
    %v752 = vld [vmem:[#allocation7 + $0xe40] sm:$0xff]
    %v753 = vld [vmem:[#allocation7 + $0xe48] sm:$0xff]
    %v754 = vld [vmem:[#allocation7 + $0xe50] sm:$0xff]
    %v755 = vld [vmem:[#allocation7 + $0xe58] sm:$0xff]
    %v756 = vld [vmem:[#allocation7 + $0xe60] sm:$0xff]
    %v757 = vld [vmem:[#allocation7 + $0xe68] sm:$0xff]
    %v758 = vld [vmem:[#allocation7 + $0xe70] sm:$0xff]
    %v759 = vld [vmem:[#allocation7 + $0xe78] sm:$0xff]
    %v760 = vld [vmem:[#allocation7 + $0xe80] sm:$0xff]
    %v761 = vld [vmem:[#allocation7 + $0xe88] sm:$0xff]
    %v762 = vld [vmem:[#allocation7 + $0xe90] sm:$0xff]
    %v763 = vld [vmem:[#allocation7 + $0xe98] sm:$0xff]
    %v764 = vld [vmem:[#allocation7 + $0xea0] sm:$0xff]
    %v765 = vld [vmem:[#allocation7 + $0xea8] sm:$0xff]
    %v766 = vld [vmem:[#allocation7 + $0xeb0] sm:$0xff]
    %v767 = vld [vmem:[#allocation7 + $0xeb8] sm:$0xff]
    %v768 = vld [vmem:[#allocation7 + $0xec0] sm:$0xff]
    %v769 = vld [vmem:[#allocation7 + $0xec8] sm:$0xff]
    %v770 = vld [vmem:[#allocation7 + $0xed0] sm:$0xff]
    %v771 = vld [vmem:[#allocation7 + $0xed8] sm:$0xff]
    %v772 = vld [vmem:[#allocation7 + $0xee0] sm:$0xff]
    %v773 = vld [vmem:[#allocation7 + $0xee8] sm:$0xff]
    %v774 = vld [vmem:[#allocation7 + $0xef0] sm:$0xff]
    %v775 = vld [vmem:[#allocation7 + $0xef8] sm:$0xff]
    %v776 = vld [vmem:[#allocation7 + $0xf00] sm:$0xff]
    %v777 = vld [vmem:[#allocation7 + $0xf08] sm:$0xff]
    %v778 = vld [vmem:[#allocation7 + $0xf10] sm:$0xff]
    %v779 = vld [vmem:[#allocation7 + $0xf18] sm:$0xff]
    %v780 = vld [vmem:[#allocation7 + $0xf20] sm:$0xff]
    %v781 = vld [vmem:[#allocation7 + $0xf28] sm:$0xff]
    %v782 = vld [vmem:[#allocation7 + $0xf30] sm:$0xff]
    %v783 = vld [vmem:[#allocation7 + $0xf38] sm:$0xff]
    %v784 = vld [vmem:[#allocation7 + $0xf40] sm:$0xff]
    %v785 = vld [vmem:[#allocation7 + $0xf48] sm:$0xff]
    %v786 = vld [vmem:[#allocation7 + $0xf50] sm:$0xff]
    %v787 = vld [vmem:[#allocation7 + $0xf58] sm:$0xff]
    %v788 = vld [vmem:[#allocation7 + $0xf60] sm:$0xff]
    %v789 = vld [vmem:[#allocation7 + $0xf68] sm:$0xff]
    %v790 = vld [vmem:[#allocation7 + $0xf70] sm:$0xff]
    %v791 = vld [vmem:[#allocation7 + $0xf78] sm:$0xff]
    %v792 = vld [vmem:[#allocation7 + $0xf80] sm:$0xff]
    %v793 = vld [vmem:[#allocation7 + $0xf88] sm:$0xff]
    %v794 = vld [vmem:[#allocation7 + $0xf90] sm:$0xff]
    %v795 = vld [vmem:[#allocation7 + $0xf98] sm:$0xff]
    %v796 = vld [vmem:[#allocation7 + $0xfa0] sm:$0xff]
    %v797 = vld [vmem:[#allocation7 + $0xfa8] sm:$0xff]
    %v798 = vld [vmem:[#allocation7 + $0xfb0] sm:$0xff]
    %v799 = vld [vmem:[#allocation7 + $0xfb8] sm:$0xff]
    %v800 = vld [vmem:[#allocation7 + $0xfc0] sm:$0xff]
    %v801 = vld [vmem:[#allocation7 + $0xfc8] sm:$0xff]
    %v802 = vld [vmem:[#allocation7 + $0xfd0] sm:$0xff]
    %v803 = vld [vmem:[#allocation7 + $0xfd8] sm:$0xff]
    %v804 = vld [vmem:[#allocation7 + $0xfe0] sm:$0xff]
    %v805 = vld [vmem:[#allocation7 + $0xfe8] sm:$0xff]
    %v806 = vld [vmem:[#allocation7 + $0xff0] sm:$0xff]
    %v807 = vld [vmem:[#allocation7 + $0xff8] sm:$0xff]
    %v808 = vld [vmem:[#allocation7 + $0x1000] sm:$0xff]
    %v809 = vld [vmem:[#allocation7 + $0x1008] sm:$0xff]
    %v810 = vld [vmem:[#allocation7 + $0x1010] sm:$0xff]
    %v811 = vld [vmem:[#allocation7 + $0x1018] sm:$0xff]
    %v812 = vld [vmem:[#allocation7 + $0x1020] sm:$0xff]
    %v813 = vld [vmem:[#allocation7 + $0x1028] sm:$0xff]
    %v814 = vld [vmem:[#allocation7 + $0x1030] sm:$0xff]
    %v815 = vld [vmem:[#allocation7 + $0x1038] sm:$0xff]
    %v816 = vld [vmem:[#allocation7 + $0x1040] sm:$0xff]
    %v817 = vld [vmem:[#allocation7 + $0x1048] sm:$0xff]
    %v818 = vld [vmem:[#allocation7 + $0x1050] sm:$0xff]
    %v819 = vld [vmem:[#allocation7 + $0x1058] sm:$0xff]
    %v820 = vld [vmem:[#allocation7 + $0x1060] sm:$0xff]
    %v821 = vld [vmem:[#allocation7 + $0x1068] sm:$0xff]
    %v822 = vld [vmem:[#allocation7 + $0x1070] sm:$0xff]
    %v823 = vld [vmem:[#allocation7 + $0x1078] sm:$0xff]
    %v824 = vld [vmem:[#allocation7 + $0x1080] sm:$0xff]
    %v825 = vld [vmem:[#allocation7 + $0x1088] sm:$0xff]
    %v826 = vld [vmem:[#allocation7 + $0x1090] sm:$0xff]
    %v827 = vld [vmem:[#allocation7 + $0x1098] sm:$0xff]
    %v828 = vld [vmem:[#allocation7 + $0x10a0] sm:$0xff]
    %v829 = vld [vmem:[#allocation7 + $0x10a8] sm:$0xff]
    %v830 = vld [vmem:[#allocation7 + $0x10b0] sm:$0xff]
    %v831 = vld [vmem:[#allocation7 + $0x10b8] sm:$0xff]
    %v832 = vld [vmem:[#allocation7 + $0x10c0] sm:$0xff]
    %v833 = vld [vmem:[#allocation7 + $0x10c8] sm:$0xff]
    %v834 = vld [vmem:[#allocation7 + $0x10d0] sm:$0xff]
    %v835 = vld [vmem:[#allocation7 + $0x10d8] sm:$0xff]
    %v836 = vld [vmem:[#allocation7 + $0x10e0] sm:$0xff]
    %v837 = vld [vmem:[#allocation7 + $0x10e8] sm:$0xff]
    %v838 = vld [vmem:[#allocation7 + $0x10f0] sm:$0xff]
    %v839 = vld [vmem:[#allocation7 + $0x10f8] sm:$0xff]
    %v840 = vld [vmem:[#allocation7 + $0x1100] sm:$0xff]
    %v841 = vld [vmem:[#allocation7 + $0x1108] sm:$0xff]
    %v842 = vld [vmem:[#allocation7 + $0x1110] sm:$0xff]
    %v843 = vld [vmem:[#allocation7 + $0x1118] sm:$0xff]
    %v844 = vld [vmem:[#allocation7 + $0x1120] sm:$0xff]
    %v845 = vld [vmem:[#allocation7 + $0x1128] sm:$0xff]
    %v846 = vld [vmem:[#allocation7 + $0x1130] sm:$0xff]
    %v847 = vld [vmem:[#allocation7 + $0x1138] sm:$0xff]
    %v848 = vld [vmem:[#allocation7 + $0x1140] sm:$0xff]
    %v849 = vld [vmem:[#allocation7 + $0x1148] sm:$0xff]
    %v850 = vld [vmem:[#allocation7 + $0x1150] sm:$0xff]
    %v851 = vld [vmem:[#allocation7 + $0x1158] sm:$0xff]
    %v852 = vld [vmem:[#allocation7 + $0x1160] sm:$0xff]
    %v853 = vld [vmem:[#allocation7 + $0x1168] sm:$0xff]
    %v854 = vld [vmem:[#allocation7 + $0x1170] sm:$0xff]
    %v855 = vld [vmem:[#allocation7 + $0x1178] sm:$0xff]
    %v856 = vld [vmem:[#allocation7 + $0x1180] sm:$0xff]
    %v857 = vld [vmem:[#allocation7 + $0x1188] sm:$0xff]
    %v858 = vld [vmem:[#allocation7 + $0x1190] sm:$0xff]
    %v859 = vld [vmem:[#allocation7 + $0x1198] sm:$0xff]
    %v860 = vld [vmem:[#allocation7 + $0x11a0] sm:$0xff]
    %v861 = vld [vmem:[#allocation7 + $0x11a8] sm:$0xff]
    %v862 = vld [vmem:[#allocation7 + $0x11b0] sm:$0xff]
    %v863 = vld [vmem:[#allocation7 + $0x11b8] sm:$0xff]
    %v864 = vld [vmem:[#allocation7 + $0x11c0] sm:$0xff]
    %v865 = vld [vmem:[#allocation7 + $0x11c8] sm:$0xff]
    %v866 = vld [vmem:[#allocation7 + $0x11d0] sm:$0xff]
    %v867 = vld [vmem:[#allocation7 + $0x11d8] sm:$0xff]
    %v868 = vld [vmem:[#allocation7 + $0x11e0] sm:$0xff]
    %v869 = vld [vmem:[#allocation7 + $0x11e8] sm:$0xff]
    %v870 = vld [vmem:[#allocation7 + $0x11f0] sm:$0xff]
    %v871 = vld [vmem:[#allocation7 + $0x11f8] sm:$0xff]
    %v872 = vld [vmem:[#allocation7 + $0x1200] sm:$0xff]
    %v873 = vld [vmem:[#allocation7 + $0x1208] sm:$0xff]
    %v874 = vld [vmem:[#allocation7 + $0x1210] sm:$0xff]
    %v875 = vld [vmem:[#allocation7 + $0x1218] sm:$0xff]
    %v876 = vld [vmem:[#allocation7 + $0x1220] sm:$0xff]
    %v877 = vld [vmem:[#allocation7 + $0x1228] sm:$0xff]
    %v878 = vld [vmem:[#allocation7 + $0x1230] sm:$0xff]
    %v879 = vld [vmem:[#allocation7 + $0x1238] sm:$0xff]
    %v880 = vld [vmem:[#allocation7 + $0x1240] sm:$0xff]
    %v881 = vld [vmem:[#allocation7 + $0x1248] sm:$0xff]
    %v882 = vld [vmem:[#allocation7 + $0x1250] sm:$0xff]
    %v883 = vld [vmem:[#allocation7 + $0x1258] sm:$0xff]
    %v884 = vld [vmem:[#allocation7 + $0x1260] sm:$0xff]
    %v885 = vld [vmem:[#allocation7 + $0x1268] sm:$0xff]
    %v886 = vld [vmem:[#allocation7 + $0x1270] sm:$0xff]
    %v887 = vld [vmem:[#allocation7 + $0x1278] sm:$0xff]
    %v888 = vld [vmem:[#allocation7 + $0x1280] sm:$0xff]
    %v889 = vld [vmem:[#allocation7 + $0x1288] sm:$0xff]
    %v890 = vld [vmem:[#allocation7 + $0x1290] sm:$0xff]
    %v891 = vld [vmem:[#allocation7 + $0x1298] sm:$0xff]
    %v892 = vld [vmem:[#allocation7 + $0x12a0] sm:$0xff]
    %v893 = vld [vmem:[#allocation7 + $0x12a8] sm:$0xff]
    %v894 = vld [vmem:[#allocation7 + $0x12b0] sm:$0xff]
    %v895 = vld [vmem:[#allocation7 + $0x12b8] sm:$0xff]
    %v896 = vld [vmem:[#allocation7 + $0x12c0] sm:$0xff]
    %v897 = vld [vmem:[#allocation7 + $0x12c8] sm:$0xff]
    %v898 = vld [vmem:[#allocation7 + $0x12d0] sm:$0xff]
    %v899 = vld [vmem:[#allocation7 + $0x12d8] sm:$0xff]
    %v900 = vld [vmem:[#allocation7 + $0x12e0] sm:$0xff]
    %v901 = vld [vmem:[#allocation7 + $0x12e8] sm:$0xff]
    %v902 = vld [vmem:[#allocation7 + $0x12f0] sm:$0xff]
    %v903 = vld [vmem:[#allocation7 + $0x12f8] sm:$0xff]
    %v904 = vld [vmem:[#allocation7 + $0x1300] sm:$0xff]
    %v905 = vld [vmem:[#allocation7 + $0x1308] sm:$0xff]
    %v906 = vld [vmem:[#allocation7 + $0x1310] sm:$0xff]
    %v907 = vld [vmem:[#allocation7 + $0x1318] sm:$0xff]
    %v908 = vld [vmem:[#allocation7 + $0x1320] sm:$0xff]
    %v909 = vld [vmem:[#allocation7 + $0x1328] sm:$0xff]
    %v910 = vld [vmem:[#allocation7 + $0x1330] sm:$0xff]
    %v911 = vld [vmem:[#allocation7 + $0x1338] sm:$0xff]
    %v912 = vld [vmem:[#allocation7 + $0x1340] sm:$0xff]
    %v913 = vld [vmem:[#allocation7 + $0x1348] sm:$0xff]
    %v914 = vld [vmem:[#allocation7 + $0x1350] sm:$0xff]
    %v915 = vld [vmem:[#allocation7 + $0x1358] sm:$0xff]
    %v916 = vld [vmem:[#allocation7 + $0x1360] sm:$0xff]
    %v917 = vld [vmem:[#allocation7 + $0x1368] sm:$0xff]
    %v918 = vld [vmem:[#allocation7 + $0x1370] sm:$0xff]
    %v919 = vld [vmem:[#allocation7 + $0x1378] sm:$0xff]
    %v920 = vld [vmem:[#allocation7 + $0x1380] sm:$0xff]
    %v921 = vld [vmem:[#allocation7 + $0x1388] sm:$0xff]
    %v922 = vld [vmem:[#allocation7 + $0x1390] sm:$0xff]
    %v923 = vld [vmem:[#allocation7 + $0x1398] sm:$0xff]
    %v924 = vld [vmem:[#allocation7 + $0x13a0] sm:$0xff]
    %v925 = vld [vmem:[#allocation7 + $0x13a8] sm:$0xff]
    %v926 = vld [vmem:[#allocation7 + $0x13b0] sm:$0xff]
    %v927 = vld [vmem:[#allocation7 + $0x13b8] sm:$0xff]
    %v928 = vld [vmem:[#allocation7 + $0x13c0] sm:$0xff]
    %v929 = vld [vmem:[#allocation7 + $0x13c8] sm:$0xff]
    %v930 = vld [vmem:[#allocation7 + $0x13d0] sm:$0xff]
    %v931 = vld [vmem:[#allocation7 + $0x13d8] sm:$0xff]
    %v932 = vld [vmem:[#allocation7 + $0x13e0] sm:$0xff]
    %v933 = vld [vmem:[#allocation7 + $0x13e8] sm:$0xff]
    %v934 = vld [vmem:[#allocation7 + $0x13f0] sm:$0xff]
    %v935 = vld [vmem:[#allocation7 + $0x13f8] sm:$0xff]
    %v936 = vld [vmem:[#allocation7 + $0x1400] sm:$0xff]
    %v937 = vld [vmem:[#allocation7 + $0x1408] sm:$0xff]
    %v938 = vld [vmem:[#allocation7 + $0x1410] sm:$0xff]
    %v939 = vld [vmem:[#allocation7 + $0x1418] sm:$0xff]
    %v940 = vld [vmem:[#allocation7 + $0x1420] sm:$0xff]
    %v941 = vld [vmem:[#allocation7 + $0x1428] sm:$0xff]
    %v942 = vld [vmem:[#allocation7 + $0x1430] sm:$0xff]
    %v943 = vld [vmem:[#allocation7 + $0x1438] sm:$0xff]
    %v944 = vld [vmem:[#allocation7 + $0x1440] sm:$0xff]
    %v945 = vld [vmem:[#allocation7 + $0x1448] sm:$0xff]
    %v946 = vld [vmem:[#allocation7 + $0x1450] sm:$0xff]
    %v947 = vld [vmem:[#allocation7 + $0x1458] sm:$0xff]
    %v948 = vld [vmem:[#allocation7 + $0x1460] sm:$0xff]
    %v949 = vld [vmem:[#allocation7 + $0x1468] sm:$0xff]
    %v950 = vld [vmem:[#allocation7 + $0x1470] sm:$0xff]
    %v951 = vld [vmem:[#allocation7 + $0x1478] sm:$0xff]
    %v952 = vld [vmem:[#allocation7 + $0x1480] sm:$0xff]
    %v953 = vld [vmem:[#allocation7 + $0x1488] sm:$0xff]
    %v954 = vld [vmem:[#allocation7 + $0x1490] sm:$0xff]
    %v955 = vld [vmem:[#allocation7 + $0x1498] sm:$0xff]
    %v956 = vld [vmem:[#allocation7 + $0x14a0] sm:$0xff]
    %v957 = vld [vmem:[#allocation7 + $0x14a8] sm:$0xff]
    %v958 = vld [vmem:[#allocation7 + $0x14b0] sm:$0xff]
    %v959 = vld [vmem:[#allocation7 + $0x14b8] sm:$0xff]
    %v960 = vld [vmem:[#allocation7 + $0x14c0] sm:$0xff]
    %v961 = vld [vmem:[#allocation7 + $0x14c8] sm:$0xff]
    %v962 = vld [vmem:[#allocation7 + $0x14d0] sm:$0xff]
    %v963 = vld [vmem:[#allocation7 + $0x14d8] sm:$0xff]
    %v964 = vld [vmem:[#allocation7 + $0x14e0] sm:$0xff]
    %v965 = vld [vmem:[#allocation7 + $0x14e8] sm:$0xff]
    %v966 = vld [vmem:[#allocation7 + $0x14f0] sm:$0xff]
    %v967 = vld [vmem:[#allocation7 + $0x14f8] sm:$0xff]
    %v968 = vld [vmem:[#allocation7 + $0x1500] sm:$0xff]
    %v969 = vld [vmem:[#allocation7 + $0x1508] sm:$0xff]
    %v970 = vld [vmem:[#allocation7 + $0x1510] sm:$0xff]
    %v971 = vld [vmem:[#allocation7 + $0x1518] sm:$0xff]
    %v972 = vld [vmem:[#allocation7 + $0x1520] sm:$0xff]
    %v973 = vld [vmem:[#allocation7 + $0x1528] sm:$0xff]
    %v974 = vld [vmem:[#allocation7 + $0x1530] sm:$0xff]
    %v975 = vld [vmem:[#allocation7 + $0x1538] sm:$0xff]
    %v976 = vld [vmem:[#allocation7 + $0x1540] sm:$0xff]
    %v977 = vld [vmem:[#allocation7 + $0x1548] sm:$0xff]
    %v978 = vld [vmem:[#allocation7 + $0x1550] sm:$0xff]
    %v979 = vld [vmem:[#allocation7 + $0x1558] sm:$0xff]
    %v980 = vld [vmem:[#allocation7 + $0x1560] sm:$0xff]
    %v981 = vld [vmem:[#allocation7 + $0x1568] sm:$0xff]
    %v982 = vld [vmem:[#allocation7 + $0x1570] sm:$0xff]
    %v983 = vld [vmem:[#allocation7 + $0x1578] sm:$0xff]
    %v984 = vld [vmem:[#allocation7 + $0x1580] sm:$0xff]
    %v985 = vld [vmem:[#allocation7 + $0x1588] sm:$0xff]
    %v986 = vld [vmem:[#allocation7 + $0x1590] sm:$0xff]
    %v987 = vld [vmem:[#allocation7 + $0x1598] sm:$0xff]
    %v988 = vld [vmem:[#allocation7 + $0x15a0] sm:$0xff]
    %v989 = vld [vmem:[#allocation7 + $0x15a8] sm:$0xff]
    %v990 = vld [vmem:[#allocation7 + $0x15b0] sm:$0xff]
    %v991 = vld [vmem:[#allocation7 + $0x15b8] sm:$0xff]
    %v992 = vld [vmem:[#allocation7 + $0x15c0] sm:$0xff]
    %v993 = vld [vmem:[#allocation7 + $0x15c8] sm:$0xff]
    %v994 = vld [vmem:[#allocation7 + $0x15d0] sm:$0xff]
    %v995 = vld [vmem:[#allocation7 + $0x15d8] sm:$0xff]
    %v996 = vld [vmem:[#allocation7 + $0x15e0] sm:$0xff]
    %v997 = vld [vmem:[#allocation7 + $0x15e8] sm:$0xff]
    %v998 = vld [vmem:[#allocation7 + $0x15f0] sm:$0xff]
    %v999 = vld [vmem:[#allocation7 + $0x15f8] sm:$0xff]
    %v1000 = vld [vmem:[#allocation7 + $0x1600] sm:$0xff]
    %v1001 = vld [vmem:[#allocation7 + $0x1608] sm:$0xff]
    %v1002 = vld [vmem:[#allocation7 + $0x1610] sm:$0xff]
    %v1003 = vld [vmem:[#allocation7 + $0x1618] sm:$0xff]
    %v1004 = vld [vmem:[#allocation7 + $0x1620] sm:$0xff]
    %v1005 = vld [vmem:[#allocation7 + $0x1628] sm:$0xff]
    %v1006 = vld [vmem:[#allocation7 + $0x1630] sm:$0xff]
    %v1007 = vld [vmem:[#allocation7 + $0x1638] sm:$0xff]
    %v1008 = vld [vmem:[#allocation7 + $0x1640] sm:$0xff]
    %v1009 = vld [vmem:[#allocation7 + $0x1648] sm:$0xff]
    %v1010 = vld [vmem:[#allocation7 + $0x1650] sm:$0xff]
    %v1011 = vld [vmem:[#allocation7 + $0x1658] sm:$0xff]
    %v1012 = vld [vmem:[#allocation7 + $0x1660] sm:$0xff]
    %v1013 = vld [vmem:[#allocation7 + $0x1668] sm:$0xff]
    %v1014 = vld [vmem:[#allocation7 + $0x1670] sm:$0xff]
    %v1015 = vld [vmem:[#allocation7 + $0x1678] sm:$0xff]
    %v1016 = vld [vmem:[#allocation7 + $0x1680] sm:$0xff]
    %v1017 = vld [vmem:[#allocation7 + $0x1688] sm:$0xff]
    %v1018 = vld [vmem:[#allocation7 + $0x1690] sm:$0xff]
    %v1019 = vld [vmem:[#allocation7 + $0x1698] sm:$0xff]
    %v1020 = vld [vmem:[#allocation7 + $0x16a0] sm:$0xff]
    %v1021 = vld [vmem:[#allocation7 + $0x16a8] sm:$0xff]
    %v1022 = vld [vmem:[#allocation7 + $0x16b0] sm:$0xff]
    %v1023 = vld [vmem:[#allocation7 + $0x16b8] sm:$0xff]
    %v1024 = vld [vmem:[#allocation7 + $0x16c0] sm:$0xff]
    %v1025 = vld [vmem:[#allocation7 + $0x16c8] sm:$0xff]
    %v1026 = vld [vmem:[#allocation7 + $0x16d0] sm:$0xff]
    %v1027 = vld [vmem:[#allocation7 + $0x16d8] sm:$0xff]
    %v1028 = vld [vmem:[#allocation7 + $0x16e0] sm:$0xff]
    %v1029 = vld [vmem:[#allocation7 + $0x16e8] sm:$0xff]
    %v1030 = vld [vmem:[#allocation7 + $0x16f0] sm:$0xff]
    %v1031 = vld [vmem:[#allocation7 + $0x16f8] sm:$0xff]
    %v1032 = vld [vmem:[#allocation7 + $0x1700] sm:$0xff]
    %v1033 = vld [vmem:[#allocation7 + $0x1708] sm:$0xff]
    %v1034 = vld [vmem:[#allocation7 + $0x1710] sm:$0xff]
    %v1035 = vld [vmem:[#allocation7 + $0x1718] sm:$0xff]
    %v1036 = vld [vmem:[#allocation7 + $0x1720] sm:$0xff]
    %v1037 = vld [vmem:[#allocation7 + $0x1728] sm:$0xff]
    %v1038 = vld [vmem:[#allocation7 + $0x1730] sm:$0xff]
    %v1039 = vld [vmem:[#allocation7 + $0x1738] sm:$0xff]
    %v1040 = vld [vmem:[#allocation7 + $0x1740] sm:$0xff]
    %v1041 = vld [vmem:[#allocation7 + $0x1748] sm:$0xff]
    %v1042 = vld [vmem:[#allocation7 + $0x1750] sm:$0xff]
    %v1043 = vld [vmem:[#allocation7 + $0x1758] sm:$0xff]
    %v1044 = vld [vmem:[#allocation7 + $0x1760] sm:$0xff]
    %v1045 = vld [vmem:[#allocation7 + $0x1768] sm:$0xff]
    %v1046 = vld [vmem:[#allocation7 + $0x1770] sm:$0xff]
    %v1047 = vld [vmem:[#allocation7 + $0x1778] sm:$0xff]
    %v1048 = vld [vmem:[#allocation7 + $0x1780] sm:$0xff]
    %v1049 = vld [vmem:[#allocation7 + $0x1788] sm:$0xff]
    %v1050 = vld [vmem:[#allocation7 + $0x1790] sm:$0xff]
    %v1051 = vld [vmem:[#allocation7 + $0x1798] sm:$0xff]
    %v1052 = vld [vmem:[#allocation7 + $0x17a0] sm:$0xff]
    %v1053 = vld [vmem:[#allocation7 + $0x17a8] sm:$0xff]
    %v1054 = vld [vmem:[#allocation7 + $0x17b0] sm:$0xff]
    %v1055 = vld [vmem:[#allocation7 + $0x17b8] sm:$0xff]
    %v1056 = vld [vmem:[#allocation7 + $0x17c0] sm:$0xff]
    %v1057 = vld [vmem:[#allocation7 + $0x17c8] sm:$0xff]
    %v1058 = vld [vmem:[#allocation7 + $0x17d0] sm:$0xff]
    %v1059 = vld [vmem:[#allocation7 + $0x17d8] sm:$0xff]
    %v1060 = vld [vmem:[#allocation7 + $0x17e0] sm:$0xff]
    %v1061 = vld [vmem:[#allocation7 + $0x17e8] sm:$0xff]
    %v1062 = vld [vmem:[#allocation7 + $0x17f0] sm:$0xff]
    %v1063 = vld [vmem:[#allocation7 + $0x17f8] sm:$0xff]
    %v1064 = vld [vmem:[#allocation7 + $0x1800] sm:$0xff]
    %v1065 = vld [vmem:[#allocation7 + $0x1808] sm:$0xff]
    %v1066 = vld [vmem:[#allocation7 + $0x1810] sm:$0xff]
    %v1067 = vld [vmem:[#allocation7 + $0x1818] sm:$0xff]
    %v1068 = vld [vmem:[#allocation7 + $0x1820] sm:$0xff]
    %v1069 = vld [vmem:[#allocation7 + $0x1828] sm:$0xff]
    %v1070 = vld [vmem:[#allocation7 + $0x1830] sm:$0xff]
    %v1071 = vld [vmem:[#allocation7 + $0x1838] sm:$0xff]
    %v1072 = vld [vmem:[#allocation7 + $0x1840] sm:$0xff]
    %v1073 = vld [vmem:[#allocation7 + $0x1848] sm:$0xff]
    %v1074 = vld [vmem:[#allocation7 + $0x1850] sm:$0xff]
    %v1075 = vld [vmem:[#allocation7 + $0x1858] sm:$0xff]
    %v1076 = vld [vmem:[#allocation7 + $0x1860] sm:$0xff]
    %v1077 = vld [vmem:[#allocation7 + $0x1868] sm:$0xff]
    %v1078 = vld [vmem:[#allocation7 + $0x1870] sm:$0xff]
    %v1079 = vld [vmem:[#allocation7 + $0x1878] sm:$0xff]
    %v1080 = vld [vmem:[#allocation7 + $0x1880] sm:$0xff]
    %v1081 = vld [vmem:[#allocation7 + $0x1888] sm:$0xff]
    %v1082 = vld [vmem:[#allocation7 + $0x1890] sm:$0xff]
    %v1083 = vld [vmem:[#allocation7 + $0x1898] sm:$0xff]
    %v1084 = vld [vmem:[#allocation7 + $0x18a0] sm:$0xff]
    %v1085 = vld [vmem:[#allocation7 + $0x18a8] sm:$0xff]
    %v1086 = vld [vmem:[#allocation7 + $0x18b0] sm:$0xff]
    %v1087 = vld [vmem:[#allocation7 + $0x18b8] sm:$0xff]
    %v1088 = vld [vmem:[#allocation7 + $0x18c0] sm:$0xff]
    %v1089 = vld [vmem:[#allocation7 + $0x18c8] sm:$0xff]
    %v1090 = vld [vmem:[#allocation7 + $0x18d0] sm:$0xff]
    %v1091 = vld [vmem:[#allocation7 + $0x18d8] sm:$0xff]
    %v1092 = vld [vmem:[#allocation7 + $0x18e0] sm:$0xff]
    %v1093 = vld [vmem:[#allocation7 + $0x18e8] sm:$0xff]
    %v1094 = vld [vmem:[#allocation7 + $0x18f0] sm:$0xff]
    %v1095 = vld [vmem:[#allocation7 + $0x18f8] sm:$0xff]
    %v1096 = vld [vmem:[#allocation7 + $0x1900] sm:$0xff]
    %v1097 = vld [vmem:[#allocation7 + $0x1908] sm:$0xff]
    %v1098 = vld [vmem:[#allocation7 + $0x1910] sm:$0xff]
    %v1099 = vld [vmem:[#allocation7 + $0x1918] sm:$0xff]
    %v1100 = vld [vmem:[#allocation7 + $0x1920] sm:$0xff]
    %v1101 = vld [vmem:[#allocation7 + $0x1928] sm:$0xff]
    %v1102 = vld [vmem:[#allocation7 + $0x1930] sm:$0xff]
    %v1103 = vld [vmem:[#allocation7 + $0x1938] sm:$0xff]
    %v1104 = vld [vmem:[#allocation7 + $0x1940] sm:$0xff]
    %v1105 = vld [vmem:[#allocation7 + $0x1948] sm:$0xff]
    %v1106 = vld [vmem:[#allocation7 + $0x1950] sm:$0xff]
    %v1107 = vld [vmem:[#allocation7 + $0x1958] sm:$0xff]
    %v1108 = vld [vmem:[#allocation7 + $0x1960] sm:$0xff]
    %v1109 = vld [vmem:[#allocation7 + $0x1968] sm:$0xff]
    %v1110 = vld [vmem:[#allocation7 + $0x1970] sm:$0xff]
    %v1111 = vld [vmem:[#allocation7 + $0x1978] sm:$0xff]
    %v1112 = vld [vmem:[#allocation7 + $0x1980] sm:$0xff]
    %v1113 = vld [vmem:[#allocation7 + $0x1988] sm:$0xff]
    %v1114 = vld [vmem:[#allocation7 + $0x1990] sm:$0xff]
    %v1115 = vld [vmem:[#allocation7 + $0x1998] sm:$0xff]
    %v1116 = vld [vmem:[#allocation7 + $0x19a0] sm:$0xff]
    %v1117 = vld [vmem:[#allocation7 + $0x19a8] sm:$0xff]
    %v1118 = vld [vmem:[#allocation7 + $0x19b0] sm:$0xff]
    %v1119 = vld [vmem:[#allocation7 + $0x19b8] sm:$0xff]
    %v1120 = vld [vmem:[#allocation7 + $0x19c0] sm:$0xff]
    %v1121 = vld [vmem:[#allocation7 + $0x19c8] sm:$0xff]
    %v1122 = vld [vmem:[#allocation7 + $0x19d0] sm:$0xff]
    %v1123 = vld [vmem:[#allocation7 + $0x19d8] sm:$0xff]
    %v1124 = vld [vmem:[#allocation7 + $0x19e0] sm:$0xff]
    %v1125 = vld [vmem:[#allocation7 + $0x19e8] sm:$0xff]
    %v1126 = vld [vmem:[#allocation7 + $0x19f0] sm:$0xff]
    %v1127 = vld [vmem:[#allocation7 + $0x19f8] sm:$0xff]
    %v1128 = vld [vmem:[#allocation7 + $0x1a00] sm:$0xff]
    %v1129 = vld [vmem:[#allocation7 + $0x1a08] sm:$0xff]
    %v1130 = vld [vmem:[#allocation7 + $0x1a10] sm:$0xff]
    %v1131 = vld [vmem:[#allocation7 + $0x1a18] sm:$0xff]
    %v1132 = vld [vmem:[#allocation7 + $0x1a20] sm:$0xff]
    %v1133 = vld [vmem:[#allocation7 + $0x1a28] sm:$0xff]
    %v1134 = vld [vmem:[#allocation7 + $0x1a30] sm:$0xff]
    %v1135 = vld [vmem:[#allocation7 + $0x1a38] sm:$0xff]
    %v1136 = vld [vmem:[#allocation7 + $0x1a40] sm:$0xff]
    %v1137 = vld [vmem:[#allocation7 + $0x1a48] sm:$0xff]
    %v1138 = vld [vmem:[#allocation7 + $0x1a50] sm:$0xff]
    %v1139 = vld [vmem:[#allocation7 + $0x1a58] sm:$0xff]
    %v1140 = vld [vmem:[#allocation7 + $0x1a60] sm:$0xff]
    %v1141 = vld [vmem:[#allocation7 + $0x1a68] sm:$0xff]
    %v1142 = vld [vmem:[#allocation7 + $0x1a70] sm:$0xff]
    %v1143 = vld [vmem:[#allocation7 + $0x1a78] sm:$0xff]
    %v1144 = vld [vmem:[#allocation7 + $0x1a80] sm:$0xff]
    %v1145 = vld [vmem:[#allocation7 + $0x1a88] sm:$0xff]
    %v1146 = vld [vmem:[#allocation7 + $0x1a90] sm:$0xff]
    %v1147 = vld [vmem:[#allocation7 + $0x1a98] sm:$0xff]
    %v1148 = vld [vmem:[#allocation7 + $0x1aa0] sm:$0xff]
    %v1149 = vld [vmem:[#allocation7 + $0x1aa8] sm:$0xff]
    %v1150 = vld [vmem:[#allocation7 + $0x1ab0] sm:$0xff]
    %v1151 = vld [vmem:[#allocation7 + $0x1ab8] sm:$0xff]
    %v1152 = vld [vmem:[#allocation7 + $0x1ac0] sm:$0xff]
    %v1153 = vld [vmem:[#allocation7 + $0x1ac8] sm:$0xff]
    %v1154 = vld [vmem:[#allocation7 + $0x1ad0] sm:$0xff]
    %v1155 = vld [vmem:[#allocation7 + $0x1ad8] sm:$0xff]
    %v1156 = vld [vmem:[#allocation7 + $0x1ae0] sm:$0xff]
    %v1157 = vld [vmem:[#allocation7 + $0x1ae8] sm:$0xff]
    %v1158 = vld [vmem:[#allocation7 + $0x1af0] sm:$0xff]
    %v1159 = vld [vmem:[#allocation7 + $0x1af8] sm:$0xff]
    %v1160 = vld [vmem:[#allocation7 + $0x1b00] sm:$0xff]
    %v1161 = vld [vmem:[#allocation7 + $0x1b08] sm:$0xff]
    %v1162 = vld [vmem:[#allocation7 + $0x1b10] sm:$0xff]
    %v1163 = vld [vmem:[#allocation7 + $0x1b18] sm:$0xff]
    %v1164 = vld [vmem:[#allocation7 + $0x1b20] sm:$0xff]
    %v1165 = vld [vmem:[#allocation7 + $0x1b28] sm:$0xff]
    %v1166 = vld [vmem:[#allocation7 + $0x1b30] sm:$0xff]
    %v1167 = vld [vmem:[#allocation7 + $0x1b38] sm:$0xff]
    %v1168 = vld [vmem:[#allocation7 + $0x1b40] sm:$0xff]
    %v1169 = vld [vmem:[#allocation7 + $0x1b48] sm:$0xff]
    %v1170 = vld [vmem:[#allocation7 + $0x1b50] sm:$0xff]
    %v1171 = vld [vmem:[#allocation7 + $0x1b58] sm:$0xff]
    %v1172 = vld [vmem:[#allocation7 + $0x1b60] sm:$0xff]
    %v1173 = vld [vmem:[#allocation7 + $0x1b68] sm:$0xff]
    %v1174 = vld [vmem:[#allocation7 + $0x1b70] sm:$0xff]
    %v1175 = vld [vmem:[#allocation7 + $0x1b78] sm:$0xff]
    %v1176 = vld [vmem:[#allocation7 + $0x1b80] sm:$0xff]
    %v1177 = vld [vmem:[#allocation7 + $0x1b88] sm:$0xff]
    %v1178 = vld [vmem:[#allocation7 + $0x1b90] sm:$0xff]
    %v1179 = vld [vmem:[#allocation7 + $0x1b98] sm:$0xff]
    %v1180 = vld [vmem:[#allocation7 + $0x1ba0] sm:$0xff]
    %v1181 = vld [vmem:[#allocation7 + $0x1ba8] sm:$0xff]
    %v1182 = vld [vmem:[#allocation7 + $0x1bb0] sm:$0xff]
    %v1183 = vld [vmem:[#allocation7 + $0x1bb8] sm:$0xff]
    %v1184 = vld [vmem:[#allocation7 + $0x1bc0] sm:$0xff]
    %v1185 = vld [vmem:[#allocation7 + $0x1bc8] sm:$0xff]
    %v1186 = vld [vmem:[#allocation7 + $0x1bd0] sm:$0xff]
    %v1187 = vld [vmem:[#allocation7 + $0x1bd8] sm:$0xff]
    %v1188 = vld [vmem:[#allocation7 + $0x1be0] sm:$0xff]
    %v1189 = vld [vmem:[#allocation7 + $0x1be8] sm:$0xff]
    %v1190 = vld [vmem:[#allocation7 + $0x1bf0] sm:$0xff]
    %v1191 = vld [vmem:[#allocation7 + $0x1bf8] sm:$0xff]
    %v1192 = vld [vmem:[#allocation7 + $0x1c00] sm:$0xff]
    %v1193 = vld [vmem:[#allocation7 + $0x1c08] sm:$0xff]
    %v1194 = vld [vmem:[#allocation7 + $0x1c10] sm:$0xff]
    %v1195 = vld [vmem:[#allocation7 + $0x1c18] sm:$0xff]
    %v1196 = vld [vmem:[#allocation7 + $0x1c20] sm:$0xff]
    %v1197 = vld [vmem:[#allocation7 + $0x1c28] sm:$0xff]
    %v1198 = vld [vmem:[#allocation7 + $0x1c30] sm:$0xff]
    %v1199 = vld [vmem:[#allocation7 + $0x1c38] sm:$0xff]
    %v1200 = vld [vmem:[#allocation7 + $0x1c40] sm:$0xff]
    %v1201 = vld [vmem:[#allocation7 + $0x1c48] sm:$0xff]
    %v1202 = vld [vmem:[#allocation7 + $0x1c50] sm:$0xff]
    %v1203 = vld [vmem:[#allocation7 + $0x1c58] sm:$0xff]
    %v1204 = vld [vmem:[#allocation7 + $0x1c60] sm:$0xff]
    %v1205 = vld [vmem:[#allocation7 + $0x1c68] sm:$0xff]
    %v1206 = vld [vmem:[#allocation7 + $0x1c70] sm:$0xff]
    %v1207 = vld [vmem:[#allocation7 + $0x1c78] sm:$0xff]
    %v1208 = vld [vmem:[#allocation7 + $0x1c80] sm:$0xff]
    %v1209 = vld [vmem:[#allocation7 + $0x1c88] sm:$0xff]
    %v1210 = vld [vmem:[#allocation7 + $0x1c90] sm:$0xff]
    %v1211 = vld [vmem:[#allocation7 + $0x1c98] sm:$0xff]
    %v1212 = vld [vmem:[#allocation7 + $0x1ca0] sm:$0xff]
    %v1213 = vld [vmem:[#allocation7 + $0x1ca8] sm:$0xff]
    %v1214 = vld [vmem:[#allocation7 + $0x1cb0] sm:$0xff]
    %v1215 = vld [vmem:[#allocation7 + $0x1cb8] sm:$0xff]
    %v1216 = vld [vmem:[#allocation7 + $0x1cc0] sm:$0xff]
    %v1217 = vld [vmem:[#allocation7 + $0x1cc8] sm:$0xff]
    %v1218 = vld [vmem:[#allocation7 + $0x1cd0] sm:$0xff]
    %v1219 = vld [vmem:[#allocation7 + $0x1cd8] sm:$0xff]
    %v1220 = vld [vmem:[#allocation7 + $0x1ce0] sm:$0xff]
    %v1221 = vld [vmem:[#allocation7 + $0x1ce8] sm:$0xff]
    %v1222 = vld [vmem:[#allocation7 + $0x1cf0] sm:$0xff]
    %v1223 = vld [vmem:[#allocation7 + $0x1cf8] sm:$0xff]
    %v1224 = vld [vmem:[#allocation7 + $0x1d00] sm:$0xff]
    %v1225 = vld [vmem:[#allocation7 + $0x1d08] sm:$0xff]
    %v1226 = vld [vmem:[#allocation7 + $0x1d10] sm:$0xff]
    %v1227 = vld [vmem:[#allocation7 + $0x1d18] sm:$0xff]
    %v1228 = vld [vmem:[#allocation7 + $0x1d20] sm:$0xff]
    %v1229 = vld [vmem:[#allocation7 + $0x1d28] sm:$0xff]
    %v1230 = vld [vmem:[#allocation7 + $0x1d30] sm:$0xff]
    %v1231 = vld [vmem:[#allocation7 + $0x1d38] sm:$0xff]
    %v1232 = vld [vmem:[#allocation7 + $0x1d40] sm:$0xff]
    %v1233 = vld [vmem:[#allocation7 + $0x1d48] sm:$0xff]
    %v1234 = vld [vmem:[#allocation7 + $0x1d50] sm:$0xff]
    %v1235 = vld [vmem:[#allocation7 + $0x1d58] sm:$0xff]
    %v1236 = vld [vmem:[#allocation7 + $0x1d60] sm:$0xff]
    %v1237 = vld [vmem:[#allocation7 + $0x1d68] sm:$0xff]
    %v1238 = vld [vmem:[#allocation7 + $0x1d70] sm:$0xff]
    %v1239 = vld [vmem:[#allocation7 + $0x1d78] sm:$0xff]
    %v1240 = vld [vmem:[#allocation7 + $0x1d80] sm:$0xff]
    %v1241 = vld [vmem:[#allocation7 + $0x1d88] sm:$0xff]
    %v1242 = vld [vmem:[#allocation7 + $0x1d90] sm:$0xff]
    %v1243 = vld [vmem:[#allocation7 + $0x1d98] sm:$0xff]
    %v1244 = vld [vmem:[#allocation7 + $0x1da0] sm:$0xff]
    %v1245 = vld [vmem:[#allocation7 + $0x1da8] sm:$0xff]
    %v1246 = vld [vmem:[#allocation7 + $0x1db0] sm:$0xff]
    %v1247 = vld [vmem:[#allocation7 + $0x1db8] sm:$0xff]
    %v1248 = vld [vmem:[#allocation7 + $0x1dc0] sm:$0xff]
    %v1249 = vld [vmem:[#allocation7 + $0x1dc8] sm:$0xff]
    %v1250 = vld [vmem:[#allocation7 + $0x1dd0] sm:$0xff]
    %v1251 = vld [vmem:[#allocation7 + $0x1dd8] sm:$0xff]
    %v1252 = vld [vmem:[#allocation7 + $0x1de0] sm:$0xff]
    %v1253 = vld [vmem:[#allocation7 + $0x1de8] sm:$0xff]
    %v1254 = vld [vmem:[#allocation7 + $0x1df0] sm:$0xff]
    %v1255 = vld [vmem:[#allocation7 + $0x1df8] sm:$0xff]
    %v1256 = vld [vmem:[#allocation7 + $0x1e00] sm:$0xff]
    %v1257 = vld [vmem:[#allocation7 + $0x1e08] sm:$0xff]
    %v1258 = vld [vmem:[#allocation7 + $0x1e10] sm:$0xff]
    %v1259 = vld [vmem:[#allocation7 + $0x1e18] sm:$0xff]
    %v1260 = vld [vmem:[#allocation7 + $0x1e20] sm:$0xff]
    %v1261 = vld [vmem:[#allocation7 + $0x1e28] sm:$0xff]
    %v1262 = vld [vmem:[#allocation7 + $0x1e30] sm:$0xff]
    %v1263 = vld [vmem:[#allocation7 + $0x1e38] sm:$0xff]
    %v1264 = vld [vmem:[#allocation7 + $0x1e40] sm:$0xff]
    %v1265 = vld [vmem:[#allocation7 + $0x1e48] sm:$0xff]
    %v1266 = vld [vmem:[#allocation7 + $0x1e50] sm:$0xff]
    %v1267 = vld [vmem:[#allocation7 + $0x1e58] sm:$0xff]
    %v1268 = vld [vmem:[#allocation7 + $0x1e60] sm:$0xff]
    %v1269 = vld [vmem:[#allocation7 + $0x1e68] sm:$0xff]
    %v1270 = vld [vmem:[#allocation7 + $0x1e70] sm:$0xff]
    %v1271 = vld [vmem:[#allocation7 + $0x1e78] sm:$0xff]
    %v1272 = vld [vmem:[#allocation7 + $0x1e80] sm:$0xff]
    %v1273 = vld [vmem:[#allocation7 + $0x1e88] sm:$0xff]
    %v1274 = vld [vmem:[#allocation7 + $0x1e90] sm:$0xff]
    %v1275 = vld [vmem:[#allocation7 + $0x1e98] sm:$0xff]
    %v1276 = vld [vmem:[#allocation7 + $0x1ea0] sm:$0xff]
    %v1277 = vld [vmem:[#allocation7 + $0x1ea8] sm:$0xff]
    %v1278 = vld [vmem:[#allocation7 + $0x1eb0] sm:$0xff]
    %v1279 = vld [vmem:[#allocation7 + $0x1eb8] sm:$0xff]
    %v1280 = vld [vmem:[#allocation7 + $0x1ec0] sm:$0xff]
    %v1281 = vld [vmem:[#allocation7 + $0x1ec8] sm:$0xff]
    %v1282 = vld [vmem:[#allocation7 + $0x1ed0] sm:$0xff]
    %v1283 = vld [vmem:[#allocation7 + $0x1ed8] sm:$0xff]
    %v1284 = vld [vmem:[#allocation7 + $0x1ee0] sm:$0xff]
    %v1285 = vld [vmem:[#allocation7 + $0x1ee8] sm:$0xff]
    %v1286 = vld [vmem:[#allocation7 + $0x1ef0] sm:$0xff]
    %v1287 = vld [vmem:[#allocation7 + $0x1ef8] sm:$0xff]
    %v1288 = vld [vmem:[#allocation7 + $0x1f00] sm:$0xff]
    %v1289 = vld [vmem:[#allocation7 + $0x1f08] sm:$0xff]
    %v1290 = vld [vmem:[#allocation7 + $0x1f10] sm:$0xff]
    %v1291 = vld [vmem:[#allocation7 + $0x1f18] sm:$0xff]
    %v1292 = vld [vmem:[#allocation7 + $0x1f20] sm:$0xff]
    %v1293 = vld [vmem:[#allocation7 + $0x1f28] sm:$0xff]
    %v1294 = vld [vmem:[#allocation7 + $0x1f30] sm:$0xff]
    %v1295 = vld [vmem:[#allocation7 + $0x1f38] sm:$0xff]
    %v1296 = vld [vmem:[#allocation7 + $0x1f40] sm:$0xff]
    %v1297 = vld [vmem:[#allocation7 + $0x1f48] sm:$0xff]
    %v1298 = vld [vmem:[#allocation7 + $0x1f50] sm:$0xff]
    %v1299 = vld [vmem:[#allocation7 + $0x1f58] sm:$0xff]
    %v1300 = vld [vmem:[#allocation7 + $0x1f60] sm:$0xff]
    %v1301 = vld [vmem:[#allocation7 + $0x1f68] sm:$0xff]
    %v1302 = vld [vmem:[#allocation7 + $0x1f70] sm:$0xff]
    %v1303 = vld [vmem:[#allocation7 + $0x1f78] sm:$0xff]
    %v1304 = vld [vmem:[#allocation7 + $0x1f80] sm:$0xff]
    %v1305 = vld [vmem:[#allocation7 + $0x1f88] sm:$0xff]
    %v1306 = vld [vmem:[#allocation7 + $0x1f90] sm:$0xff]
    %v1307 = vld [vmem:[#allocation7 + $0x1f98] sm:$0xff]
    %v1308 = vld [vmem:[#allocation7 + $0x1fa0] sm:$0xff]
    %v1309 = vld [vmem:[#allocation7 + $0x1fa8] sm:$0xff]
    %v1310 = vld [vmem:[#allocation7 + $0x1fb0] sm:$0xff]
    %v1311 = vld [vmem:[#allocation7 + $0x1fb8] sm:$0xff]
    %v1312 = vld [vmem:[#allocation7 + $0x1fc0] sm:$0xff]
    %v1313 = vld [vmem:[#allocation7 + $0x1fc8] sm:$0xff]
    %v1314 = vld [vmem:[#allocation7 + $0x1fd0] sm:$0xff]
    %v1315 = vld [vmem:[#allocation7 + $0x1fd8] sm:$0xff]
    %v1316 = vld [vmem:[#allocation7 + $0x1fe0] sm:$0xff]
    %v1317 = vld [vmem:[#allocation7 + $0x1fe8] sm:$0xff]
    %v1318 = vld [vmem:[#allocation7 + $0x1ff0] sm:$0xff]
    %v1319 = vld [vmem:[#allocation7 + $0x1ff8] sm:$0xff]
    %v1320 = vld [vmem:[#allocation9] sm:$0xff]
    %v1322 = vlaneseq
    %v1323 = vshrl.u32 %v1322, 7
    %v1324 = vsub.s32 0, %v1323
    %v1325 = vrot.slane %v1320, %v1324
    %v1326 = vlaneseq
    %v1327 = vshrl.u32 %v1326, 7
    %v1328 = vsub.s32 1, %v1327
    %v1329 = vrot.slane %v1320, %v1328
    %v1330 = vlaneseq
    %v1331 = vshrl.u32 %v1330, 7
    %v1332 = vsub.s32 2, %v1331
    %v1333 = vrot.slane %v1320, %v1332
    %v1334 = vlaneseq
    %v1335 = vshrl.u32 %v1334, 7
    %v1336 = vsub.s32 3, %v1335
    %v1337 = vrot.slane %v1320, %v1336
    %v1338 = vlaneseq
    %v1339 = vshrl.u32 %v1338, 7
    %v1340 = vsub.s32 4, %v1339
    %v1341 = vrot.slane %v1320, %v1340
    %v1342 = vlaneseq
    %v1343 = vshrl.u32 %v1342, 7
    %v1344 = vsub.s32 5, %v1343
    %v1345 = vrot.slane %v1320, %v1344
    %v1346 = vlaneseq
    %v1347 = vshrl.u32 %v1346, 7
    %v1348 = vsub.s32 6, %v1347
    %v1349 = vrot.slane %v1320, %v1348
    %v1350 = vlaneseq
    %v1351 = vshrl.u32 %v1350, 7
    %v1352 = vsub.s32 7, %v1351
    %v1353 = vrot.slane %v1320, %v1352
    %v2386 = vunpack.c.l.b16 %v296
    %v2387 = vunpack.c.h.b16 %v296
    %v2388 = vunpack.c.l.b16 %v297
    %v2389 = vunpack.c.h.b16 %v297
    %v2390 = vunpack.c.l.b16 %v298
    %v2391 = vunpack.c.h.b16 %v298
    %v2392 = vunpack.c.l.b16 %v299
    %v2393 = vunpack.c.h.b16 %v299
    %v2394 = vunpack.c.l.b16 %v300
    %v2395 = vunpack.c.h.b16 %v300
    %v2396 = vunpack.c.l.b16 %v301
    %v2397 = vunpack.c.h.b16 %v301
    %v2398 = vunpack.c.l.b16 %v302
    %v2399 = vunpack.c.h.b16 %v302
    %v2400 = vunpack.c.l.b16 %v303
    %v2401 = vunpack.c.h.b16 %v303
    %v2402 = vunpack.c.l.b16 %v304
    %v2403 = vunpack.c.h.b16 %v304
    %v2404 = vunpack.c.l.b16 %v305
    %v2405 = vunpack.c.h.b16 %v305
    %v2406 = vunpack.c.l.b16 %v306
    %v2407 = vunpack.c.h.b16 %v306
    %v2408 = vunpack.c.l.b16 %v307
    %v2409 = vunpack.c.h.b16 %v307
    %v2410 = vunpack.c.l.b16 %v308
    %v2411 = vunpack.c.h.b16 %v308
    %v2412 = vunpack.c.l.b16 %v309
    %v2413 = vunpack.c.h.b16 %v309
    %v2414 = vunpack.c.l.b16 %v310
    %v2415 = vunpack.c.h.b16 %v310
    %v2416 = vunpack.c.l.b16 %v311
    %v2417 = vunpack.c.h.b16 %v311
    %v2418 = vunpack.c.l.b16 %v312
    %v2419 = vunpack.c.h.b16 %v312
    %v2420 = vunpack.c.l.b16 %v313
    %v2421 = vunpack.c.h.b16 %v313
    %v2422 = vunpack.c.l.b16 %v314
    %v2423 = vunpack.c.h.b16 %v314
    %v2424 = vunpack.c.l.b16 %v315
    %v2425 = vunpack.c.h.b16 %v315
    %v2426 = vunpack.c.l.b16 %v316
    %v2427 = vunpack.c.h.b16 %v316
    %v2428 = vunpack.c.l.b16 %v317
    %v2429 = vunpack.c.h.b16 %v317
    %v2430 = vunpack.c.l.b16 %v318
    %v2431 = vunpack.c.h.b16 %v318
    %v2432 = vunpack.c.l.b16 %v319
    %v2433 = vunpack.c.h.b16 %v319
    %v2434 = vunpack.c.l.b16 %v320
    %v2435 = vunpack.c.h.b16 %v320
    %v2436 = vunpack.c.l.b16 %v321
    %v2437 = vunpack.c.h.b16 %v321
    %v2438 = vunpack.c.l.b16 %v322
    %v2439 = vunpack.c.h.b16 %v322
    %v2440 = vunpack.c.l.b16 %v323
    %v2441 = vunpack.c.h.b16 %v323
    %v2442 = vunpack.c.l.b16 %v324
    %v2443 = vunpack.c.h.b16 %v324
    %v2444 = vunpack.c.l.b16 %v325
    %v2445 = vunpack.c.h.b16 %v325
    %v2446 = vunpack.c.l.b16 %v326
    %v2447 = vunpack.c.h.b16 %v326
    %v2448 = vunpack.c.l.b16 %v327
    %v2449 = vunpack.c.h.b16 %v327
    %v2450 = vunpack.c.l.b16 %v328
    %v2451 = vunpack.c.h.b16 %v328
    %v2452 = vunpack.c.l.b16 %v329
    %v2453 = vunpack.c.h.b16 %v329
    %v2454 = vunpack.c.l.b16 %v330
    %v2455 = vunpack.c.h.b16 %v330
    %v2456 = vunpack.c.l.b16 %v331
    %v2457 = vunpack.c.h.b16 %v331
    %v2458 = vunpack.c.l.b16 %v332
    %v2459 = vunpack.c.h.b16 %v332
    %v2460 = vunpack.c.l.b16 %v333
    %v2461 = vunpack.c.h.b16 %v333
    %v2462 = vunpack.c.l.b16 %v334
    %v2463 = vunpack.c.h.b16 %v334
    %v2464 = vunpack.c.l.b16 %v335
    %v2465 = vunpack.c.h.b16 %v335
    %v2466 = vunpack.c.l.b16 %v336
    %v2467 = vunpack.c.h.b16 %v336
    %v2468 = vunpack.c.l.b16 %v337
    %v2469 = vunpack.c.h.b16 %v337
    %v2470 = vunpack.c.l.b16 %v338
    %v2471 = vunpack.c.h.b16 %v338
    %v2472 = vunpack.c.l.b16 %v339
    %v2473 = vunpack.c.h.b16 %v339
    %v2474 = vunpack.c.l.b16 %v340
    %v2475 = vunpack.c.h.b16 %v340
    %v2476 = vunpack.c.l.b16 %v341
    %v2477 = vunpack.c.h.b16 %v341
    %v2478 = vunpack.c.l.b16 %v342
    %v2479 = vunpack.c.h.b16 %v342
    %v2480 = vunpack.c.l.b16 %v343
    %v2481 = vunpack.c.h.b16 %v343
    %v2482 = vunpack.c.l.b16 %v344
    %v2483 = vunpack.c.h.b16 %v344
    %v2484 = vunpack.c.l.b16 %v345
    %v2485 = vunpack.c.h.b16 %v345
    %v2486 = vunpack.c.l.b16 %v346
    %v2487 = vunpack.c.h.b16 %v346
    %v2488 = vunpack.c.l.b16 %v347
    %v2489 = vunpack.c.h.b16 %v347
    %v2490 = vunpack.c.l.b16 %v348
    %v2491 = vunpack.c.h.b16 %v348
    %v2492 = vunpack.c.l.b16 %v349
    %v2493 = vunpack.c.h.b16 %v349
    %v2494 = vunpack.c.l.b16 %v350
    %v2495 = vunpack.c.h.b16 %v350
    %v2496 = vunpack.c.l.b16 %v351
    %v2497 = vunpack.c.h.b16 %v351
    %v2498 = vunpack.c.l.b16 %v352
    %v2499 = vunpack.c.h.b16 %v352
    %v2500 = vunpack.c.l.b16 %v353
    %v2501 = vunpack.c.h.b16 %v353
    %v2502 = vunpack.c.l.b16 %v354
    %v2503 = vunpack.c.h.b16 %v354
    %v2504 = vunpack.c.l.b16 %v355
    %v2505 = vunpack.c.h.b16 %v355
    %v2506 = vunpack.c.l.b16 %v356
    %v2507 = vunpack.c.h.b16 %v356
    %v2508 = vunpack.c.l.b16 %v357
    %v2509 = vunpack.c.h.b16 %v357
    %v2510 = vunpack.c.l.b16 %v358
    %v2511 = vunpack.c.h.b16 %v358
    %v2512 = vunpack.c.l.b16 %v359
    %v2513 = vunpack.c.h.b16 %v359
    %v2514 = vunpack.c.l.b16 %v360
    %v2515 = vunpack.c.h.b16 %v360
    %v2516 = vunpack.c.l.b16 %v361
    %v2517 = vunpack.c.h.b16 %v361
    %v2518 = vunpack.c.l.b16 %v362
    %v2519 = vunpack.c.h.b16 %v362
    %v2520 = vunpack.c.l.b16 %v363
    %v2521 = vunpack.c.h.b16 %v363
    %v2522 = vunpack.c.l.b16 %v364
    %v2523 = vunpack.c.h.b16 %v364
    %v2524 = vunpack.c.l.b16 %v365
    %v2525 = vunpack.c.h.b16 %v365
    %v2526 = vunpack.c.l.b16 %v366
    %v2527 = vunpack.c.h.b16 %v366
    %v2528 = vunpack.c.l.b16 %v367
    %v2529 = vunpack.c.h.b16 %v367
    %v2530 = vunpack.c.l.b16 %v368
    %v2531 = vunpack.c.h.b16 %v368
    %v2532 = vunpack.c.l.b16 %v369
    %v2533 = vunpack.c.h.b16 %v369
    %v2534 = vunpack.c.l.b16 %v370
    %v2535 = vunpack.c.h.b16 %v370
    %v2536 = vunpack.c.l.b16 %v371
    %v2537 = vunpack.c.h.b16 %v371
    %v2538 = vunpack.c.l.b16 %v372
    %v2539 = vunpack.c.h.b16 %v372
    %v2540 = vunpack.c.l.b16 %v373
    %v2541 = vunpack.c.h.b16 %v373
    %v2542 = vunpack.c.l.b16 %v374
    %v2543 = vunpack.c.h.b16 %v374
    %v2544 = vunpack.c.l.b16 %v375
    %v2545 = vunpack.c.h.b16 %v375
    %v2546 = vunpack.c.l.b16 %v376
    %v2547 = vunpack.c.h.b16 %v376
    %v2548 = vunpack.c.l.b16 %v377
    %v2549 = vunpack.c.h.b16 %v377
    %v2550 = vunpack.c.l.b16 %v378
    %v2551 = vunpack.c.h.b16 %v378
    %v2552 = vunpack.c.l.b16 %v379
    %v2553 = vunpack.c.h.b16 %v379
    %v2554 = vunpack.c.l.b16 %v380
    %v2555 = vunpack.c.h.b16 %v380
    %v2556 = vunpack.c.l.b16 %v381
    %v2557 = vunpack.c.h.b16 %v381
    %v2558 = vunpack.c.l.b16 %v382
    %v2559 = vunpack.c.h.b16 %v382
    %v2560 = vunpack.c.l.b16 %v383
    %v2561 = vunpack.c.h.b16 %v383
    %v2562 = vunpack.c.l.b16 %v384
    %v2563 = vunpack.c.h.b16 %v384
    %v2564 = vunpack.c.l.b16 %v385
    %v2565 = vunpack.c.h.b16 %v385
    %v2566 = vunpack.c.l.b16 %v386
    %v2567 = vunpack.c.h.b16 %v386
    %v2568 = vunpack.c.l.b16 %v387
    %v2569 = vunpack.c.h.b16 %v387
    %v2570 = vunpack.c.l.b16 %v388
    %v2571 = vunpack.c.h.b16 %v388
    %v2572 = vunpack.c.l.b16 %v389
    %v2573 = vunpack.c.h.b16 %v389
    %v2574 = vunpack.c.l.b16 %v390
    %v2575 = vunpack.c.h.b16 %v390
    %v2576 = vunpack.c.l.b16 %v391
    %v2577 = vunpack.c.h.b16 %v391
    %v2578 = vunpack.c.l.b16 %v392
    %v2579 = vunpack.c.h.b16 %v392
    %v2580 = vunpack.c.l.b16 %v393
    %v2581 = vunpack.c.h.b16 %v393
    %v2582 = vunpack.c.l.b16 %v394
    %v2583 = vunpack.c.h.b16 %v394
    %v2584 = vunpack.c.l.b16 %v395
    %v2585 = vunpack.c.h.b16 %v395
    %v2586 = vunpack.c.l.b16 %v396
    %v2587 = vunpack.c.h.b16 %v396
    %v2588 = vunpack.c.l.b16 %v397
    %v2589 = vunpack.c.h.b16 %v397
    %v2590 = vunpack.c.l.b16 %v398
    %v2591 = vunpack.c.h.b16 %v398
    %v2592 = vunpack.c.l.b16 %v399
    %v2593 = vunpack.c.h.b16 %v399
    %v2594 = vunpack.c.l.b16 %v400
    %v2595 = vunpack.c.h.b16 %v400
    %v2596 = vunpack.c.l.b16 %v401
    %v2597 = vunpack.c.h.b16 %v401
    %v2598 = vunpack.c.l.b16 %v402
    %v2599 = vunpack.c.h.b16 %v402
    %v2600 = vunpack.c.l.b16 %v403
    %v2601 = vunpack.c.h.b16 %v403
    %v2602 = vunpack.c.l.b16 %v404
    %v2603 = vunpack.c.h.b16 %v404
    %v2604 = vunpack.c.l.b16 %v405
    %v2605 = vunpack.c.h.b16 %v405
    %v2606 = vunpack.c.l.b16 %v406
    %v2607 = vunpack.c.h.b16 %v406
    %v2608 = vunpack.c.l.b16 %v407
    %v2609 = vunpack.c.h.b16 %v407
    %v2610 = vunpack.c.l.b16 %v408
    %v2611 = vunpack.c.h.b16 %v408
    %v2612 = vunpack.c.l.b16 %v409
    %v2613 = vunpack.c.h.b16 %v409
    %v2614 = vunpack.c.l.b16 %v410
    %v2615 = vunpack.c.h.b16 %v410
    %v2616 = vunpack.c.l.b16 %v411
    %v2617 = vunpack.c.h.b16 %v411
    %v2618 = vunpack.c.l.b16 %v412
    %v2619 = vunpack.c.h.b16 %v412
    %v2620 = vunpack.c.l.b16 %v413
    %v2621 = vunpack.c.h.b16 %v413
    %v2622 = vunpack.c.l.b16 %v414
    %v2623 = vunpack.c.h.b16 %v414
    %v2624 = vunpack.c.l.b16 %v415
    %v2625 = vunpack.c.h.b16 %v415
    %v2626 = vunpack.c.l.b16 %v416
    %v2627 = vunpack.c.h.b16 %v416
    %v2628 = vunpack.c.l.b16 %v417
    %v2629 = vunpack.c.h.b16 %v417
    %v2630 = vunpack.c.l.b16 %v418
    %v2631 = vunpack.c.h.b16 %v418
    %v2632 = vunpack.c.l.b16 %v419
    %v2633 = vunpack.c.h.b16 %v419
    %v2634 = vunpack.c.l.b16 %v420
    %v2635 = vunpack.c.h.b16 %v420
    %v2636 = vunpack.c.l.b16 %v421
    %v2637 = vunpack.c.h.b16 %v421
    %v2638 = vunpack.c.l.b16 %v422
    %v2639 = vunpack.c.h.b16 %v422
    %v2640 = vunpack.c.l.b16 %v423
    %v2641 = vunpack.c.h.b16 %v423
    %v2642 = vunpack.c.l.b16 %v424
    %v2643 = vunpack.c.h.b16 %v424
    %v2644 = vunpack.c.l.b16 %v425
    %v2645 = vunpack.c.h.b16 %v425
    %v2646 = vunpack.c.l.b16 %v426
    %v2647 = vunpack.c.h.b16 %v426
    %v2648 = vunpack.c.l.b16 %v427
    %v2649 = vunpack.c.h.b16 %v427
    %v2650 = vunpack.c.l.b16 %v428
    %v2651 = vunpack.c.h.b16 %v428
    %v2652 = vunpack.c.l.b16 %v429
    %v2653 = vunpack.c.h.b16 %v429
    %v2654 = vunpack.c.l.b16 %v430
    %v2655 = vunpack.c.h.b16 %v430
    %v2656 = vunpack.c.l.b16 %v431
    %v2657 = vunpack.c.h.b16 %v431
    %v2658 = vunpack.c.l.b16 %v432
    %v2659 = vunpack.c.h.b16 %v432
    %v2660 = vunpack.c.l.b16 %v433
    %v2661 = vunpack.c.h.b16 %v433
    %v2662 = vunpack.c.l.b16 %v434
    %v2663 = vunpack.c.h.b16 %v434
    %v2664 = vunpack.c.l.b16 %v435
    %v2665 = vunpack.c.h.b16 %v435
    %v2666 = vunpack.c.l.b16 %v436
    %v2667 = vunpack.c.h.b16 %v436
    %v2668 = vunpack.c.l.b16 %v437
    %v2669 = vunpack.c.h.b16 %v437
    %v2670 = vunpack.c.l.b16 %v438
    %v2671 = vunpack.c.h.b16 %v438
    %v2672 = vunpack.c.l.b16 %v439
    %v2673 = vunpack.c.h.b16 %v439
    %v2674 = vunpack.c.l.b16 %v440
    %v2675 = vunpack.c.h.b16 %v440
    %v2676 = vunpack.c.l.b16 %v441
    %v2677 = vunpack.c.h.b16 %v441
    %v2678 = vunpack.c.l.b16 %v442
    %v2679 = vunpack.c.h.b16 %v442
    %v2680 = vunpack.c.l.b16 %v443
    %v2681 = vunpack.c.h.b16 %v443
    %v2682 = vunpack.c.l.b16 %v444
    %v2683 = vunpack.c.h.b16 %v444
    %v2684 = vunpack.c.l.b16 %v445
    %v2685 = vunpack.c.h.b16 %v445
    %v2686 = vunpack.c.l.b16 %v446
    %v2687 = vunpack.c.h.b16 %v446
    %v2688 = vunpack.c.l.b16 %v447
    %v2689 = vunpack.c.h.b16 %v447
    %v2690 = vunpack.c.l.b16 %v448
    %v2691 = vunpack.c.h.b16 %v448
    %v2692 = vunpack.c.l.b16 %v449
    %v2693 = vunpack.c.h.b16 %v449
    %v2694 = vunpack.c.l.b16 %v450
    %v2695 = vunpack.c.h.b16 %v450
    %v2696 = vunpack.c.l.b16 %v451
    %v2697 = vunpack.c.h.b16 %v451
    %v2698 = vunpack.c.l.b16 %v452
    %v2699 = vunpack.c.h.b16 %v452
    %v2700 = vunpack.c.l.b16 %v453
    %v2701 = vunpack.c.h.b16 %v453
    %v2702 = vunpack.c.l.b16 %v454
    %v2703 = vunpack.c.h.b16 %v454
    %v2704 = vunpack.c.l.b16 %v455
    %v2705 = vunpack.c.h.b16 %v455
    %v2706 = vunpack.c.l.b16 %v456
    %v2707 = vunpack.c.h.b16 %v456
    %v2708 = vunpack.c.l.b16 %v457
    %v2709 = vunpack.c.h.b16 %v457
    %v2710 = vunpack.c.l.b16 %v458
    %v2711 = vunpack.c.h.b16 %v458
    %v2712 = vunpack.c.l.b16 %v459
    %v2713 = vunpack.c.h.b16 %v459
    %v2714 = vunpack.c.l.b16 %v460
    %v2715 = vunpack.c.h.b16 %v460
    %v2716 = vunpack.c.l.b16 %v461
    %v2717 = vunpack.c.h.b16 %v461
    %v2718 = vunpack.c.l.b16 %v462
    %v2719 = vunpack.c.h.b16 %v462
    %v2720 = vunpack.c.l.b16 %v463
    %v2721 = vunpack.c.h.b16 %v463
    %v2722 = vunpack.c.l.b16 %v464
    %v2723 = vunpack.c.h.b16 %v464
    %v2724 = vunpack.c.l.b16 %v465
    %v2725 = vunpack.c.h.b16 %v465
    %v2726 = vunpack.c.l.b16 %v466
    %v2727 = vunpack.c.h.b16 %v466
    %v2728 = vunpack.c.l.b16 %v467
    %v2729 = vunpack.c.h.b16 %v467
    %v2730 = vunpack.c.l.b16 %v468
    %v2731 = vunpack.c.h.b16 %v468
    %v2732 = vunpack.c.l.b16 %v469
    %v2733 = vunpack.c.h.b16 %v469
    %v2734 = vunpack.c.l.b16 %v470
    %v2735 = vunpack.c.h.b16 %v470
    %v2736 = vunpack.c.l.b16 %v471
    %v2737 = vunpack.c.h.b16 %v471
    %v2738 = vunpack.c.l.b16 %v472
    %v2739 = vunpack.c.h.b16 %v472
    %v2740 = vunpack.c.l.b16 %v473
    %v2741 = vunpack.c.h.b16 %v473
    %v2742 = vunpack.c.l.b16 %v474
    %v2743 = vunpack.c.h.b16 %v474
    %v2744 = vunpack.c.l.b16 %v475
    %v2745 = vunpack.c.h.b16 %v475
    %v2746 = vunpack.c.l.b16 %v476
    %v2747 = vunpack.c.h.b16 %v476
    %v2748 = vunpack.c.l.b16 %v477
    %v2749 = vunpack.c.h.b16 %v477
    %v2750 = vunpack.c.l.b16 %v478
    %v2751 = vunpack.c.h.b16 %v478
    %v2752 = vunpack.c.l.b16 %v479
    %v2753 = vunpack.c.h.b16 %v479
    %v2754 = vunpack.c.l.b16 %v480
    %v2755 = vunpack.c.h.b16 %v480
    %v2756 = vunpack.c.l.b16 %v481
    %v2757 = vunpack.c.h.b16 %v481
    %v2758 = vunpack.c.l.b16 %v482
    %v2759 = vunpack.c.h.b16 %v482
    %v2760 = vunpack.c.l.b16 %v483
    %v2761 = vunpack.c.h.b16 %v483
    %v2762 = vunpack.c.l.b16 %v484
    %v2763 = vunpack.c.h.b16 %v484
    %v2764 = vunpack.c.l.b16 %v485
    %v2765 = vunpack.c.h.b16 %v485
    %v2766 = vunpack.c.l.b16 %v486
    %v2767 = vunpack.c.h.b16 %v486
    %v2768 = vunpack.c.l.b16 %v487
    %v2769 = vunpack.c.h.b16 %v487
    %v2770 = vunpack.c.l.b16 %v488
    %v2771 = vunpack.c.h.b16 %v488
    %v2772 = vunpack.c.l.b16 %v489
    %v2773 = vunpack.c.h.b16 %v489
    %v2774 = vunpack.c.l.b16 %v490
    %v2775 = vunpack.c.h.b16 %v490
    %v2776 = vunpack.c.l.b16 %v491
    %v2777 = vunpack.c.h.b16 %v491
    %v2778 = vunpack.c.l.b16 %v492
    %v2779 = vunpack.c.h.b16 %v492
    %v2780 = vunpack.c.l.b16 %v493
    %v2781 = vunpack.c.h.b16 %v493
    %v2782 = vunpack.c.l.b16 %v494
    %v2783 = vunpack.c.h.b16 %v494
    %v2784 = vunpack.c.l.b16 %v495
    %v2785 = vunpack.c.h.b16 %v495
    %v2786 = vunpack.c.l.b16 %v496
    %v2787 = vunpack.c.h.b16 %v496
    %v2788 = vunpack.c.l.b16 %v497
    %v2789 = vunpack.c.h.b16 %v497
    %v2790 = vunpack.c.l.b16 %v498
    %v2791 = vunpack.c.h.b16 %v498
    %v2792 = vunpack.c.l.b16 %v499
    %v2793 = vunpack.c.h.b16 %v499
    %v2794 = vunpack.c.l.b16 %v500
    %v2795 = vunpack.c.h.b16 %v500
    %v2796 = vunpack.c.l.b16 %v501
    %v2797 = vunpack.c.h.b16 %v501
    %v2798 = vunpack.c.l.b16 %v502
    %v2799 = vunpack.c.h.b16 %v502
    %v2800 = vunpack.c.l.b16 %v503
    %v2801 = vunpack.c.h.b16 %v503
    %v2802 = vunpack.c.l.b16 %v504
    %v2803 = vunpack.c.h.b16 %v504
    %v2804 = vunpack.c.l.b16 %v505
    %v2805 = vunpack.c.h.b16 %v505
    %v2806 = vunpack.c.l.b16 %v506
    %v2807 = vunpack.c.h.b16 %v506
    %v2808 = vunpack.c.l.b16 %v507
    %v2809 = vunpack.c.h.b16 %v507
    %v2810 = vunpack.c.l.b16 %v508
    %v2811 = vunpack.c.h.b16 %v508
    %v2812 = vunpack.c.l.b16 %v509
    %v2813 = vunpack.c.h.b16 %v509
    %v2814 = vunpack.c.l.b16 %v510
    %v2815 = vunpack.c.h.b16 %v510
    %v2816 = vunpack.c.l.b16 %v511
    %v2817 = vunpack.c.h.b16 %v511
    %v2818 = vunpack.c.l.b16 %v512
    %v2819 = vunpack.c.h.b16 %v512
    %v2820 = vunpack.c.l.b16 %v513
    %v2821 = vunpack.c.h.b16 %v513
    %v2822 = vunpack.c.l.b16 %v514
    %v2823 = vunpack.c.h.b16 %v514
    %v2824 = vunpack.c.l.b16 %v515
    %v2825 = vunpack.c.h.b16 %v515
    %v2826 = vunpack.c.l.b16 %v516
    %v2827 = vunpack.c.h.b16 %v516
    %v2828 = vunpack.c.l.b16 %v517
    %v2829 = vunpack.c.h.b16 %v517
    %v2830 = vunpack.c.l.b16 %v518
    %v2831 = vunpack.c.h.b16 %v518
    %v2832 = vunpack.c.l.b16 %v519
    %v2833 = vunpack.c.h.b16 %v519
    %v2834 = vunpack.c.l.b16 %v520
    %v2835 = vunpack.c.h.b16 %v520
    %v2836 = vunpack.c.l.b16 %v521
    %v2837 = vunpack.c.h.b16 %v521
    %v2838 = vunpack.c.l.b16 %v522
    %v2839 = vunpack.c.h.b16 %v522
    %v2840 = vunpack.c.l.b16 %v523
    %v2841 = vunpack.c.h.b16 %v523
    %v2842 = vunpack.c.l.b16 %v524
    %v2843 = vunpack.c.h.b16 %v524
    %v2844 = vunpack.c.l.b16 %v525
    %v2845 = vunpack.c.h.b16 %v525
    %v2846 = vunpack.c.l.b16 %v526
    %v2847 = vunpack.c.h.b16 %v526
    %v2848 = vunpack.c.l.b16 %v527
    %v2849 = vunpack.c.h.b16 %v527
    %v2850 = vunpack.c.l.b16 %v528
    %v2851 = vunpack.c.h.b16 %v528
    %v2852 = vunpack.c.l.b16 %v529
    %v2853 = vunpack.c.h.b16 %v529
    %v2854 = vunpack.c.l.b16 %v530
    %v2855 = vunpack.c.h.b16 %v530
    %v2856 = vunpack.c.l.b16 %v531
    %v2857 = vunpack.c.h.b16 %v531
    %v2858 = vunpack.c.l.b16 %v532
    %v2859 = vunpack.c.h.b16 %v532
    %v2860 = vunpack.c.l.b16 %v533
    %v2861 = vunpack.c.h.b16 %v533
    %v2862 = vunpack.c.l.b16 %v534
    %v2863 = vunpack.c.h.b16 %v534
    %v2864 = vunpack.c.l.b16 %v535
    %v2865 = vunpack.c.h.b16 %v535
    %v2866 = vunpack.c.l.b16 %v536
    %v2867 = vunpack.c.h.b16 %v536
    %v2868 = vunpack.c.l.b16 %v537
    %v2869 = vunpack.c.h.b16 %v537
    %v2870 = vunpack.c.l.b16 %v538
    %v2871 = vunpack.c.h.b16 %v538
    %v2872 = vunpack.c.l.b16 %v539
    %v2873 = vunpack.c.h.b16 %v539
    %v2874 = vunpack.c.l.b16 %v540
    %v2875 = vunpack.c.h.b16 %v540
    %v2876 = vunpack.c.l.b16 %v541
    %v2877 = vunpack.c.h.b16 %v541
    %v2878 = vunpack.c.l.b16 %v542
    %v2879 = vunpack.c.h.b16 %v542
    %v2880 = vunpack.c.l.b16 %v543
    %v2881 = vunpack.c.h.b16 %v543
    %v2882 = vunpack.c.l.b16 %v544
    %v2883 = vunpack.c.h.b16 %v544
    %v2884 = vunpack.c.l.b16 %v545
    %v2885 = vunpack.c.h.b16 %v545
    %v2886 = vunpack.c.l.b16 %v546
    %v2887 = vunpack.c.h.b16 %v546
    %v2888 = vunpack.c.l.b16 %v547
    %v2889 = vunpack.c.h.b16 %v547
    %v2890 = vunpack.c.l.b16 %v548
    %v2891 = vunpack.c.h.b16 %v548
    %v2892 = vunpack.c.l.b16 %v549
    %v2893 = vunpack.c.h.b16 %v549
    %v2894 = vunpack.c.l.b16 %v550
    %v2895 = vunpack.c.h.b16 %v550
    %v2896 = vunpack.c.l.b16 %v551
    %v2897 = vunpack.c.h.b16 %v551
    %v2898 = vunpack.c.l.b16 %v552
    %v2899 = vunpack.c.h.b16 %v552
    %v2900 = vunpack.c.l.b16 %v553
    %v2901 = vunpack.c.h.b16 %v553
    %v2902 = vunpack.c.l.b16 %v554
    %v2903 = vunpack.c.h.b16 %v554
    %v2904 = vunpack.c.l.b16 %v555
    %v2905 = vunpack.c.h.b16 %v555
    %v2906 = vunpack.c.l.b16 %v556
    %v2907 = vunpack.c.h.b16 %v556
    %v2908 = vunpack.c.l.b16 %v557
    %v2909 = vunpack.c.h.b16 %v557
    %v2910 = vunpack.c.l.b16 %v558
    %v2911 = vunpack.c.h.b16 %v558
    %v2912 = vunpack.c.l.b16 %v559
    %v2913 = vunpack.c.h.b16 %v559
    %v2914 = vunpack.c.l.b16 %v560
    %v2915 = vunpack.c.h.b16 %v560
    %v2916 = vunpack.c.l.b16 %v561
    %v2917 = vunpack.c.h.b16 %v561
    %v2918 = vunpack.c.l.b16 %v562
    %v2919 = vunpack.c.h.b16 %v562
    %v2920 = vunpack.c.l.b16 %v563
    %v2921 = vunpack.c.h.b16 %v563
    %v2922 = vunpack.c.l.b16 %v564
    %v2923 = vunpack.c.h.b16 %v564
    %v2924 = vunpack.c.l.b16 %v565
    %v2925 = vunpack.c.h.b16 %v565
    %v2926 = vunpack.c.l.b16 %v566
    %v2927 = vunpack.c.h.b16 %v566
    %v2928 = vunpack.c.l.b16 %v567
    %v2929 = vunpack.c.h.b16 %v567
    %v2930 = vunpack.c.l.b16 %v568
    %v2931 = vunpack.c.h.b16 %v568
    %v2932 = vunpack.c.l.b16 %v569
    %v2933 = vunpack.c.h.b16 %v569
    %v2934 = vunpack.c.l.b16 %v570
    %v2935 = vunpack.c.h.b16 %v570
    %v2936 = vunpack.c.l.b16 %v571
    %v2937 = vunpack.c.h.b16 %v571
    %v2938 = vunpack.c.l.b16 %v572
    %v2939 = vunpack.c.h.b16 %v572
    %v2940 = vunpack.c.l.b16 %v573
    %v2941 = vunpack.c.h.b16 %v573
    %v2942 = vunpack.c.l.b16 %v574
    %v2943 = vunpack.c.h.b16 %v574
    %v2944 = vunpack.c.l.b16 %v575
    %v2945 = vunpack.c.h.b16 %v575
    %v2946 = vunpack.c.l.b16 %v576
    %v2947 = vunpack.c.h.b16 %v576
    %v2948 = vunpack.c.l.b16 %v577
    %v2949 = vunpack.c.h.b16 %v577
    %v2950 = vunpack.c.l.b16 %v578
    %v2951 = vunpack.c.h.b16 %v578
    %v2952 = vunpack.c.l.b16 %v579
    %v2953 = vunpack.c.h.b16 %v579
    %v2954 = vunpack.c.l.b16 %v580
    %v2955 = vunpack.c.h.b16 %v580
    %v2956 = vunpack.c.l.b16 %v581
    %v2957 = vunpack.c.h.b16 %v581
    %v2958 = vunpack.c.l.b16 %v582
    %v2959 = vunpack.c.h.b16 %v582
    %v2960 = vunpack.c.l.b16 %v583
    %v2961 = vunpack.c.h.b16 %v583
    %v2962 = vunpack.c.l.b16 %v584
    %v2963 = vunpack.c.h.b16 %v584
    %v2964 = vunpack.c.l.b16 %v585
    %v2965 = vunpack.c.h.b16 %v585
    %v2966 = vunpack.c.l.b16 %v586
    %v2967 = vunpack.c.h.b16 %v586
    %v2968 = vunpack.c.l.b16 %v587
    %v2969 = vunpack.c.h.b16 %v587
    %v2970 = vunpack.c.l.b16 %v588
    %v2971 = vunpack.c.h.b16 %v588
    %v2972 = vunpack.c.l.b16 %v589
    %v2973 = vunpack.c.h.b16 %v589
    %v2974 = vunpack.c.l.b16 %v590
    %v2975 = vunpack.c.h.b16 %v590
    %v2976 = vunpack.c.l.b16 %v591
    %v2977 = vunpack.c.h.b16 %v591
    %v2978 = vunpack.c.l.b16 %v592
    %v2979 = vunpack.c.h.b16 %v592
    %v2980 = vunpack.c.l.b16 %v593
    %v2981 = vunpack.c.h.b16 %v593
    %v2982 = vunpack.c.l.b16 %v594
    %v2983 = vunpack.c.h.b16 %v594
    %v2984 = vunpack.c.l.b16 %v595
    %v2985 = vunpack.c.h.b16 %v595
    %v2986 = vunpack.c.l.b16 %v596
    %v2987 = vunpack.c.h.b16 %v596
    %v2988 = vunpack.c.l.b16 %v597
    %v2989 = vunpack.c.h.b16 %v597
    %v2990 = vunpack.c.l.b16 %v598
    %v2991 = vunpack.c.h.b16 %v598
    %v2992 = vunpack.c.l.b16 %v599
    %v2993 = vunpack.c.h.b16 %v599
    %v2994 = vunpack.c.l.b16 %v600
    %v2995 = vunpack.c.h.b16 %v600
    %v2996 = vunpack.c.l.b16 %v601
    %v2997 = vunpack.c.h.b16 %v601
    %v2998 = vunpack.c.l.b16 %v602
    %v2999 = vunpack.c.h.b16 %v602
    %v3000 = vunpack.c.l.b16 %v603
    %v3001 = vunpack.c.h.b16 %v603
    %v3002 = vunpack.c.l.b16 %v604
    %v3003 = vunpack.c.h.b16 %v604
    %v3004 = vunpack.c.l.b16 %v605
    %v3005 = vunpack.c.h.b16 %v605
    %v3006 = vunpack.c.l.b16 %v606
    %v3007 = vunpack.c.h.b16 %v606
    %v3008 = vunpack.c.l.b16 %v607
    %v3009 = vunpack.c.h.b16 %v607
    %v3010 = vunpack.c.l.b16 %v608
    %v3011 = vunpack.c.h.b16 %v608
    %v3012 = vunpack.c.l.b16 %v609
    %v3013 = vunpack.c.h.b16 %v609
    %v3014 = vunpack.c.l.b16 %v610
    %v3015 = vunpack.c.h.b16 %v610
    %v3016 = vunpack.c.l.b16 %v611
    %v3017 = vunpack.c.h.b16 %v611
    %v3018 = vunpack.c.l.b16 %v612
    %v3019 = vunpack.c.h.b16 %v612
    %v3020 = vunpack.c.l.b16 %v613
    %v3021 = vunpack.c.h.b16 %v613
    %v3022 = vunpack.c.l.b16 %v614
    %v3023 = vunpack.c.h.b16 %v614
    %v3024 = vunpack.c.l.b16 %v615
    %v3025 = vunpack.c.h.b16 %v615
    %v3026 = vunpack.c.l.b16 %v616
    %v3027 = vunpack.c.h.b16 %v616
    %v3028 = vunpack.c.l.b16 %v617
    %v3029 = vunpack.c.h.b16 %v617
    %v3030 = vunpack.c.l.b16 %v618
    %v3031 = vunpack.c.h.b16 %v618
    %v3032 = vunpack.c.l.b16 %v619
    %v3033 = vunpack.c.h.b16 %v619
    %v3034 = vunpack.c.l.b16 %v620
    %v3035 = vunpack.c.h.b16 %v620
    %v3036 = vunpack.c.l.b16 %v621
    %v3037 = vunpack.c.h.b16 %v621
    %v3038 = vunpack.c.l.b16 %v622
    %v3039 = vunpack.c.h.b16 %v622
    %v3040 = vunpack.c.l.b16 %v623
    %v3041 = vunpack.c.h.b16 %v623
    %v3042 = vunpack.c.l.b16 %v624
    %v3043 = vunpack.c.h.b16 %v624
    %v3044 = vunpack.c.l.b16 %v625
    %v3045 = vunpack.c.h.b16 %v625
    %v3046 = vunpack.c.l.b16 %v626
    %v3047 = vunpack.c.h.b16 %v626
    %v3048 = vunpack.c.l.b16 %v627
    %v3049 = vunpack.c.h.b16 %v627
    %v3050 = vunpack.c.l.b16 %v628
    %v3051 = vunpack.c.h.b16 %v628
    %v3052 = vunpack.c.l.b16 %v629
    %v3053 = vunpack.c.h.b16 %v629
    %v3054 = vunpack.c.l.b16 %v630
    %v3055 = vunpack.c.h.b16 %v630
    %v3056 = vunpack.c.l.b16 %v631
    %v3057 = vunpack.c.h.b16 %v631
    %v3058 = vunpack.c.l.b16 %v632
    %v3059 = vunpack.c.h.b16 %v632
    %v3060 = vunpack.c.l.b16 %v633
    %v3061 = vunpack.c.h.b16 %v633
    %v3062 = vunpack.c.l.b16 %v634
    %v3063 = vunpack.c.h.b16 %v634
    %v3064 = vunpack.c.l.b16 %v635
    %v3065 = vunpack.c.h.b16 %v635
    %v3066 = vunpack.c.l.b16 %v636
    %v3067 = vunpack.c.h.b16 %v636
    %v3068 = vunpack.c.l.b16 %v637
    %v3069 = vunpack.c.h.b16 %v637
    %v3070 = vunpack.c.l.b16 %v638
    %v3071 = vunpack.c.h.b16 %v638
    %v3072 = vunpack.c.l.b16 %v639
    %v3073 = vunpack.c.h.b16 %v639
    %v3074 = vunpack.c.l.b16 %v640
    %v3075 = vunpack.c.h.b16 %v640
    %v3076 = vunpack.c.l.b16 %v641
    %v3077 = vunpack.c.h.b16 %v641
    %v3078 = vunpack.c.l.b16 %v642
    %v3079 = vunpack.c.h.b16 %v642
    %v3080 = vunpack.c.l.b16 %v643
    %v3081 = vunpack.c.h.b16 %v643
    %v3082 = vunpack.c.l.b16 %v644
    %v3083 = vunpack.c.h.b16 %v644
    %v3084 = vunpack.c.l.b16 %v645
    %v3085 = vunpack.c.h.b16 %v645
    %v3086 = vunpack.c.l.b16 %v646
    %v3087 = vunpack.c.h.b16 %v646
    %v3088 = vunpack.c.l.b16 %v647
    %v3089 = vunpack.c.h.b16 %v647
    %v3090 = vunpack.c.l.b16 %v648
    %v3091 = vunpack.c.h.b16 %v648
    %v3092 = vunpack.c.l.b16 %v649
    %v3093 = vunpack.c.h.b16 %v649
    %v3094 = vunpack.c.l.b16 %v650
    %v3095 = vunpack.c.h.b16 %v650
    %v3096 = vunpack.c.l.b16 %v651
    %v3097 = vunpack.c.h.b16 %v651
    %v3098 = vunpack.c.l.b16 %v652
    %v3099 = vunpack.c.h.b16 %v652
    %v3100 = vunpack.c.l.b16 %v653
    %v3101 = vunpack.c.h.b16 %v653
    %v3102 = vunpack.c.l.b16 %v654
    %v3103 = vunpack.c.h.b16 %v654
    %v3104 = vunpack.c.l.b16 %v655
    %v3105 = vunpack.c.h.b16 %v655
    %v3106 = vunpack.c.l.b16 %v656
    %v3107 = vunpack.c.h.b16 %v656
    %v3108 = vunpack.c.l.b16 %v657
    %v3109 = vunpack.c.h.b16 %v657
    %v3110 = vunpack.c.l.b16 %v658
    %v3111 = vunpack.c.h.b16 %v658
    %v3112 = vunpack.c.l.b16 %v659
    %v3113 = vunpack.c.h.b16 %v659
    %v3114 = vunpack.c.l.b16 %v660
    %v3115 = vunpack.c.h.b16 %v660
    %v3116 = vunpack.c.l.b16 %v661
    %v3117 = vunpack.c.h.b16 %v661
    %v3118 = vunpack.c.l.b16 %v662
    %v3119 = vunpack.c.h.b16 %v662
    %v3120 = vunpack.c.l.b16 %v663
    %v3121 = vunpack.c.h.b16 %v663
    %v3122 = vunpack.c.l.b16 %v664
    %v3123 = vunpack.c.h.b16 %v664
    %v3124 = vunpack.c.l.b16 %v665
    %v3125 = vunpack.c.h.b16 %v665
    %v3126 = vunpack.c.l.b16 %v666
    %v3127 = vunpack.c.h.b16 %v666
    %v3128 = vunpack.c.l.b16 %v667
    %v3129 = vunpack.c.h.b16 %v667
    %v3130 = vunpack.c.l.b16 %v668
    %v3131 = vunpack.c.h.b16 %v668
    %v3132 = vunpack.c.l.b16 %v669
    %v3133 = vunpack.c.h.b16 %v669
    %v3134 = vunpack.c.l.b16 %v670
    %v3135 = vunpack.c.h.b16 %v670
    %v3136 = vunpack.c.l.b16 %v671
    %v3137 = vunpack.c.h.b16 %v671
    %v3138 = vunpack.c.l.b16 %v672
    %v3139 = vunpack.c.h.b16 %v672
    %v3140 = vunpack.c.l.b16 %v673
    %v3141 = vunpack.c.h.b16 %v673
    %v3142 = vunpack.c.l.b16 %v674
    %v3143 = vunpack.c.h.b16 %v674
    %v3144 = vunpack.c.l.b16 %v675
    %v3145 = vunpack.c.h.b16 %v675
    %v3146 = vunpack.c.l.b16 %v676
    %v3147 = vunpack.c.h.b16 %v676
    %v3148 = vunpack.c.l.b16 %v677
    %v3149 = vunpack.c.h.b16 %v677
    %v3150 = vunpack.c.l.b16 %v678
    %v3151 = vunpack.c.h.b16 %v678
    %v3152 = vunpack.c.l.b16 %v679
    %v3153 = vunpack.c.h.b16 %v679
    %v3154 = vunpack.c.l.b16 %v680
    %v3155 = vunpack.c.h.b16 %v680
    %v3156 = vunpack.c.l.b16 %v681
    %v3157 = vunpack.c.h.b16 %v681
    %v3158 = vunpack.c.l.b16 %v682
    %v3159 = vunpack.c.h.b16 %v682
    %v3160 = vunpack.c.l.b16 %v683
    %v3161 = vunpack.c.h.b16 %v683
    %v3162 = vunpack.c.l.b16 %v684
    %v3163 = vunpack.c.h.b16 %v684
    %v3164 = vunpack.c.l.b16 %v685
    %v3165 = vunpack.c.h.b16 %v685
    %v3166 = vunpack.c.l.b16 %v686
    %v3167 = vunpack.c.h.b16 %v686
    %v3168 = vunpack.c.l.b16 %v687
    %v3169 = vunpack.c.h.b16 %v687
    %v3170 = vunpack.c.l.b16 %v688
    %v3171 = vunpack.c.h.b16 %v688
    %v3172 = vunpack.c.l.b16 %v689
    %v3173 = vunpack.c.h.b16 %v689
    %v3174 = vunpack.c.l.b16 %v690
    %v3175 = vunpack.c.h.b16 %v690
    %v3176 = vunpack.c.l.b16 %v691
    %v3177 = vunpack.c.h.b16 %v691
    %v3178 = vunpack.c.l.b16 %v692
    %v3179 = vunpack.c.h.b16 %v692
    %v3180 = vunpack.c.l.b16 %v693
    %v3181 = vunpack.c.h.b16 %v693
    %v3182 = vunpack.c.l.b16 %v694
    %v3183 = vunpack.c.h.b16 %v694
    %v3184 = vunpack.c.l.b16 %v695
    %v3185 = vunpack.c.h.b16 %v695
    %v3186 = vunpack.c.l.b16 %v696
    %v3187 = vunpack.c.h.b16 %v696
    %v3188 = vunpack.c.l.b16 %v697
    %v3189 = vunpack.c.h.b16 %v697
    %v3190 = vunpack.c.l.b16 %v698
    %v3191 = vunpack.c.h.b16 %v698
    %v3192 = vunpack.c.l.b16 %v699
    %v3193 = vunpack.c.h.b16 %v699
    %v3194 = vunpack.c.l.b16 %v700
    %v3195 = vunpack.c.h.b16 %v700
    %v3196 = vunpack.c.l.b16 %v701
    %v3197 = vunpack.c.h.b16 %v701
    %v3198 = vunpack.c.l.b16 %v702
    %v3199 = vunpack.c.h.b16 %v702
    %v3200 = vunpack.c.l.b16 %v703
    %v3201 = vunpack.c.h.b16 %v703
    %v3202 = vunpack.c.l.b16 %v704
    %v3203 = vunpack.c.h.b16 %v704
    %v3204 = vunpack.c.l.b16 %v705
    %v3205 = vunpack.c.h.b16 %v705
    %v3206 = vunpack.c.l.b16 %v706
    %v3207 = vunpack.c.h.b16 %v706
    %v3208 = vunpack.c.l.b16 %v707
    %v3209 = vunpack.c.h.b16 %v707
    %v3210 = vunpack.c.l.b16 %v708
    %v3211 = vunpack.c.h.b16 %v708
    %v3212 = vunpack.c.l.b16 %v709
    %v3213 = vunpack.c.h.b16 %v709
    %v3214 = vunpack.c.l.b16 %v710
    %v3215 = vunpack.c.h.b16 %v710
    %v3216 = vunpack.c.l.b16 %v711
    %v3217 = vunpack.c.h.b16 %v711
    %v3218 = vunpack.c.l.b16 %v712
    %v3219 = vunpack.c.h.b16 %v712
    %v3220 = vunpack.c.l.b16 %v713
    %v3221 = vunpack.c.h.b16 %v713
    %v3222 = vunpack.c.l.b16 %v714
    %v3223 = vunpack.c.h.b16 %v714
    %v3224 = vunpack.c.l.b16 %v715
    %v3225 = vunpack.c.h.b16 %v715
    %v3226 = vunpack.c.l.b16 %v716
    %v3227 = vunpack.c.h.b16 %v716
    %v3228 = vunpack.c.l.b16 %v717
    %v3229 = vunpack.c.h.b16 %v717
    %v3230 = vunpack.c.l.b16 %v718
    %v3231 = vunpack.c.h.b16 %v718
    %v3232 = vunpack.c.l.b16 %v719
    %v3233 = vunpack.c.h.b16 %v719
    %v3234 = vunpack.c.l.b16 %v720
    %v3235 = vunpack.c.h.b16 %v720
    %v3236 = vunpack.c.l.b16 %v721
    %v3237 = vunpack.c.h.b16 %v721
    %v3238 = vunpack.c.l.b16 %v722
    %v3239 = vunpack.c.h.b16 %v722
    %v3240 = vunpack.c.l.b16 %v723
    %v3241 = vunpack.c.h.b16 %v723
    %v3242 = vunpack.c.l.b16 %v724
    %v3243 = vunpack.c.h.b16 %v724
    %v3244 = vunpack.c.l.b16 %v725
    %v3245 = vunpack.c.h.b16 %v725
    %v3246 = vunpack.c.l.b16 %v726
    %v3247 = vunpack.c.h.b16 %v726
    %v3248 = vunpack.c.l.b16 %v727
    %v3249 = vunpack.c.h.b16 %v727
    %v3250 = vunpack.c.l.b16 %v728
    %v3251 = vunpack.c.h.b16 %v728
    %v3252 = vunpack.c.l.b16 %v729
    %v3253 = vunpack.c.h.b16 %v729
    %v3254 = vunpack.c.l.b16 %v730
    %v3255 = vunpack.c.h.b16 %v730
    %v3256 = vunpack.c.l.b16 %v731
    %v3257 = vunpack.c.h.b16 %v731
    %v3258 = vunpack.c.l.b16 %v732
    %v3259 = vunpack.c.h.b16 %v732
    %v3260 = vunpack.c.l.b16 %v733
    %v3261 = vunpack.c.h.b16 %v733
    %v3262 = vunpack.c.l.b16 %v734
    %v3263 = vunpack.c.h.b16 %v734
    %v3264 = vunpack.c.l.b16 %v735
    %v3265 = vunpack.c.h.b16 %v735
    %v3266 = vunpack.c.l.b16 %v736
    %v3267 = vunpack.c.h.b16 %v736
    %v3268 = vunpack.c.l.b16 %v737
    %v3269 = vunpack.c.h.b16 %v737
    %v3270 = vunpack.c.l.b16 %v738
    %v3271 = vunpack.c.h.b16 %v738
    %v3272 = vunpack.c.l.b16 %v739
    %v3273 = vunpack.c.h.b16 %v739
    %v3274 = vunpack.c.l.b16 %v740
    %v3275 = vunpack.c.h.b16 %v740
    %v3276 = vunpack.c.l.b16 %v741
    %v3277 = vunpack.c.h.b16 %v741
    %v3278 = vunpack.c.l.b16 %v742
    %v3279 = vunpack.c.h.b16 %v742
    %v3280 = vunpack.c.l.b16 %v743
    %v3281 = vunpack.c.h.b16 %v743
    %v3282 = vunpack.c.l.b16 %v744
    %v3283 = vunpack.c.h.b16 %v744
    %v3284 = vunpack.c.l.b16 %v745
    %v3285 = vunpack.c.h.b16 %v745
    %v3286 = vunpack.c.l.b16 %v746
    %v3287 = vunpack.c.h.b16 %v746
    %v3288 = vunpack.c.l.b16 %v747
    %v3289 = vunpack.c.h.b16 %v747
    %v3290 = vunpack.c.l.b16 %v748
    %v3291 = vunpack.c.h.b16 %v748
    %v3292 = vunpack.c.l.b16 %v749
    %v3293 = vunpack.c.h.b16 %v749
    %v3294 = vunpack.c.l.b16 %v750
    %v3295 = vunpack.c.h.b16 %v750
    %v3296 = vunpack.c.l.b16 %v751
    %v3297 = vunpack.c.h.b16 %v751
    %v3298 = vunpack.c.l.b16 %v752
    %v3299 = vunpack.c.h.b16 %v752
    %v3300 = vunpack.c.l.b16 %v753
    %v3301 = vunpack.c.h.b16 %v753
    %v3302 = vunpack.c.l.b16 %v754
    %v3303 = vunpack.c.h.b16 %v754
    %v3304 = vunpack.c.l.b16 %v755
    %v3305 = vunpack.c.h.b16 %v755
    %v3306 = vunpack.c.l.b16 %v756
    %v3307 = vunpack.c.h.b16 %v756
    %v3308 = vunpack.c.l.b16 %v757
    %v3309 = vunpack.c.h.b16 %v757
    %v3310 = vunpack.c.l.b16 %v758
    %v3311 = vunpack.c.h.b16 %v758
    %v3312 = vunpack.c.l.b16 %v759
    %v3313 = vunpack.c.h.b16 %v759
    %v3314 = vunpack.c.l.b16 %v760
    %v3315 = vunpack.c.h.b16 %v760
    %v3316 = vunpack.c.l.b16 %v761
    %v3317 = vunpack.c.h.b16 %v761
    %v3318 = vunpack.c.l.b16 %v762
    %v3319 = vunpack.c.h.b16 %v762
    %v3320 = vunpack.c.l.b16 %v763
    %v3321 = vunpack.c.h.b16 %v763
    %v3322 = vunpack.c.l.b16 %v764
    %v3323 = vunpack.c.h.b16 %v764
    %v3324 = vunpack.c.l.b16 %v765
    %v3325 = vunpack.c.h.b16 %v765
    %v3326 = vunpack.c.l.b16 %v766
    %v3327 = vunpack.c.h.b16 %v766
    %v3328 = vunpack.c.l.b16 %v767
    %v3329 = vunpack.c.h.b16 %v767
    %v3330 = vunpack.c.l.b16 %v768
    %v3331 = vunpack.c.h.b16 %v768
    %v3332 = vunpack.c.l.b16 %v769
    %v3333 = vunpack.c.h.b16 %v769
    %v3334 = vunpack.c.l.b16 %v770
    %v3335 = vunpack.c.h.b16 %v770
    %v3336 = vunpack.c.l.b16 %v771
    %v3337 = vunpack.c.h.b16 %v771
    %v3338 = vunpack.c.l.b16 %v772
    %v3339 = vunpack.c.h.b16 %v772
    %v3340 = vunpack.c.l.b16 %v773
    %v3341 = vunpack.c.h.b16 %v773
    %v3342 = vunpack.c.l.b16 %v774
    %v3343 = vunpack.c.h.b16 %v774
    %v3344 = vunpack.c.l.b16 %v775
    %v3345 = vunpack.c.h.b16 %v775
    %v3346 = vunpack.c.l.b16 %v776
    %v3347 = vunpack.c.h.b16 %v776
    %v3348 = vunpack.c.l.b16 %v777
    %v3349 = vunpack.c.h.b16 %v777
    %v3350 = vunpack.c.l.b16 %v778
    %v3351 = vunpack.c.h.b16 %v778
    %v3352 = vunpack.c.l.b16 %v779
    %v3353 = vunpack.c.h.b16 %v779
    %v3354 = vunpack.c.l.b16 %v780
    %v3355 = vunpack.c.h.b16 %v780
    %v3356 = vunpack.c.l.b16 %v781
    %v3357 = vunpack.c.h.b16 %v781
    %v3358 = vunpack.c.l.b16 %v782
    %v3359 = vunpack.c.h.b16 %v782
    %v3360 = vunpack.c.l.b16 %v783
    %v3361 = vunpack.c.h.b16 %v783
    %v3362 = vunpack.c.l.b16 %v784
    %v3363 = vunpack.c.h.b16 %v784
    %v3364 = vunpack.c.l.b16 %v785
    %v3365 = vunpack.c.h.b16 %v785
    %v3366 = vunpack.c.l.b16 %v786
    %v3367 = vunpack.c.h.b16 %v786
    %v3368 = vunpack.c.l.b16 %v787
    %v3369 = vunpack.c.h.b16 %v787
    %v3370 = vunpack.c.l.b16 %v788
    %v3371 = vunpack.c.h.b16 %v788
    %v3372 = vunpack.c.l.b16 %v789
    %v3373 = vunpack.c.h.b16 %v789
    %v3374 = vunpack.c.l.b16 %v790
    %v3375 = vunpack.c.h.b16 %v790
    %v3376 = vunpack.c.l.b16 %v791
    %v3377 = vunpack.c.h.b16 %v791
    %v3378 = vunpack.c.l.b16 %v792
    %v3379 = vunpack.c.h.b16 %v792
    %v3380 = vunpack.c.l.b16 %v793
    %v3381 = vunpack.c.h.b16 %v793
    %v3382 = vunpack.c.l.b16 %v794
    %v3383 = vunpack.c.h.b16 %v794
    %v3384 = vunpack.c.l.b16 %v795
    %v3385 = vunpack.c.h.b16 %v795
    %v3386 = vunpack.c.l.b16 %v796
    %v3387 = vunpack.c.h.b16 %v796
    %v3388 = vunpack.c.l.b16 %v797
    %v3389 = vunpack.c.h.b16 %v797
    %v3390 = vunpack.c.l.b16 %v798
    %v3391 = vunpack.c.h.b16 %v798
    %v3392 = vunpack.c.l.b16 %v799
    %v3393 = vunpack.c.h.b16 %v799
    %v3394 = vunpack.c.l.b16 %v800
    %v3395 = vunpack.c.h.b16 %v800
    %v3396 = vunpack.c.l.b16 %v801
    %v3397 = vunpack.c.h.b16 %v801
    %v3398 = vunpack.c.l.b16 %v802
    %v3399 = vunpack.c.h.b16 %v802
    %v3400 = vunpack.c.l.b16 %v803
    %v3401 = vunpack.c.h.b16 %v803
    %v3402 = vunpack.c.l.b16 %v804
    %v3403 = vunpack.c.h.b16 %v804
    %v3404 = vunpack.c.l.b16 %v805
    %v3405 = vunpack.c.h.b16 %v805
    %v3406 = vunpack.c.l.b16 %v806
    %v3407 = vunpack.c.h.b16 %v806
    %v3408 = vunpack.c.l.b16 %v807
    %v3409 = vunpack.c.h.b16 %v807
    %v3410 = vunpack.c.l.b16 %v808
    %v3411 = vunpack.c.h.b16 %v808
    %v3412 = vunpack.c.l.b16 %v809
    %v3413 = vunpack.c.h.b16 %v809
    %v3414 = vunpack.c.l.b16 %v810
    %v3415 = vunpack.c.h.b16 %v810
    %v3416 = vunpack.c.l.b16 %v811
    %v3417 = vunpack.c.h.b16 %v811
    %v3418 = vunpack.c.l.b16 %v812
    %v3419 = vunpack.c.h.b16 %v812
    %v3420 = vunpack.c.l.b16 %v813
    %v3421 = vunpack.c.h.b16 %v813
    %v3422 = vunpack.c.l.b16 %v814
    %v3423 = vunpack.c.h.b16 %v814
    %v3424 = vunpack.c.l.b16 %v815
    %v3425 = vunpack.c.h.b16 %v815
    %v3426 = vunpack.c.l.b16 %v816
    %v3427 = vunpack.c.h.b16 %v816
    %v3428 = vunpack.c.l.b16 %v817
    %v3429 = vunpack.c.h.b16 %v817
    %v3430 = vunpack.c.l.b16 %v818
    %v3431 = vunpack.c.h.b16 %v818
    %v3432 = vunpack.c.l.b16 %v819
    %v3433 = vunpack.c.h.b16 %v819
    %v3434 = vunpack.c.l.b16 %v820
    %v3435 = vunpack.c.h.b16 %v820
    %v3436 = vunpack.c.l.b16 %v821
    %v3437 = vunpack.c.h.b16 %v821
    %v3438 = vunpack.c.l.b16 %v822
    %v3439 = vunpack.c.h.b16 %v822
    %v3440 = vunpack.c.l.b16 %v823
    %v3441 = vunpack.c.h.b16 %v823
    %v3442 = vunpack.c.l.b16 %v824
    %v3443 = vunpack.c.h.b16 %v824
    %v3444 = vunpack.c.l.b16 %v825
    %v3445 = vunpack.c.h.b16 %v825
    %v3446 = vunpack.c.l.b16 %v826
    %v3447 = vunpack.c.h.b16 %v826
    %v3448 = vunpack.c.l.b16 %v827
    %v3449 = vunpack.c.h.b16 %v827
    %v3450 = vunpack.c.l.b16 %v828
    %v3451 = vunpack.c.h.b16 %v828
    %v3452 = vunpack.c.l.b16 %v829
    %v3453 = vunpack.c.h.b16 %v829
    %v3454 = vunpack.c.l.b16 %v830
    %v3455 = vunpack.c.h.b16 %v830
    %v3456 = vunpack.c.l.b16 %v831
    %v3457 = vunpack.c.h.b16 %v831
    %v3458 = vunpack.c.l.b16 %v832
    %v3459 = vunpack.c.h.b16 %v832
    %v3460 = vunpack.c.l.b16 %v833
    %v3461 = vunpack.c.h.b16 %v833
    %v3462 = vunpack.c.l.b16 %v834
    %v3463 = vunpack.c.h.b16 %v834
    %v3464 = vunpack.c.l.b16 %v835
    %v3465 = vunpack.c.h.b16 %v835
    %v3466 = vunpack.c.l.b16 %v836
    %v3467 = vunpack.c.h.b16 %v836
    %v3468 = vunpack.c.l.b16 %v837
    %v3469 = vunpack.c.h.b16 %v837
    %v3470 = vunpack.c.l.b16 %v838
    %v3471 = vunpack.c.h.b16 %v838
    %v3472 = vunpack.c.l.b16 %v839
    %v3473 = vunpack.c.h.b16 %v839
    %v3474 = vunpack.c.l.b16 %v840
    %v3475 = vunpack.c.h.b16 %v840
    %v3476 = vunpack.c.l.b16 %v841
    %v3477 = vunpack.c.h.b16 %v841
    %v3478 = vunpack.c.l.b16 %v842
    %v3479 = vunpack.c.h.b16 %v842
    %v3480 = vunpack.c.l.b16 %v843
    %v3481 = vunpack.c.h.b16 %v843
    %v3482 = vunpack.c.l.b16 %v844
    %v3483 = vunpack.c.h.b16 %v844
    %v3484 = vunpack.c.l.b16 %v845
    %v3485 = vunpack.c.h.b16 %v845
    %v3486 = vunpack.c.l.b16 %v846
    %v3487 = vunpack.c.h.b16 %v846
    %v3488 = vunpack.c.l.b16 %v847
    %v3489 = vunpack.c.h.b16 %v847
    %v3490 = vunpack.c.l.b16 %v848
    %v3491 = vunpack.c.h.b16 %v848
    %v3492 = vunpack.c.l.b16 %v849
    %v3493 = vunpack.c.h.b16 %v849
    %v3494 = vunpack.c.l.b16 %v850
    %v3495 = vunpack.c.h.b16 %v850
    %v3496 = vunpack.c.l.b16 %v851
    %v3497 = vunpack.c.h.b16 %v851
    %v3498 = vunpack.c.l.b16 %v852
    %v3499 = vunpack.c.h.b16 %v852
    %v3500 = vunpack.c.l.b16 %v853
    %v3501 = vunpack.c.h.b16 %v853
    %v3502 = vunpack.c.l.b16 %v854
    %v3503 = vunpack.c.h.b16 %v854
    %v3504 = vunpack.c.l.b16 %v855
    %v3505 = vunpack.c.h.b16 %v855
    %v3506 = vunpack.c.l.b16 %v856
    %v3507 = vunpack.c.h.b16 %v856
    %v3508 = vunpack.c.l.b16 %v857
    %v3509 = vunpack.c.h.b16 %v857
    %v3510 = vunpack.c.l.b16 %v858
    %v3511 = vunpack.c.h.b16 %v858
    %v3512 = vunpack.c.l.b16 %v859
    %v3513 = vunpack.c.h.b16 %v859
    %v3514 = vunpack.c.l.b16 %v860
    %v3515 = vunpack.c.h.b16 %v860
    %v3516 = vunpack.c.l.b16 %v861
    %v3517 = vunpack.c.h.b16 %v861
    %v3518 = vunpack.c.l.b16 %v862
    %v3519 = vunpack.c.h.b16 %v862
    %v3520 = vunpack.c.l.b16 %v863
    %v3521 = vunpack.c.h.b16 %v863
    %v3522 = vunpack.c.l.b16 %v864
    %v3523 = vunpack.c.h.b16 %v864
    %v3524 = vunpack.c.l.b16 %v865
    %v3525 = vunpack.c.h.b16 %v865
    %v3526 = vunpack.c.l.b16 %v866
    %v3527 = vunpack.c.h.b16 %v866
    %v3528 = vunpack.c.l.b16 %v867
    %v3529 = vunpack.c.h.b16 %v867
    %v3530 = vunpack.c.l.b16 %v868
    %v3531 = vunpack.c.h.b16 %v868
    %v3532 = vunpack.c.l.b16 %v869
    %v3533 = vunpack.c.h.b16 %v869
    %v3534 = vunpack.c.l.b16 %v870
    %v3535 = vunpack.c.h.b16 %v870
    %v3536 = vunpack.c.l.b16 %v871
    %v3537 = vunpack.c.h.b16 %v871
    %v3538 = vunpack.c.l.b16 %v872
    %v3539 = vunpack.c.h.b16 %v872
    %v3540 = vunpack.c.l.b16 %v873
    %v3541 = vunpack.c.h.b16 %v873
    %v3542 = vunpack.c.l.b16 %v874
    %v3543 = vunpack.c.h.b16 %v874
    %v3544 = vunpack.c.l.b16 %v875
    %v3545 = vunpack.c.h.b16 %v875
    %v3546 = vunpack.c.l.b16 %v876
    %v3547 = vunpack.c.h.b16 %v876
    %v3548 = vunpack.c.l.b16 %v877
    %v3549 = vunpack.c.h.b16 %v877
    %v3550 = vunpack.c.l.b16 %v878
    %v3551 = vunpack.c.h.b16 %v878
    %v3552 = vunpack.c.l.b16 %v879
    %v3553 = vunpack.c.h.b16 %v879
    %v3554 = vunpack.c.l.b16 %v880
    %v3555 = vunpack.c.h.b16 %v880
    %v3556 = vunpack.c.l.b16 %v881
    %v3557 = vunpack.c.h.b16 %v881
    %v3558 = vunpack.c.l.b16 %v882
    %v3559 = vunpack.c.h.b16 %v882
    %v3560 = vunpack.c.l.b16 %v883
    %v3561 = vunpack.c.h.b16 %v883
    %v3562 = vunpack.c.l.b16 %v884
    %v3563 = vunpack.c.h.b16 %v884
    %v3564 = vunpack.c.l.b16 %v885
    %v3565 = vunpack.c.h.b16 %v885
    %v3566 = vunpack.c.l.b16 %v886
    %v3567 = vunpack.c.h.b16 %v886
    %v3568 = vunpack.c.l.b16 %v887
    %v3569 = vunpack.c.h.b16 %v887
    %v3570 = vunpack.c.l.b16 %v888
    %v3571 = vunpack.c.h.b16 %v888
    %v3572 = vunpack.c.l.b16 %v889
    %v3573 = vunpack.c.h.b16 %v889
    %v3574 = vunpack.c.l.b16 %v890
    %v3575 = vunpack.c.h.b16 %v890
    %v3576 = vunpack.c.l.b16 %v891
    %v3577 = vunpack.c.h.b16 %v891
    %v3578 = vunpack.c.l.b16 %v892
    %v3579 = vunpack.c.h.b16 %v892
    %v3580 = vunpack.c.l.b16 %v893
    %v3581 = vunpack.c.h.b16 %v893
    %v3582 = vunpack.c.l.b16 %v894
    %v3583 = vunpack.c.h.b16 %v894
    %v3584 = vunpack.c.l.b16 %v895
    %v3585 = vunpack.c.h.b16 %v895
    %v3586 = vunpack.c.l.b16 %v896
    %v3587 = vunpack.c.h.b16 %v896
    %v3588 = vunpack.c.l.b16 %v897
    %v3589 = vunpack.c.h.b16 %v897
    %v3590 = vunpack.c.l.b16 %v898
    %v3591 = vunpack.c.h.b16 %v898
    %v3592 = vunpack.c.l.b16 %v899
    %v3593 = vunpack.c.h.b16 %v899
    %v3594 = vunpack.c.l.b16 %v900
    %v3595 = vunpack.c.h.b16 %v900
    %v3596 = vunpack.c.l.b16 %v901
    %v3597 = vunpack.c.h.b16 %v901
    %v3598 = vunpack.c.l.b16 %v902
    %v3599 = vunpack.c.h.b16 %v902
    %v3600 = vunpack.c.l.b16 %v903
    %v3601 = vunpack.c.h.b16 %v903
    %v3602 = vunpack.c.l.b16 %v904
    %v3603 = vunpack.c.h.b16 %v904
    %v3604 = vunpack.c.l.b16 %v905
    %v3605 = vunpack.c.h.b16 %v905
    %v3606 = vunpack.c.l.b16 %v906
    %v3607 = vunpack.c.h.b16 %v906
    %v3608 = vunpack.c.l.b16 %v907
    %v3609 = vunpack.c.h.b16 %v907
    %v3610 = vunpack.c.l.b16 %v908
    %v3611 = vunpack.c.h.b16 %v908
    %v3612 = vunpack.c.l.b16 %v909
    %v3613 = vunpack.c.h.b16 %v909
    %v3614 = vunpack.c.l.b16 %v910
    %v3615 = vunpack.c.h.b16 %v910
    %v3616 = vunpack.c.l.b16 %v911
    %v3617 = vunpack.c.h.b16 %v911
    %v3618 = vunpack.c.l.b16 %v912
    %v3619 = vunpack.c.h.b16 %v912
    %v3620 = vunpack.c.l.b16 %v913
    %v3621 = vunpack.c.h.b16 %v913
    %v3622 = vunpack.c.l.b16 %v914
    %v3623 = vunpack.c.h.b16 %v914
    %v3624 = vunpack.c.l.b16 %v915
    %v3625 = vunpack.c.h.b16 %v915
    %v3626 = vunpack.c.l.b16 %v916
    %v3627 = vunpack.c.h.b16 %v916
    %v3628 = vunpack.c.l.b16 %v917
    %v3629 = vunpack.c.h.b16 %v917
    %v3630 = vunpack.c.l.b16 %v918
    %v3631 = vunpack.c.h.b16 %v918
    %v3632 = vunpack.c.l.b16 %v919
    %v3633 = vunpack.c.h.b16 %v919
    %v3634 = vunpack.c.l.b16 %v920
    %v3635 = vunpack.c.h.b16 %v920
    %v3636 = vunpack.c.l.b16 %v921
    %v3637 = vunpack.c.h.b16 %v921
    %v3638 = vunpack.c.l.b16 %v922
    %v3639 = vunpack.c.h.b16 %v922
    %v3640 = vunpack.c.l.b16 %v923
    %v3641 = vunpack.c.h.b16 %v923
    %v3642 = vunpack.c.l.b16 %v924
    %v3643 = vunpack.c.h.b16 %v924
    %v3644 = vunpack.c.l.b16 %v925
    %v3645 = vunpack.c.h.b16 %v925
    %v3646 = vunpack.c.l.b16 %v926
    %v3647 = vunpack.c.h.b16 %v926
    %v3648 = vunpack.c.l.b16 %v927
    %v3649 = vunpack.c.h.b16 %v927
    %v3650 = vunpack.c.l.b16 %v928
    %v3651 = vunpack.c.h.b16 %v928
    %v3652 = vunpack.c.l.b16 %v929
    %v3653 = vunpack.c.h.b16 %v929
    %v3654 = vunpack.c.l.b16 %v930
    %v3655 = vunpack.c.h.b16 %v930
    %v3656 = vunpack.c.l.b16 %v931
    %v3657 = vunpack.c.h.b16 %v931
    %v3658 = vunpack.c.l.b16 %v932
    %v3659 = vunpack.c.h.b16 %v932
    %v3660 = vunpack.c.l.b16 %v933
    %v3661 = vunpack.c.h.b16 %v933
    %v3662 = vunpack.c.l.b16 %v934
    %v3663 = vunpack.c.h.b16 %v934
    %v3664 = vunpack.c.l.b16 %v935
    %v3665 = vunpack.c.h.b16 %v935
    %v3666 = vunpack.c.l.b16 %v936
    %v3667 = vunpack.c.h.b16 %v936
    %v3668 = vunpack.c.l.b16 %v937
    %v3669 = vunpack.c.h.b16 %v937
    %v3670 = vunpack.c.l.b16 %v938
    %v3671 = vunpack.c.h.b16 %v938
    %v3672 = vunpack.c.l.b16 %v939
    %v3673 = vunpack.c.h.b16 %v939
    %v3674 = vunpack.c.l.b16 %v940
    %v3675 = vunpack.c.h.b16 %v940
    %v3676 = vunpack.c.l.b16 %v941
    %v3677 = vunpack.c.h.b16 %v941
    %v3678 = vunpack.c.l.b16 %v942
    %v3679 = vunpack.c.h.b16 %v942
    %v3680 = vunpack.c.l.b16 %v943
    %v3681 = vunpack.c.h.b16 %v943
    %v3682 = vunpack.c.l.b16 %v944
    %v3683 = vunpack.c.h.b16 %v944
    %v3684 = vunpack.c.l.b16 %v945
    %v3685 = vunpack.c.h.b16 %v945
    %v3686 = vunpack.c.l.b16 %v946
    %v3687 = vunpack.c.h.b16 %v946
    %v3688 = vunpack.c.l.b16 %v947
    %v3689 = vunpack.c.h.b16 %v947
    %v3690 = vunpack.c.l.b16 %v948
    %v3691 = vunpack.c.h.b16 %v948
    %v3692 = vunpack.c.l.b16 %v949
    %v3693 = vunpack.c.h.b16 %v949
    %v3694 = vunpack.c.l.b16 %v950
    %v3695 = vunpack.c.h.b16 %v950
    %v3696 = vunpack.c.l.b16 %v951
    %v3697 = vunpack.c.h.b16 %v951
    %v3698 = vunpack.c.l.b16 %v952
    %v3699 = vunpack.c.h.b16 %v952
    %v3700 = vunpack.c.l.b16 %v953
    %v3701 = vunpack.c.h.b16 %v953
    %v3702 = vunpack.c.l.b16 %v954
    %v3703 = vunpack.c.h.b16 %v954
    %v3704 = vunpack.c.l.b16 %v955
    %v3705 = vunpack.c.h.b16 %v955
    %v3706 = vunpack.c.l.b16 %v956
    %v3707 = vunpack.c.h.b16 %v956
    %v3708 = vunpack.c.l.b16 %v957
    %v3709 = vunpack.c.h.b16 %v957
    %v3710 = vunpack.c.l.b16 %v958
    %v3711 = vunpack.c.h.b16 %v958
    %v3712 = vunpack.c.l.b16 %v959
    %v3713 = vunpack.c.h.b16 %v959
    %v3714 = vunpack.c.l.b16 %v960
    %v3715 = vunpack.c.h.b16 %v960
    %v3716 = vunpack.c.l.b16 %v961
    %v3717 = vunpack.c.h.b16 %v961
    %v3718 = vunpack.c.l.b16 %v962
    %v3719 = vunpack.c.h.b16 %v962
    %v3720 = vunpack.c.l.b16 %v963
    %v3721 = vunpack.c.h.b16 %v963
    %v3722 = vunpack.c.l.b16 %v964
    %v3723 = vunpack.c.h.b16 %v964
    %v3724 = vunpack.c.l.b16 %v965
    %v3725 = vunpack.c.h.b16 %v965
    %v3726 = vunpack.c.l.b16 %v966
    %v3727 = vunpack.c.h.b16 %v966
    %v3728 = vunpack.c.l.b16 %v967
    %v3729 = vunpack.c.h.b16 %v967
    %v3730 = vunpack.c.l.b16 %v968
    %v3731 = vunpack.c.h.b16 %v968
    %v3732 = vunpack.c.l.b16 %v969
    %v3733 = vunpack.c.h.b16 %v969
    %v3734 = vunpack.c.l.b16 %v970
    %v3735 = vunpack.c.h.b16 %v970
    %v3736 = vunpack.c.l.b16 %v971
    %v3737 = vunpack.c.h.b16 %v971
    %v3738 = vunpack.c.l.b16 %v972
    %v3739 = vunpack.c.h.b16 %v972
    %v3740 = vunpack.c.l.b16 %v973
    %v3741 = vunpack.c.h.b16 %v973
    %v3742 = vunpack.c.l.b16 %v974
    %v3743 = vunpack.c.h.b16 %v974
    %v3744 = vunpack.c.l.b16 %v975
    %v3745 = vunpack.c.h.b16 %v975
    %v3746 = vunpack.c.l.b16 %v976
    %v3747 = vunpack.c.h.b16 %v976
    %v3748 = vunpack.c.l.b16 %v977
    %v3749 = vunpack.c.h.b16 %v977
    %v3750 = vunpack.c.l.b16 %v978
    %v3751 = vunpack.c.h.b16 %v978
    %v3752 = vunpack.c.l.b16 %v979
    %v3753 = vunpack.c.h.b16 %v979
    %v3754 = vunpack.c.l.b16 %v980
    %v3755 = vunpack.c.h.b16 %v980
    %v3756 = vunpack.c.l.b16 %v981
    %v3757 = vunpack.c.h.b16 %v981
    %v3758 = vunpack.c.l.b16 %v982
    %v3759 = vunpack.c.h.b16 %v982
    %v3760 = vunpack.c.l.b16 %v983
    %v3761 = vunpack.c.h.b16 %v983
    %v3762 = vunpack.c.l.b16 %v984
    %v3763 = vunpack.c.h.b16 %v984
    %v3764 = vunpack.c.l.b16 %v985
    %v3765 = vunpack.c.h.b16 %v985
    %v3766 = vunpack.c.l.b16 %v986
    %v3767 = vunpack.c.h.b16 %v986
    %v3768 = vunpack.c.l.b16 %v987
    %v3769 = vunpack.c.h.b16 %v987
    %v3770 = vunpack.c.l.b16 %v988
    %v3771 = vunpack.c.h.b16 %v988
    %v3772 = vunpack.c.l.b16 %v989
    %v3773 = vunpack.c.h.b16 %v989
    %v3774 = vunpack.c.l.b16 %v990
    %v3775 = vunpack.c.h.b16 %v990
    %v3776 = vunpack.c.l.b16 %v991
    %v3777 = vunpack.c.h.b16 %v991
    %v3778 = vunpack.c.l.b16 %v992
    %v3779 = vunpack.c.h.b16 %v992
    %v3780 = vunpack.c.l.b16 %v993
    %v3781 = vunpack.c.h.b16 %v993
    %v3782 = vunpack.c.l.b16 %v994
    %v3783 = vunpack.c.h.b16 %v994
    %v3784 = vunpack.c.l.b16 %v995
    %v3785 = vunpack.c.h.b16 %v995
    %v3786 = vunpack.c.l.b16 %v996
    %v3787 = vunpack.c.h.b16 %v996
    %v3788 = vunpack.c.l.b16 %v997
    %v3789 = vunpack.c.h.b16 %v997
    %v3790 = vunpack.c.l.b16 %v998
    %v3791 = vunpack.c.h.b16 %v998
    %v3792 = vunpack.c.l.b16 %v999
    %v3793 = vunpack.c.h.b16 %v999
    %v3794 = vunpack.c.l.b16 %v1000
    %v3795 = vunpack.c.h.b16 %v1000
    %v3796 = vunpack.c.l.b16 %v1001
    %v3797 = vunpack.c.h.b16 %v1001
    %v3798 = vunpack.c.l.b16 %v1002
    %v3799 = vunpack.c.h.b16 %v1002
    %v3800 = vunpack.c.l.b16 %v1003
    %v3801 = vunpack.c.h.b16 %v1003
    %v3802 = vunpack.c.l.b16 %v1004
    %v3803 = vunpack.c.h.b16 %v1004
    %v3804 = vunpack.c.l.b16 %v1005
    %v3805 = vunpack.c.h.b16 %v1005
    %v3806 = vunpack.c.l.b16 %v1006
    %v3807 = vunpack.c.h.b16 %v1006
    %v3808 = vunpack.c.l.b16 %v1007
    %v3809 = vunpack.c.h.b16 %v1007
    %v3810 = vunpack.c.l.b16 %v1008
    %v3811 = vunpack.c.h.b16 %v1008
    %v3812 = vunpack.c.l.b16 %v1009
    %v3813 = vunpack.c.h.b16 %v1009
    %v3814 = vunpack.c.l.b16 %v1010
    %v3815 = vunpack.c.h.b16 %v1010
    %v3816 = vunpack.c.l.b16 %v1011
    %v3817 = vunpack.c.h.b16 %v1011
    %v3818 = vunpack.c.l.b16 %v1012
    %v3819 = vunpack.c.h.b16 %v1012
    %v3820 = vunpack.c.l.b16 %v1013
    %v3821 = vunpack.c.h.b16 %v1013
    %v3822 = vunpack.c.l.b16 %v1014
    %v3823 = vunpack.c.h.b16 %v1014
    %v3824 = vunpack.c.l.b16 %v1015
    %v3825 = vunpack.c.h.b16 %v1015
    %v3826 = vunpack.c.l.b16 %v1016
    %v3827 = vunpack.c.h.b16 %v1016
    %v3828 = vunpack.c.l.b16 %v1017
    %v3829 = vunpack.c.h.b16 %v1017
    %v3830 = vunpack.c.l.b16 %v1018
    %v3831 = vunpack.c.h.b16 %v1018
    %v3832 = vunpack.c.l.b16 %v1019
    %v3833 = vunpack.c.h.b16 %v1019
    %v3834 = vunpack.c.l.b16 %v1020
    %v3835 = vunpack.c.h.b16 %v1020
    %v3836 = vunpack.c.l.b16 %v1021
    %v3837 = vunpack.c.h.b16 %v1021
    %v3838 = vunpack.c.l.b16 %v1022
    %v3839 = vunpack.c.h.b16 %v1022
    %v3840 = vunpack.c.l.b16 %v1023
    %v3841 = vunpack.c.h.b16 %v1023
    %v3842 = vunpack.c.l.b16 %v1024
    %v3843 = vunpack.c.h.b16 %v1024
    %v3844 = vunpack.c.l.b16 %v1025
    %v3845 = vunpack.c.h.b16 %v1025
    %v3846 = vunpack.c.l.b16 %v1026
    %v3847 = vunpack.c.h.b16 %v1026
    %v3848 = vunpack.c.l.b16 %v1027
    %v3849 = vunpack.c.h.b16 %v1027
    %v3850 = vunpack.c.l.b16 %v1028
    %v3851 = vunpack.c.h.b16 %v1028
    %v3852 = vunpack.c.l.b16 %v1029
    %v3853 = vunpack.c.h.b16 %v1029
    %v3854 = vunpack.c.l.b16 %v1030
    %v3855 = vunpack.c.h.b16 %v1030
    %v3856 = vunpack.c.l.b16 %v1031
    %v3857 = vunpack.c.h.b16 %v1031
    %v3858 = vunpack.c.l.b16 %v1032
    %v3859 = vunpack.c.h.b16 %v1032
    %v3860 = vunpack.c.l.b16 %v1033
    %v3861 = vunpack.c.h.b16 %v1033
    %v3862 = vunpack.c.l.b16 %v1034
    %v3863 = vunpack.c.h.b16 %v1034
    %v3864 = vunpack.c.l.b16 %v1035
    %v3865 = vunpack.c.h.b16 %v1035
    %v3866 = vunpack.c.l.b16 %v1036
    %v3867 = vunpack.c.h.b16 %v1036
    %v3868 = vunpack.c.l.b16 %v1037
    %v3869 = vunpack.c.h.b16 %v1037
    %v3870 = vunpack.c.l.b16 %v1038
    %v3871 = vunpack.c.h.b16 %v1038
    %v3872 = vunpack.c.l.b16 %v1039
    %v3873 = vunpack.c.h.b16 %v1039
    %v3874 = vunpack.c.l.b16 %v1040
    %v3875 = vunpack.c.h.b16 %v1040
    %v3876 = vunpack.c.l.b16 %v1041
    %v3877 = vunpack.c.h.b16 %v1041
    %v3878 = vunpack.c.l.b16 %v1042
    %v3879 = vunpack.c.h.b16 %v1042
    %v3880 = vunpack.c.l.b16 %v1043
    %v3881 = vunpack.c.h.b16 %v1043
    %v3882 = vunpack.c.l.b16 %v1044
    %v3883 = vunpack.c.h.b16 %v1044
    %v3884 = vunpack.c.l.b16 %v1045
    %v3885 = vunpack.c.h.b16 %v1045
    %v3886 = vunpack.c.l.b16 %v1046
    %v3887 = vunpack.c.h.b16 %v1046
    %v3888 = vunpack.c.l.b16 %v1047
    %v3889 = vunpack.c.h.b16 %v1047
    %v3890 = vunpack.c.l.b16 %v1048
    %v3891 = vunpack.c.h.b16 %v1048
    %v3892 = vunpack.c.l.b16 %v1049
    %v3893 = vunpack.c.h.b16 %v1049
    %v3894 = vunpack.c.l.b16 %v1050
    %v3895 = vunpack.c.h.b16 %v1050
    %v3896 = vunpack.c.l.b16 %v1051
    %v3897 = vunpack.c.h.b16 %v1051
    %v3898 = vunpack.c.l.b16 %v1052
    %v3899 = vunpack.c.h.b16 %v1052
    %v3900 = vunpack.c.l.b16 %v1053
    %v3901 = vunpack.c.h.b16 %v1053
    %v3902 = vunpack.c.l.b16 %v1054
    %v3903 = vunpack.c.h.b16 %v1054
    %v3904 = vunpack.c.l.b16 %v1055
    %v3905 = vunpack.c.h.b16 %v1055
    %v3906 = vunpack.c.l.b16 %v1056
    %v3907 = vunpack.c.h.b16 %v1056
    %v3908 = vunpack.c.l.b16 %v1057
    %v3909 = vunpack.c.h.b16 %v1057
    %v3910 = vunpack.c.l.b16 %v1058
    %v3911 = vunpack.c.h.b16 %v1058
    %v3912 = vunpack.c.l.b16 %v1059
    %v3913 = vunpack.c.h.b16 %v1059
    %v3914 = vunpack.c.l.b16 %v1060
    %v3915 = vunpack.c.h.b16 %v1060
    %v3916 = vunpack.c.l.b16 %v1061
    %v3917 = vunpack.c.h.b16 %v1061
    %v3918 = vunpack.c.l.b16 %v1062
    %v3919 = vunpack.c.h.b16 %v1062
    %v3920 = vunpack.c.l.b16 %v1063
    %v3921 = vunpack.c.h.b16 %v1063
    %v3922 = vunpack.c.l.b16 %v1064
    %v3923 = vunpack.c.h.b16 %v1064
    %v3924 = vunpack.c.l.b16 %v1065
    %v3925 = vunpack.c.h.b16 %v1065
    %v3926 = vunpack.c.l.b16 %v1066
    %v3927 = vunpack.c.h.b16 %v1066
    %v3928 = vunpack.c.l.b16 %v1067
    %v3929 = vunpack.c.h.b16 %v1067
    %v3930 = vunpack.c.l.b16 %v1068
    %v3931 = vunpack.c.h.b16 %v1068
    %v3932 = vunpack.c.l.b16 %v1069
    %v3933 = vunpack.c.h.b16 %v1069
    %v3934 = vunpack.c.l.b16 %v1070
    %v3935 = vunpack.c.h.b16 %v1070
    %v3936 = vunpack.c.l.b16 %v1071
    %v3937 = vunpack.c.h.b16 %v1071
    %v3938 = vunpack.c.l.b16 %v1072
    %v3939 = vunpack.c.h.b16 %v1072
    %v3940 = vunpack.c.l.b16 %v1073
    %v3941 = vunpack.c.h.b16 %v1073
    %v3942 = vunpack.c.l.b16 %v1074
    %v3943 = vunpack.c.h.b16 %v1074
    %v3944 = vunpack.c.l.b16 %v1075
    %v3945 = vunpack.c.h.b16 %v1075
    %v3946 = vunpack.c.l.b16 %v1076
    %v3947 = vunpack.c.h.b16 %v1076
    %v3948 = vunpack.c.l.b16 %v1077
    %v3949 = vunpack.c.h.b16 %v1077
    %v3950 = vunpack.c.l.b16 %v1078
    %v3951 = vunpack.c.h.b16 %v1078
    %v3952 = vunpack.c.l.b16 %v1079
    %v3953 = vunpack.c.h.b16 %v1079
    %v3954 = vunpack.c.l.b16 %v1080
    %v3955 = vunpack.c.h.b16 %v1080
    %v3956 = vunpack.c.l.b16 %v1081
    %v3957 = vunpack.c.h.b16 %v1081
    %v3958 = vunpack.c.l.b16 %v1082
    %v3959 = vunpack.c.h.b16 %v1082
    %v3960 = vunpack.c.l.b16 %v1083
    %v3961 = vunpack.c.h.b16 %v1083
    %v3962 = vunpack.c.l.b16 %v1084
    %v3963 = vunpack.c.h.b16 %v1084
    %v3964 = vunpack.c.l.b16 %v1085
    %v3965 = vunpack.c.h.b16 %v1085
    %v3966 = vunpack.c.l.b16 %v1086
    %v3967 = vunpack.c.h.b16 %v1086
    %v3968 = vunpack.c.l.b16 %v1087
    %v3969 = vunpack.c.h.b16 %v1087
    %v3970 = vunpack.c.l.b16 %v1088
    %v3971 = vunpack.c.h.b16 %v1088
    %v3972 = vunpack.c.l.b16 %v1089
    %v3973 = vunpack.c.h.b16 %v1089
    %v3974 = vunpack.c.l.b16 %v1090
    %v3975 = vunpack.c.h.b16 %v1090
    %v3976 = vunpack.c.l.b16 %v1091
    %v3977 = vunpack.c.h.b16 %v1091
    %v3978 = vunpack.c.l.b16 %v1092
    %v3979 = vunpack.c.h.b16 %v1092
    %v3980 = vunpack.c.l.b16 %v1093
    %v3981 = vunpack.c.h.b16 %v1093
    %v3982 = vunpack.c.l.b16 %v1094
    %v3983 = vunpack.c.h.b16 %v1094
    %v3984 = vunpack.c.l.b16 %v1095
    %v3985 = vunpack.c.h.b16 %v1095
    %v3986 = vunpack.c.l.b16 %v1096
    %v3987 = vunpack.c.h.b16 %v1096
    %v3988 = vunpack.c.l.b16 %v1097
    %v3989 = vunpack.c.h.b16 %v1097
    %v3990 = vunpack.c.l.b16 %v1098
    %v3991 = vunpack.c.h.b16 %v1098
    %v3992 = vunpack.c.l.b16 %v1099
    %v3993 = vunpack.c.h.b16 %v1099
    %v3994 = vunpack.c.l.b16 %v1100
    %v3995 = vunpack.c.h.b16 %v1100
    %v3996 = vunpack.c.l.b16 %v1101
    %v3997 = vunpack.c.h.b16 %v1101
    %v3998 = vunpack.c.l.b16 %v1102
    %v3999 = vunpack.c.h.b16 %v1102
    %v4000 = vunpack.c.l.b16 %v1103
    %v4001 = vunpack.c.h.b16 %v1103
    %v4002 = vunpack.c.l.b16 %v1104
    %v4003 = vunpack.c.h.b16 %v1104
    %v4004 = vunpack.c.l.b16 %v1105
    %v4005 = vunpack.c.h.b16 %v1105
    %v4006 = vunpack.c.l.b16 %v1106
    %v4007 = vunpack.c.h.b16 %v1106
    %v4008 = vunpack.c.l.b16 %v1107
    %v4009 = vunpack.c.h.b16 %v1107
    %v4010 = vunpack.c.l.b16 %v1108
    %v4011 = vunpack.c.h.b16 %v1108
    %v4012 = vunpack.c.l.b16 %v1109
    %v4013 = vunpack.c.h.b16 %v1109
    %v4014 = vunpack.c.l.b16 %v1110
    %v4015 = vunpack.c.h.b16 %v1110
    %v4016 = vunpack.c.l.b16 %v1111
    %v4017 = vunpack.c.h.b16 %v1111
    %v4018 = vunpack.c.l.b16 %v1112
    %v4019 = vunpack.c.h.b16 %v1112
    %v4020 = vunpack.c.l.b16 %v1113
    %v4021 = vunpack.c.h.b16 %v1113
    %v4022 = vunpack.c.l.b16 %v1114
    %v4023 = vunpack.c.h.b16 %v1114
    %v4024 = vunpack.c.l.b16 %v1115
    %v4025 = vunpack.c.h.b16 %v1115
    %v4026 = vunpack.c.l.b16 %v1116
    %v4027 = vunpack.c.h.b16 %v1116
    %v4028 = vunpack.c.l.b16 %v1117
    %v4029 = vunpack.c.h.b16 %v1117
    %v4030 = vunpack.c.l.b16 %v1118
    %v4031 = vunpack.c.h.b16 %v1118
    %v4032 = vunpack.c.l.b16 %v1119
    %v4033 = vunpack.c.h.b16 %v1119
    %v4034 = vunpack.c.l.b16 %v1120
    %v4035 = vunpack.c.h.b16 %v1120
    %v4036 = vunpack.c.l.b16 %v1121
    %v4037 = vunpack.c.h.b16 %v1121
    %v4038 = vunpack.c.l.b16 %v1122
    %v4039 = vunpack.c.h.b16 %v1122
    %v4040 = vunpack.c.l.b16 %v1123
    %v4041 = vunpack.c.h.b16 %v1123
    %v4042 = vunpack.c.l.b16 %v1124
    %v4043 = vunpack.c.h.b16 %v1124
    %v4044 = vunpack.c.l.b16 %v1125
    %v4045 = vunpack.c.h.b16 %v1125
    %v4046 = vunpack.c.l.b16 %v1126
    %v4047 = vunpack.c.h.b16 %v1126
    %v4048 = vunpack.c.l.b16 %v1127
    %v4049 = vunpack.c.h.b16 %v1127
    %v4050 = vunpack.c.l.b16 %v1128
    %v4051 = vunpack.c.h.b16 %v1128
    %v4052 = vunpack.c.l.b16 %v1129
    %v4053 = vunpack.c.h.b16 %v1129
    %v4054 = vunpack.c.l.b16 %v1130
    %v4055 = vunpack.c.h.b16 %v1130
    %v4056 = vunpack.c.l.b16 %v1131
    %v4057 = vunpack.c.h.b16 %v1131
    %v4058 = vunpack.c.l.b16 %v1132
    %v4059 = vunpack.c.h.b16 %v1132
    %v4060 = vunpack.c.l.b16 %v1133
    %v4061 = vunpack.c.h.b16 %v1133
    %v4062 = vunpack.c.l.b16 %v1134
    %v4063 = vunpack.c.h.b16 %v1134
    %v4064 = vunpack.c.l.b16 %v1135
    %v4065 = vunpack.c.h.b16 %v1135
    %v4066 = vunpack.c.l.b16 %v1136
    %v4067 = vunpack.c.h.b16 %v1136
    %v4068 = vunpack.c.l.b16 %v1137
    %v4069 = vunpack.c.h.b16 %v1137
    %v4070 = vunpack.c.l.b16 %v1138
    %v4071 = vunpack.c.h.b16 %v1138
    %v4072 = vunpack.c.l.b16 %v1139
    %v4073 = vunpack.c.h.b16 %v1139
    %v4074 = vunpack.c.l.b16 %v1140
    %v4075 = vunpack.c.h.b16 %v1140
    %v4076 = vunpack.c.l.b16 %v1141
    %v4077 = vunpack.c.h.b16 %v1141
    %v4078 = vunpack.c.l.b16 %v1142
    %v4079 = vunpack.c.h.b16 %v1142
    %v4080 = vunpack.c.l.b16 %v1143
    %v4081 = vunpack.c.h.b16 %v1143
    %v4082 = vunpack.c.l.b16 %v1144
    %v4083 = vunpack.c.h.b16 %v1144
    %v4084 = vunpack.c.l.b16 %v1145
    %v4085 = vunpack.c.h.b16 %v1145
    %v4086 = vunpack.c.l.b16 %v1146
    %v4087 = vunpack.c.h.b16 %v1146
    %v4088 = vunpack.c.l.b16 %v1147
    %v4089 = vunpack.c.h.b16 %v1147
    %v4090 = vunpack.c.l.b16 %v1148
    %v4091 = vunpack.c.h.b16 %v1148
    %v4092 = vunpack.c.l.b16 %v1149
    %v4093 = vunpack.c.h.b16 %v1149
    %v4094 = vunpack.c.l.b16 %v1150
    %v4095 = vunpack.c.h.b16 %v1150
    %v4096 = vunpack.c.l.b16 %v1151
    %v4097 = vunpack.c.h.b16 %v1151
    %v4098 = vunpack.c.l.b16 %v1152
    %v4099 = vunpack.c.h.b16 %v1152
    %v4100 = vunpack.c.l.b16 %v1153
    %v4101 = vunpack.c.h.b16 %v1153
    %v4102 = vunpack.c.l.b16 %v1154
    %v4103 = vunpack.c.h.b16 %v1154
    %v4104 = vunpack.c.l.b16 %v1155
    %v4105 = vunpack.c.h.b16 %v1155
    %v4106 = vunpack.c.l.b16 %v1156
    %v4107 = vunpack.c.h.b16 %v1156
    %v4108 = vunpack.c.l.b16 %v1157
    %v4109 = vunpack.c.h.b16 %v1157
    %v4110 = vunpack.c.l.b16 %v1158
    %v4111 = vunpack.c.h.b16 %v1158
    %v4112 = vunpack.c.l.b16 %v1159
    %v4113 = vunpack.c.h.b16 %v1159
    %v4114 = vunpack.c.l.b16 %v1160
    %v4115 = vunpack.c.h.b16 %v1160
    %v4116 = vunpack.c.l.b16 %v1161
    %v4117 = vunpack.c.h.b16 %v1161
    %v4118 = vunpack.c.l.b16 %v1162
    %v4119 = vunpack.c.h.b16 %v1162
    %v4120 = vunpack.c.l.b16 %v1163
    %v4121 = vunpack.c.h.b16 %v1163
    %v4122 = vunpack.c.l.b16 %v1164
    %v4123 = vunpack.c.h.b16 %v1164
    %v4124 = vunpack.c.l.b16 %v1165
    %v4125 = vunpack.c.h.b16 %v1165
    %v4126 = vunpack.c.l.b16 %v1166
    %v4127 = vunpack.c.h.b16 %v1166
    %v4128 = vunpack.c.l.b16 %v1167
    %v4129 = vunpack.c.h.b16 %v1167
    %v4130 = vunpack.c.l.b16 %v1168
    %v4131 = vunpack.c.h.b16 %v1168
    %v4132 = vunpack.c.l.b16 %v1169
    %v4133 = vunpack.c.h.b16 %v1169
    %v4134 = vunpack.c.l.b16 %v1170
    %v4135 = vunpack.c.h.b16 %v1170
    %v4136 = vunpack.c.l.b16 %v1171
    %v4137 = vunpack.c.h.b16 %v1171
    %v4138 = vunpack.c.l.b16 %v1172
    %v4139 = vunpack.c.h.b16 %v1172
    %v4140 = vunpack.c.l.b16 %v1173
    %v4141 = vunpack.c.h.b16 %v1173
    %v4142 = vunpack.c.l.b16 %v1174
    %v4143 = vunpack.c.h.b16 %v1174
    %v4144 = vunpack.c.l.b16 %v1175
    %v4145 = vunpack.c.h.b16 %v1175
    %v4146 = vunpack.c.l.b16 %v1176
    %v4147 = vunpack.c.h.b16 %v1176
    %v4148 = vunpack.c.l.b16 %v1177
    %v4149 = vunpack.c.h.b16 %v1177
    %v4150 = vunpack.c.l.b16 %v1178
    %v4151 = vunpack.c.h.b16 %v1178
    %v4152 = vunpack.c.l.b16 %v1179
    %v4153 = vunpack.c.h.b16 %v1179
    %v4154 = vunpack.c.l.b16 %v1180
    %v4155 = vunpack.c.h.b16 %v1180
    %v4156 = vunpack.c.l.b16 %v1181
    %v4157 = vunpack.c.h.b16 %v1181
    %v4158 = vunpack.c.l.b16 %v1182
    %v4159 = vunpack.c.h.b16 %v1182
    %v4160 = vunpack.c.l.b16 %v1183
    %v4161 = vunpack.c.h.b16 %v1183
    %v4162 = vunpack.c.l.b16 %v1184
    %v4163 = vunpack.c.h.b16 %v1184
    %v4164 = vunpack.c.l.b16 %v1185
    %v4165 = vunpack.c.h.b16 %v1185
    %v4166 = vunpack.c.l.b16 %v1186
    %v4167 = vunpack.c.h.b16 %v1186
    %v4168 = vunpack.c.l.b16 %v1187
    %v4169 = vunpack.c.h.b16 %v1187
    %v4170 = vunpack.c.l.b16 %v1188
    %v4171 = vunpack.c.h.b16 %v1188
    %v4172 = vunpack.c.l.b16 %v1189
    %v4173 = vunpack.c.h.b16 %v1189
    %v4174 = vunpack.c.l.b16 %v1190
    %v4175 = vunpack.c.h.b16 %v1190
    %v4176 = vunpack.c.l.b16 %v1191
    %v4177 = vunpack.c.h.b16 %v1191
    %v4178 = vunpack.c.l.b16 %v1192
    %v4179 = vunpack.c.h.b16 %v1192
    %v4180 = vunpack.c.l.b16 %v1193
    %v4181 = vunpack.c.h.b16 %v1193
    %v4182 = vunpack.c.l.b16 %v1194
    %v4183 = vunpack.c.h.b16 %v1194
    %v4184 = vunpack.c.l.b16 %v1195
    %v4185 = vunpack.c.h.b16 %v1195
    %v4186 = vunpack.c.l.b16 %v1196
    %v4187 = vunpack.c.h.b16 %v1196
    %v4188 = vunpack.c.l.b16 %v1197
    %v4189 = vunpack.c.h.b16 %v1197
    %v4190 = vunpack.c.l.b16 %v1198
    %v4191 = vunpack.c.h.b16 %v1198
    %v4192 = vunpack.c.l.b16 %v1199
    %v4193 = vunpack.c.h.b16 %v1199
    %v4194 = vunpack.c.l.b16 %v1200
    %v4195 = vunpack.c.h.b16 %v1200
    %v4196 = vunpack.c.l.b16 %v1201
    %v4197 = vunpack.c.h.b16 %v1201
    %v4198 = vunpack.c.l.b16 %v1202
    %v4199 = vunpack.c.h.b16 %v1202
    %v4200 = vunpack.c.l.b16 %v1203
    %v4201 = vunpack.c.h.b16 %v1203
    %v4202 = vunpack.c.l.b16 %v1204
    %v4203 = vunpack.c.h.b16 %v1204
    %v4204 = vunpack.c.l.b16 %v1205
    %v4205 = vunpack.c.h.b16 %v1205
    %v4206 = vunpack.c.l.b16 %v1206
    %v4207 = vunpack.c.h.b16 %v1206
    %v4208 = vunpack.c.l.b16 %v1207
    %v4209 = vunpack.c.h.b16 %v1207
    %v4210 = vunpack.c.l.b16 %v1208
    %v4211 = vunpack.c.h.b16 %v1208
    %v4212 = vunpack.c.l.b16 %v1209
    %v4213 = vunpack.c.h.b16 %v1209
    %v4214 = vunpack.c.l.b16 %v1210
    %v4215 = vunpack.c.h.b16 %v1210
    %v4216 = vunpack.c.l.b16 %v1211
    %v4217 = vunpack.c.h.b16 %v1211
    %v4218 = vunpack.c.l.b16 %v1212
    %v4219 = vunpack.c.h.b16 %v1212
    %v4220 = vunpack.c.l.b16 %v1213
    %v4221 = vunpack.c.h.b16 %v1213
    %v4222 = vunpack.c.l.b16 %v1214
    %v4223 = vunpack.c.h.b16 %v1214
    %v4224 = vunpack.c.l.b16 %v1215
    %v4225 = vunpack.c.h.b16 %v1215
    %v4226 = vunpack.c.l.b16 %v1216
    %v4227 = vunpack.c.h.b16 %v1216
    %v4228 = vunpack.c.l.b16 %v1217
    %v4229 = vunpack.c.h.b16 %v1217
    %v4230 = vunpack.c.l.b16 %v1218
    %v4231 = vunpack.c.h.b16 %v1218
    %v4232 = vunpack.c.l.b16 %v1219
    %v4233 = vunpack.c.h.b16 %v1219
    %v4234 = vunpack.c.l.b16 %v1220
    %v4235 = vunpack.c.h.b16 %v1220
    %v4236 = vunpack.c.l.b16 %v1221
    %v4237 = vunpack.c.h.b16 %v1221
    %v4238 = vunpack.c.l.b16 %v1222
    %v4239 = vunpack.c.h.b16 %v1222
    %v4240 = vunpack.c.l.b16 %v1223
    %v4241 = vunpack.c.h.b16 %v1223
    %v4242 = vunpack.c.l.b16 %v1224
    %v4243 = vunpack.c.h.b16 %v1224
    %v4244 = vunpack.c.l.b16 %v1225
    %v4245 = vunpack.c.h.b16 %v1225
    %v4246 = vunpack.c.l.b16 %v1226
    %v4247 = vunpack.c.h.b16 %v1226
    %v4248 = vunpack.c.l.b16 %v1227
    %v4249 = vunpack.c.h.b16 %v1227
    %v4250 = vunpack.c.l.b16 %v1228
    %v4251 = vunpack.c.h.b16 %v1228
    %v4252 = vunpack.c.l.b16 %v1229
    %v4253 = vunpack.c.h.b16 %v1229
    %v4254 = vunpack.c.l.b16 %v1230
    %v4255 = vunpack.c.h.b16 %v1230
    %v4256 = vunpack.c.l.b16 %v1231
    %v4257 = vunpack.c.h.b16 %v1231
    %v4258 = vunpack.c.l.b16 %v1232
    %v4259 = vunpack.c.h.b16 %v1232
    %v4260 = vunpack.c.l.b16 %v1233
    %v4261 = vunpack.c.h.b16 %v1233
    %v4262 = vunpack.c.l.b16 %v1234
    %v4263 = vunpack.c.h.b16 %v1234
    %v4264 = vunpack.c.l.b16 %v1235
    %v4265 = vunpack.c.h.b16 %v1235
    %v4266 = vunpack.c.l.b16 %v1236
    %v4267 = vunpack.c.h.b16 %v1236
    %v4268 = vunpack.c.l.b16 %v1237
    %v4269 = vunpack.c.h.b16 %v1237
    %v4270 = vunpack.c.l.b16 %v1238
    %v4271 = vunpack.c.h.b16 %v1238
    %v4272 = vunpack.c.l.b16 %v1239
    %v4273 = vunpack.c.h.b16 %v1239
    %v4274 = vunpack.c.l.b16 %v1240
    %v4275 = vunpack.c.h.b16 %v1240
    %v4276 = vunpack.c.l.b16 %v1241
    %v4277 = vunpack.c.h.b16 %v1241
    %v4278 = vunpack.c.l.b16 %v1242
    %v4279 = vunpack.c.h.b16 %v1242
    %v4280 = vunpack.c.l.b16 %v1243
    %v4281 = vunpack.c.h.b16 %v1243
    %v4282 = vunpack.c.l.b16 %v1244
    %v4283 = vunpack.c.h.b16 %v1244
    %v4284 = vunpack.c.l.b16 %v1245
    %v4285 = vunpack.c.h.b16 %v1245
    %v4286 = vunpack.c.l.b16 %v1246
    %v4287 = vunpack.c.h.b16 %v1246
    %v4288 = vunpack.c.l.b16 %v1247
    %v4289 = vunpack.c.h.b16 %v1247
    %v4290 = vunpack.c.l.b16 %v1248
    %v4291 = vunpack.c.h.b16 %v1248
    %v4292 = vunpack.c.l.b16 %v1249
    %v4293 = vunpack.c.h.b16 %v1249
    %v4294 = vunpack.c.l.b16 %v1250
    %v4295 = vunpack.c.h.b16 %v1250
    %v4296 = vunpack.c.l.b16 %v1251
    %v4297 = vunpack.c.h.b16 %v1251
    %v4298 = vunpack.c.l.b16 %v1252
    %v4299 = vunpack.c.h.b16 %v1252
    %v4300 = vunpack.c.l.b16 %v1253
    %v4301 = vunpack.c.h.b16 %v1253
    %v4302 = vunpack.c.l.b16 %v1254
    %v4303 = vunpack.c.h.b16 %v1254
    %v4304 = vunpack.c.l.b16 %v1255
    %v4305 = vunpack.c.h.b16 %v1255
    %v4306 = vunpack.c.l.b16 %v1256
    %v4307 = vunpack.c.h.b16 %v1256
    %v4308 = vunpack.c.l.b16 %v1257
    %v4309 = vunpack.c.h.b16 %v1257
    %v4310 = vunpack.c.l.b16 %v1258
    %v4311 = vunpack.c.h.b16 %v1258
    %v4312 = vunpack.c.l.b16 %v1259
    %v4313 = vunpack.c.h.b16 %v1259
    %v4314 = vunpack.c.l.b16 %v1260
    %v4315 = vunpack.c.h.b16 %v1260
    %v4316 = vunpack.c.l.b16 %v1261
    %v4317 = vunpack.c.h.b16 %v1261
    %v4318 = vunpack.c.l.b16 %v1262
    %v4319 = vunpack.c.h.b16 %v1262
    %v4320 = vunpack.c.l.b16 %v1263
    %v4321 = vunpack.c.h.b16 %v1263
    %v4322 = vunpack.c.l.b16 %v1264
    %v4323 = vunpack.c.h.b16 %v1264
    %v4324 = vunpack.c.l.b16 %v1265
    %v4325 = vunpack.c.h.b16 %v1265
    %v4326 = vunpack.c.l.b16 %v1266
    %v4327 = vunpack.c.h.b16 %v1266
    %v4328 = vunpack.c.l.b16 %v1267
    %v4329 = vunpack.c.h.b16 %v1267
    %v4330 = vunpack.c.l.b16 %v1268
    %v4331 = vunpack.c.h.b16 %v1268
    %v4332 = vunpack.c.l.b16 %v1269
    %v4333 = vunpack.c.h.b16 %v1269
    %v4334 = vunpack.c.l.b16 %v1270
    %v4335 = vunpack.c.h.b16 %v1270
    %v4336 = vunpack.c.l.b16 %v1271
    %v4337 = vunpack.c.h.b16 %v1271
    %v4338 = vunpack.c.l.b16 %v1272
    %v4339 = vunpack.c.h.b16 %v1272
    %v4340 = vunpack.c.l.b16 %v1273
    %v4341 = vunpack.c.h.b16 %v1273
    %v4342 = vunpack.c.l.b16 %v1274
    %v4343 = vunpack.c.h.b16 %v1274
    %v4344 = vunpack.c.l.b16 %v1275
    %v4345 = vunpack.c.h.b16 %v1275
    %v4346 = vunpack.c.l.b16 %v1276
    %v4347 = vunpack.c.h.b16 %v1276
    %v4348 = vunpack.c.l.b16 %v1277
    %v4349 = vunpack.c.h.b16 %v1277
    %v4350 = vunpack.c.l.b16 %v1278
    %v4351 = vunpack.c.h.b16 %v1278
    %v4352 = vunpack.c.l.b16 %v1279
    %v4353 = vunpack.c.h.b16 %v1279
    %v4354 = vunpack.c.l.b16 %v1280
    %v4355 = vunpack.c.h.b16 %v1280
    %v4356 = vunpack.c.l.b16 %v1281
    %v4357 = vunpack.c.h.b16 %v1281
    %v4358 = vunpack.c.l.b16 %v1282
    %v4359 = vunpack.c.h.b16 %v1282
    %v4360 = vunpack.c.l.b16 %v1283
    %v4361 = vunpack.c.h.b16 %v1283
    %v4362 = vunpack.c.l.b16 %v1284
    %v4363 = vunpack.c.h.b16 %v1284
    %v4364 = vunpack.c.l.b16 %v1285
    %v4365 = vunpack.c.h.b16 %v1285
    %v4366 = vunpack.c.l.b16 %v1286
    %v4367 = vunpack.c.h.b16 %v1286
    %v4368 = vunpack.c.l.b16 %v1287
    %v4369 = vunpack.c.h.b16 %v1287
    %v4370 = vunpack.c.l.b16 %v1288
    %v4371 = vunpack.c.h.b16 %v1288
    %v4372 = vunpack.c.l.b16 %v1289
    %v4373 = vunpack.c.h.b16 %v1289
    %v4374 = vunpack.c.l.b16 %v1290
    %v4375 = vunpack.c.h.b16 %v1290
    %v4376 = vunpack.c.l.b16 %v1291
    %v4377 = vunpack.c.h.b16 %v1291
    %v4378 = vunpack.c.l.b16 %v1292
    %v4379 = vunpack.c.h.b16 %v1292
    %v4380 = vunpack.c.l.b16 %v1293
    %v4381 = vunpack.c.h.b16 %v1293
    %v4382 = vunpack.c.l.b16 %v1294
    %v4383 = vunpack.c.h.b16 %v1294
    %v4384 = vunpack.c.l.b16 %v1295
    %v4385 = vunpack.c.h.b16 %v1295
    %v4386 = vunpack.c.l.b16 %v1296
    %v4387 = vunpack.c.h.b16 %v1296
    %v4388 = vunpack.c.l.b16 %v1297
    %v4389 = vunpack.c.h.b16 %v1297
    %v4390 = vunpack.c.l.b16 %v1298
    %v4391 = vunpack.c.h.b16 %v1298
    %v4392 = vunpack.c.l.b16 %v1299
    %v4393 = vunpack.c.h.b16 %v1299
    %v4394 = vunpack.c.l.b16 %v1300
    %v4395 = vunpack.c.h.b16 %v1300
    %v4396 = vunpack.c.l.b16 %v1301
    %v4397 = vunpack.c.h.b16 %v1301
    %v4398 = vunpack.c.l.b16 %v1302
    %v4399 = vunpack.c.h.b16 %v1302
    %v4400 = vunpack.c.l.b16 %v1303
    %v4401 = vunpack.c.h.b16 %v1303
    %v4402 = vunpack.c.l.b16 %v1304
    %v4403 = vunpack.c.h.b16 %v1304
    %v4404 = vunpack.c.l.b16 %v1305
    %v4405 = vunpack.c.h.b16 %v1305
    %v4406 = vunpack.c.l.b16 %v1306
    %v4407 = vunpack.c.h.b16 %v1306
    %v4408 = vunpack.c.l.b16 %v1307
    %v4409 = vunpack.c.h.b16 %v1307
    %v4410 = vunpack.c.l.b16 %v1308
    %v4411 = vunpack.c.h.b16 %v1308
    %v4412 = vunpack.c.l.b16 %v1309
    %v4413 = vunpack.c.h.b16 %v1309
    %v4414 = vunpack.c.l.b16 %v1310
    %v4415 = vunpack.c.h.b16 %v1310
    %v4416 = vunpack.c.l.b16 %v1311
    %v4417 = vunpack.c.h.b16 %v1311
    %v4418 = vunpack.c.l.b16 %v1312
    %v4419 = vunpack.c.h.b16 %v1312
    %v4420 = vunpack.c.l.b16 %v1313
    %v4421 = vunpack.c.h.b16 %v1313
    %v4422 = vunpack.c.l.b16 %v1314
    %v4423 = vunpack.c.h.b16 %v1314
    %v4424 = vunpack.c.l.b16 %v1315
    %v4425 = vunpack.c.h.b16 %v1315
    %v4426 = vunpack.c.l.b16 %v1316
    %v4427 = vunpack.c.h.b16 %v1316
    %v4428 = vunpack.c.l.b16 %v1317
    %v4429 = vunpack.c.h.b16 %v1317
    %v4430 = vunpack.c.l.b16 %v1318
    %v4431 = vunpack.c.h.b16 %v1318
    %v4432 = vunpack.c.l.b16 %v1319
    %v4433 = vunpack.c.h.b16 %v1319
    %v4434 = vpack.c.b16 %v2394, %v2386
    %v4435 = vpack.c.b16 %v2395, %v2387
    %v4436 = vpack.c.b16 %v2396, %v2388
    %v4437 = vpack.c.b16 %v2397, %v2389
    %v4438 = vpack.c.b16 %v2398, %v2390
    %v4439 = vpack.c.b16 %v2399, %v2391
    %v4440 = vpack.c.b16 %v2400, %v2392
    %v4441 = vpack.c.b16 %v2401, %v2393
    %v4442 = vpack.c.b16 %v2410, %v2402
    %v4443 = vpack.c.b16 %v2411, %v2403
    %v4444 = vpack.c.b16 %v2412, %v2404
    %v4445 = vpack.c.b16 %v2413, %v2405
    %v4446 = vpack.c.b16 %v2414, %v2406
    %v4447 = vpack.c.b16 %v2415, %v2407
    %v4448 = vpack.c.b16 %v2416, %v2408
    %v4449 = vpack.c.b16 %v2417, %v2409
    %v4450 = vpack.c.b16 %v2426, %v2418
    %v4451 = vpack.c.b16 %v2427, %v2419
    %v4452 = vpack.c.b16 %v2428, %v2420
    %v4453 = vpack.c.b16 %v2429, %v2421
    %v4454 = vpack.c.b16 %v2430, %v2422
    %v4455 = vpack.c.b16 %v2431, %v2423
    %v4456 = vpack.c.b16 %v2432, %v2424
    %v4457 = vpack.c.b16 %v2433, %v2425
    %v4458 = vpack.c.b16 %v2442, %v2434
    %v4459 = vpack.c.b16 %v2443, %v2435
    %v4460 = vpack.c.b16 %v2444, %v2436
    %v4461 = vpack.c.b16 %v2445, %v2437
    %v4462 = vpack.c.b16 %v2446, %v2438
    %v4463 = vpack.c.b16 %v2447, %v2439
    %v4464 = vpack.c.b16 %v2448, %v2440
    %v4465 = vpack.c.b16 %v2449, %v2441
    %v4466 = vpack.c.b16 %v2458, %v2450
    %v4467 = vpack.c.b16 %v2459, %v2451
    %v4468 = vpack.c.b16 %v2460, %v2452
    %v4469 = vpack.c.b16 %v2461, %v2453
    %v4470 = vpack.c.b16 %v2462, %v2454
    %v4471 = vpack.c.b16 %v2463, %v2455
    %v4472 = vpack.c.b16 %v2464, %v2456
    %v4473 = vpack.c.b16 %v2465, %v2457
    %v4474 = vpack.c.b16 %v2474, %v2466
    %v4475 = vpack.c.b16 %v2475, %v2467
    %v4476 = vpack.c.b16 %v2476, %v2468
    %v4477 = vpack.c.b16 %v2477, %v2469
    %v4478 = vpack.c.b16 %v2478, %v2470
    %v4479 = vpack.c.b16 %v2479, %v2471
    %v4480 = vpack.c.b16 %v2480, %v2472
    %v4481 = vpack.c.b16 %v2481, %v2473
    %v4482 = vpack.c.b16 %v2490, %v2482
    %v4483 = vpack.c.b16 %v2491, %v2483
    %v4484 = vpack.c.b16 %v2492, %v2484
    %v4485 = vpack.c.b16 %v2493, %v2485
    %v4486 = vpack.c.b16 %v2494, %v2486
    %v4487 = vpack.c.b16 %v2495, %v2487
    %v4488 = vpack.c.b16 %v2496, %v2488
    %v4489 = vpack.c.b16 %v2497, %v2489
    %v4490 = vpack.c.b16 %v2506, %v2498
    %v4491 = vpack.c.b16 %v2507, %v2499
    %v4492 = vpack.c.b16 %v2508, %v2500
    %v4493 = vpack.c.b16 %v2509, %v2501
    %v4494 = vpack.c.b16 %v2510, %v2502
    %v4495 = vpack.c.b16 %v2511, %v2503
    %v4496 = vpack.c.b16 %v2512, %v2504
    %v4497 = vpack.c.b16 %v2513, %v2505
    %v4498 = vpack.c.b16 %v2522, %v2514
    %v4499 = vpack.c.b16 %v2523, %v2515
    %v4500 = vpack.c.b16 %v2524, %v2516
    %v4501 = vpack.c.b16 %v2525, %v2517
    %v4502 = vpack.c.b16 %v2526, %v2518
    %v4503 = vpack.c.b16 %v2527, %v2519
    %v4504 = vpack.c.b16 %v2528, %v2520
    %v4505 = vpack.c.b16 %v2529, %v2521
    %v4506 = vpack.c.b16 %v2538, %v2530
    %v4507 = vpack.c.b16 %v2539, %v2531
    %v4508 = vpack.c.b16 %v2540, %v2532
    %v4509 = vpack.c.b16 %v2541, %v2533
    %v4510 = vpack.c.b16 %v2542, %v2534
    %v4511 = vpack.c.b16 %v2543, %v2535
    %v4512 = vpack.c.b16 %v2544, %v2536
    %v4513 = vpack.c.b16 %v2545, %v2537
    %v4514 = vpack.c.b16 %v2554, %v2546
    %v4515 = vpack.c.b16 %v2555, %v2547
    %v4516 = vpack.c.b16 %v2556, %v2548
    %v4517 = vpack.c.b16 %v2557, %v2549
    %v4518 = vpack.c.b16 %v2558, %v2550
    %v4519 = vpack.c.b16 %v2559, %v2551
    %v4520 = vpack.c.b16 %v2560, %v2552
    %v4521 = vpack.c.b16 %v2561, %v2553
    %v4522 = vpack.c.b16 %v2570, %v2562
    %v4523 = vpack.c.b16 %v2571, %v2563
    %v4524 = vpack.c.b16 %v2572, %v2564
    %v4525 = vpack.c.b16 %v2573, %v2565
    %v4526 = vpack.c.b16 %v2574, %v2566
    %v4527 = vpack.c.b16 %v2575, %v2567
    %v4528 = vpack.c.b16 %v2576, %v2568
    %v4529 = vpack.c.b16 %v2577, %v2569
    %v4530 = vpack.c.b16 %v2586, %v2578
    %v4531 = vpack.c.b16 %v2587, %v2579
    %v4532 = vpack.c.b16 %v2588, %v2580
    %v4533 = vpack.c.b16 %v2589, %v2581
    %v4534 = vpack.c.b16 %v2590, %v2582
    %v4535 = vpack.c.b16 %v2591, %v2583
    %v4536 = vpack.c.b16 %v2592, %v2584
    %v4537 = vpack.c.b16 %v2593, %v2585
    %v4538 = vpack.c.b16 %v2602, %v2594
    %v4539 = vpack.c.b16 %v2603, %v2595
    %v4540 = vpack.c.b16 %v2604, %v2596
    %v4541 = vpack.c.b16 %v2605, %v2597
    %v4542 = vpack.c.b16 %v2606, %v2598
    %v4543 = vpack.c.b16 %v2607, %v2599
    %v4544 = vpack.c.b16 %v2608, %v2600
    %v4545 = vpack.c.b16 %v2609, %v2601
    %v4546 = vpack.c.b16 %v2618, %v2610
    %v4547 = vpack.c.b16 %v2619, %v2611
    %v4548 = vpack.c.b16 %v2620, %v2612
    %v4549 = vpack.c.b16 %v2621, %v2613
    %v4550 = vpack.c.b16 %v2622, %v2614
    %v4551 = vpack.c.b16 %v2623, %v2615
    %v4552 = vpack.c.b16 %v2624, %v2616
    %v4553 = vpack.c.b16 %v2625, %v2617
    %v4554 = vpack.c.b16 %v2634, %v2626
    %v4555 = vpack.c.b16 %v2635, %v2627
    %v4556 = vpack.c.b16 %v2636, %v2628
    %v4557 = vpack.c.b16 %v2637, %v2629
    %v4558 = vpack.c.b16 %v2638, %v2630
    %v4559 = vpack.c.b16 %v2639, %v2631
    %v4560 = vpack.c.b16 %v2640, %v2632
    %v4561 = vpack.c.b16 %v2641, %v2633
    %v4562 = vpack.c.b16 %v2650, %v2642
    %v4563 = vpack.c.b16 %v2651, %v2643
    %v4564 = vpack.c.b16 %v2652, %v2644
    %v4565 = vpack.c.b16 %v2653, %v2645
    %v4566 = vpack.c.b16 %v2654, %v2646
    %v4567 = vpack.c.b16 %v2655, %v2647
    %v4568 = vpack.c.b16 %v2656, %v2648
    %v4569 = vpack.c.b16 %v2657, %v2649
    %v4570 = vpack.c.b16 %v2666, %v2658
    %v4571 = vpack.c.b16 %v2667, %v2659
    %v4572 = vpack.c.b16 %v2668, %v2660
    %v4573 = vpack.c.b16 %v2669, %v2661
    %v4574 = vpack.c.b16 %v2670, %v2662
    %v4575 = vpack.c.b16 %v2671, %v2663
    %v4576 = vpack.c.b16 %v2672, %v2664
    %v4577 = vpack.c.b16 %v2673, %v2665
    %v4578 = vpack.c.b16 %v2682, %v2674
    %v4579 = vpack.c.b16 %v2683, %v2675
    %v4580 = vpack.c.b16 %v2684, %v2676
    %v4581 = vpack.c.b16 %v2685, %v2677
    %v4582 = vpack.c.b16 %v2686, %v2678
    %v4583 = vpack.c.b16 %v2687, %v2679
    %v4584 = vpack.c.b16 %v2688, %v2680
    %v4585 = vpack.c.b16 %v2689, %v2681
    %v4586 = vpack.c.b16 %v2698, %v2690
    %v4587 = vpack.c.b16 %v2699, %v2691
    %v4588 = vpack.c.b16 %v2700, %v2692
    %v4589 = vpack.c.b16 %v2701, %v2693
    %v4590 = vpack.c.b16 %v2702, %v2694
    %v4591 = vpack.c.b16 %v2703, %v2695
    %v4592 = vpack.c.b16 %v2704, %v2696
    %v4593 = vpack.c.b16 %v2705, %v2697
    %v4594 = vpack.c.b16 %v2714, %v2706
    %v4595 = vpack.c.b16 %v2715, %v2707
    %v4596 = vpack.c.b16 %v2716, %v2708
    %v4597 = vpack.c.b16 %v2717, %v2709
    %v4598 = vpack.c.b16 %v2718, %v2710
    %v4599 = vpack.c.b16 %v2719, %v2711
    %v4600 = vpack.c.b16 %v2720, %v2712
    %v4601 = vpack.c.b16 %v2721, %v2713
    %v4602 = vpack.c.b16 %v2730, %v2722
    %v4603 = vpack.c.b16 %v2731, %v2723
    %v4604 = vpack.c.b16 %v2732, %v2724
    %v4605 = vpack.c.b16 %v2733, %v2725
    %v4606 = vpack.c.b16 %v2734, %v2726
    %v4607 = vpack.c.b16 %v2735, %v2727
    %v4608 = vpack.c.b16 %v2736, %v2728
    %v4609 = vpack.c.b16 %v2737, %v2729
    %v4610 = vpack.c.b16 %v2746, %v2738
    %v4611 = vpack.c.b16 %v2747, %v2739
    %v4612 = vpack.c.b16 %v2748, %v2740
    %v4613 = vpack.c.b16 %v2749, %v2741
    %v4614 = vpack.c.b16 %v2750, %v2742
    %v4615 = vpack.c.b16 %v2751, %v2743
    %v4616 = vpack.c.b16 %v2752, %v2744
    %v4617 = vpack.c.b16 %v2753, %v2745
    %v4618 = vpack.c.b16 %v2762, %v2754
    %v4619 = vpack.c.b16 %v2763, %v2755
    %v4620 = vpack.c.b16 %v2764, %v2756
    %v4621 = vpack.c.b16 %v2765, %v2757
    %v4622 = vpack.c.b16 %v2766, %v2758
    %v4623 = vpack.c.b16 %v2767, %v2759
    %v4624 = vpack.c.b16 %v2768, %v2760
    %v4625 = vpack.c.b16 %v2769, %v2761
    %v4626 = vpack.c.b16 %v2778, %v2770
    %v4627 = vpack.c.b16 %v2779, %v2771
    %v4628 = vpack.c.b16 %v2780, %v2772
    %v4629 = vpack.c.b16 %v2781, %v2773
    %v4630 = vpack.c.b16 %v2782, %v2774
    %v4631 = vpack.c.b16 %v2783, %v2775
    %v4632 = vpack.c.b16 %v2784, %v2776
    %v4633 = vpack.c.b16 %v2785, %v2777
    %v4634 = vpack.c.b16 %v2794, %v2786
    %v4635 = vpack.c.b16 %v2795, %v2787
    %v4636 = vpack.c.b16 %v2796, %v2788
    %v4637 = vpack.c.b16 %v2797, %v2789
    %v4638 = vpack.c.b16 %v2798, %v2790
    %v4639 = vpack.c.b16 %v2799, %v2791
    %v4640 = vpack.c.b16 %v2800, %v2792
    %v4641 = vpack.c.b16 %v2801, %v2793
    %v4642 = vpack.c.b16 %v2810, %v2802
    %v4643 = vpack.c.b16 %v2811, %v2803
    %v4644 = vpack.c.b16 %v2812, %v2804
    %v4645 = vpack.c.b16 %v2813, %v2805
    %v4646 = vpack.c.b16 %v2814, %v2806
    %v4647 = vpack.c.b16 %v2815, %v2807
    %v4648 = vpack.c.b16 %v2816, %v2808
    %v4649 = vpack.c.b16 %v2817, %v2809
    %v4650 = vpack.c.b16 %v2826, %v2818
    %v4651 = vpack.c.b16 %v2827, %v2819
    %v4652 = vpack.c.b16 %v2828, %v2820
    %v4653 = vpack.c.b16 %v2829, %v2821
    %v4654 = vpack.c.b16 %v2830, %v2822
    %v4655 = vpack.c.b16 %v2831, %v2823
    %v4656 = vpack.c.b16 %v2832, %v2824
    %v4657 = vpack.c.b16 %v2833, %v2825
    %v4658 = vpack.c.b16 %v2842, %v2834
    %v4659 = vpack.c.b16 %v2843, %v2835
    %v4660 = vpack.c.b16 %v2844, %v2836
    %v4661 = vpack.c.b16 %v2845, %v2837
    %v4662 = vpack.c.b16 %v2846, %v2838
    %v4663 = vpack.c.b16 %v2847, %v2839
    %v4664 = vpack.c.b16 %v2848, %v2840
    %v4665 = vpack.c.b16 %v2849, %v2841
    %v4666 = vpack.c.b16 %v2858, %v2850
    %v4667 = vpack.c.b16 %v2859, %v2851
    %v4668 = vpack.c.b16 %v2860, %v2852
    %v4669 = vpack.c.b16 %v2861, %v2853
    %v4670 = vpack.c.b16 %v2862, %v2854
    %v4671 = vpack.c.b16 %v2863, %v2855
    %v4672 = vpack.c.b16 %v2864, %v2856
    %v4673 = vpack.c.b16 %v2865, %v2857
    %v4674 = vpack.c.b16 %v2874, %v2866
    %v4675 = vpack.c.b16 %v2875, %v2867
    %v4676 = vpack.c.b16 %v2876, %v2868
    %v4677 = vpack.c.b16 %v2877, %v2869
    %v4678 = vpack.c.b16 %v2878, %v2870
    %v4679 = vpack.c.b16 %v2879, %v2871
    %v4680 = vpack.c.b16 %v2880, %v2872
    %v4681 = vpack.c.b16 %v2881, %v2873
    %v4682 = vpack.c.b16 %v2890, %v2882
    %v4683 = vpack.c.b16 %v2891, %v2883
    %v4684 = vpack.c.b16 %v2892, %v2884
    %v4685 = vpack.c.b16 %v2893, %v2885
    %v4686 = vpack.c.b16 %v2894, %v2886
    %v4687 = vpack.c.b16 %v2895, %v2887
    %v4688 = vpack.c.b16 %v2896, %v2888
    %v4689 = vpack.c.b16 %v2897, %v2889
    %v4690 = vpack.c.b16 %v2906, %v2898
    %v4691 = vpack.c.b16 %v2907, %v2899
    %v4692 = vpack.c.b16 %v2908, %v2900
    %v4693 = vpack.c.b16 %v2909, %v2901
    %v4694 = vpack.c.b16 %v2910, %v2902
    %v4695 = vpack.c.b16 %v2911, %v2903
    %v4696 = vpack.c.b16 %v2912, %v2904
    %v4697 = vpack.c.b16 %v2913, %v2905
    %v4698 = vpack.c.b16 %v2922, %v2914
    %v4699 = vpack.c.b16 %v2923, %v2915
    %v4700 = vpack.c.b16 %v2924, %v2916
    %v4701 = vpack.c.b16 %v2925, %v2917
    %v4702 = vpack.c.b16 %v2926, %v2918
    %v4703 = vpack.c.b16 %v2927, %v2919
    %v4704 = vpack.c.b16 %v2928, %v2920
    %v4705 = vpack.c.b16 %v2929, %v2921
    %v4706 = vpack.c.b16 %v2938, %v2930
    %v4707 = vpack.c.b16 %v2939, %v2931
    %v4708 = vpack.c.b16 %v2940, %v2932
    %v4709 = vpack.c.b16 %v2941, %v2933
    %v4710 = vpack.c.b16 %v2942, %v2934
    %v4711 = vpack.c.b16 %v2943, %v2935
    %v4712 = vpack.c.b16 %v2944, %v2936
    %v4713 = vpack.c.b16 %v2945, %v2937
    %v4714 = vpack.c.b16 %v2954, %v2946
    %v4715 = vpack.c.b16 %v2955, %v2947
    %v4716 = vpack.c.b16 %v2956, %v2948
    %v4717 = vpack.c.b16 %v2957, %v2949
    %v4718 = vpack.c.b16 %v2958, %v2950
    %v4719 = vpack.c.b16 %v2959, %v2951
    %v4720 = vpack.c.b16 %v2960, %v2952
    %v4721 = vpack.c.b16 %v2961, %v2953
    %v4722 = vpack.c.b16 %v2970, %v2962
    %v4723 = vpack.c.b16 %v2971, %v2963
    %v4724 = vpack.c.b16 %v2972, %v2964
    %v4725 = vpack.c.b16 %v2973, %v2965
    %v4726 = vpack.c.b16 %v2974, %v2966
    %v4727 = vpack.c.b16 %v2975, %v2967
    %v4728 = vpack.c.b16 %v2976, %v2968
    %v4729 = vpack.c.b16 %v2977, %v2969
    %v4730 = vpack.c.b16 %v2986, %v2978
    %v4731 = vpack.c.b16 %v2987, %v2979
    %v4732 = vpack.c.b16 %v2988, %v2980
    %v4733 = vpack.c.b16 %v2989, %v2981
    %v4734 = vpack.c.b16 %v2990, %v2982
    %v4735 = vpack.c.b16 %v2991, %v2983
    %v4736 = vpack.c.b16 %v2992, %v2984
    %v4737 = vpack.c.b16 %v2993, %v2985
    %v4738 = vpack.c.b16 %v3002, %v2994
    %v4739 = vpack.c.b16 %v3003, %v2995
    %v4740 = vpack.c.b16 %v3004, %v2996
    %v4741 = vpack.c.b16 %v3005, %v2997
    %v4742 = vpack.c.b16 %v3006, %v2998
    %v4743 = vpack.c.b16 %v3007, %v2999
    %v4744 = vpack.c.b16 %v3008, %v3000
    %v4745 = vpack.c.b16 %v3009, %v3001
    %v4746 = vpack.c.b16 %v3018, %v3010
    %v4747 = vpack.c.b16 %v3019, %v3011
    %v4748 = vpack.c.b16 %v3020, %v3012
    %v4749 = vpack.c.b16 %v3021, %v3013
    %v4750 = vpack.c.b16 %v3022, %v3014
    %v4751 = vpack.c.b16 %v3023, %v3015
    %v4752 = vpack.c.b16 %v3024, %v3016
    %v4753 = vpack.c.b16 %v3025, %v3017
    %v4754 = vpack.c.b16 %v3034, %v3026
    %v4755 = vpack.c.b16 %v3035, %v3027
    %v4756 = vpack.c.b16 %v3036, %v3028
    %v4757 = vpack.c.b16 %v3037, %v3029
    %v4758 = vpack.c.b16 %v3038, %v3030
    %v4759 = vpack.c.b16 %v3039, %v3031
    %v4760 = vpack.c.b16 %v3040, %v3032
    %v4761 = vpack.c.b16 %v3041, %v3033
    %v4762 = vpack.c.b16 %v3050, %v3042
    %v4763 = vpack.c.b16 %v3051, %v3043
    %v4764 = vpack.c.b16 %v3052, %v3044
    %v4765 = vpack.c.b16 %v3053, %v3045
    %v4766 = vpack.c.b16 %v3054, %v3046
    %v4767 = vpack.c.b16 %v3055, %v3047
    %v4768 = vpack.c.b16 %v3056, %v3048
    %v4769 = vpack.c.b16 %v3057, %v3049
    %v4770 = vpack.c.b16 %v3066, %v3058
    %v4771 = vpack.c.b16 %v3067, %v3059
    %v4772 = vpack.c.b16 %v3068, %v3060
    %v4773 = vpack.c.b16 %v3069, %v3061
    %v4774 = vpack.c.b16 %v3070, %v3062
    %v4775 = vpack.c.b16 %v3071, %v3063
    %v4776 = vpack.c.b16 %v3072, %v3064
    %v4777 = vpack.c.b16 %v3073, %v3065
    %v4778 = vpack.c.b16 %v3082, %v3074
    %v4779 = vpack.c.b16 %v3083, %v3075
    %v4780 = vpack.c.b16 %v3084, %v3076
    %v4781 = vpack.c.b16 %v3085, %v3077
    %v4782 = vpack.c.b16 %v3086, %v3078
    %v4783 = vpack.c.b16 %v3087, %v3079
    %v4784 = vpack.c.b16 %v3088, %v3080
    %v4785 = vpack.c.b16 %v3089, %v3081
    %v4786 = vpack.c.b16 %v3098, %v3090
    %v4787 = vpack.c.b16 %v3099, %v3091
    %v4788 = vpack.c.b16 %v3100, %v3092
    %v4789 = vpack.c.b16 %v3101, %v3093
    %v4790 = vpack.c.b16 %v3102, %v3094
    %v4791 = vpack.c.b16 %v3103, %v3095
    %v4792 = vpack.c.b16 %v3104, %v3096
    %v4793 = vpack.c.b16 %v3105, %v3097
    %v4794 = vpack.c.b16 %v3114, %v3106
    %v4795 = vpack.c.b16 %v3115, %v3107
    %v4796 = vpack.c.b16 %v3116, %v3108
    %v4797 = vpack.c.b16 %v3117, %v3109
    %v4798 = vpack.c.b16 %v3118, %v3110
    %v4799 = vpack.c.b16 %v3119, %v3111
    %v4800 = vpack.c.b16 %v3120, %v3112
    %v4801 = vpack.c.b16 %v3121, %v3113
    %v4802 = vpack.c.b16 %v3130, %v3122
    %v4803 = vpack.c.b16 %v3131, %v3123
    %v4804 = vpack.c.b16 %v3132, %v3124
    %v4805 = vpack.c.b16 %v3133, %v3125
    %v4806 = vpack.c.b16 %v3134, %v3126
    %v4807 = vpack.c.b16 %v3135, %v3127
    %v4808 = vpack.c.b16 %v3136, %v3128
    %v4809 = vpack.c.b16 %v3137, %v3129
    %v4810 = vpack.c.b16 %v3146, %v3138
    %v4811 = vpack.c.b16 %v3147, %v3139
    %v4812 = vpack.c.b16 %v3148, %v3140
    %v4813 = vpack.c.b16 %v3149, %v3141
    %v4814 = vpack.c.b16 %v3150, %v3142
    %v4815 = vpack.c.b16 %v3151, %v3143
    %v4816 = vpack.c.b16 %v3152, %v3144
    %v4817 = vpack.c.b16 %v3153, %v3145
    %v4818 = vpack.c.b16 %v3162, %v3154
    %v4819 = vpack.c.b16 %v3163, %v3155
    %v4820 = vpack.c.b16 %v3164, %v3156
    %v4821 = vpack.c.b16 %v3165, %v3157
    %v4822 = vpack.c.b16 %v3166, %v3158
    %v4823 = vpack.c.b16 %v3167, %v3159
    %v4824 = vpack.c.b16 %v3168, %v3160
    %v4825 = vpack.c.b16 %v3169, %v3161
    %v4826 = vpack.c.b16 %v3178, %v3170
    %v4827 = vpack.c.b16 %v3179, %v3171
    %v4828 = vpack.c.b16 %v3180, %v3172
    %v4829 = vpack.c.b16 %v3181, %v3173
    %v4830 = vpack.c.b16 %v3182, %v3174
    %v4831 = vpack.c.b16 %v3183, %v3175
    %v4832 = vpack.c.b16 %v3184, %v3176
    %v4833 = vpack.c.b16 %v3185, %v3177
    %v4834 = vpack.c.b16 %v3194, %v3186
    %v4835 = vpack.c.b16 %v3195, %v3187
    %v4836 = vpack.c.b16 %v3196, %v3188
    %v4837 = vpack.c.b16 %v3197, %v3189
    %v4838 = vpack.c.b16 %v3198, %v3190
    %v4839 = vpack.c.b16 %v3199, %v3191
    %v4840 = vpack.c.b16 %v3200, %v3192
    %v4841 = vpack.c.b16 %v3201, %v3193
    %v4842 = vpack.c.b16 %v3210, %v3202
    %v4843 = vpack.c.b16 %v3211, %v3203
    %v4844 = vpack.c.b16 %v3212, %v3204
    %v4845 = vpack.c.b16 %v3213, %v3205
    %v4846 = vpack.c.b16 %v3214, %v3206
    %v4847 = vpack.c.b16 %v3215, %v3207
    %v4848 = vpack.c.b16 %v3216, %v3208
    %v4849 = vpack.c.b16 %v3217, %v3209
    %v4850 = vpack.c.b16 %v3226, %v3218
    %v4851 = vpack.c.b16 %v3227, %v3219
    %v4852 = vpack.c.b16 %v3228, %v3220
    %v4853 = vpack.c.b16 %v3229, %v3221
    %v4854 = vpack.c.b16 %v3230, %v3222
    %v4855 = vpack.c.b16 %v3231, %v3223
    %v4856 = vpack.c.b16 %v3232, %v3224
    %v4857 = vpack.c.b16 %v3233, %v3225
    %v4858 = vpack.c.b16 %v3242, %v3234
    %v4859 = vpack.c.b16 %v3243, %v3235
    %v4860 = vpack.c.b16 %v3244, %v3236
    %v4861 = vpack.c.b16 %v3245, %v3237
    %v4862 = vpack.c.b16 %v3246, %v3238
    %v4863 = vpack.c.b16 %v3247, %v3239
    %v4864 = vpack.c.b16 %v3248, %v3240
    %v4865 = vpack.c.b16 %v3249, %v3241
    %v4866 = vpack.c.b16 %v3258, %v3250
    %v4867 = vpack.c.b16 %v3259, %v3251
    %v4868 = vpack.c.b16 %v3260, %v3252
    %v4869 = vpack.c.b16 %v3261, %v3253
    %v4870 = vpack.c.b16 %v3262, %v3254
    %v4871 = vpack.c.b16 %v3263, %v3255
    %v4872 = vpack.c.b16 %v3264, %v3256
    %v4873 = vpack.c.b16 %v3265, %v3257
    %v4874 = vpack.c.b16 %v3274, %v3266
    %v4875 = vpack.c.b16 %v3275, %v3267
    %v4876 = vpack.c.b16 %v3276, %v3268
    %v4877 = vpack.c.b16 %v3277, %v3269
    %v4878 = vpack.c.b16 %v3278, %v3270
    %v4879 = vpack.c.b16 %v3279, %v3271
    %v4880 = vpack.c.b16 %v3280, %v3272
    %v4881 = vpack.c.b16 %v3281, %v3273
    %v4882 = vpack.c.b16 %v3290, %v3282
    %v4883 = vpack.c.b16 %v3291, %v3283
    %v4884 = vpack.c.b16 %v3292, %v3284
    %v4885 = vpack.c.b16 %v3293, %v3285
    %v4886 = vpack.c.b16 %v3294, %v3286
    %v4887 = vpack.c.b16 %v3295, %v3287
    %v4888 = vpack.c.b16 %v3296, %v3288
    %v4889 = vpack.c.b16 %v3297, %v3289
    %v4890 = vpack.c.b16 %v3306, %v3298
    %v4891 = vpack.c.b16 %v3307, %v3299
    %v4892 = vpack.c.b16 %v3308, %v3300
    %v4893 = vpack.c.b16 %v3309, %v3301
    %v4894 = vpack.c.b16 %v3310, %v3302
    %v4895 = vpack.c.b16 %v3311, %v3303
    %v4896 = vpack.c.b16 %v3312, %v3304
    %v4897 = vpack.c.b16 %v3313, %v3305
    %v4898 = vpack.c.b16 %v3322, %v3314
    %v4899 = vpack.c.b16 %v3323, %v3315
    %v4900 = vpack.c.b16 %v3324, %v3316
    %v4901 = vpack.c.b16 %v3325, %v3317
    %v4902 = vpack.c.b16 %v3326, %v3318
    %v4903 = vpack.c.b16 %v3327, %v3319
    %v4904 = vpack.c.b16 %v3328, %v3320
    %v4905 = vpack.c.b16 %v3329, %v3321
    %v4906 = vpack.c.b16 %v3338, %v3330
    %v4907 = vpack.c.b16 %v3339, %v3331
    %v4908 = vpack.c.b16 %v3340, %v3332
    %v4909 = vpack.c.b16 %v3341, %v3333
    %v4910 = vpack.c.b16 %v3342, %v3334
    %v4911 = vpack.c.b16 %v3343, %v3335
    %v4912 = vpack.c.b16 %v3344, %v3336
    %v4913 = vpack.c.b16 %v3345, %v3337
    %v4914 = vpack.c.b16 %v3354, %v3346
    %v4915 = vpack.c.b16 %v3355, %v3347
    %v4916 = vpack.c.b16 %v3356, %v3348
    %v4917 = vpack.c.b16 %v3357, %v3349
    %v4918 = vpack.c.b16 %v3358, %v3350
    %v4919 = vpack.c.b16 %v3359, %v3351
    %v4920 = vpack.c.b16 %v3360, %v3352
    %v4921 = vpack.c.b16 %v3361, %v3353
    %v4922 = vpack.c.b16 %v3370, %v3362
    %v4923 = vpack.c.b16 %v3371, %v3363
    %v4924 = vpack.c.b16 %v3372, %v3364
    %v4925 = vpack.c.b16 %v3373, %v3365
    %v4926 = vpack.c.b16 %v3374, %v3366
    %v4927 = vpack.c.b16 %v3375, %v3367
    %v4928 = vpack.c.b16 %v3376, %v3368
    %v4929 = vpack.c.b16 %v3377, %v3369
    %v4930 = vpack.c.b16 %v3386, %v3378
    %v4931 = vpack.c.b16 %v3387, %v3379
    %v4932 = vpack.c.b16 %v3388, %v3380
    %v4933 = vpack.c.b16 %v3389, %v3381
    %v4934 = vpack.c.b16 %v3390, %v3382
    %v4935 = vpack.c.b16 %v3391, %v3383
    %v4936 = vpack.c.b16 %v3392, %v3384
    %v4937 = vpack.c.b16 %v3393, %v3385
    %v4938 = vpack.c.b16 %v3402, %v3394
    %v4939 = vpack.c.b16 %v3403, %v3395
    %v4940 = vpack.c.b16 %v3404, %v3396
    %v4941 = vpack.c.b16 %v3405, %v3397
    %v4942 = vpack.c.b16 %v3406, %v3398
    %v4943 = vpack.c.b16 %v3407, %v3399
    %v4944 = vpack.c.b16 %v3408, %v3400
    %v4945 = vpack.c.b16 %v3409, %v3401
    %v4946 = vpack.c.b16 %v3418, %v3410
    %v4947 = vpack.c.b16 %v3419, %v3411
    %v4948 = vpack.c.b16 %v3420, %v3412
    %v4949 = vpack.c.b16 %v3421, %v3413
    %v4950 = vpack.c.b16 %v3422, %v3414
    %v4951 = vpack.c.b16 %v3423, %v3415
    %v4952 = vpack.c.b16 %v3424, %v3416
    %v4953 = vpack.c.b16 %v3425, %v3417
    %v4954 = vpack.c.b16 %v3434, %v3426
    %v4955 = vpack.c.b16 %v3435, %v3427
    %v4956 = vpack.c.b16 %v3436, %v3428
    %v4957 = vpack.c.b16 %v3437, %v3429
    %v4958 = vpack.c.b16 %v3438, %v3430
    %v4959 = vpack.c.b16 %v3439, %v3431
    %v4960 = vpack.c.b16 %v3440, %v3432
    %v4961 = vpack.c.b16 %v3441, %v3433
    %v4962 = vpack.c.b16 %v3450, %v3442
    %v4963 = vpack.c.b16 %v3451, %v3443
    %v4964 = vpack.c.b16 %v3452, %v3444
    %v4965 = vpack.c.b16 %v3453, %v3445
    %v4966 = vpack.c.b16 %v3454, %v3446
    %v4967 = vpack.c.b16 %v3455, %v3447
    %v4968 = vpack.c.b16 %v3456, %v3448
    %v4969 = vpack.c.b16 %v3457, %v3449
    %v4970 = vpack.c.b16 %v3466, %v3458
    %v4971 = vpack.c.b16 %v3467, %v3459
    %v4972 = vpack.c.b16 %v3468, %v3460
    %v4973 = vpack.c.b16 %v3469, %v3461
    %v4974 = vpack.c.b16 %v3470, %v3462
    %v4975 = vpack.c.b16 %v3471, %v3463
    %v4976 = vpack.c.b16 %v3472, %v3464
    %v4977 = vpack.c.b16 %v3473, %v3465
    %v4978 = vpack.c.b16 %v3482, %v3474
    %v4979 = vpack.c.b16 %v3483, %v3475
    %v4980 = vpack.c.b16 %v3484, %v3476
    %v4981 = vpack.c.b16 %v3485, %v3477
    %v4982 = vpack.c.b16 %v3486, %v3478
    %v4983 = vpack.c.b16 %v3487, %v3479
    %v4984 = vpack.c.b16 %v3488, %v3480
    %v4985 = vpack.c.b16 %v3489, %v3481
    %v4986 = vpack.c.b16 %v3498, %v3490
    %v4987 = vpack.c.b16 %v3499, %v3491
    %v4988 = vpack.c.b16 %v3500, %v3492
    %v4989 = vpack.c.b16 %v3501, %v3493
    %v4990 = vpack.c.b16 %v3502, %v3494
    %v4991 = vpack.c.b16 %v3503, %v3495
    %v4992 = vpack.c.b16 %v3504, %v3496
    %v4993 = vpack.c.b16 %v3505, %v3497
    %v4994 = vpack.c.b16 %v3514, %v3506
    %v4995 = vpack.c.b16 %v3515, %v3507
    %v4996 = vpack.c.b16 %v3516, %v3508
    %v4997 = vpack.c.b16 %v3517, %v3509
    %v4998 = vpack.c.b16 %v3518, %v3510
    %v4999 = vpack.c.b16 %v3519, %v3511
    %v5000 = vpack.c.b16 %v3520, %v3512
    %v5001 = vpack.c.b16 %v3521, %v3513
    %v5002 = vpack.c.b16 %v3530, %v3522
    %v5003 = vpack.c.b16 %v3531, %v3523
    %v5004 = vpack.c.b16 %v3532, %v3524
    %v5005 = vpack.c.b16 %v3533, %v3525
    %v5006 = vpack.c.b16 %v3534, %v3526
    %v5007 = vpack.c.b16 %v3535, %v3527
    %v5008 = vpack.c.b16 %v3536, %v3528
    %v5009 = vpack.c.b16 %v3537, %v3529
    %v5010 = vpack.c.b16 %v3546, %v3538
    %v5011 = vpack.c.b16 %v3547, %v3539
    %v5012 = vpack.c.b16 %v3548, %v3540
    %v5013 = vpack.c.b16 %v3549, %v3541
    %v5014 = vpack.c.b16 %v3550, %v3542
    %v5015 = vpack.c.b16 %v3551, %v3543
    %v5016 = vpack.c.b16 %v3552, %v3544
    %v5017 = vpack.c.b16 %v3553, %v3545
    %v5018 = vpack.c.b16 %v3562, %v3554
    %v5019 = vpack.c.b16 %v3563, %v3555
    %v5020 = vpack.c.b16 %v3564, %v3556
    %v5021 = vpack.c.b16 %v3565, %v3557
    %v5022 = vpack.c.b16 %v3566, %v3558
    %v5023 = vpack.c.b16 %v3567, %v3559
    %v5024 = vpack.c.b16 %v3568, %v3560
    %v5025 = vpack.c.b16 %v3569, %v3561
    %v5026 = vpack.c.b16 %v3578, %v3570
    %v5027 = vpack.c.b16 %v3579, %v3571
    %v5028 = vpack.c.b16 %v3580, %v3572
    %v5029 = vpack.c.b16 %v3581, %v3573
    %v5030 = vpack.c.b16 %v3582, %v3574
    %v5031 = vpack.c.b16 %v3583, %v3575
    %v5032 = vpack.c.b16 %v3584, %v3576
    %v5033 = vpack.c.b16 %v3585, %v3577
    %v5034 = vpack.c.b16 %v3594, %v3586
    %v5035 = vpack.c.b16 %v3595, %v3587
    %v5036 = vpack.c.b16 %v3596, %v3588
    %v5037 = vpack.c.b16 %v3597, %v3589
    %v5038 = vpack.c.b16 %v3598, %v3590
    %v5039 = vpack.c.b16 %v3599, %v3591
    %v5040 = vpack.c.b16 %v3600, %v3592
    %v5041 = vpack.c.b16 %v3601, %v3593
    %v5042 = vpack.c.b16 %v3610, %v3602
    %v5043 = vpack.c.b16 %v3611, %v3603
    %v5044 = vpack.c.b16 %v3612, %v3604
    %v5045 = vpack.c.b16 %v3613, %v3605
    %v5046 = vpack.c.b16 %v3614, %v3606
    %v5047 = vpack.c.b16 %v3615, %v3607
    %v5048 = vpack.c.b16 %v3616, %v3608
    %v5049 = vpack.c.b16 %v3617, %v3609
    %v5050 = vpack.c.b16 %v3626, %v3618
    %v5051 = vpack.c.b16 %v3627, %v3619
    %v5052 = vpack.c.b16 %v3628, %v3620
    %v5053 = vpack.c.b16 %v3629, %v3621
    %v5054 = vpack.c.b16 %v3630, %v3622
    %v5055 = vpack.c.b16 %v3631, %v3623
    %v5056 = vpack.c.b16 %v3632, %v3624
    %v5057 = vpack.c.b16 %v3633, %v3625
    %v5058 = vpack.c.b16 %v3642, %v3634
    %v5059 = vpack.c.b16 %v3643, %v3635
    %v5060 = vpack.c.b16 %v3644, %v3636
    %v5061 = vpack.c.b16 %v3645, %v3637
    %v5062 = vpack.c.b16 %v3646, %v3638
    %v5063 = vpack.c.b16 %v3647, %v3639
    %v5064 = vpack.c.b16 %v3648, %v3640
    %v5065 = vpack.c.b16 %v3649, %v3641
    %v5066 = vpack.c.b16 %v3658, %v3650
    %v5067 = vpack.c.b16 %v3659, %v3651
    %v5068 = vpack.c.b16 %v3660, %v3652
    %v5069 = vpack.c.b16 %v3661, %v3653
    %v5070 = vpack.c.b16 %v3662, %v3654
    %v5071 = vpack.c.b16 %v3663, %v3655
    %v5072 = vpack.c.b16 %v3664, %v3656
    %v5073 = vpack.c.b16 %v3665, %v3657
    %v5074 = vpack.c.b16 %v3674, %v3666
    %v5075 = vpack.c.b16 %v3675, %v3667
    %v5076 = vpack.c.b16 %v3676, %v3668
    %v5077 = vpack.c.b16 %v3677, %v3669
    %v5078 = vpack.c.b16 %v3678, %v3670
    %v5079 = vpack.c.b16 %v3679, %v3671
    %v5080 = vpack.c.b16 %v3680, %v3672
    %v5081 = vpack.c.b16 %v3681, %v3673
    %v5082 = vpack.c.b16 %v3690, %v3682
    %v5083 = vpack.c.b16 %v3691, %v3683
    %v5084 = vpack.c.b16 %v3692, %v3684
    %v5085 = vpack.c.b16 %v3693, %v3685
    %v5086 = vpack.c.b16 %v3694, %v3686
    %v5087 = vpack.c.b16 %v3695, %v3687
    %v5088 = vpack.c.b16 %v3696, %v3688
    %v5089 = vpack.c.b16 %v3697, %v3689
    %v5090 = vpack.c.b16 %v3706, %v3698
    %v5091 = vpack.c.b16 %v3707, %v3699
    %v5092 = vpack.c.b16 %v3708, %v3700
    %v5093 = vpack.c.b16 %v3709, %v3701
    %v5094 = vpack.c.b16 %v3710, %v3702
    %v5095 = vpack.c.b16 %v3711, %v3703
    %v5096 = vpack.c.b16 %v3712, %v3704
    %v5097 = vpack.c.b16 %v3713, %v3705
    %v5098 = vpack.c.b16 %v3722, %v3714
    %v5099 = vpack.c.b16 %v3723, %v3715
    %v5100 = vpack.c.b16 %v3724, %v3716
    %v5101 = vpack.c.b16 %v3725, %v3717
    %v5102 = vpack.c.b16 %v3726, %v3718
    %v5103 = vpack.c.b16 %v3727, %v3719
    %v5104 = vpack.c.b16 %v3728, %v3720
    %v5105 = vpack.c.b16 %v3729, %v3721
    %v5106 = vpack.c.b16 %v3738, %v3730
    %v5107 = vpack.c.b16 %v3739, %v3731
    %v5108 = vpack.c.b16 %v3740, %v3732
    %v5109 = vpack.c.b16 %v3741, %v3733
    %v5110 = vpack.c.b16 %v3742, %v3734
    %v5111 = vpack.c.b16 %v3743, %v3735
    %v5112 = vpack.c.b16 %v3744, %v3736
    %v5113 = vpack.c.b16 %v3745, %v3737
    %v5114 = vpack.c.b16 %v3754, %v3746
    %v5115 = vpack.c.b16 %v3755, %v3747
    %v5116 = vpack.c.b16 %v3756, %v3748
    %v5117 = vpack.c.b16 %v3757, %v3749
    %v5118 = vpack.c.b16 %v3758, %v3750
    %v5119 = vpack.c.b16 %v3759, %v3751
    %v5120 = vpack.c.b16 %v3760, %v3752
    %v5121 = vpack.c.b16 %v3761, %v3753
    %v5122 = vpack.c.b16 %v3770, %v3762
    %v5123 = vpack.c.b16 %v3771, %v3763
    %v5124 = vpack.c.b16 %v3772, %v3764
    %v5125 = vpack.c.b16 %v3773, %v3765
    %v5126 = vpack.c.b16 %v3774, %v3766
    %v5127 = vpack.c.b16 %v3775, %v3767
    %v5128 = vpack.c.b16 %v3776, %v3768
    %v5129 = vpack.c.b16 %v3777, %v3769
    %v5130 = vpack.c.b16 %v3786, %v3778
    %v5131 = vpack.c.b16 %v3787, %v3779
    %v5132 = vpack.c.b16 %v3788, %v3780
    %v5133 = vpack.c.b16 %v3789, %v3781
    %v5134 = vpack.c.b16 %v3790, %v3782
    %v5135 = vpack.c.b16 %v3791, %v3783
    %v5136 = vpack.c.b16 %v3792, %v3784
    %v5137 = vpack.c.b16 %v3793, %v3785
    %v5138 = vpack.c.b16 %v3802, %v3794
    %v5139 = vpack.c.b16 %v3803, %v3795
    %v5140 = vpack.c.b16 %v3804, %v3796
    %v5141 = vpack.c.b16 %v3805, %v3797
    %v5142 = vpack.c.b16 %v3806, %v3798
    %v5143 = vpack.c.b16 %v3807, %v3799
    %v5144 = vpack.c.b16 %v3808, %v3800
    %v5145 = vpack.c.b16 %v3809, %v3801
    %v5146 = vpack.c.b16 %v3818, %v3810
    %v5147 = vpack.c.b16 %v3819, %v3811
    %v5148 = vpack.c.b16 %v3820, %v3812
    %v5149 = vpack.c.b16 %v3821, %v3813
    %v5150 = vpack.c.b16 %v3822, %v3814
    %v5151 = vpack.c.b16 %v3823, %v3815
    %v5152 = vpack.c.b16 %v3824, %v3816
    %v5153 = vpack.c.b16 %v3825, %v3817
    %v5154 = vpack.c.b16 %v3834, %v3826
    %v5155 = vpack.c.b16 %v3835, %v3827
    %v5156 = vpack.c.b16 %v3836, %v3828
    %v5157 = vpack.c.b16 %v3837, %v3829
    %v5158 = vpack.c.b16 %v3838, %v3830
    %v5159 = vpack.c.b16 %v3839, %v3831
    %v5160 = vpack.c.b16 %v3840, %v3832
    %v5161 = vpack.c.b16 %v3841, %v3833
    %v5162 = vpack.c.b16 %v3850, %v3842
    %v5163 = vpack.c.b16 %v3851, %v3843
    %v5164 = vpack.c.b16 %v3852, %v3844
    %v5165 = vpack.c.b16 %v3853, %v3845
    %v5166 = vpack.c.b16 %v3854, %v3846
    %v5167 = vpack.c.b16 %v3855, %v3847
    %v5168 = vpack.c.b16 %v3856, %v3848
    %v5169 = vpack.c.b16 %v3857, %v3849
    %v5170 = vpack.c.b16 %v3866, %v3858
    %v5171 = vpack.c.b16 %v3867, %v3859
    %v5172 = vpack.c.b16 %v3868, %v3860
    %v5173 = vpack.c.b16 %v3869, %v3861
    %v5174 = vpack.c.b16 %v3870, %v3862
    %v5175 = vpack.c.b16 %v3871, %v3863
    %v5176 = vpack.c.b16 %v3872, %v3864
    %v5177 = vpack.c.b16 %v3873, %v3865
    %v5178 = vpack.c.b16 %v3882, %v3874
    %v5179 = vpack.c.b16 %v3883, %v3875
    %v5180 = vpack.c.b16 %v3884, %v3876
    %v5181 = vpack.c.b16 %v3885, %v3877
    %v5182 = vpack.c.b16 %v3886, %v3878
    %v5183 = vpack.c.b16 %v3887, %v3879
    %v5184 = vpack.c.b16 %v3888, %v3880
    %v5185 = vpack.c.b16 %v3889, %v3881
    %v5186 = vpack.c.b16 %v3898, %v3890
    %v5187 = vpack.c.b16 %v3899, %v3891
    %v5188 = vpack.c.b16 %v3900, %v3892
    %v5189 = vpack.c.b16 %v3901, %v3893
    %v5190 = vpack.c.b16 %v3902, %v3894
    %v5191 = vpack.c.b16 %v3903, %v3895
    %v5192 = vpack.c.b16 %v3904, %v3896
    %v5193 = vpack.c.b16 %v3905, %v3897
    %v5194 = vpack.c.b16 %v3914, %v3906
    %v5195 = vpack.c.b16 %v3915, %v3907
    %v5196 = vpack.c.b16 %v3916, %v3908
    %v5197 = vpack.c.b16 %v3917, %v3909
    %v5198 = vpack.c.b16 %v3918, %v3910
    %v5199 = vpack.c.b16 %v3919, %v3911
    %v5200 = vpack.c.b16 %v3920, %v3912
    %v5201 = vpack.c.b16 %v3921, %v3913
    %v5202 = vpack.c.b16 %v3930, %v3922
    %v5203 = vpack.c.b16 %v3931, %v3923
    %v5204 = vpack.c.b16 %v3932, %v3924
    %v5205 = vpack.c.b16 %v3933, %v3925
    %v5206 = vpack.c.b16 %v3934, %v3926
    %v5207 = vpack.c.b16 %v3935, %v3927
    %v5208 = vpack.c.b16 %v3936, %v3928
    %v5209 = vpack.c.b16 %v3937, %v3929
    %v5210 = vpack.c.b16 %v3946, %v3938
    %v5211 = vpack.c.b16 %v3947, %v3939
    %v5212 = vpack.c.b16 %v3948, %v3940
    %v5213 = vpack.c.b16 %v3949, %v3941
    %v5214 = vpack.c.b16 %v3950, %v3942
    %v5215 = vpack.c.b16 %v3951, %v3943
    %v5216 = vpack.c.b16 %v3952, %v3944
    %v5217 = vpack.c.b16 %v3953, %v3945
    %v5218 = vpack.c.b16 %v3962, %v3954
    %v5219 = vpack.c.b16 %v3963, %v3955
    %v5220 = vpack.c.b16 %v3964, %v3956
    %v5221 = vpack.c.b16 %v3965, %v3957
    %v5222 = vpack.c.b16 %v3966, %v3958
    %v5223 = vpack.c.b16 %v3967, %v3959
    %v5224 = vpack.c.b16 %v3968, %v3960
    %v5225 = vpack.c.b16 %v3969, %v3961
    %v5226 = vpack.c.b16 %v3978, %v3970
    %v5227 = vpack.c.b16 %v3979, %v3971
    %v5228 = vpack.c.b16 %v3980, %v3972
    %v5229 = vpack.c.b16 %v3981, %v3973
    %v5230 = vpack.c.b16 %v3982, %v3974
    %v5231 = vpack.c.b16 %v3983, %v3975
    %v5232 = vpack.c.b16 %v3984, %v3976
    %v5233 = vpack.c.b16 %v3985, %v3977
    %v5234 = vpack.c.b16 %v3994, %v3986
    %v5235 = vpack.c.b16 %v3995, %v3987
    %v5236 = vpack.c.b16 %v3996, %v3988
    %v5237 = vpack.c.b16 %v3997, %v3989
    %v5238 = vpack.c.b16 %v3998, %v3990
    %v5239 = vpack.c.b16 %v3999, %v3991
    %v5240 = vpack.c.b16 %v4000, %v3992
    %v5241 = vpack.c.b16 %v4001, %v3993
    %v5242 = vpack.c.b16 %v4010, %v4002
    %v5243 = vpack.c.b16 %v4011, %v4003
    %v5244 = vpack.c.b16 %v4012, %v4004
    %v5245 = vpack.c.b16 %v4013, %v4005
    %v5246 = vpack.c.b16 %v4014, %v4006
    %v5247 = vpack.c.b16 %v4015, %v4007
    %v5248 = vpack.c.b16 %v4016, %v4008
    %v5249 = vpack.c.b16 %v4017, %v4009
    %v5250 = vpack.c.b16 %v4026, %v4018
    %v5251 = vpack.c.b16 %v4027, %v4019
    %v5252 = vpack.c.b16 %v4028, %v4020
    %v5253 = vpack.c.b16 %v4029, %v4021
    %v5254 = vpack.c.b16 %v4030, %v4022
    %v5255 = vpack.c.b16 %v4031, %v4023
    %v5256 = vpack.c.b16 %v4032, %v4024
    %v5257 = vpack.c.b16 %v4033, %v4025
    %v5258 = vpack.c.b16 %v4042, %v4034
    %v5259 = vpack.c.b16 %v4043, %v4035
    %v5260 = vpack.c.b16 %v4044, %v4036
    %v5261 = vpack.c.b16 %v4045, %v4037
    %v5262 = vpack.c.b16 %v4046, %v4038
    %v5263 = vpack.c.b16 %v4047, %v4039
    %v5264 = vpack.c.b16 %v4048, %v4040
    %v5265 = vpack.c.b16 %v4049, %v4041
    %v5266 = vpack.c.b16 %v4058, %v4050
    %v5267 = vpack.c.b16 %v4059, %v4051
    %v5268 = vpack.c.b16 %v4060, %v4052
    %v5269 = vpack.c.b16 %v4061, %v4053
    %v5270 = vpack.c.b16 %v4062, %v4054
    %v5271 = vpack.c.b16 %v4063, %v4055
    %v5272 = vpack.c.b16 %v4064, %v4056
    %v5273 = vpack.c.b16 %v4065, %v4057
    %v5274 = vpack.c.b16 %v4074, %v4066
    %v5275 = vpack.c.b16 %v4075, %v4067
    %v5276 = vpack.c.b16 %v4076, %v4068
    %v5277 = vpack.c.b16 %v4077, %v4069
    %v5278 = vpack.c.b16 %v4078, %v4070
    %v5279 = vpack.c.b16 %v4079, %v4071
    %v5280 = vpack.c.b16 %v4080, %v4072
    %v5281 = vpack.c.b16 %v4081, %v4073
    %v5282 = vpack.c.b16 %v4090, %v4082
    %v5283 = vpack.c.b16 %v4091, %v4083
    %v5284 = vpack.c.b16 %v4092, %v4084
    %v5285 = vpack.c.b16 %v4093, %v4085
    %v5286 = vpack.c.b16 %v4094, %v4086
    %v5287 = vpack.c.b16 %v4095, %v4087
    %v5288 = vpack.c.b16 %v4096, %v4088
    %v5289 = vpack.c.b16 %v4097, %v4089
    %v5290 = vpack.c.b16 %v4106, %v4098
    %v5291 = vpack.c.b16 %v4107, %v4099
    %v5292 = vpack.c.b16 %v4108, %v4100
    %v5293 = vpack.c.b16 %v4109, %v4101
    %v5294 = vpack.c.b16 %v4110, %v4102
    %v5295 = vpack.c.b16 %v4111, %v4103
    %v5296 = vpack.c.b16 %v4112, %v4104
    %v5297 = vpack.c.b16 %v4113, %v4105
    %v5298 = vpack.c.b16 %v4122, %v4114
    %v5299 = vpack.c.b16 %v4123, %v4115
    %v5300 = vpack.c.b16 %v4124, %v4116
    %v5301 = vpack.c.b16 %v4125, %v4117
    %v5302 = vpack.c.b16 %v4126, %v4118
    %v5303 = vpack.c.b16 %v4127, %v4119
    %v5304 = vpack.c.b16 %v4128, %v4120
    %v5305 = vpack.c.b16 %v4129, %v4121
    %v5306 = vpack.c.b16 %v4138, %v4130
    %v5307 = vpack.c.b16 %v4139, %v4131
    %v5308 = vpack.c.b16 %v4140, %v4132
    %v5309 = vpack.c.b16 %v4141, %v4133
    %v5310 = vpack.c.b16 %v4142, %v4134
    %v5311 = vpack.c.b16 %v4143, %v4135
    %v5312 = vpack.c.b16 %v4144, %v4136
    %v5313 = vpack.c.b16 %v4145, %v4137
    %v5314 = vpack.c.b16 %v4154, %v4146
    %v5315 = vpack.c.b16 %v4155, %v4147
    %v5316 = vpack.c.b16 %v4156, %v4148
    %v5317 = vpack.c.b16 %v4157, %v4149
    %v5318 = vpack.c.b16 %v4158, %v4150
    %v5319 = vpack.c.b16 %v4159, %v4151
    %v5320 = vpack.c.b16 %v4160, %v4152
    %v5321 = vpack.c.b16 %v4161, %v4153
    %v5322 = vpack.c.b16 %v4170, %v4162
    %v5323 = vpack.c.b16 %v4171, %v4163
    %v5324 = vpack.c.b16 %v4172, %v4164
    %v5325 = vpack.c.b16 %v4173, %v4165
    %v5326 = vpack.c.b16 %v4174, %v4166
    %v5327 = vpack.c.b16 %v4175, %v4167
    %v5328 = vpack.c.b16 %v4176, %v4168
    %v5329 = vpack.c.b16 %v4177, %v4169
    %v5330 = vpack.c.b16 %v4186, %v4178
    %v5331 = vpack.c.b16 %v4187, %v4179
    %v5332 = vpack.c.b16 %v4188, %v4180
    %v5333 = vpack.c.b16 %v4189, %v4181
    %v5334 = vpack.c.b16 %v4190, %v4182
    %v5335 = vpack.c.b16 %v4191, %v4183
    %v5336 = vpack.c.b16 %v4192, %v4184
    %v5337 = vpack.c.b16 %v4193, %v4185
    %v5338 = vpack.c.b16 %v4202, %v4194
    %v5339 = vpack.c.b16 %v4203, %v4195
    %v5340 = vpack.c.b16 %v4204, %v4196
    %v5341 = vpack.c.b16 %v4205, %v4197
    %v5342 = vpack.c.b16 %v4206, %v4198
    %v5343 = vpack.c.b16 %v4207, %v4199
    %v5344 = vpack.c.b16 %v4208, %v4200
    %v5345 = vpack.c.b16 %v4209, %v4201
    %v5346 = vpack.c.b16 %v4218, %v4210
    %v5347 = vpack.c.b16 %v4219, %v4211
    %v5348 = vpack.c.b16 %v4220, %v4212
    %v5349 = vpack.c.b16 %v4221, %v4213
    %v5350 = vpack.c.b16 %v4222, %v4214
    %v5351 = vpack.c.b16 %v4223, %v4215
    %v5352 = vpack.c.b16 %v4224, %v4216
    %v5353 = vpack.c.b16 %v4225, %v4217
    %v5354 = vpack.c.b16 %v4234, %v4226
    %v5355 = vpack.c.b16 %v4235, %v4227
    %v5356 = vpack.c.b16 %v4236, %v4228
    %v5357 = vpack.c.b16 %v4237, %v4229
    %v5358 = vpack.c.b16 %v4238, %v4230
    %v5359 = vpack.c.b16 %v4239, %v4231
    %v5360 = vpack.c.b16 %v4240, %v4232
    %v5361 = vpack.c.b16 %v4241, %v4233
    %v5362 = vpack.c.b16 %v4250, %v4242
    %v5363 = vpack.c.b16 %v4251, %v4243
    %v5364 = vpack.c.b16 %v4252, %v4244
    %v5365 = vpack.c.b16 %v4253, %v4245
    %v5366 = vpack.c.b16 %v4254, %v4246
    %v5367 = vpack.c.b16 %v4255, %v4247
    %v5368 = vpack.c.b16 %v4256, %v4248
    %v5369 = vpack.c.b16 %v4257, %v4249
    %v5370 = vpack.c.b16 %v4266, %v4258
    %v5371 = vpack.c.b16 %v4267, %v4259
    %v5372 = vpack.c.b16 %v4268, %v4260
    %v5373 = vpack.c.b16 %v4269, %v4261
    %v5374 = vpack.c.b16 %v4270, %v4262
    %v5375 = vpack.c.b16 %v4271, %v4263
    %v5376 = vpack.c.b16 %v4272, %v4264
    %v5377 = vpack.c.b16 %v4273, %v4265
    %v5378 = vpack.c.b16 %v4282, %v4274
    %v5379 = vpack.c.b16 %v4283, %v4275
    %v5380 = vpack.c.b16 %v4284, %v4276
    %v5381 = vpack.c.b16 %v4285, %v4277
    %v5382 = vpack.c.b16 %v4286, %v4278
    %v5383 = vpack.c.b16 %v4287, %v4279
    %v5384 = vpack.c.b16 %v4288, %v4280
    %v5385 = vpack.c.b16 %v4289, %v4281
    %v5386 = vpack.c.b16 %v4298, %v4290
    %v5387 = vpack.c.b16 %v4299, %v4291
    %v5388 = vpack.c.b16 %v4300, %v4292
    %v5389 = vpack.c.b16 %v4301, %v4293
    %v5390 = vpack.c.b16 %v4302, %v4294
    %v5391 = vpack.c.b16 %v4303, %v4295
    %v5392 = vpack.c.b16 %v4304, %v4296
    %v5393 = vpack.c.b16 %v4305, %v4297
    %v5394 = vpack.c.b16 %v4314, %v4306
    %v5395 = vpack.c.b16 %v4315, %v4307
    %v5396 = vpack.c.b16 %v4316, %v4308
    %v5397 = vpack.c.b16 %v4317, %v4309
    %v5398 = vpack.c.b16 %v4318, %v4310
    %v5399 = vpack.c.b16 %v4319, %v4311
    %v5400 = vpack.c.b16 %v4320, %v4312
    %v5401 = vpack.c.b16 %v4321, %v4313
    %v5402 = vpack.c.b16 %v4330, %v4322
    %v5403 = vpack.c.b16 %v4331, %v4323
    %v5404 = vpack.c.b16 %v4332, %v4324
    %v5405 = vpack.c.b16 %v4333, %v4325
    %v5406 = vpack.c.b16 %v4334, %v4326
    %v5407 = vpack.c.b16 %v4335, %v4327
    %v5408 = vpack.c.b16 %v4336, %v4328
    %v5409 = vpack.c.b16 %v4337, %v4329
    %v5410 = vpack.c.b16 %v4346, %v4338
    %v5411 = vpack.c.b16 %v4347, %v4339
    %v5412 = vpack.c.b16 %v4348, %v4340
    %v5413 = vpack.c.b16 %v4349, %v4341
    %v5414 = vpack.c.b16 %v4350, %v4342
    %v5415 = vpack.c.b16 %v4351, %v4343
    %v5416 = vpack.c.b16 %v4352, %v4344
    %v5417 = vpack.c.b16 %v4353, %v4345
    %v5418 = vpack.c.b16 %v4362, %v4354
    %v5419 = vpack.c.b16 %v4363, %v4355
    %v5420 = vpack.c.b16 %v4364, %v4356
    %v5421 = vpack.c.b16 %v4365, %v4357
    %v5422 = vpack.c.b16 %v4366, %v4358
    %v5423 = vpack.c.b16 %v4367, %v4359
    %v5424 = vpack.c.b16 %v4368, %v4360
    %v5425 = vpack.c.b16 %v4369, %v4361
    %v5426 = vpack.c.b16 %v4378, %v4370
    %v5427 = vpack.c.b16 %v4379, %v4371
    %v5428 = vpack.c.b16 %v4380, %v4372
    %v5429 = vpack.c.b16 %v4381, %v4373
    %v5430 = vpack.c.b16 %v4382, %v4374
    %v5431 = vpack.c.b16 %v4383, %v4375
    %v5432 = vpack.c.b16 %v4384, %v4376
    %v5433 = vpack.c.b16 %v4385, %v4377
    %v5434 = vpack.c.b16 %v4394, %v4386
    %v5435 = vpack.c.b16 %v4395, %v4387
    %v5436 = vpack.c.b16 %v4396, %v4388
    %v5437 = vpack.c.b16 %v4397, %v4389
    %v5438 = vpack.c.b16 %v4398, %v4390
    %v5439 = vpack.c.b16 %v4399, %v4391
    %v5440 = vpack.c.b16 %v4400, %v4392
    %v5441 = vpack.c.b16 %v4401, %v4393
    %v5442 = vpack.c.b16 %v4410, %v4402
    %v5443 = vpack.c.b16 %v4411, %v4403
    %v5444 = vpack.c.b16 %v4412, %v4404
    %v5445 = vpack.c.b16 %v4413, %v4405
    %v5446 = vpack.c.b16 %v4414, %v4406
    %v5447 = vpack.c.b16 %v4415, %v4407
    %v5448 = vpack.c.b16 %v4416, %v4408
    %v5449 = vpack.c.b16 %v4417, %v4409
    %v5450 = vpack.c.b16 %v4426, %v4418
    %v5451 = vpack.c.b16 %v4427, %v4419
    %v5452 = vpack.c.b16 %v4428, %v4420
    %v5453 = vpack.c.b16 %v4429, %v4421
    %v5454 = vpack.c.b16 %v4430, %v4422
    %v5455 = vpack.c.b16 %v4431, %v4423
    %v5456 = vpack.c.b16 %v4432, %v4424
    %v5457 = vpack.c.b16 %v4433, %v4425
    %6482 = vmatprep.subr.bf16.mxu0 %v4491
    %6483 = vmatpush1.bf16.msra.mxu0 %v4490
    %6484 = vmatprep.subr.bf16.mxu0 %v4483
    %6485 = vmatpush1.bf16.msra.mxu0 %v4482
    %6486 = vmatprep.subr.bf16.mxu0 %v4475
    %6487 = vmatpush1.bf16.msra.mxu0 %v4474
    %6488 = vmatprep.subr.bf16.mxu0 %v4467
    %6489 = vmatpush1.bf16.msra.mxu0 %v4466
    %6490 = vmatprep.subr.bf16.mxu0 %v4459
    %6491 = vmatpush1.bf16.msra.mxu0 %v4458
    %6492 = vmatprep.subr.bf16.mxu0 %v4451
    %6493 = vmatpush1.bf16.msra.mxu0 %v4450
    %6494 = vmatprep.subr.bf16.mxu0 %v4443
    %6495 = vmatpush1.bf16.msra.mxu0 %v4442
    %6496 = vmatprep.subr.bf16.mxu0 %v4435
    %6497 = vmatpush1.bf16.msra.mxu0 %v4434
    %6498 = vmatprep.subr.bf16.mxu0 %v4555
    %6499 = vmatpush2.bf16.msra.mxu0 %v4554
    %6500 = vmatprep.subr.bf16.mxu0 %v4547
    %6501 = vmatpush2.bf16.msra.mxu0 %v4546
    %6502 = vmatprep.subr.bf16.mxu0 %v4539
    %6503 = vmatpush2.bf16.msra.mxu0 %v4538
    %6504 = vmatprep.subr.bf16.mxu0 %v4531
    %6505 = vmatpush2.bf16.msra.mxu0 %v4530
    %6506 = vmatprep.subr.bf16.mxu0 %v4523
    %6507 = vmatpush2.bf16.msra.mxu0 %v4522
    %6508 = vmatprep.subr.bf16.mxu0 %v4515
    %6509 = vmatpush2.bf16.msra.mxu0 %v4514
    %6510 = vmatprep.subr.bf16.mxu0 %v4507
    %6511 = vmatpush2.bf16.msra.mxu0 %v4506
    %6512 = vmatprep.subr.bf16.mxu0 %v4499
    %6513 = vmatpush2.bf16.msra.mxu0 %v4498
    %6514 = vmatprep.mubr.bf16.mxu0 %v281
    %6515 = vmatmul.mubr.bf16.gmra.mxu0 %v280
    %v6516 = vpop.f32.mrf.mxu0
    %v6517 = vadd.f32 %v1325, %v6516
    %v6518 = vpop.f32.mrf.mxu0
    %v6519 = vadd.f32 %v1329, %v6518
    %v6520 = vpop.f32.mrf.mxu0
    %v6521 = vpop.f32.mrf.mxu0
    %6522 = vdwg.mxu0
    %6523 = vmatprep.subr.bf16.mxu0 %v4619
    %6524 = vmatpush1.bf16.msra.mxu0 %v4618
    %6525 = vmatprep.subr.bf16.mxu0 %v4611
    %6526 = vmatpush1.bf16.msra.mxu0 %v4610
    %6527 = vmatprep.subr.bf16.mxu0 %v4603
    %6528 = vmatpush1.bf16.msra.mxu0 %v4602
    %6529 = vmatprep.subr.bf16.mxu0 %v4595
    %6530 = vmatpush1.bf16.msra.mxu0 %v4594
    %6531 = vmatprep.subr.bf16.mxu0 %v4587
    %6532 = vmatpush1.bf16.msra.mxu0 %v4586
    %6533 = vmatprep.subr.bf16.mxu0 %v4579
    %6534 = vmatpush1.bf16.msra.mxu0 %v4578
    %6535 = vmatprep.subr.bf16.mxu0 %v4571
    %6536 = vmatpush1.bf16.msra.mxu0 %v4570
    %6537 = vmatprep.subr.bf16.mxu0 %v4563
    %6538 = vmatpush1.bf16.msra.mxu0 %v4562
    %6539 = vmatprep.subr.bf16.mxu0 %v4683
    %6540 = vmatpush2.bf16.msra.mxu0 %v4682
    %6541 = vmatprep.subr.bf16.mxu0 %v4675
    %6542 = vmatpush2.bf16.msra.mxu0 %v4674
    %6543 = vmatprep.subr.bf16.mxu0 %v4667
    %6544 = vmatpush2.bf16.msra.mxu0 %v4666
    %6545 = vmatprep.subr.bf16.mxu0 %v4659
    %6546 = vmatpush2.bf16.msra.mxu0 %v4658
    %6547 = vmatprep.subr.bf16.mxu0 %v4651
    %6548 = vmatpush2.bf16.msra.mxu0 %v4650
    %6549 = vmatprep.subr.bf16.mxu0 %v4643
    %6550 = vmatpush2.bf16.msra.mxu0 %v4642
    %6551 = vmatprep.subr.bf16.mxu0 %v4635
    %6552 = vmatpush2.bf16.msra.mxu0 %v4634
    %6553 = vmatprep.subr.bf16.mxu0 %v4627
    %6554 = vmatpush2.bf16.msra.mxu0 %v4626
    %6555 = vmatprep.mubr.bf16.mxu0 %v283
    %6556 = vmatmul.mubr.bf16.gmra.mxu0 %v282
    %v6557 = vpop.f32.mrf.mxu0
    %v6558 = vadd.f32 %v6517, %v6557
    %v6559 = vpop.f32.mrf.mxu0
    %v6560 = vadd.f32 %v6519, %v6559
    %v6561 = vpop.f32.mrf.mxu0
    %v6562 = vpop.f32.mrf.mxu0
    %6563 = vdwg.mxu0
    %6564 = vmatprep.subr.bf16.mxu0 %v4747
    %6565 = vmatpush1.bf16.msra.mxu0 %v4746
    %6566 = vmatprep.subr.bf16.mxu0 %v4739
    %6567 = vmatpush1.bf16.msra.mxu0 %v4738
    %6568 = vmatprep.subr.bf16.mxu0 %v4731
    %6569 = vmatpush1.bf16.msra.mxu0 %v4730
    %6570 = vmatprep.subr.bf16.mxu0 %v4723
    %6571 = vmatpush1.bf16.msra.mxu0 %v4722
    %6572 = vmatprep.subr.bf16.mxu0 %v4715
    %6573 = vmatpush1.bf16.msra.mxu0 %v4714
    %6574 = vmatprep.subr.bf16.mxu0 %v4707
    %6575 = vmatpush1.bf16.msra.mxu0 %v4706
    %6576 = vmatprep.subr.bf16.mxu0 %v4699
    %6577 = vmatpush1.bf16.msra.mxu0 %v4698
    %6578 = vmatprep.subr.bf16.mxu0 %v4691
    %6579 = vmatpush1.bf16.msra.mxu0 %v4690
    %6580 = vmatprep.subr.bf16.mxu0 %v4811
    %6581 = vmatpush2.bf16.msra.mxu0 %v4810
    %6582 = vmatprep.subr.bf16.mxu0 %v4803
    %6583 = vmatpush2.bf16.msra.mxu0 %v4802
    %6584 = vmatprep.subr.bf16.mxu0 %v4795
    %6585 = vmatpush2.bf16.msra.mxu0 %v4794
    %6586 = vmatprep.subr.bf16.mxu0 %v4787
    %6587 = vmatpush2.bf16.msra.mxu0 %v4786
    %6588 = vmatprep.subr.bf16.mxu0 %v4779
    %6589 = vmatpush2.bf16.msra.mxu0 %v4778
    %6590 = vmatprep.subr.bf16.mxu0 %v4771
    %6591 = vmatpush2.bf16.msra.mxu0 %v4770
    %6592 = vmatprep.subr.bf16.mxu0 %v4763
    %6593 = vmatpush2.bf16.msra.mxu0 %v4762
    %6594 = vmatprep.subr.bf16.mxu0 %v4755
    %6595 = vmatpush2.bf16.msra.mxu0 %v4754
    %6596 = vmatprep.mubr.bf16.mxu0 %v285
    %6597 = vmatmul.mubr.bf16.gmra.mxu0 %v284
    %v6598 = vpop.f32.mrf.mxu0
    %v6599 = vadd.f32 %v6558, %v6598
    %v6600 = vpop.f32.mrf.mxu0
    %v6601 = vadd.f32 %v6560, %v6600
    %v6602 = vpop.f32.mrf.mxu0
    %v6603 = vpop.f32.mrf.mxu0
    %6604 = vdwg.mxu0
    %6605 = vmatprep.subr.bf16.mxu0 %v4875
    %6606 = vmatpush1.bf16.msra.mxu0 %v4874
    %6607 = vmatprep.subr.bf16.mxu0 %v4867
    %6608 = vmatpush1.bf16.msra.mxu0 %v4866
    %6609 = vmatprep.subr.bf16.mxu0 %v4859
    %6610 = vmatpush1.bf16.msra.mxu0 %v4858
    %6611 = vmatprep.subr.bf16.mxu0 %v4851
    %6612 = vmatpush1.bf16.msra.mxu0 %v4850
    %6613 = vmatprep.subr.bf16.mxu0 %v4843
    %6614 = vmatpush1.bf16.msra.mxu0 %v4842
    %6615 = vmatprep.subr.bf16.mxu0 %v4835
    %6616 = vmatpush1.bf16.msra.mxu0 %v4834
    %6617 = vmatprep.subr.bf16.mxu0 %v4827
    %6618 = vmatpush1.bf16.msra.mxu0 %v4826
    %6619 = vmatprep.subr.bf16.mxu0 %v4819
    %6620 = vmatpush1.bf16.msra.mxu0 %v4818
    %6621 = vmatprep.subr.bf16.mxu0 %v4939
    %6622 = vmatpush2.bf16.msra.mxu0 %v4938
    %6623 = vmatprep.subr.bf16.mxu0 %v4931
    %6624 = vmatpush2.bf16.msra.mxu0 %v4930
    %6625 = vmatprep.subr.bf16.mxu0 %v4923
    %6626 = vmatpush2.bf16.msra.mxu0 %v4922
    %6627 = vmatprep.subr.bf16.mxu0 %v4915
    %6628 = vmatpush2.bf16.msra.mxu0 %v4914
    %6629 = vmatprep.subr.bf16.mxu0 %v4907
    %6630 = vmatpush2.bf16.msra.mxu0 %v4906
    %6631 = vmatprep.subr.bf16.mxu0 %v4899
    %6632 = vmatpush2.bf16.msra.mxu0 %v4898
    %6633 = vmatprep.subr.bf16.mxu0 %v4891
    %6634 = vmatpush2.bf16.msra.mxu0 %v4890
    %6635 = vmatprep.subr.bf16.mxu0 %v4883
    %6636 = vmatpush2.bf16.msra.mxu0 %v4882
    %6637 = vmatprep.mubr.bf16.mxu0 %v287
    %6638 = vmatmul.mubr.bf16.gmra.mxu0 %v286
    %v6639 = vpop.f32.mrf.mxu0
    %v6640 = vadd.f32 %v6599, %v6639
    %v6641 = vpop.f32.mrf.mxu0
    %v6642 = vadd.f32 %v6601, %v6641
    %v6643 = vpop.f32.mrf.mxu0
    %v6644 = vpop.f32.mrf.mxu0
    %6645 = vdwg.mxu0
    %6646 = vmatprep.subr.bf16.mxu0 %v5003
    %6647 = vmatpush1.bf16.msra.mxu0 %v5002
    %6648 = vmatprep.subr.bf16.mxu0 %v4995
    %6649 = vmatpush1.bf16.msra.mxu0 %v4994
    %6650 = vmatprep.subr.bf16.mxu0 %v4987
    %6651 = vmatpush1.bf16.msra.mxu0 %v4986
    %6652 = vmatprep.subr.bf16.mxu0 %v4979
    %6653 = vmatpush1.bf16.msra.mxu0 %v4978
    %6654 = vmatprep.subr.bf16.mxu0 %v4971
    %6655 = vmatpush1.bf16.msra.mxu0 %v4970
    %6656 = vmatprep.subr.bf16.mxu0 %v4963
    %6657 = vmatpush1.bf16.msra.mxu0 %v4962
    %6658 = vmatprep.subr.bf16.mxu0 %v4955
    %6659 = vmatpush1.bf16.msra.mxu0 %v4954
    %6660 = vmatprep.subr.bf16.mxu0 %v4947
    %6661 = vmatpush1.bf16.msra.mxu0 %v4946
    %6662 = vmatprep.subr.bf16.mxu0 %v5067
    %6663 = vmatpush2.bf16.msra.mxu0 %v5066
    %6664 = vmatprep.subr.bf16.mxu0 %v5059
    %6665 = vmatpush2.bf16.msra.mxu0 %v5058
    %6666 = vmatprep.subr.bf16.mxu0 %v5051
    %6667 = vmatpush2.bf16.msra.mxu0 %v5050
    %6668 = vmatprep.subr.bf16.mxu0 %v5043
    %6669 = vmatpush2.bf16.msra.mxu0 %v5042
    %6670 = vmatprep.subr.bf16.mxu0 %v5035
    %6671 = vmatpush2.bf16.msra.mxu0 %v5034
    %6672 = vmatprep.subr.bf16.mxu0 %v5027
    %6673 = vmatpush2.bf16.msra.mxu0 %v5026
    %6674 = vmatprep.subr.bf16.mxu0 %v5019
    %6675 = vmatpush2.bf16.msra.mxu0 %v5018
    %6676 = vmatprep.subr.bf16.mxu0 %v5011
    %6677 = vmatpush2.bf16.msra.mxu0 %v5010
    %6678 = vmatprep.mubr.bf16.mxu0 %v289
    %6679 = vmatmul.mubr.bf16.gmra.mxu0 %v288
    %v6680 = vpop.f32.mrf.mxu0
    %v6681 = vadd.f32 %v6640, %v6680
    %v6682 = vpop.f32.mrf.mxu0
    %v6683 = vadd.f32 %v6642, %v6682
    %v6684 = vpop.f32.mrf.mxu0
    %v6685 = vpop.f32.mrf.mxu0
    %6686 = vdwg.mxu0
    %6687 = vmatprep.subr.bf16.mxu0 %v5131
    %6688 = vmatpush1.bf16.msra.mxu0 %v5130
    %6689 = vmatprep.subr.bf16.mxu0 %v5123
    %6690 = vmatpush1.bf16.msra.mxu0 %v5122
    %6691 = vmatprep.subr.bf16.mxu0 %v5115
    %6692 = vmatpush1.bf16.msra.mxu0 %v5114
    %6693 = vmatprep.subr.bf16.mxu0 %v5107
    %6694 = vmatpush1.bf16.msra.mxu0 %v5106
    %6695 = vmatprep.subr.bf16.mxu0 %v5099
    %6696 = vmatpush1.bf16.msra.mxu0 %v5098
    %6697 = vmatprep.subr.bf16.mxu0 %v5091
    %6698 = vmatpush1.bf16.msra.mxu0 %v5090
    %6699 = vmatprep.subr.bf16.mxu0 %v5083
    %6700 = vmatpush1.bf16.msra.mxu0 %v5082
    %6701 = vmatprep.subr.bf16.mxu0 %v5075
    %6702 = vmatpush1.bf16.msra.mxu0 %v5074
    %6703 = vmatprep.subr.bf16.mxu0 %v5195
    %6704 = vmatpush2.bf16.msra.mxu0 %v5194
    %6705 = vmatprep.subr.bf16.mxu0 %v5187
    %6706 = vmatpush2.bf16.msra.mxu0 %v5186
    %6707 = vmatprep.subr.bf16.mxu0 %v5179
    %6708 = vmatpush2.bf16.msra.mxu0 %v5178
    %6709 = vmatprep.subr.bf16.mxu0 %v5171
    %6710 = vmatpush2.bf16.msra.mxu0 %v5170
    %6711 = vmatprep.subr.bf16.mxu0 %v5163
    %6712 = vmatpush2.bf16.msra.mxu0 %v5162
    %6713 = vmatprep.subr.bf16.mxu0 %v5155
    %6714 = vmatpush2.bf16.msra.mxu0 %v5154
    %6715 = vmatprep.subr.bf16.mxu0 %v5147
    %6716 = vmatpush2.bf16.msra.mxu0 %v5146
    %6717 = vmatprep.subr.bf16.mxu0 %v5139
    %6718 = vmatpush2.bf16.msra.mxu0 %v5138
    %6719 = vmatprep.mubr.bf16.mxu0 %v291
    %6720 = vmatmul.mubr.bf16.gmra.mxu0 %v290
    %v6721 = vpop.f32.mrf.mxu0
    %v6722 = vadd.f32 %v6681, %v6721
    %v6723 = vpop.f32.mrf.mxu0
    %v6724 = vadd.f32 %v6683, %v6723
    %v6725 = vpop.f32.mrf.mxu0
    %v6726 = vpop.f32.mrf.mxu0
    %6727 = vdwg.mxu0
    %6728 = vmatprep.subr.bf16.mxu0 %v5259
    %6729 = vmatpush1.bf16.msra.mxu0 %v5258
    %6730 = vmatprep.subr.bf16.mxu0 %v5251
    %6731 = vmatpush1.bf16.msra.mxu0 %v5250
    %6732 = vmatprep.subr.bf16.mxu0 %v5243
    %6733 = vmatpush1.bf16.msra.mxu0 %v5242
    %6734 = vmatprep.subr.bf16.mxu0 %v5235
    %6735 = vmatpush1.bf16.msra.mxu0 %v5234
    %6736 = vmatprep.subr.bf16.mxu0 %v5227
    %6737 = vmatpush1.bf16.msra.mxu0 %v5226
    %6738 = vmatprep.subr.bf16.mxu0 %v5219
    %6739 = vmatpush1.bf16.msra.mxu0 %v5218
    %6740 = vmatprep.subr.bf16.mxu0 %v5211
    %6741 = vmatpush1.bf16.msra.mxu0 %v5210
    %6742 = vmatprep.subr.bf16.mxu0 %v5203
    %6743 = vmatpush1.bf16.msra.mxu0 %v5202
    %6744 = vmatprep.subr.bf16.mxu0 %v5323
    %6745 = vmatpush2.bf16.msra.mxu0 %v5322
    %6746 = vmatprep.subr.bf16.mxu0 %v5315
    %6747 = vmatpush2.bf16.msra.mxu0 %v5314
    %6748 = vmatprep.subr.bf16.mxu0 %v5307
    %6749 = vmatpush2.bf16.msra.mxu0 %v5306
    %6750 = vmatprep.subr.bf16.mxu0 %v5299
    %6751 = vmatpush2.bf16.msra.mxu0 %v5298
    %6752 = vmatprep.subr.bf16.mxu0 %v5291
    %6753 = vmatpush2.bf16.msra.mxu0 %v5290
    %6754 = vmatprep.subr.bf16.mxu0 %v5283
    %6755 = vmatpush2.bf16.msra.mxu0 %v5282
    %6756 = vmatprep.subr.bf16.mxu0 %v5275
    %6757 = vmatpush2.bf16.msra.mxu0 %v5274
    %6758 = vmatprep.subr.bf16.mxu0 %v5267
    %6759 = vmatpush2.bf16.msra.mxu0 %v5266
    %6760 = vmatprep.mubr.bf16.mxu0 %v293
    %6761 = vmatmul.mubr.bf16.gmra.mxu0 %v292
    %v6762 = vpop.f32.mrf.mxu0
    %v6763 = vadd.f32 %v6722, %v6762
    %v6764 = vpop.f32.mrf.mxu0
    %v6765 = vadd.f32 %v6724, %v6764
    %v6766 = vpop.f32.mrf.mxu0
    %v6767 = vpop.f32.mrf.mxu0
    %6768 = vdwg.mxu0
    %6769 = vmatprep.subr.bf16.mxu0 %v5387
    %6770 = vmatpush1.bf16.msra.mxu0 %v5386
    %6771 = vmatprep.subr.bf16.mxu0 %v5379
    %6772 = vmatpush1.bf16.msra.mxu0 %v5378
    %6773 = vmatprep.subr.bf16.mxu0 %v5371
    %6774 = vmatpush1.bf16.msra.mxu0 %v5370
    %6775 = vmatprep.subr.bf16.mxu0 %v5363
    %6776 = vmatpush1.bf16.msra.mxu0 %v5362
    %6777 = vmatprep.subr.bf16.mxu0 %v5355
    %6778 = vmatpush1.bf16.msra.mxu0 %v5354
    %6779 = vmatprep.subr.bf16.mxu0 %v5347
    %6780 = vmatpush1.bf16.msra.mxu0 %v5346
    %6781 = vmatprep.subr.bf16.mxu0 %v5339
    %6782 = vmatpush1.bf16.msra.mxu0 %v5338
    %6783 = vmatprep.subr.bf16.mxu0 %v5331
    %6784 = vmatpush1.bf16.msra.mxu0 %v5330
    %6785 = vmatprep.subr.bf16.mxu0 %v5451
    %6786 = vmatpush2.bf16.msra.mxu0 %v5450
    %6787 = vmatprep.subr.bf16.mxu0 %v5443
    %6788 = vmatpush2.bf16.msra.mxu0 %v5442
    %6789 = vmatprep.subr.bf16.mxu0 %v5435
    %6790 = vmatpush2.bf16.msra.mxu0 %v5434
    %6791 = vmatprep.subr.bf16.mxu0 %v5427
    %6792 = vmatpush2.bf16.msra.mxu0 %v5426
    %6793 = vmatprep.subr.bf16.mxu0 %v5419
    %6794 = vmatpush2.bf16.msra.mxu0 %v5418
    %6795 = vmatprep.subr.bf16.mxu0 %v5411
    %6796 = vmatpush2.bf16.msra.mxu0 %v5410
    %6797 = vmatprep.subr.bf16.mxu0 %v5403
    %6798 = vmatpush2.bf16.msra.mxu0 %v5402
    %6799 = vmatprep.subr.bf16.mxu0 %v5395
    %6800 = vmatpush2.bf16.msra.mxu0 %v5394
    %6801 = vmatprep.mubr.bf16.mxu0 %v295
    %6802 = vmatmul.mubr.bf16.gmra.mxu0 %v294
    %v6803 = vpop.f32.mrf.mxu0
    %v6804 = vadd.f32 %v6763, %v6803
    %v6805 = vpop.f32.mrf.mxu0
    %v6806 = vadd.f32 %v6765, %v6805
    %v6807 = vpop.f32.mrf.mxu0
    %v6808 = vpop.f32.mrf.mxu0
    %6809 = vdwg.mxu0
    %6810 = vmatprep.subr.bf16.mxu0 %v4493
    %6811 = vmatpush1.bf16.msra.mxu0 %v4492
    %6812 = vmatprep.subr.bf16.mxu0 %v4485
    %6813 = vmatpush1.bf16.msra.mxu0 %v4484
    %6814 = vmatprep.subr.bf16.mxu0 %v4477
    %6815 = vmatpush1.bf16.msra.mxu0 %v4476
    %6816 = vmatprep.subr.bf16.mxu0 %v4469
    %6817 = vmatpush1.bf16.msra.mxu0 %v4468
    %6818 = vmatprep.subr.bf16.mxu0 %v4461
    %6819 = vmatpush1.bf16.msra.mxu0 %v4460
    %6820 = vmatprep.subr.bf16.mxu0 %v4453
    %6821 = vmatpush1.bf16.msra.mxu0 %v4452
    %6822 = vmatprep.subr.bf16.mxu0 %v4445
    %6823 = vmatpush1.bf16.msra.mxu0 %v4444
    %6824 = vmatprep.subr.bf16.mxu0 %v4437
    %6825 = vmatpush1.bf16.msra.mxu0 %v4436
    %6826 = vmatprep.subr.bf16.mxu0 %v4557
    %6827 = vmatpush2.bf16.msra.mxu0 %v4556
    %6828 = vmatprep.subr.bf16.mxu0 %v4549
    %6829 = vmatpush2.bf16.msra.mxu0 %v4548
    %6830 = vmatprep.subr.bf16.mxu0 %v4541
    %6831 = vmatpush2.bf16.msra.mxu0 %v4540
    %6832 = vmatprep.subr.bf16.mxu0 %v4533
    %6833 = vmatpush2.bf16.msra.mxu0 %v4532
    %6834 = vmatprep.subr.bf16.mxu0 %v4525
    %6835 = vmatpush2.bf16.msra.mxu0 %v4524
    %6836 = vmatprep.subr.bf16.mxu0 %v4517
    %6837 = vmatpush2.bf16.msra.mxu0 %v4516
    %6838 = vmatprep.subr.bf16.mxu0 %v4509
    %6839 = vmatpush2.bf16.msra.mxu0 %v4508
    %6840 = vmatprep.subr.bf16.mxu0 %v4501
    %6841 = vmatpush2.bf16.msra.mxu0 %v4500
    %6842 = vmatprep.mubr.bf16.mxu0 %v281
    %6843 = vmatmul.mubr.bf16.gmra.mxu0 %v280
    %v6844 = vpop.f32.mrf.mxu0
    %v6845 = vadd.f32 %v1333, %v6844
    %v6846 = vpop.f32.mrf.mxu0
    %v6847 = vadd.f32 %v1337, %v6846
    %v6848 = vpop.f32.mrf.mxu0
    %v6849 = vpop.f32.mrf.mxu0
    %6850 = vdwg.mxu0
    %6851 = vmatprep.subr.bf16.mxu0 %v4621
    %6852 = vmatpush1.bf16.msra.mxu0 %v4620
    %6853 = vmatprep.subr.bf16.mxu0 %v4613
    %6854 = vmatpush1.bf16.msra.mxu0 %v4612
    %6855 = vmatprep.subr.bf16.mxu0 %v4605
    %6856 = vmatpush1.bf16.msra.mxu0 %v4604
    %6857 = vmatprep.subr.bf16.mxu0 %v4597
    %6858 = vmatpush1.bf16.msra.mxu0 %v4596
    %6859 = vmatprep.subr.bf16.mxu0 %v4589
    %6860 = vmatpush1.bf16.msra.mxu0 %v4588
    %6861 = vmatprep.subr.bf16.mxu0 %v4581
    %6862 = vmatpush1.bf16.msra.mxu0 %v4580
    %6863 = vmatprep.subr.bf16.mxu0 %v4573
    %6864 = vmatpush1.bf16.msra.mxu0 %v4572
    %6865 = vmatprep.subr.bf16.mxu0 %v4565
    %6866 = vmatpush1.bf16.msra.mxu0 %v4564
    %6867 = vmatprep.subr.bf16.mxu0 %v4685
    %6868 = vmatpush2.bf16.msra.mxu0 %v4684
    %6869 = vmatprep.subr.bf16.mxu0 %v4677
    %6870 = vmatpush2.bf16.msra.mxu0 %v4676
    %6871 = vmatprep.subr.bf16.mxu0 %v4669
    %6872 = vmatpush2.bf16.msra.mxu0 %v4668
    %6873 = vmatprep.subr.bf16.mxu0 %v4661
    %6874 = vmatpush2.bf16.msra.mxu0 %v4660
    %6875 = vmatprep.subr.bf16.mxu0 %v4653
    %6876 = vmatpush2.bf16.msra.mxu0 %v4652
    %6877 = vmatprep.subr.bf16.mxu0 %v4645
    %6878 = vmatpush2.bf16.msra.mxu0 %v4644
    %6879 = vmatprep.subr.bf16.mxu0 %v4637
    %6880 = vmatpush2.bf16.msra.mxu0 %v4636
    %6881 = vmatprep.subr.bf16.mxu0 %v4629
    %6882 = vmatpush2.bf16.msra.mxu0 %v4628
    %6883 = vmatprep.mubr.bf16.mxu0 %v283
    %6884 = vmatmul.mubr.bf16.gmra.mxu0 %v282
    %v6885 = vpop.f32.mrf.mxu0
    %v6886 = vadd.f32 %v6845, %v6885
    %v6887 = vpop.f32.mrf.mxu0
    %v6888 = vadd.f32 %v6847, %v6887
    %v6889 = vpop.f32.mrf.mxu0
    %v6890 = vpop.f32.mrf.mxu0
    %6891 = vdwg.mxu0
    %6892 = vmatprep.subr.bf16.mxu0 %v4749
    %6893 = vmatpush1.bf16.msra.mxu0 %v4748
    %6894 = vmatprep.subr.bf16.mxu0 %v4741
    %6895 = vmatpush1.bf16.msra.mxu0 %v4740
    %6896 = vmatprep.subr.bf16.mxu0 %v4733
    %6897 = vmatpush1.bf16.msra.mxu0 %v4732
    %6898 = vmatprep.subr.bf16.mxu0 %v4725
    %6899 = vmatpush1.bf16.msra.mxu0 %v4724
    %6900 = vmatprep.subr.bf16.mxu0 %v4717
    %6901 = vmatpush1.bf16.msra.mxu0 %v4716
    %6902 = vmatprep.subr.bf16.mxu0 %v4709
    %6903 = vmatpush1.bf16.msra.mxu0 %v4708
    %6904 = vmatprep.subr.bf16.mxu0 %v4701
    %6905 = vmatpush1.bf16.msra.mxu0 %v4700
    %6906 = vmatprep.subr.bf16.mxu0 %v4693
    %6907 = vmatpush1.bf16.msra.mxu0 %v4692
    %6908 = vmatprep.subr.bf16.mxu0 %v4813
    %6909 = vmatpush2.bf16.msra.mxu0 %v4812
    %6910 = vmatprep.subr.bf16.mxu0 %v4805
    %6911 = vmatpush2.bf16.msra.mxu0 %v4804
    %6912 = vmatprep.subr.bf16.mxu0 %v4797
    %6913 = vmatpush2.bf16.msra.mxu0 %v4796
    %6914 = vmatprep.subr.bf16.mxu0 %v4789
    %6915 = vmatpush2.bf16.msra.mxu0 %v4788
    %6916 = vmatprep.subr.bf16.mxu0 %v4781
    %6917 = vmatpush2.bf16.msra.mxu0 %v4780
    %6918 = vmatprep.subr.bf16.mxu0 %v4773
    %6919 = vmatpush2.bf16.msra.mxu0 %v4772
    %6920 = vmatprep.subr.bf16.mxu0 %v4765
    %6921 = vmatpush2.bf16.msra.mxu0 %v4764
    %6922 = vmatprep.subr.bf16.mxu0 %v4757
    %6923 = vmatpush2.bf16.msra.mxu0 %v4756
    %6924 = vmatprep.mubr.bf16.mxu0 %v285
    %6925 = vmatmul.mubr.bf16.gmra.mxu0 %v284
    %v6926 = vpop.f32.mrf.mxu0
    %v6927 = vadd.f32 %v6886, %v6926
    %v6928 = vpop.f32.mrf.mxu0
    %v6929 = vadd.f32 %v6888, %v6928
    %v6930 = vpop.f32.mrf.mxu0
    %v6931 = vpop.f32.mrf.mxu0
    %6932 = vdwg.mxu0
    %6933 = vmatprep.subr.bf16.mxu0 %v4877
    %6934 = vmatpush1.bf16.msra.mxu0 %v4876
    %6935 = vmatprep.subr.bf16.mxu0 %v4869
    %6936 = vmatpush1.bf16.msra.mxu0 %v4868
    %6937 = vmatprep.subr.bf16.mxu0 %v4861
    %6938 = vmatpush1.bf16.msra.mxu0 %v4860
    %6939 = vmatprep.subr.bf16.mxu0 %v4853
    %6940 = vmatpush1.bf16.msra.mxu0 %v4852
    %6941 = vmatprep.subr.bf16.mxu0 %v4845
    %6942 = vmatpush1.bf16.msra.mxu0 %v4844
    %6943 = vmatprep.subr.bf16.mxu0 %v4837
    %6944 = vmatpush1.bf16.msra.mxu0 %v4836
    %6945 = vmatprep.subr.bf16.mxu0 %v4829
    %6946 = vmatpush1.bf16.msra.mxu0 %v4828
    %6947 = vmatprep.subr.bf16.mxu0 %v4821
    %6948 = vmatpush1.bf16.msra.mxu0 %v4820
    %6949 = vmatprep.subr.bf16.mxu0 %v4941
    %6950 = vmatpush2.bf16.msra.mxu0 %v4940
    %6951 = vmatprep.subr.bf16.mxu0 %v4933
    %6952 = vmatpush2.bf16.msra.mxu0 %v4932
    %6953 = vmatprep.subr.bf16.mxu0 %v4925
    %6954 = vmatpush2.bf16.msra.mxu0 %v4924
    %6955 = vmatprep.subr.bf16.mxu0 %v4917
    %6956 = vmatpush2.bf16.msra.mxu0 %v4916
    %6957 = vmatprep.subr.bf16.mxu0 %v4909
    %6958 = vmatpush2.bf16.msra.mxu0 %v4908
    %6959 = vmatprep.subr.bf16.mxu0 %v4901
    %6960 = vmatpush2.bf16.msra.mxu0 %v4900
    %6961 = vmatprep.subr.bf16.mxu0 %v4893
    %6962 = vmatpush2.bf16.msra.mxu0 %v4892
    %6963 = vmatprep.subr.bf16.mxu0 %v4885
    %6964 = vmatpush2.bf16.msra.mxu0 %v4884
    %6965 = vmatprep.mubr.bf16.mxu0 %v287
    %6966 = vmatmul.mubr.bf16.gmra.mxu0 %v286
    %v6967 = vpop.f32.mrf.mxu0
    %v6968 = vadd.f32 %v6927, %v6967
    %v6969 = vpop.f32.mrf.mxu0
    %v6970 = vadd.f32 %v6929, %v6969
    %v6971 = vpop.f32.mrf.mxu0
    %v6972 = vpop.f32.mrf.mxu0
    %6973 = vdwg.mxu0
    %6974 = vmatprep.subr.bf16.mxu0 %v5005
    %6975 = vmatpush1.bf16.msra.mxu0 %v5004
    %6976 = vmatprep.subr.bf16.mxu0 %v4997
    %6977 = vmatpush1.bf16.msra.mxu0 %v4996
    %6978 = vmatprep.subr.bf16.mxu0 %v4989
    %6979 = vmatpush1.bf16.msra.mxu0 %v4988
    %6980 = vmatprep.subr.bf16.mxu0 %v4981
    %6981 = vmatpush1.bf16.msra.mxu0 %v4980
    %6982 = vmatprep.subr.bf16.mxu0 %v4973
    %6983 = vmatpush1.bf16.msra.mxu0 %v4972
    %6984 = vmatprep.subr.bf16.mxu0 %v4965
    %6985 = vmatpush1.bf16.msra.mxu0 %v4964
    %6986 = vmatprep.subr.bf16.mxu0 %v4957
    %6987 = vmatpush1.bf16.msra.mxu0 %v4956
    %6988 = vmatprep.subr.bf16.mxu0 %v4949
    %6989 = vmatpush1.bf16.msra.mxu0 %v4948
    %6990 = vmatprep.subr.bf16.mxu0 %v5069
    %6991 = vmatpush2.bf16.msra.mxu0 %v5068
    %6992 = vmatprep.subr.bf16.mxu0 %v5061
    %6993 = vmatpush2.bf16.msra.mxu0 %v5060
    %6994 = vmatprep.subr.bf16.mxu0 %v5053
    %6995 = vmatpush2.bf16.msra.mxu0 %v5052
    %6996 = vmatprep.subr.bf16.mxu0 %v5045
    %6997 = vmatpush2.bf16.msra.mxu0 %v5044
    %6998 = vmatprep.subr.bf16.mxu0 %v5037
    %6999 = vmatpush2.bf16.msra.mxu0 %v5036
    %7000 = vmatprep.subr.bf16.mxu0 %v5029
    %7001 = vmatpush2.bf16.msra.mxu0 %v5028
    %7002 = vmatprep.subr.bf16.mxu0 %v5021
    %7003 = vmatpush2.bf16.msra.mxu0 %v5020
    %7004 = vmatprep.subr.bf16.mxu0 %v5013
    %7005 = vmatpush2.bf16.msra.mxu0 %v5012
    %7006 = vmatprep.mubr.bf16.mxu0 %v289
    %7007 = vmatmul.mubr.bf16.gmra.mxu0 %v288
    %v7008 = vpop.f32.mrf.mxu0
    %v7009 = vadd.f32 %v6968, %v7008
    %v7010 = vpop.f32.mrf.mxu0
    %v7011 = vadd.f32 %v6970, %v7010
    %v7012 = vpop.f32.mrf.mxu0
    %v7013 = vpop.f32.mrf.mxu0
    %7014 = vdwg.mxu0
    %7015 = vmatprep.subr.bf16.mxu0 %v5133
    %7016 = vmatpush1.bf16.msra.mxu0 %v5132
    %7017 = vmatprep.subr.bf16.mxu0 %v5125
    %7018 = vmatpush1.bf16.msra.mxu0 %v5124
    %7019 = vmatprep.subr.bf16.mxu0 %v5117
    %7020 = vmatpush1.bf16.msra.mxu0 %v5116
    %7021 = vmatprep.subr.bf16.mxu0 %v5109
    %7022 = vmatpush1.bf16.msra.mxu0 %v5108
    %7023 = vmatprep.subr.bf16.mxu0 %v5101
    %7024 = vmatpush1.bf16.msra.mxu0 %v5100
    %7025 = vmatprep.subr.bf16.mxu0 %v5093
    %7026 = vmatpush1.bf16.msra.mxu0 %v5092
    %7027 = vmatprep.subr.bf16.mxu0 %v5085
    %7028 = vmatpush1.bf16.msra.mxu0 %v5084
    %7029 = vmatprep.subr.bf16.mxu0 %v5077
    %7030 = vmatpush1.bf16.msra.mxu0 %v5076
    %7031 = vmatprep.subr.bf16.mxu0 %v5197
    %7032 = vmatpush2.bf16.msra.mxu0 %v5196
    %7033 = vmatprep.subr.bf16.mxu0 %v5189
    %7034 = vmatpush2.bf16.msra.mxu0 %v5188
    %7035 = vmatprep.subr.bf16.mxu0 %v5181
    %7036 = vmatpush2.bf16.msra.mxu0 %v5180
    %7037 = vmatprep.subr.bf16.mxu0 %v5173
    %7038 = vmatpush2.bf16.msra.mxu0 %v5172
    %7039 = vmatprep.subr.bf16.mxu0 %v5165
    %7040 = vmatpush2.bf16.msra.mxu0 %v5164
    %7041 = vmatprep.subr.bf16.mxu0 %v5157
    %7042 = vmatpush2.bf16.msra.mxu0 %v5156
    %7043 = vmatprep.subr.bf16.mxu0 %v5149
    %7044 = vmatpush2.bf16.msra.mxu0 %v5148
    %7045 = vmatprep.subr.bf16.mxu0 %v5141
    %7046 = vmatpush2.bf16.msra.mxu0 %v5140
    %7047 = vmatprep.mubr.bf16.mxu0 %v291
    %7048 = vmatmul.mubr.bf16.gmra.mxu0 %v290
    %v7049 = vpop.f32.mrf.mxu0
    %v7050 = vadd.f32 %v7009, %v7049
    %v7051 = vpop.f32.mrf.mxu0
    %v7052 = vadd.f32 %v7011, %v7051
    %v7053 = vpop.f32.mrf.mxu0
    %v7054 = vpop.f32.mrf.mxu0
    %7055 = vdwg.mxu0
    %7056 = vmatprep.subr.bf16.mxu0 %v5261
    %7057 = vmatpush1.bf16.msra.mxu0 %v5260
    %7058 = vmatprep.subr.bf16.mxu0 %v5253
    %7059 = vmatpush1.bf16.msra.mxu0 %v5252
    %7060 = vmatprep.subr.bf16.mxu0 %v5245
    %7061 = vmatpush1.bf16.msra.mxu0 %v5244
    %7062 = vmatprep.subr.bf16.mxu0 %v5237
    %7063 = vmatpush1.bf16.msra.mxu0 %v5236
    %7064 = vmatprep.subr.bf16.mxu0 %v5229
    %7065 = vmatpush1.bf16.msra.mxu0 %v5228
    %7066 = vmatprep.subr.bf16.mxu0 %v5221
    %7067 = vmatpush1.bf16.msra.mxu0 %v5220
    %7068 = vmatprep.subr.bf16.mxu0 %v5213
    %7069 = vmatpush1.bf16.msra.mxu0 %v5212
    %7070 = vmatprep.subr.bf16.mxu0 %v5205
    %7071 = vmatpush1.bf16.msra.mxu0 %v5204
    %7072 = vmatprep.subr.bf16.mxu0 %v5325
    %7073 = vmatpush2.bf16.msra.mxu0 %v5324
    %7074 = vmatprep.subr.bf16.mxu0 %v5317
    %7075 = vmatpush2.bf16.msra.mxu0 %v5316
    %7076 = vmatprep.subr.bf16.mxu0 %v5309
    %7077 = vmatpush2.bf16.msra.mxu0 %v5308
    %7078 = vmatprep.subr.bf16.mxu0 %v5301
    %7079 = vmatpush2.bf16.msra.mxu0 %v5300
    %7080 = vmatprep.subr.bf16.mxu0 %v5293
    %7081 = vmatpush2.bf16.msra.mxu0 %v5292
    %7082 = vmatprep.subr.bf16.mxu0 %v5285
    %7083 = vmatpush2.bf16.msra.mxu0 %v5284
    %7084 = vmatprep.subr.bf16.mxu0 %v5277
    %7085 = vmatpush2.bf16.msra.mxu0 %v5276
    %7086 = vmatprep.subr.bf16.mxu0 %v5269
    %7087 = vmatpush2.bf16.msra.mxu0 %v5268
    %7088 = vmatprep.mubr.bf16.mxu0 %v293
    %7089 = vmatmul.mubr.bf16.gmra.mxu0 %v292
    %v7090 = vpop.f32.mrf.mxu0
    %v7091 = vadd.f32 %v7050, %v7090
    %v7092 = vpop.f32.mrf.mxu0
    %v7093 = vadd.f32 %v7052, %v7092
    %v7094 = vpop.f32.mrf.mxu0
    %v7095 = vpop.f32.mrf.mxu0
    %7096 = vdwg.mxu0
    %7097 = vmatprep.subr.bf16.mxu0 %v5389
    %7098 = vmatpush1.bf16.msra.mxu0 %v5388
    %7099 = vmatprep.subr.bf16.mxu0 %v5381
    %7100 = vmatpush1.bf16.msra.mxu0 %v5380
    %7101 = vmatprep.subr.bf16.mxu0 %v5373
    %7102 = vmatpush1.bf16.msra.mxu0 %v5372
    %7103 = vmatprep.subr.bf16.mxu0 %v5365
    %7104 = vmatpush1.bf16.msra.mxu0 %v5364
    %7105 = vmatprep.subr.bf16.mxu0 %v5357
    %7106 = vmatpush1.bf16.msra.mxu0 %v5356
    %7107 = vmatprep.subr.bf16.mxu0 %v5349
    %7108 = vmatpush1.bf16.msra.mxu0 %v5348
    %7109 = vmatprep.subr.bf16.mxu0 %v5341
    %7110 = vmatpush1.bf16.msra.mxu0 %v5340
    %7111 = vmatprep.subr.bf16.mxu0 %v5333
    %7112 = vmatpush1.bf16.msra.mxu0 %v5332
    %7113 = vmatprep.subr.bf16.mxu0 %v5453
    %7114 = vmatpush2.bf16.msra.mxu0 %v5452
    %7115 = vmatprep.subr.bf16.mxu0 %v5445
    %7116 = vmatpush2.bf16.msra.mxu0 %v5444
    %7117 = vmatprep.subr.bf16.mxu0 %v5437
    %7118 = vmatpush2.bf16.msra.mxu0 %v5436
    %7119 = vmatprep.subr.bf16.mxu0 %v5429
    %7120 = vmatpush2.bf16.msra.mxu0 %v5428
    %7121 = vmatprep.subr.bf16.mxu0 %v5421
    %7122 = vmatpush2.bf16.msra.mxu0 %v5420
    %7123 = vmatprep.subr.bf16.mxu0 %v5413
    %7124 = vmatpush2.bf16.msra.mxu0 %v5412
    %7125 = vmatprep.subr.bf16.mxu0 %v5405
    %7126 = vmatpush2.bf16.msra.mxu0 %v5404
    %7127 = vmatprep.subr.bf16.mxu0 %v5397
    %7128 = vmatpush2.bf16.msra.mxu0 %v5396
    %7129 = vmatprep.mubr.bf16.mxu0 %v295
    %7130 = vmatmul.mubr.bf16.gmra.mxu0 %v294
    %v7131 = vpop.f32.mrf.mxu0
    %v7132 = vadd.f32 %v7091, %v7131
    %v7133 = vpop.f32.mrf.mxu0
    %v7134 = vadd.f32 %v7093, %v7133
    %v7135 = vpop.f32.mrf.mxu0
    %v7136 = vpop.f32.mrf.mxu0
    %7137 = vdwg.mxu0
    %7138 = vmatprep.subr.bf16.mxu0 %v4495
    %7139 = vmatpush1.bf16.msra.mxu0 %v4494
    %7140 = vmatprep.subr.bf16.mxu0 %v4487
    %7141 = vmatpush1.bf16.msra.mxu0 %v4486
    %7142 = vmatprep.subr.bf16.mxu0 %v4479
    %7143 = vmatpush1.bf16.msra.mxu0 %v4478
    %7144 = vmatprep.subr.bf16.mxu0 %v4471
    %7145 = vmatpush1.bf16.msra.mxu0 %v4470
    %7146 = vmatprep.subr.bf16.mxu0 %v4463
    %7147 = vmatpush1.bf16.msra.mxu0 %v4462
    %7148 = vmatprep.subr.bf16.mxu0 %v4455
    %7149 = vmatpush1.bf16.msra.mxu0 %v4454
    %7150 = vmatprep.subr.bf16.mxu0 %v4447
    %7151 = vmatpush1.bf16.msra.mxu0 %v4446
    %7152 = vmatprep.subr.bf16.mxu0 %v4439
    %7153 = vmatpush1.bf16.msra.mxu0 %v4438
    %7154 = vmatprep.subr.bf16.mxu0 %v4559
    %7155 = vmatpush2.bf16.msra.mxu0 %v4558
    %7156 = vmatprep.subr.bf16.mxu0 %v4551
    %7157 = vmatpush2.bf16.msra.mxu0 %v4550
    %7158 = vmatprep.subr.bf16.mxu0 %v4543
    %7159 = vmatpush2.bf16.msra.mxu0 %v4542
    %7160 = vmatprep.subr.bf16.mxu0 %v4535
    %7161 = vmatpush2.bf16.msra.mxu0 %v4534
    %7162 = vmatprep.subr.bf16.mxu0 %v4527
    %7163 = vmatpush2.bf16.msra.mxu0 %v4526
    %7164 = vmatprep.subr.bf16.mxu0 %v4519
    %7165 = vmatpush2.bf16.msra.mxu0 %v4518
    %7166 = vmatprep.subr.bf16.mxu0 %v4511
    %7167 = vmatpush2.bf16.msra.mxu0 %v4510
    %7168 = vmatprep.subr.bf16.mxu0 %v4503
    %7169 = vmatpush2.bf16.msra.mxu0 %v4502
    %7170 = vmatprep.mubr.bf16.mxu0 %v281
    %7171 = vmatmul.mubr.bf16.gmra.mxu0 %v280
    %v7172 = vpop.f32.mrf.mxu0
    %v7173 = vadd.f32 %v1341, %v7172
    %v7174 = vpop.f32.mrf.mxu0
    %v7175 = vadd.f32 %v1345, %v7174
    %v7176 = vpop.f32.mrf.mxu0
    %v7177 = vpop.f32.mrf.mxu0
    %7178 = vdwg.mxu0
    %7179 = vmatprep.subr.bf16.mxu0 %v4623
    %7180 = vmatpush1.bf16.msra.mxu0 %v4622
    %7181 = vmatprep.subr.bf16.mxu0 %v4615
    %7182 = vmatpush1.bf16.msra.mxu0 %v4614
    %7183 = vmatprep.subr.bf16.mxu0 %v4607
    %7184 = vmatpush1.bf16.msra.mxu0 %v4606
    %7185 = vmatprep.subr.bf16.mxu0 %v4599
    %7186 = vmatpush1.bf16.msra.mxu0 %v4598
    %7187 = vmatprep.subr.bf16.mxu0 %v4591
    %7188 = vmatpush1.bf16.msra.mxu0 %v4590
    %7189 = vmatprep.subr.bf16.mxu0 %v4583
    %7190 = vmatpush1.bf16.msra.mxu0 %v4582
    %7191 = vmatprep.subr.bf16.mxu0 %v4575
    %7192 = vmatpush1.bf16.msra.mxu0 %v4574
    %7193 = vmatprep.subr.bf16.mxu0 %v4567
    %7194 = vmatpush1.bf16.msra.mxu0 %v4566
    %7195 = vmatprep.subr.bf16.mxu0 %v4687
    %7196 = vmatpush2.bf16.msra.mxu0 %v4686
    %7197 = vmatprep.subr.bf16.mxu0 %v4679
    %7198 = vmatpush2.bf16.msra.mxu0 %v4678
    %7199 = vmatprep.subr.bf16.mxu0 %v4671
    %7200 = vmatpush2.bf16.msra.mxu0 %v4670
    %7201 = vmatprep.subr.bf16.mxu0 %v4663
    %7202 = vmatpush2.bf16.msra.mxu0 %v4662
    %7203 = vmatprep.subr.bf16.mxu0 %v4655
    %7204 = vmatpush2.bf16.msra.mxu0 %v4654
    %7205 = vmatprep.subr.bf16.mxu0 %v4647
    %7206 = vmatpush2.bf16.msra.mxu0 %v4646
    %7207 = vmatprep.subr.bf16.mxu0 %v4639
    %7208 = vmatpush2.bf16.msra.mxu0 %v4638
    %7209 = vmatprep.subr.bf16.mxu0 %v4631
    %7210 = vmatpush2.bf16.msra.mxu0 %v4630
    %7211 = vmatprep.mubr.bf16.mxu0 %v283
    %7212 = vmatmul.mubr.bf16.gmra.mxu0 %v282
    %v7213 = vpop.f32.mrf.mxu0
    %v7214 = vadd.f32 %v7173, %v7213
    %v7215 = vpop.f32.mrf.mxu0
    %v7216 = vadd.f32 %v7175, %v7215
    %v7217 = vpop.f32.mrf.mxu0
    %v7218 = vpop.f32.mrf.mxu0
    %7219 = vdwg.mxu0
    %7220 = vmatprep.subr.bf16.mxu0 %v4751
    %7221 = vmatpush1.bf16.msra.mxu0 %v4750
    %7222 = vmatprep.subr.bf16.mxu0 %v4743
    %7223 = vmatpush1.bf16.msra.mxu0 %v4742
    %7224 = vmatprep.subr.bf16.mxu0 %v4735
    %7225 = vmatpush1.bf16.msra.mxu0 %v4734
    %7226 = vmatprep.subr.bf16.mxu0 %v4727
    %7227 = vmatpush1.bf16.msra.mxu0 %v4726
    %7228 = vmatprep.subr.bf16.mxu0 %v4719
    %7229 = vmatpush1.bf16.msra.mxu0 %v4718
    %7230 = vmatprep.subr.bf16.mxu0 %v4711
    %7231 = vmatpush1.bf16.msra.mxu0 %v4710
    %7232 = vmatprep.subr.bf16.mxu0 %v4703
    %7233 = vmatpush1.bf16.msra.mxu0 %v4702
    %7234 = vmatprep.subr.bf16.mxu0 %v4695
    %7235 = vmatpush1.bf16.msra.mxu0 %v4694
    %7236 = vmatprep.subr.bf16.mxu0 %v4815
    %7237 = vmatpush2.bf16.msra.mxu0 %v4814
    %7238 = vmatprep.subr.bf16.mxu0 %v4807
    %7239 = vmatpush2.bf16.msra.mxu0 %v4806
    %7240 = vmatprep.subr.bf16.mxu0 %v4799
    %7241 = vmatpush2.bf16.msra.mxu0 %v4798
    %7242 = vmatprep.subr.bf16.mxu0 %v4791
    %7243 = vmatpush2.bf16.msra.mxu0 %v4790
    %7244 = vmatprep.subr.bf16.mxu0 %v4783
    %7245 = vmatpush2.bf16.msra.mxu0 %v4782
    %7246 = vmatprep.subr.bf16.mxu0 %v4775
    %7247 = vmatpush2.bf16.msra.mxu0 %v4774
    %7248 = vmatprep.subr.bf16.mxu0 %v4767
    %7249 = vmatpush2.bf16.msra.mxu0 %v4766
    %7250 = vmatprep.subr.bf16.mxu0 %v4759
    %7251 = vmatpush2.bf16.msra.mxu0 %v4758
    %7252 = vmatprep.mubr.bf16.mxu0 %v285
    %7253 = vmatmul.mubr.bf16.gmra.mxu0 %v284
    %v7254 = vpop.f32.mrf.mxu0
    %v7255 = vadd.f32 %v7214, %v7254
    %v7256 = vpop.f32.mrf.mxu0
    %v7257 = vadd.f32 %v7216, %v7256
    %v7258 = vpop.f32.mrf.mxu0
    %v7259 = vpop.f32.mrf.mxu0
    %7260 = vdwg.mxu0
    %7261 = vmatprep.subr.bf16.mxu0 %v4879
    %7262 = vmatpush1.bf16.msra.mxu0 %v4878
    %7263 = vmatprep.subr.bf16.mxu0 %v4871
    %7264 = vmatpush1.bf16.msra.mxu0 %v4870
    %7265 = vmatprep.subr.bf16.mxu0 %v4863
    %7266 = vmatpush1.bf16.msra.mxu0 %v4862
    %7267 = vmatprep.subr.bf16.mxu0 %v4855
    %7268 = vmatpush1.bf16.msra.mxu0 %v4854
    %7269 = vmatprep.subr.bf16.mxu0 %v4847
    %7270 = vmatpush1.bf16.msra.mxu0 %v4846
    %7271 = vmatprep.subr.bf16.mxu0 %v4839
    %7272 = vmatpush1.bf16.msra.mxu0 %v4838
    %7273 = vmatprep.subr.bf16.mxu0 %v4831
    %7274 = vmatpush1.bf16.msra.mxu0 %v4830
    %7275 = vmatprep.subr.bf16.mxu0 %v4823
    %7276 = vmatpush1.bf16.msra.mxu0 %v4822
    %7277 = vmatprep.subr.bf16.mxu0 %v4943
    %7278 = vmatpush2.bf16.msra.mxu0 %v4942
    %7279 = vmatprep.subr.bf16.mxu0 %v4935
    %7280 = vmatpush2.bf16.msra.mxu0 %v4934
    %7281 = vmatprep.subr.bf16.mxu0 %v4927
    %7282 = vmatpush2.bf16.msra.mxu0 %v4926
    %7283 = vmatprep.subr.bf16.mxu0 %v4919
    %7284 = vmatpush2.bf16.msra.mxu0 %v4918
    %7285 = vmatprep.subr.bf16.mxu0 %v4911
    %7286 = vmatpush2.bf16.msra.mxu0 %v4910
    %7287 = vmatprep.subr.bf16.mxu0 %v4903
    %7288 = vmatpush2.bf16.msra.mxu0 %v4902
    %7289 = vmatprep.subr.bf16.mxu0 %v4895
    %7290 = vmatpush2.bf16.msra.mxu0 %v4894
    %7291 = vmatprep.subr.bf16.mxu0 %v4887
    %7292 = vmatpush2.bf16.msra.mxu0 %v4886
    %7293 = vmatprep.mubr.bf16.mxu0 %v287
    %7294 = vmatmul.mubr.bf16.gmra.mxu0 %v286
    %v7295 = vpop.f32.mrf.mxu0
    %v7296 = vadd.f32 %v7255, %v7295
    %v7297 = vpop.f32.mrf.mxu0
    %v7298 = vadd.f32 %v7257, %v7297
    %v7299 = vpop.f32.mrf.mxu0
    %v7300 = vpop.f32.mrf.mxu0
    %7301 = vdwg.mxu0
    %7302 = vmatprep.subr.bf16.mxu0 %v5007
    %7303 = vmatpush1.bf16.msra.mxu0 %v5006
    %7304 = vmatprep.subr.bf16.mxu0 %v4999
    %7305 = vmatpush1.bf16.msra.mxu0 %v4998
    %7306 = vmatprep.subr.bf16.mxu0 %v4991
    %7307 = vmatpush1.bf16.msra.mxu0 %v4990
    %7308 = vmatprep.subr.bf16.mxu0 %v4983
    %7309 = vmatpush1.bf16.msra.mxu0 %v4982
    %7310 = vmatprep.subr.bf16.mxu0 %v4975
    %7311 = vmatpush1.bf16.msra.mxu0 %v4974
    %7312 = vmatprep.subr.bf16.mxu0 %v4967
    %7313 = vmatpush1.bf16.msra.mxu0 %v4966
    %7314 = vmatprep.subr.bf16.mxu0 %v4959
    %7315 = vmatpush1.bf16.msra.mxu0 %v4958
    %7316 = vmatprep.subr.bf16.mxu0 %v4951
    %7317 = vmatpush1.bf16.msra.mxu0 %v4950
    %7318 = vmatprep.subr.bf16.mxu0 %v5071
    %7319 = vmatpush2.bf16.msra.mxu0 %v5070
    %7320 = vmatprep.subr.bf16.mxu0 %v5063
    %7321 = vmatpush2.bf16.msra.mxu0 %v5062
    %7322 = vmatprep.subr.bf16.mxu0 %v5055
    %7323 = vmatpush2.bf16.msra.mxu0 %v5054
    %7324 = vmatprep.subr.bf16.mxu0 %v5047
    %7325 = vmatpush2.bf16.msra.mxu0 %v5046
    %7326 = vmatprep.subr.bf16.mxu0 %v5039
    %7327 = vmatpush2.bf16.msra.mxu0 %v5038
    %7328 = vmatprep.subr.bf16.mxu0 %v5031
    %7329 = vmatpush2.bf16.msra.mxu0 %v5030
    %7330 = vmatprep.subr.bf16.mxu0 %v5023
    %7331 = vmatpush2.bf16.msra.mxu0 %v5022
    %7332 = vmatprep.subr.bf16.mxu0 %v5015
    %7333 = vmatpush2.bf16.msra.mxu0 %v5014
    %7334 = vmatprep.mubr.bf16.mxu0 %v289
    %7335 = vmatmul.mubr.bf16.gmra.mxu0 %v288
    %v7336 = vpop.f32.mrf.mxu0
    %v7337 = vadd.f32 %v7296, %v7336
    %v7338 = vpop.f32.mrf.mxu0
    %v7339 = vadd.f32 %v7298, %v7338
    %v7340 = vpop.f32.mrf.mxu0
    %v7341 = vpop.f32.mrf.mxu0
    %7342 = vdwg.mxu0
    %7343 = vmatprep.subr.bf16.mxu0 %v5135
    %7344 = vmatpush1.bf16.msra.mxu0 %v5134
    %7345 = vmatprep.subr.bf16.mxu0 %v5127
    %7346 = vmatpush1.bf16.msra.mxu0 %v5126
    %7347 = vmatprep.subr.bf16.mxu0 %v5119
    %7348 = vmatpush1.bf16.msra.mxu0 %v5118
    %7349 = vmatprep.subr.bf16.mxu0 %v5111
    %7350 = vmatpush1.bf16.msra.mxu0 %v5110
    %7351 = vmatprep.subr.bf16.mxu0 %v5103
    %7352 = vmatpush1.bf16.msra.mxu0 %v5102
    %7353 = vmatprep.subr.bf16.mxu0 %v5095
    %7354 = vmatpush1.bf16.msra.mxu0 %v5094
    %7355 = vmatprep.subr.bf16.mxu0 %v5087
    %7356 = vmatpush1.bf16.msra.mxu0 %v5086
    %7357 = vmatprep.subr.bf16.mxu0 %v5079
    %7358 = vmatpush1.bf16.msra.mxu0 %v5078
    %7359 = vmatprep.subr.bf16.mxu0 %v5199
    %7360 = vmatpush2.bf16.msra.mxu0 %v5198
    %7361 = vmatprep.subr.bf16.mxu0 %v5191
    %7362 = vmatpush2.bf16.msra.mxu0 %v5190
    %7363 = vmatprep.subr.bf16.mxu0 %v5183
    %7364 = vmatpush2.bf16.msra.mxu0 %v5182
    %7365 = vmatprep.subr.bf16.mxu0 %v5175
    %7366 = vmatpush2.bf16.msra.mxu0 %v5174
    %7367 = vmatprep.subr.bf16.mxu0 %v5167
    %7368 = vmatpush2.bf16.msra.mxu0 %v5166
    %7369 = vmatprep.subr.bf16.mxu0 %v5159
    %7370 = vmatpush2.bf16.msra.mxu0 %v5158
    %7371 = vmatprep.subr.bf16.mxu0 %v5151
    %7372 = vmatpush2.bf16.msra.mxu0 %v5150
    %7373 = vmatprep.subr.bf16.mxu0 %v5143
    %7374 = vmatpush2.bf16.msra.mxu0 %v5142
    %7375 = vmatprep.mubr.bf16.mxu0 %v291
    %7376 = vmatmul.mubr.bf16.gmra.mxu0 %v290
    %v7377 = vpop.f32.mrf.mxu0
    %v7378 = vadd.f32 %v7337, %v7377
    %v7379 = vpop.f32.mrf.mxu0
    %v7380 = vadd.f32 %v7339, %v7379
    %v7381 = vpop.f32.mrf.mxu0
    %v7382 = vpop.f32.mrf.mxu0
    %7383 = vdwg.mxu0
    %7384 = vmatprep.subr.bf16.mxu0 %v5263
    %7385 = vmatpush1.bf16.msra.mxu0 %v5262
    %7386 = vmatprep.subr.bf16.mxu0 %v5255
    %7387 = vmatpush1.bf16.msra.mxu0 %v5254
    %7388 = vmatprep.subr.bf16.mxu0 %v5247
    %7389 = vmatpush1.bf16.msra.mxu0 %v5246
    %7390 = vmatprep.subr.bf16.mxu0 %v5239
    %7391 = vmatpush1.bf16.msra.mxu0 %v5238
    %7392 = vmatprep.subr.bf16.mxu0 %v5231
    %7393 = vmatpush1.bf16.msra.mxu0 %v5230
    %7394 = vmatprep.subr.bf16.mxu0 %v5223
    %7395 = vmatpush1.bf16.msra.mxu0 %v5222
    %7396 = vmatprep.subr.bf16.mxu0 %v5215
    %7397 = vmatpush1.bf16.msra.mxu0 %v5214
    %7398 = vmatprep.subr.bf16.mxu0 %v5207
    %7399 = vmatpush1.bf16.msra.mxu0 %v5206
    %7400 = vmatprep.subr.bf16.mxu0 %v5327
    %7401 = vmatpush2.bf16.msra.mxu0 %v5326
    %7402 = vmatprep.subr.bf16.mxu0 %v5319
    %7403 = vmatpush2.bf16.msra.mxu0 %v5318
    %7404 = vmatprep.subr.bf16.mxu0 %v5311
    %7405 = vmatpush2.bf16.msra.mxu0 %v5310
    %7406 = vmatprep.subr.bf16.mxu0 %v5303
    %7407 = vmatpush2.bf16.msra.mxu0 %v5302
    %7408 = vmatprep.subr.bf16.mxu0 %v5295
    %7409 = vmatpush2.bf16.msra.mxu0 %v5294
    %7410 = vmatprep.subr.bf16.mxu0 %v5287
    %7411 = vmatpush2.bf16.msra.mxu0 %v5286
    %7412 = vmatprep.subr.bf16.mxu0 %v5279
    %7413 = vmatpush2.bf16.msra.mxu0 %v5278
    %7414 = vmatprep.subr.bf16.mxu0 %v5271
    %7415 = vmatpush2.bf16.msra.mxu0 %v5270
    %7416 = vmatprep.mubr.bf16.mxu0 %v293
    %7417 = vmatmul.mubr.bf16.gmra.mxu0 %v292
    %v7418 = vpop.f32.mrf.mxu0
    %v7419 = vadd.f32 %v7378, %v7418
    %v7420 = vpop.f32.mrf.mxu0
    %v7421 = vadd.f32 %v7380, %v7420
    %v7422 = vpop.f32.mrf.mxu0
    %v7423 = vpop.f32.mrf.mxu0
    %7424 = vdwg.mxu0
    %7425 = vmatprep.subr.bf16.mxu0 %v5391
    %7426 = vmatpush1.bf16.msra.mxu0 %v5390
    %7427 = vmatprep.subr.bf16.mxu0 %v5383
    %7428 = vmatpush1.bf16.msra.mxu0 %v5382
    %7429 = vmatprep.subr.bf16.mxu0 %v5375
    %7430 = vmatpush1.bf16.msra.mxu0 %v5374
    %7431 = vmatprep.subr.bf16.mxu0 %v5367
    %7432 = vmatpush1.bf16.msra.mxu0 %v5366
    %7433 = vmatprep.subr.bf16.mxu0 %v5359
    %7434 = vmatpush1.bf16.msra.mxu0 %v5358
    %7435 = vmatprep.subr.bf16.mxu0 %v5351
    %7436 = vmatpush1.bf16.msra.mxu0 %v5350
    %7437 = vmatprep.subr.bf16.mxu0 %v5343
    %7438 = vmatpush1.bf16.msra.mxu0 %v5342
    %7439 = vmatprep.subr.bf16.mxu0 %v5335
    %7440 = vmatpush1.bf16.msra.mxu0 %v5334
    %7441 = vmatprep.subr.bf16.mxu0 %v5455
    %7442 = vmatpush2.bf16.msra.mxu0 %v5454
    %7443 = vmatprep.subr.bf16.mxu0 %v5447
    %7444 = vmatpush2.bf16.msra.mxu0 %v5446
    %7445 = vmatprep.subr.bf16.mxu0 %v5439
    %7446 = vmatpush2.bf16.msra.mxu0 %v5438
    %7447 = vmatprep.subr.bf16.mxu0 %v5431
    %7448 = vmatpush2.bf16.msra.mxu0 %v5430
    %7449 = vmatprep.subr.bf16.mxu0 %v5423
    %7450 = vmatpush2.bf16.msra.mxu0 %v5422
    %7451 = vmatprep.subr.bf16.mxu0 %v5415
    %7452 = vmatpush2.bf16.msra.mxu0 %v5414
    %7453 = vmatprep.subr.bf16.mxu0 %v5407
    %7454 = vmatpush2.bf16.msra.mxu0 %v5406
    %7455 = vmatprep.subr.bf16.mxu0 %v5399
    %7456 = vmatpush2.bf16.msra.mxu0 %v5398
    %7457 = vmatprep.mubr.bf16.mxu0 %v295
    %7458 = vmatmul.mubr.bf16.gmra.mxu0 %v294
    %v7459 = vpop.f32.mrf.mxu0
    %v7460 = vadd.f32 %v7419, %v7459
    %v7461 = vpop.f32.mrf.mxu0
    %v7462 = vadd.f32 %v7421, %v7461
    %v7463 = vpop.f32.mrf.mxu0
    %v7464 = vpop.f32.mrf.mxu0
    %7465 = vdwg.mxu0
    %7466 = vmatprep.subr.bf16.mxu0 %v4497
    %7467 = vmatpush1.bf16.msra.mxu0 %v4496
    %7468 = vmatprep.subr.bf16.mxu0 %v4489
    %7469 = vmatpush1.bf16.msra.mxu0 %v4488
    %7470 = vmatprep.subr.bf16.mxu0 %v4481
    %7471 = vmatpush1.bf16.msra.mxu0 %v4480
    %7472 = vmatprep.subr.bf16.mxu0 %v4473
    %7473 = vmatpush1.bf16.msra.mxu0 %v4472
    %7474 = vmatprep.subr.bf16.mxu0 %v4465
    %7475 = vmatpush1.bf16.msra.mxu0 %v4464
    %7476 = vmatprep.subr.bf16.mxu0 %v4457
    %7477 = vmatpush1.bf16.msra.mxu0 %v4456
    %7478 = vmatprep.subr.bf16.mxu0 %v4449
    %7479 = vmatpush1.bf16.msra.mxu0 %v4448
    %7480 = vmatprep.subr.bf16.mxu0 %v4441
    %7481 = vmatpush1.bf16.msra.mxu0 %v4440
    %7482 = vmatprep.subr.bf16.mxu0 %v4561
    %7483 = vmatpush2.bf16.msra.mxu0 %v4560
    %7484 = vmatprep.subr.bf16.mxu0 %v4553
    %7485 = vmatpush2.bf16.msra.mxu0 %v4552
    %7486 = vmatprep.subr.bf16.mxu0 %v4545
    %7487 = vmatpush2.bf16.msra.mxu0 %v4544
    %7488 = vmatprep.subr.bf16.mxu0 %v4537
    %7489 = vmatpush2.bf16.msra.mxu0 %v4536
    %7490 = vmatprep.subr.bf16.mxu0 %v4529
    %7491 = vmatpush2.bf16.msra.mxu0 %v4528
    %7492 = vmatprep.subr.bf16.mxu0 %v4521
    %7493 = vmatpush2.bf16.msra.mxu0 %v4520
    %7494 = vmatprep.subr.bf16.mxu0 %v4513
    %7495 = vmatpush2.bf16.msra.mxu0 %v4512
    %7496 = vmatprep.subr.bf16.mxu0 %v4505
    %7497 = vmatpush2.bf16.msra.mxu0 %v4504
    %7498 = vmatprep.mubr.bf16.mxu0 %v281
    %7499 = vmatmul.mubr.bf16.gmra.mxu0 %v280
    %v7500 = vpop.f32.mrf.mxu0
    %v7501 = vadd.f32 %v1349, %v7500
    %v7502 = vpop.f32.mrf.mxu0
    %v7503 = vadd.f32 %v1353, %v7502
    %v7504 = vpop.f32.mrf.mxu0
    %v7505 = vpop.f32.mrf.mxu0
    %7506 = vdwg.mxu0
    %7507 = vmatprep.subr.bf16.mxu0 %v4625
    %7508 = vmatpush1.bf16.msra.mxu0 %v4624
    %7509 = vmatprep.subr.bf16.mxu0 %v4617
    %7510 = vmatpush1.bf16.msra.mxu0 %v4616
    %7511 = vmatprep.subr.bf16.mxu0 %v4609
    %7512 = vmatpush1.bf16.msra.mxu0 %v4608
    %7513 = vmatprep.subr.bf16.mxu0 %v4601
    %7514 = vmatpush1.bf16.msra.mxu0 %v4600
    %7515 = vmatprep.subr.bf16.mxu0 %v4593
    %7516 = vmatpush1.bf16.msra.mxu0 %v4592
    %7517 = vmatprep.subr.bf16.mxu0 %v4585
    %7518 = vmatpush1.bf16.msra.mxu0 %v4584
    %7519 = vmatprep.subr.bf16.mxu0 %v4577
    %7520 = vmatpush1.bf16.msra.mxu0 %v4576
    %7521 = vmatprep.subr.bf16.mxu0 %v4569
    %7522 = vmatpush1.bf16.msra.mxu0 %v4568
    %7523 = vmatprep.subr.bf16.mxu0 %v4689
    %7524 = vmatpush2.bf16.msra.mxu0 %v4688
    %7525 = vmatprep.subr.bf16.mxu0 %v4681
    %7526 = vmatpush2.bf16.msra.mxu0 %v4680
    %7527 = vmatprep.subr.bf16.mxu0 %v4673
    %7528 = vmatpush2.bf16.msra.mxu0 %v4672
    %7529 = vmatprep.subr.bf16.mxu0 %v4665
    %7530 = vmatpush2.bf16.msra.mxu0 %v4664
    %7531 = vmatprep.subr.bf16.mxu0 %v4657
    %7532 = vmatpush2.bf16.msra.mxu0 %v4656
    %7533 = vmatprep.subr.bf16.mxu0 %v4649
    %7534 = vmatpush2.bf16.msra.mxu0 %v4648
    %7535 = vmatprep.subr.bf16.mxu0 %v4641
    %7536 = vmatpush2.bf16.msra.mxu0 %v4640
    %7537 = vmatprep.subr.bf16.mxu0 %v4633
    %7538 = vmatpush2.bf16.msra.mxu0 %v4632
    %7539 = vmatprep.mubr.bf16.mxu0 %v283
    %7540 = vmatmul.mubr.bf16.gmra.mxu0 %v282
    %v7541 = vpop.f32.mrf.mxu0
    %v7542 = vadd.f32 %v7501, %v7541
    %v7543 = vpop.f32.mrf.mxu0
    %v7544 = vadd.f32 %v7503, %v7543
    %v7545 = vpop.f32.mrf.mxu0
    %v7546 = vpop.f32.mrf.mxu0
    %7547 = vdwg.mxu0
    %7548 = vmatprep.subr.bf16.mxu0 %v4753
    %7549 = vmatpush1.bf16.msra.mxu0 %v4752
    %7550 = vmatprep.subr.bf16.mxu0 %v4745
    %7551 = vmatpush1.bf16.msra.mxu0 %v4744
    %7552 = vmatprep.subr.bf16.mxu0 %v4737
    %7553 = vmatpush1.bf16.msra.mxu0 %v4736
    %7554 = vmatprep.subr.bf16.mxu0 %v4729
    %7555 = vmatpush1.bf16.msra.mxu0 %v4728
    %7556 = vmatprep.subr.bf16.mxu0 %v4721
    %7557 = vmatpush1.bf16.msra.mxu0 %v4720
    %7558 = vmatprep.subr.bf16.mxu0 %v4713
    %7559 = vmatpush1.bf16.msra.mxu0 %v4712
    %7560 = vmatprep.subr.bf16.mxu0 %v4705
    %7561 = vmatpush1.bf16.msra.mxu0 %v4704
    %7562 = vmatprep.subr.bf16.mxu0 %v4697
    %7563 = vmatpush1.bf16.msra.mxu0 %v4696
    %7564 = vmatprep.subr.bf16.mxu0 %v4817
    %7565 = vmatpush2.bf16.msra.mxu0 %v4816
    %7566 = vmatprep.subr.bf16.mxu0 %v4809
    %7567 = vmatpush2.bf16.msra.mxu0 %v4808
    %7568 = vmatprep.subr.bf16.mxu0 %v4801
    %7569 = vmatpush2.bf16.msra.mxu0 %v4800
    %7570 = vmatprep.subr.bf16.mxu0 %v4793
    %7571 = vmatpush2.bf16.msra.mxu0 %v4792
    %7572 = vmatprep.subr.bf16.mxu0 %v4785
    %7573 = vmatpush2.bf16.msra.mxu0 %v4784
    %7574 = vmatprep.subr.bf16.mxu0 %v4777
    %7575 = vmatpush2.bf16.msra.mxu0 %v4776
    %7576 = vmatprep.subr.bf16.mxu0 %v4769
    %7577 = vmatpush2.bf16.msra.mxu0 %v4768
    %7578 = vmatprep.subr.bf16.mxu0 %v4761
    %7579 = vmatpush2.bf16.msra.mxu0 %v4760
    %7580 = vmatprep.mubr.bf16.mxu0 %v285
    %7581 = vmatmul.mubr.bf16.gmra.mxu0 %v284
    %v7582 = vpop.f32.mrf.mxu0
    %v7583 = vadd.f32 %v7542, %v7582
    %v7584 = vpop.f32.mrf.mxu0
    %v7585 = vadd.f32 %v7544, %v7584
    %v7586 = vpop.f32.mrf.mxu0
    %v7587 = vpop.f32.mrf.mxu0
    %7588 = vdwg.mxu0
    %7589 = vmatprep.subr.bf16.mxu0 %v4881
    %7590 = vmatpush1.bf16.msra.mxu0 %v4880
    %7591 = vmatprep.subr.bf16.mxu0 %v4873
    %7592 = vmatpush1.bf16.msra.mxu0 %v4872
    %7593 = vmatprep.subr.bf16.mxu0 %v4865
    %7594 = vmatpush1.bf16.msra.mxu0 %v4864
    %7595 = vmatprep.subr.bf16.mxu0 %v4857
    %7596 = vmatpush1.bf16.msra.mxu0 %v4856
    %7597 = vmatprep.subr.bf16.mxu0 %v4849
    %7598 = vmatpush1.bf16.msra.mxu0 %v4848
    %7599 = vmatprep.subr.bf16.mxu0 %v4841
    %7600 = vmatpush1.bf16.msra.mxu0 %v4840
    %7601 = vmatprep.subr.bf16.mxu0 %v4833
    %7602 = vmatpush1.bf16.msra.mxu0 %v4832
    %7603 = vmatprep.subr.bf16.mxu0 %v4825
    %7604 = vmatpush1.bf16.msra.mxu0 %v4824
    %7605 = vmatprep.subr.bf16.mxu0 %v4945
    %7606 = vmatpush2.bf16.msra.mxu0 %v4944
    %7607 = vmatprep.subr.bf16.mxu0 %v4937
    %7608 = vmatpush2.bf16.msra.mxu0 %v4936
    %7609 = vmatprep.subr.bf16.mxu0 %v4929
    %7610 = vmatpush2.bf16.msra.mxu0 %v4928
    %7611 = vmatprep.subr.bf16.mxu0 %v4921
    %7612 = vmatpush2.bf16.msra.mxu0 %v4920
    %7613 = vmatprep.subr.bf16.mxu0 %v4913
    %7614 = vmatpush2.bf16.msra.mxu0 %v4912
    %7615 = vmatprep.subr.bf16.mxu0 %v4905
    %7616 = vmatpush2.bf16.msra.mxu0 %v4904
    %7617 = vmatprep.subr.bf16.mxu0 %v4897
    %7618 = vmatpush2.bf16.msra.mxu0 %v4896
    %7619 = vmatprep.subr.bf16.mxu0 %v4889
    %7620 = vmatpush2.bf16.msra.mxu0 %v4888
    %7621 = vmatprep.mubr.bf16.mxu0 %v287
    %7622 = vmatmul.mubr.bf16.gmra.mxu0 %v286
    %v7623 = vpop.f32.mrf.mxu0
    %v7624 = vadd.f32 %v7583, %v7623
    %v7625 = vpop.f32.mrf.mxu0
    %v7626 = vadd.f32 %v7585, %v7625
    %v7627 = vpop.f32.mrf.mxu0
    %v7628 = vpop.f32.mrf.mxu0
    %7629 = vdwg.mxu0
    %7630 = vmatprep.subr.bf16.mxu0 %v5009
    %7631 = vmatpush1.bf16.msra.mxu0 %v5008
    %7632 = vmatprep.subr.bf16.mxu0 %v5001
    %7633 = vmatpush1.bf16.msra.mxu0 %v5000
    %7634 = vmatprep.subr.bf16.mxu0 %v4993
    %7635 = vmatpush1.bf16.msra.mxu0 %v4992
    %7636 = vmatprep.subr.bf16.mxu0 %v4985
    %7637 = vmatpush1.bf16.msra.mxu0 %v4984
    %7638 = vmatprep.subr.bf16.mxu0 %v4977
    %7639 = vmatpush1.bf16.msra.mxu0 %v4976
    %7640 = vmatprep.subr.bf16.mxu0 %v4969
    %7641 = vmatpush1.bf16.msra.mxu0 %v4968
    %7642 = vmatprep.subr.bf16.mxu0 %v4961
    %7643 = vmatpush1.bf16.msra.mxu0 %v4960
    %7644 = vmatprep.subr.bf16.mxu0 %v4953
    %7645 = vmatpush1.bf16.msra.mxu0 %v4952
    %7646 = vmatprep.subr.bf16.mxu0 %v5073
    %7647 = vmatpush2.bf16.msra.mxu0 %v5072
    %7648 = vmatprep.subr.bf16.mxu0 %v5065
    %7649 = vmatpush2.bf16.msra.mxu0 %v5064
    %7650 = vmatprep.subr.bf16.mxu0 %v5057
    %7651 = vmatpush2.bf16.msra.mxu0 %v5056
    %7652 = vmatprep.subr.bf16.mxu0 %v5049
    %7653 = vmatpush2.bf16.msra.mxu0 %v5048
    %7654 = vmatprep.subr.bf16.mxu0 %v5041
    %7655 = vmatpush2.bf16.msra.mxu0 %v5040
    %7656 = vmatprep.subr.bf16.mxu0 %v5033
    %7657 = vmatpush2.bf16.msra.mxu0 %v5032
    %7658 = vmatprep.subr.bf16.mxu0 %v5025
    %7659 = vmatpush2.bf16.msra.mxu0 %v5024
    %7660 = vmatprep.subr.bf16.mxu0 %v5017
    %7661 = vmatpush2.bf16.msra.mxu0 %v5016
    %7662 = vmatprep.mubr.bf16.mxu0 %v289
    %7663 = vmatmul.mubr.bf16.gmra.mxu0 %v288
    %v7664 = vpop.f32.mrf.mxu0
    %v7665 = vadd.f32 %v7624, %v7664
    %v7666 = vpop.f32.mrf.mxu0
    %v7667 = vadd.f32 %v7626, %v7666
    %v7668 = vpop.f32.mrf.mxu0
    %v7669 = vpop.f32.mrf.mxu0
    %7670 = vdwg.mxu0
    %7671 = vmatprep.subr.bf16.mxu0 %v5137
    %7672 = vmatpush1.bf16.msra.mxu0 %v5136
    %7673 = vmatprep.subr.bf16.mxu0 %v5129
    %7674 = vmatpush1.bf16.msra.mxu0 %v5128
    %7675 = vmatprep.subr.bf16.mxu0 %v5121
    %7676 = vmatpush1.bf16.msra.mxu0 %v5120
    %7677 = vmatprep.subr.bf16.mxu0 %v5113
    %7678 = vmatpush1.bf16.msra.mxu0 %v5112
    %7679 = vmatprep.subr.bf16.mxu0 %v5105
    %7680 = vmatpush1.bf16.msra.mxu0 %v5104
    %7681 = vmatprep.subr.bf16.mxu0 %v5097
    %7682 = vmatpush1.bf16.msra.mxu0 %v5096
    %7683 = vmatprep.subr.bf16.mxu0 %v5089
    %7684 = vmatpush1.bf16.msra.mxu0 %v5088
    %7685 = vmatprep.subr.bf16.mxu0 %v5081
    %7686 = vmatpush1.bf16.msra.mxu0 %v5080
    %7687 = vmatprep.subr.bf16.mxu0 %v5201
    %7688 = vmatpush2.bf16.msra.mxu0 %v5200
    %7689 = vmatprep.subr.bf16.mxu0 %v5193
    %7690 = vmatpush2.bf16.msra.mxu0 %v5192
    %7691 = vmatprep.subr.bf16.mxu0 %v5185
    %7692 = vmatpush2.bf16.msra.mxu0 %v5184
    %7693 = vmatprep.subr.bf16.mxu0 %v5177
    %7694 = vmatpush2.bf16.msra.mxu0 %v5176
    %7695 = vmatprep.subr.bf16.mxu0 %v5169
    %7696 = vmatpush2.bf16.msra.mxu0 %v5168
    %7697 = vmatprep.subr.bf16.mxu0 %v5161
    %7698 = vmatpush2.bf16.msra.mxu0 %v5160
    %7699 = vmatprep.subr.bf16.mxu0 %v5153
    %7700 = vmatpush2.bf16.msra.mxu0 %v5152
    %7701 = vmatprep.subr.bf16.mxu0 %v5145
    %7702 = vmatpush2.bf16.msra.mxu0 %v5144
    %7703 = vmatprep.mubr.bf16.mxu0 %v291
    %7704 = vmatmul.mubr.bf16.gmra.mxu0 %v290
    %v7705 = vpop.f32.mrf.mxu0
    %v7706 = vadd.f32 %v7665, %v7705
    %v7707 = vpop.f32.mrf.mxu0
    %v7708 = vadd.f32 %v7667, %v7707
    %v7709 = vpop.f32.mrf.mxu0
    %v7710 = vpop.f32.mrf.mxu0
    %7711 = vdwg.mxu0
    %7712 = vmatprep.subr.bf16.mxu0 %v5265
    %7713 = vmatpush1.bf16.msra.mxu0 %v5264
    %7714 = vmatprep.subr.bf16.mxu0 %v5257
    %7715 = vmatpush1.bf16.msra.mxu0 %v5256
    %7716 = vmatprep.subr.bf16.mxu0 %v5249
    %7717 = vmatpush1.bf16.msra.mxu0 %v5248
    %7718 = vmatprep.subr.bf16.mxu0 %v5241
    %7719 = vmatpush1.bf16.msra.mxu0 %v5240
    %7720 = vmatprep.subr.bf16.mxu0 %v5233
    %7721 = vmatpush1.bf16.msra.mxu0 %v5232
    %7722 = vmatprep.subr.bf16.mxu0 %v5225
    %7723 = vmatpush1.bf16.msra.mxu0 %v5224
    %7724 = vmatprep.subr.bf16.mxu0 %v5217
    %7725 = vmatpush1.bf16.msra.mxu0 %v5216
    %7726 = vmatprep.subr.bf16.mxu0 %v5209
    %7727 = vmatpush1.bf16.msra.mxu0 %v5208
    %7728 = vmatprep.subr.bf16.mxu0 %v5329
    %7729 = vmatpush2.bf16.msra.mxu0 %v5328
    %7730 = vmatprep.subr.bf16.mxu0 %v5321
    %7731 = vmatpush2.bf16.msra.mxu0 %v5320
    %7732 = vmatprep.subr.bf16.mxu0 %v5313
    %7733 = vmatpush2.bf16.msra.mxu0 %v5312
    %7734 = vmatprep.subr.bf16.mxu0 %v5305
    %7735 = vmatpush2.bf16.msra.mxu0 %v5304
    %7736 = vmatprep.subr.bf16.mxu0 %v5297
    %7737 = vmatpush2.bf16.msra.mxu0 %v5296
    %7738 = vmatprep.subr.bf16.mxu0 %v5289
    %7739 = vmatpush2.bf16.msra.mxu0 %v5288
    %7740 = vmatprep.subr.bf16.mxu0 %v5281
    %7741 = vmatpush2.bf16.msra.mxu0 %v5280
    %7742 = vmatprep.subr.bf16.mxu0 %v5273
    %7743 = vmatpush2.bf16.msra.mxu0 %v5272
    %7744 = vmatprep.mubr.bf16.mxu0 %v293
    %7745 = vmatmul.mubr.bf16.gmra.mxu0 %v292
    %v7746 = vpop.f32.mrf.mxu0
    %v7747 = vadd.f32 %v7706, %v7746
    %v7748 = vpop.f32.mrf.mxu0
    %v7749 = vadd.f32 %v7708, %v7748
    %v7750 = vpop.f32.mrf.mxu0
    %v7751 = vpop.f32.mrf.mxu0
    %7752 = vdwg.mxu0
    %7753 = vmatprep.subr.bf16.mxu0 %v5393
    %7754 = vmatpush1.bf16.msra.mxu0 %v5392
    %7755 = vmatprep.subr.bf16.mxu0 %v5385
    %7756 = vmatpush1.bf16.msra.mxu0 %v5384
    %7757 = vmatprep.subr.bf16.mxu0 %v5377
    %7758 = vmatpush1.bf16.msra.mxu0 %v5376
    %7759 = vmatprep.subr.bf16.mxu0 %v5369
    %7760 = vmatpush1.bf16.msra.mxu0 %v5368
    %7761 = vmatprep.subr.bf16.mxu0 %v5361
    %7762 = vmatpush1.bf16.msra.mxu0 %v5360
    %7763 = vmatprep.subr.bf16.mxu0 %v5353
    %7764 = vmatpush1.bf16.msra.mxu0 %v5352
    %7765 = vmatprep.subr.bf16.mxu0 %v5345
    %7766 = vmatpush1.bf16.msra.mxu0 %v5344
    %7767 = vmatprep.subr.bf16.mxu0 %v5337
    %7768 = vmatpush1.bf16.msra.mxu0 %v5336
    %7769 = vmatprep.subr.bf16.mxu0 %v5457
    %7770 = vmatpush2.bf16.msra.mxu0 %v5456
    %7771 = vmatprep.subr.bf16.mxu0 %v5449
    %7772 = vmatpush2.bf16.msra.mxu0 %v5448
    %7773 = vmatprep.subr.bf16.mxu0 %v5441
    %7774 = vmatpush2.bf16.msra.mxu0 %v5440
    %7775 = vmatprep.subr.bf16.mxu0 %v5433
    %7776 = vmatpush2.bf16.msra.mxu0 %v5432
    %7777 = vmatprep.subr.bf16.mxu0 %v5425
    %7778 = vmatpush2.bf16.msra.mxu0 %v5424
    %7779 = vmatprep.subr.bf16.mxu0 %v5417
    %7780 = vmatpush2.bf16.msra.mxu0 %v5416
    %7781 = vmatprep.subr.bf16.mxu0 %v5409
    %7782 = vmatpush2.bf16.msra.mxu0 %v5408
    %7783 = vmatprep.subr.bf16.mxu0 %v5401
    %7784 = vmatpush2.bf16.msra.mxu0 %v5400
    %7785 = vmatprep.mubr.bf16.mxu0 %v295
    %7786 = vmatmul.mubr.bf16.gmra.mxu0 %v294
    %v7787 = vpop.f32.mrf.mxu0
    %v7788 = vadd.f32 %v7747, %v7787
    %v7789 = vpop.f32.mrf.mxu0
    %v7790 = vadd.f32 %v7749, %v7789
    %v7791 = vpop.f32.mrf.mxu0
    %v7792 = vpop.f32.mrf.mxu0
    %7793 = vdwg.mxu0
    %v7794 = vmax.f32 %v6804, 0.0
    %v7795 = vmax.f32 %v6806, 0.0
    %v7796 = vmax.f32 %v7132, 0.0
    %v7797 = vmax.f32 %v7134, 0.0
    %v7798 = vmax.f32 %v7460, 0.0
    %v7799 = vmax.f32 %v7462, 0.0
    %v7800 = vmax.f32 %v7788, 0.0
    %v7801 = vmax.f32 %v7790, 0.0
    %v7802 = vpack.c.bf16 %v7794, %v7794
    %v7803 = vpack.c.bf16 %v7795, %v7795
    %v7804 = vpack.c.bf16 %v7796, %v7796
    %v7805 = vpack.c.bf16 %v7797, %v7797
    %v7806 = vpack.c.bf16 %v7798, %v7798
    %v7807 = vpack.c.bf16 %v7799, %v7799
    %v7808 = vpack.c.bf16 %v7800, %v7800
    %v7809 = vpack.c.bf16 %v7801, %v7801
    %v7810 = vld [vmem:[#allocation10] sm:$0xf]
    %v7811 = vld [vmem:[#allocation10 + $0x4] sm:$0xf]
    %v7812 = vld [vmem:[#allocation10 + $0x8] sm:$0xf]
    %v7813 = vld [vmem:[#allocation10 + $0xc] sm:$0xf]
    %v7814 = vld [vmem:[#allocation10 + $0x10] sm:$0xf]
    %v7815 = vld [vmem:[#allocation10 + $0x14] sm:$0xf]
    %v7816 = vld [vmem:[#allocation10 + $0x18] sm:$0xf]
    %v7817 = vld [vmem:[#allocation10 + $0x1c] sm:$0xf]
    %v7818 = vld [vmem:[#allocation10 + $0x20] sm:$0xf]
    %v7819 = vld [vmem:[#allocation10 + $0x24] sm:$0xf]
    %v7820 = vld [vmem:[#allocation10 + $0x28] sm:$0xf]
    %v7821 = vld [vmem:[#allocation10 + $0x2c] sm:$0xf]
    %v7822 = vld [vmem:[#allocation10 + $0x30] sm:$0xf]
    %v7823 = vld [vmem:[#allocation10 + $0x34] sm:$0xf]
    %v7824 = vld [vmem:[#allocation10 + $0x38] sm:$0xf]
    %v7825 = vld [vmem:[#allocation10 + $0x3c] sm:$0xf]
    %v7826 = vld [vmem:[#allocation10 + $0x40] sm:$0xf]
    %v7827 = vld [vmem:[#allocation10 + $0x44] sm:$0xf]
    %v7828 = vld [vmem:[#allocation10 + $0x48] sm:$0xf]
    %v7829 = vld [vmem:[#allocation10 + $0x4c] sm:$0xf]
    %v7830 = vld [vmem:[#allocation10 + $0x50] sm:$0xf]
    %v7831 = vld [vmem:[#allocation10 + $0x54] sm:$0xf]
    %v7832 = vld [vmem:[#allocation10 + $0x58] sm:$0xf]
    %v7833 = vld [vmem:[#allocation10 + $0x5c] sm:$0xf]
    %v7834 = vld [vmem:[#allocation10 + $0x60] sm:$0xf]
    %v7835 = vld [vmem:[#allocation10 + $0x64] sm:$0xf]
    %v7836 = vld [vmem:[#allocation10 + $0x68] sm:$0xf]
    %v7837 = vld [vmem:[#allocation10 + $0x6c] sm:$0xf]
    %v7838 = vld [vmem:[#allocation10 + $0x70] sm:$0xf]
    %v7839 = vld [vmem:[#allocation10 + $0x74] sm:$0xf]
    %v7840 = vld [vmem:[#allocation10 + $0x78] sm:$0xf]
    %v7841 = vld [vmem:[#allocation10 + $0x7c] sm:$0xf]
    %v7842 = vld [vmem:[#allocation10 + $0x80] sm:$0xf]
    %v7843 = vld [vmem:[#allocation10 + $0x84] sm:$0xf]
    %v7844 = vld [vmem:[#allocation10 + $0x88] sm:$0xf]
    %v7845 = vld [vmem:[#allocation10 + $0x8c] sm:$0xf]
    %v7846 = vld [vmem:[#allocation10 + $0x90] sm:$0xf]
    %v7847 = vld [vmem:[#allocation10 + $0x94] sm:$0xf]
    %v7848 = vld [vmem:[#allocation10 + $0x98] sm:$0xf]
    %v7849 = vld [vmem:[#allocation10 + $0x9c] sm:$0xf]
    %v7850 = vld [vmem:[#allocation10 + $0xa0] sm:$0xf]
    %v7851 = vld [vmem:[#allocation10 + $0xa4] sm:$0xf]
    %v7852 = vld [vmem:[#allocation10 + $0xa8] sm:$0xf]
    %v7853 = vld [vmem:[#allocation10 + $0xac] sm:$0xf]
    %v7854 = vld [vmem:[#allocation10 + $0xb0] sm:$0xf]
    %v7855 = vld [vmem:[#allocation10 + $0xb4] sm:$0xf]
    %v7856 = vld [vmem:[#allocation10 + $0xb8] sm:$0xf]
    %v7857 = vld [vmem:[#allocation10 + $0xbc] sm:$0xf]
    %v7858 = vld [vmem:[#allocation10 + $0xc0] sm:$0xf]
    %v7859 = vld [vmem:[#allocation10 + $0xc4] sm:$0xf]
    %v7860 = vld [vmem:[#allocation10 + $0xc8] sm:$0xf]
    %v7861 = vld [vmem:[#allocation10 + $0xcc] sm:$0xf]
    %v7862 = vld [vmem:[#allocation10 + $0xd0] sm:$0xf]
    %v7863 = vld [vmem:[#allocation10 + $0xd4] sm:$0xf]
    %v7864 = vld [vmem:[#allocation10 + $0xd8] sm:$0xf]
    %v7865 = vld [vmem:[#allocation10 + $0xdc] sm:$0xf]
    %v7866 = vld [vmem:[#allocation10 + $0xe0] sm:$0xf]
    %v7867 = vld [vmem:[#allocation10 + $0xe4] sm:$0xf]
    %v7868 = vld [vmem:[#allocation10 + $0xe8] sm:$0xf]
    %v7869 = vld [vmem:[#allocation10 + $0xec] sm:$0xf]
    %v7870 = vld [vmem:[#allocation10 + $0xf0] sm:$0xf]
    %v7871 = vld [vmem:[#allocation10 + $0xf4] sm:$0xf]
    %v7872 = vld [vmem:[#allocation10 + $0xf8] sm:$0xf]
    %v7873 = vld [vmem:[#allocation10 + $0xfc] sm:$0xf]
    %v7874 = vld [vmem:[#allocation10 + $0x100] sm:$0xf]
    %v7875 = vld [vmem:[#allocation10 + $0x104] sm:$0xf]
    %v7876 = vld [vmem:[#allocation10 + $0x108] sm:$0xf]
    %v7877 = vld [vmem:[#allocation10 + $0x10c] sm:$0xf]
    %v7878 = vld [vmem:[#allocation10 + $0x110] sm:$0xf]
    %v7879 = vld [vmem:[#allocation10 + $0x114] sm:$0xf]
    %v7880 = vld [vmem:[#allocation10 + $0x118] sm:$0xf]
    %v7881 = vld [vmem:[#allocation10 + $0x11c] sm:$0xf]
    %v7882 = vld [vmem:[#allocation10 + $0x120] sm:$0xf]
    %v7883 = vld [vmem:[#allocation10 + $0x124] sm:$0xf]
    %v7884 = vld [vmem:[#allocation10 + $0x128] sm:$0xf]
    %v7885 = vld [vmem:[#allocation10 + $0x12c] sm:$0xf]
    %v7886 = vld [vmem:[#allocation10 + $0x130] sm:$0xf]
    %v7887 = vld [vmem:[#allocation10 + $0x134] sm:$0xf]
    %v7888 = vld [vmem:[#allocation10 + $0x138] sm:$0xf]
    %v7889 = vld [vmem:[#allocation10 + $0x13c] sm:$0xf]
    %v7890 = vld [vmem:[#allocation10 + $0x140] sm:$0xf]
    %v7891 = vld [vmem:[#allocation10 + $0x144] sm:$0xf]
    %v7892 = vld [vmem:[#allocation10 + $0x148] sm:$0xf]
    %v7893 = vld [vmem:[#allocation10 + $0x14c] sm:$0xf]
    %v7894 = vld [vmem:[#allocation10 + $0x150] sm:$0xf]
    %v7895 = vld [vmem:[#allocation10 + $0x154] sm:$0xf]
    %v7896 = vld [vmem:[#allocation10 + $0x158] sm:$0xf]
    %v7897 = vld [vmem:[#allocation10 + $0x15c] sm:$0xf]
    %v7898 = vld [vmem:[#allocation10 + $0x160] sm:$0xf]
    %v7899 = vld [vmem:[#allocation10 + $0x164] sm:$0xf]
    %v7900 = vld [vmem:[#allocation10 + $0x168] sm:$0xf]
    %v7901 = vld [vmem:[#allocation10 + $0x16c] sm:$0xf]
    %v7902 = vld [vmem:[#allocation10 + $0x170] sm:$0xf]
    %v7903 = vld [vmem:[#allocation10 + $0x174] sm:$0xf]
    %v7904 = vld [vmem:[#allocation10 + $0x178] sm:$0xf]
    %v7905 = vld [vmem:[#allocation10 + $0x17c] sm:$0xf]
    %v7906 = vld [vmem:[#allocation10 + $0x180] sm:$0xf]
    %v7907 = vld [vmem:[#allocation10 + $0x184] sm:$0xf]
    %v7908 = vld [vmem:[#allocation10 + $0x188] sm:$0xf]
    %v7909 = vld [vmem:[#allocation10 + $0x18c] sm:$0xf]
    %v7910 = vld [vmem:[#allocation10 + $0x190] sm:$0xf]
    %v7911 = vld [vmem:[#allocation10 + $0x194] sm:$0xf]
    %v7912 = vld [vmem:[#allocation10 + $0x198] sm:$0xf]
    %v7913 = vld [vmem:[#allocation10 + $0x19c] sm:$0xf]
    %v7914 = vld [vmem:[#allocation10 + $0x1a0] sm:$0xf]
    %v7915 = vld [vmem:[#allocation10 + $0x1a4] sm:$0xf]
    %v7916 = vld [vmem:[#allocation10 + $0x1a8] sm:$0xf]
    %v7917 = vld [vmem:[#allocation10 + $0x1ac] sm:$0xf]
    %v7918 = vld [vmem:[#allocation10 + $0x1b0] sm:$0xf]
    %v7919 = vld [vmem:[#allocation10 + $0x1b4] sm:$0xf]
    %v7920 = vld [vmem:[#allocation10 + $0x1b8] sm:$0xf]
    %v7921 = vld [vmem:[#allocation10 + $0x1bc] sm:$0xf]
    %v7922 = vld [vmem:[#allocation10 + $0x1c0] sm:$0xf]
    %v7923 = vld [vmem:[#allocation10 + $0x1c4] sm:$0xf]
    %v7924 = vld [vmem:[#allocation10 + $0x1c8] sm:$0xf]
    %v7925 = vld [vmem:[#allocation10 + $0x1cc] sm:$0xf]
    %v7926 = vld [vmem:[#allocation10 + $0x1d0] sm:$0xf]
    %v7927 = vld [vmem:[#allocation10 + $0x1d4] sm:$0xf]
    %v7928 = vld [vmem:[#allocation10 + $0x1d8] sm:$0xf]
    %v7929 = vld [vmem:[#allocation10 + $0x1dc] sm:$0xf]
    %v7930 = vld [vmem:[#allocation10 + $0x1e0] sm:$0xf]
    %v7931 = vld [vmem:[#allocation10 + $0x1e4] sm:$0xf]
    %v7932 = vld [vmem:[#allocation10 + $0x1e8] sm:$0xf]
    %v7933 = vld [vmem:[#allocation10 + $0x1ec] sm:$0xf]
    %v7934 = vld [vmem:[#allocation10 + $0x1f0] sm:$0xf]
    %v7935 = vld [vmem:[#allocation10 + $0x1f4] sm:$0xf]
    %v7936 = vld [vmem:[#allocation10 + $0x1f8] sm:$0xf]
    %v7937 = vld [vmem:[#allocation10 + $0x1fc] sm:$0xf]
    %v7938 = vld [vmem:[#allocation12] sm:$0x1]
    %v7940 = vlaneseq
    %v7941 = vshrl.u32 %v7940, 7
    %v7942 = vsub.s32 0, %v7941
    %v7943 = vrot.slane %v7938, %v7942
    %v8073 = vunpack.c.l.b16 %v7810
    %v8074 = vunpack.c.l.b16 %v7811
    %v8075 = vunpack.c.l.b16 %v7812
    %v8076 = vunpack.c.l.b16 %v7813
    %v8077 = vunpack.c.l.b16 %v7814
    %v8078 = vunpack.c.l.b16 %v7815
    %v8079 = vunpack.c.l.b16 %v7816
    %v8080 = vunpack.c.l.b16 %v7817
    %v8081 = vunpack.c.l.b16 %v7818
    %v8082 = vunpack.c.l.b16 %v7819
    %v8083 = vunpack.c.l.b16 %v7820
    %v8084 = vunpack.c.l.b16 %v7821
    %v8085 = vunpack.c.l.b16 %v7822
    %v8086 = vunpack.c.l.b16 %v7823
    %v8087 = vunpack.c.l.b16 %v7824
    %v8088 = vunpack.c.l.b16 %v7825
    %v8089 = vunpack.c.l.b16 %v7826
    %v8090 = vunpack.c.l.b16 %v7827
    %v8091 = vunpack.c.l.b16 %v7828
    %v8092 = vunpack.c.l.b16 %v7829
    %v8093 = vunpack.c.l.b16 %v7830
    %v8094 = vunpack.c.l.b16 %v7831
    %v8095 = vunpack.c.l.b16 %v7832
    %v8096 = vunpack.c.l.b16 %v7833
    %v8097 = vunpack.c.l.b16 %v7834
    %v8098 = vunpack.c.l.b16 %v7835
    %v8099 = vunpack.c.l.b16 %v7836
    %v8100 = vunpack.c.l.b16 %v7837
    %v8101 = vunpack.c.l.b16 %v7838
    %v8102 = vunpack.c.l.b16 %v7839
    %v8103 = vunpack.c.l.b16 %v7840
    %v8104 = vunpack.c.l.b16 %v7841
    %v8105 = vunpack.c.l.b16 %v7842
    %v8106 = vunpack.c.l.b16 %v7843
    %v8107 = vunpack.c.l.b16 %v7844
    %v8108 = vunpack.c.l.b16 %v7845
    %v8109 = vunpack.c.l.b16 %v7846
    %v8110 = vunpack.c.l.b16 %v7847
    %v8111 = vunpack.c.l.b16 %v7848
    %v8112 = vunpack.c.l.b16 %v7849
    %v8113 = vunpack.c.l.b16 %v7850
    %v8114 = vunpack.c.l.b16 %v7851
    %v8115 = vunpack.c.l.b16 %v7852
    %v8116 = vunpack.c.l.b16 %v7853
    %v8117 = vunpack.c.l.b16 %v7854
    %v8118 = vunpack.c.l.b16 %v7855
    %v8119 = vunpack.c.l.b16 %v7856
    %v8120 = vunpack.c.l.b16 %v7857
    %v8121 = vunpack.c.l.b16 %v7858
    %v8122 = vunpack.c.l.b16 %v7859
    %v8123 = vunpack.c.l.b16 %v7860
    %v8124 = vunpack.c.l.b16 %v7861
    %v8125 = vunpack.c.l.b16 %v7862
    %v8126 = vunpack.c.l.b16 %v7863
    %v8127 = vunpack.c.l.b16 %v7864
    %v8128 = vunpack.c.l.b16 %v7865
    %v8129 = vunpack.c.l.b16 %v7866
    %v8130 = vunpack.c.l.b16 %v7867
    %v8131 = vunpack.c.l.b16 %v7868
    %v8132 = vunpack.c.l.b16 %v7869
    %v8133 = vunpack.c.l.b16 %v7870
    %v8134 = vunpack.c.l.b16 %v7871
    %v8135 = vunpack.c.l.b16 %v7872
    %v8136 = vunpack.c.l.b16 %v7873
    %v8137 = vunpack.c.l.b16 %v7874
    %v8138 = vunpack.c.l.b16 %v7875
    %v8139 = vunpack.c.l.b16 %v7876
    %v8140 = vunpack.c.l.b16 %v7877
    %v8141 = vunpack.c.l.b16 %v7878
    %v8142 = vunpack.c.l.b16 %v7879
    %v8143 = vunpack.c.l.b16 %v7880
    %v8144 = vunpack.c.l.b16 %v7881
    %v8145 = vunpack.c.l.b16 %v7882
    %v8146 = vunpack.c.l.b16 %v7883
    %v8147 = vunpack.c.l.b16 %v7884
    %v8148 = vunpack.c.l.b16 %v7885
    %v8149 = vunpack.c.l.b16 %v7886
    %v8150 = vunpack.c.l.b16 %v7887
    %v8151 = vunpack.c.l.b16 %v7888
    %v8152 = vunpack.c.l.b16 %v7889
    %v8153 = vunpack.c.l.b16 %v7890
    %v8154 = vunpack.c.l.b16 %v7891
    %v8155 = vunpack.c.l.b16 %v7892
    %v8156 = vunpack.c.l.b16 %v7893
    %v8157 = vunpack.c.l.b16 %v7894
    %v8158 = vunpack.c.l.b16 %v7895
    %v8159 = vunpack.c.l.b16 %v7896
    %v8160 = vunpack.c.l.b16 %v7897
    %v8161 = vunpack.c.l.b16 %v7898
    %v8162 = vunpack.c.l.b16 %v7899
    %v8163 = vunpack.c.l.b16 %v7900
    %v8164 = vunpack.c.l.b16 %v7901
    %v8165 = vunpack.c.l.b16 %v7902
    %v8166 = vunpack.c.l.b16 %v7903
    %v8167 = vunpack.c.l.b16 %v7904
    %v8168 = vunpack.c.l.b16 %v7905
    %v8169 = vunpack.c.l.b16 %v7906
    %v8170 = vunpack.c.l.b16 %v7907
    %v8171 = vunpack.c.l.b16 %v7908
    %v8172 = vunpack.c.l.b16 %v7909
    %v8173 = vunpack.c.l.b16 %v7910
    %v8174 = vunpack.c.l.b16 %v7911
    %v8175 = vunpack.c.l.b16 %v7912
    %v8176 = vunpack.c.l.b16 %v7913
    %v8177 = vunpack.c.l.b16 %v7914
    %v8178 = vunpack.c.l.b16 %v7915
    %v8179 = vunpack.c.l.b16 %v7916
    %v8180 = vunpack.c.l.b16 %v7917
    %v8181 = vunpack.c.l.b16 %v7918
    %v8182 = vunpack.c.l.b16 %v7919
    %v8183 = vunpack.c.l.b16 %v7920
    %v8184 = vunpack.c.l.b16 %v7921
    %v8185 = vunpack.c.l.b16 %v7922
    %v8186 = vunpack.c.l.b16 %v7923
    %v8187 = vunpack.c.l.b16 %v7924
    %v8188 = vunpack.c.l.b16 %v7925
    %v8189 = vunpack.c.l.b16 %v7926
    %v8190 = vunpack.c.l.b16 %v7927
    %v8191 = vunpack.c.l.b16 %v7928
    %v8192 = vunpack.c.l.b16 %v7929
    %v8193 = vunpack.c.l.b16 %v7930
    %v8194 = vunpack.c.l.b16 %v7931
    %v8195 = vunpack.c.l.b16 %v7932
    %v8196 = vunpack.c.l.b16 %v7933
    %v8197 = vunpack.c.l.b16 %v7934
    %v8198 = vunpack.c.l.b16 %v7935
    %v8199 = vunpack.c.l.b16 %v7936
    %v8200 = vunpack.c.l.b16 %v7937
    %v8201 = vpack.c.b16 %v8074, %v8073
    %v8202 = vpack.c.b16 %v8076, %v8075
    %v8203 = vpack.c.b16 %v8078, %v8077
    %v8204 = vpack.c.b16 %v8080, %v8079
    %v8205 = vpack.c.b16 %v8082, %v8081
    %v8206 = vpack.c.b16 %v8084, %v8083
    %v8207 = vpack.c.b16 %v8086, %v8085
    %v8208 = vpack.c.b16 %v8088, %v8087
    %v8209 = vpack.c.b16 %v8090, %v8089
    %v8210 = vpack.c.b16 %v8092, %v8091
    %v8211 = vpack.c.b16 %v8094, %v8093
    %v8212 = vpack.c.b16 %v8096, %v8095
    %v8213 = vpack.c.b16 %v8098, %v8097
    %v8214 = vpack.c.b16 %v8100, %v8099
    %v8215 = vpack.c.b16 %v8102, %v8101
    %v8216 = vpack.c.b16 %v8104, %v8103
    %v8217 = vpack.c.b16 %v8106, %v8105
    %v8218 = vpack.c.b16 %v8108, %v8107
    %v8219 = vpack.c.b16 %v8110, %v8109
    %v8220 = vpack.c.b16 %v8112, %v8111
    %v8221 = vpack.c.b16 %v8114, %v8113
    %v8222 = vpack.c.b16 %v8116, %v8115
    %v8223 = vpack.c.b16 %v8118, %v8117
    %v8224 = vpack.c.b16 %v8120, %v8119
    %v8225 = vpack.c.b16 %v8122, %v8121
    %v8226 = vpack.c.b16 %v8124, %v8123
    %v8227 = vpack.c.b16 %v8126, %v8125
    %v8228 = vpack.c.b16 %v8128, %v8127
    %v8229 = vpack.c.b16 %v8130, %v8129
    %v8230 = vpack.c.b16 %v8132, %v8131
    %v8231 = vpack.c.b16 %v8134, %v8133
    %v8232 = vpack.c.b16 %v8136, %v8135
    %v8233 = vpack.c.b16 %v8138, %v8137
    %v8234 = vpack.c.b16 %v8140, %v8139
    %v8235 = vpack.c.b16 %v8142, %v8141
    %v8236 = vpack.c.b16 %v8144, %v8143
    %v8237 = vpack.c.b16 %v8146, %v8145
    %v8238 = vpack.c.b16 %v8148, %v8147
    %v8239 = vpack.c.b16 %v8150, %v8149
    %v8240 = vpack.c.b16 %v8152, %v8151
    %v8241 = vpack.c.b16 %v8154, %v8153
    %v8242 = vpack.c.b16 %v8156, %v8155
    %v8243 = vpack.c.b16 %v8158, %v8157
    %v8244 = vpack.c.b16 %v8160, %v8159
    %v8245 = vpack.c.b16 %v8162, %v8161
    %v8246 = vpack.c.b16 %v8164, %v8163
    %v8247 = vpack.c.b16 %v8166, %v8165
    %v8248 = vpack.c.b16 %v8168, %v8167
    %v8249 = vpack.c.b16 %v8170, %v8169
    %v8250 = vpack.c.b16 %v8172, %v8171
    %v8251 = vpack.c.b16 %v8174, %v8173
    %v8252 = vpack.c.b16 %v8176, %v8175
    %v8253 = vpack.c.b16 %v8178, %v8177
    %v8254 = vpack.c.b16 %v8180, %v8179
    %v8255 = vpack.c.b16 %v8182, %v8181
    %v8256 = vpack.c.b16 %v8184, %v8183
    %v8257 = vpack.c.b16 %v8186, %v8185
    %v8258 = vpack.c.b16 %v8188, %v8187
    %v8259 = vpack.c.b16 %v8190, %v8189
    %v8260 = vpack.c.b16 %v8192, %v8191
    %v8261 = vpack.c.b16 %v8194, %v8193
    %v8262 = vpack.c.b16 %v8196, %v8195
    %v8263 = vpack.c.b16 %v8198, %v8197
    %v8264 = vpack.c.b16 %v8200, %v8199
    %8329 = vmatprep.subr.bf16.mxu0 0
    %8330 = vmatpush1.bf16.msra.mxu0 %v8208
    %8331 = vmatprep.subr.bf16.mxu0 0
    %8332 = vmatpush1.bf16.msra.mxu0 %v8207
    %8333 = vmatprep.subr.bf16.mxu0 0
    %8334 = vmatpush1.bf16.msra.mxu0 %v8206
    %8335 = vmatprep.subr.bf16.mxu0 0
    %8336 = vmatpush1.bf16.msra.mxu0 %v8205
    %8337 = vmatprep.subr.bf16.mxu0 0
    %8338 = vmatpush1.bf16.msra.mxu0 %v8204
    %8339 = vmatprep.subr.bf16.mxu0 0
    %8340 = vmatpush1.bf16.msra.mxu0 %v8203
    %8341 = vmatprep.subr.bf16.mxu0 0
    %8342 = vmatpush1.bf16.msra.mxu0 %v8202
    %8343 = vmatprep.subr.bf16.mxu0 0
    %8344 = vmatpush1.bf16.msra.mxu0 %v8201
    %8345 = vmatprep.subr.bf16.mxu0 0
    %8346 = vmatpush2.bf16.msra.mxu0 %v8216
    %8347 = vmatprep.subr.bf16.mxu0 0
    %8348 = vmatpush2.bf16.msra.mxu0 %v8215
    %8349 = vmatprep.subr.bf16.mxu0 0
    %8350 = vmatpush2.bf16.msra.mxu0 %v8214
    %8351 = vmatprep.subr.bf16.mxu0 0
    %8352 = vmatpush2.bf16.msra.mxu0 %v8213
    %8353 = vmatprep.subr.bf16.mxu0 0
    %8354 = vmatpush2.bf16.msra.mxu0 %v8212
    %8355 = vmatprep.subr.bf16.mxu0 0
    %8356 = vmatpush2.bf16.msra.mxu0 %v8211
    %8357 = vmatprep.subr.bf16.mxu0 0
    %8358 = vmatpush2.bf16.msra.mxu0 %v8210
    %8359 = vmatprep.subr.bf16.mxu0 0
    %8360 = vmatpush2.bf16.msra.mxu0 %v8209
    %8361 = vmatprep.mubr.bf16.mxu0 %v7803
    %8362 = vmatmul.mubr.bf16.gmra.mxu0 %v7802
    %v8363 = vpop.f32.mrf.mxu0
    %v8364 = vadd.f32 %v7943, %v8363
    %v8365 = vpop.f32.mrf.mxu0
    %v8366 = vpop.f32.mrf.mxu0
    %v8367 = vpop.f32.mrf.mxu0
    %8368 = vdwg.mxu0
    %8369 = vmatprep.subr.bf16.mxu0 0
    %8370 = vmatpush1.bf16.msra.mxu0 %v8224
    %8371 = vmatprep.subr.bf16.mxu0 0
    %8372 = vmatpush1.bf16.msra.mxu0 %v8223
    %8373 = vmatprep.subr.bf16.mxu0 0
    %8374 = vmatpush1.bf16.msra.mxu0 %v8222
    %8375 = vmatprep.subr.bf16.mxu0 0
    %8376 = vmatpush1.bf16.msra.mxu0 %v8221
    %8377 = vmatprep.subr.bf16.mxu0 0
    %8378 = vmatpush1.bf16.msra.mxu0 %v8220
    %8379 = vmatprep.subr.bf16.mxu0 0
    %8380 = vmatpush1.bf16.msra.mxu0 %v8219
    %8381 = vmatprep.subr.bf16.mxu0 0
    %8382 = vmatpush1.bf16.msra.mxu0 %v8218
    %8383 = vmatprep.subr.bf16.mxu0 0
    %8384 = vmatpush1.bf16.msra.mxu0 %v8217
    %8385 = vmatprep.subr.bf16.mxu0 0
    %8386 = vmatpush2.bf16.msra.mxu0 %v8232
    %8387 = vmatprep.subr.bf16.mxu0 0
    %8388 = vmatpush2.bf16.msra.mxu0 %v8231
    %8389 = vmatprep.subr.bf16.mxu0 0
    %8390 = vmatpush2.bf16.msra.mxu0 %v8230
    %8391 = vmatprep.subr.bf16.mxu0 0
    %8392 = vmatpush2.bf16.msra.mxu0 %v8229
    %8393 = vmatprep.subr.bf16.mxu0 0
    %8394 = vmatpush2.bf16.msra.mxu0 %v8228
    %8395 = vmatprep.subr.bf16.mxu0 0
    %8396 = vmatpush2.bf16.msra.mxu0 %v8227
    %8397 = vmatprep.subr.bf16.mxu0 0
    %8398 = vmatpush2.bf16.msra.mxu0 %v8226
    %8399 = vmatprep.subr.bf16.mxu0 0
    %8400 = vmatpush2.bf16.msra.mxu0 %v8225
    %8401 = vmatprep.mubr.bf16.mxu0 %v7805
    %8402 = vmatmul.mubr.bf16.gmra.mxu0 %v7804
    %v8403 = vpop.f32.mrf.mxu0
    %v8404 = vadd.f32 %v8364, %v8403
    %v8405 = vpop.f32.mrf.mxu0
    %v8406 = vpop.f32.mrf.mxu0
    %v8407 = vpop.f32.mrf.mxu0
    %8408 = vdwg.mxu0
    %8409 = vmatprep.subr.bf16.mxu0 0
    %8410 = vmatpush1.bf16.msra.mxu0 %v8240
    %8411 = vmatprep.subr.bf16.mxu0 0
    %8412 = vmatpush1.bf16.msra.mxu0 %v8239
    %8413 = vmatprep.subr.bf16.mxu0 0
    %8414 = vmatpush1.bf16.msra.mxu0 %v8238
    %8415 = vmatprep.subr.bf16.mxu0 0
    %8416 = vmatpush1.bf16.msra.mxu0 %v8237
    %8417 = vmatprep.subr.bf16.mxu0 0
    %8418 = vmatpush1.bf16.msra.mxu0 %v8236
    %8419 = vmatprep.subr.bf16.mxu0 0
    %8420 = vmatpush1.bf16.msra.mxu0 %v8235
    %8421 = vmatprep.subr.bf16.mxu0 0
    %8422 = vmatpush1.bf16.msra.mxu0 %v8234
    %8423 = vmatprep.subr.bf16.mxu0 0
    %8424 = vmatpush1.bf16.msra.mxu0 %v8233
    %8425 = vmatprep.subr.bf16.mxu0 0
    %8426 = vmatpush2.bf16.msra.mxu0 %v8248
    %8427 = vmatprep.subr.bf16.mxu0 0
    %8428 = vmatpush2.bf16.msra.mxu0 %v8247
    %8429 = vmatprep.subr.bf16.mxu0 0
    %8430 = vmatpush2.bf16.msra.mxu0 %v8246
    %8431 = vmatprep.subr.bf16.mxu0 0
    %8432 = vmatpush2.bf16.msra.mxu0 %v8245
    %8433 = vmatprep.subr.bf16.mxu0 0
    %8434 = vmatpush2.bf16.msra.mxu0 %v8244
    %8435 = vmatprep.subr.bf16.mxu0 0
    %8436 = vmatpush2.bf16.msra.mxu0 %v8243
    %8437 = vmatprep.subr.bf16.mxu0 0
    %8438 = vmatpush2.bf16.msra.mxu0 %v8242
    %8439 = vmatprep.subr.bf16.mxu0 0
    %8440 = vmatpush2.bf16.msra.mxu0 %v8241
    %8441 = vmatprep.mubr.bf16.mxu0 %v7807
    %8442 = vmatmul.mubr.bf16.gmra.mxu0 %v7806
    %v8443 = vpop.f32.mrf.mxu0
    %v8444 = vadd.f32 %v8404, %v8443
    %v8445 = vpop.f32.mrf.mxu0
    %v8446 = vpop.f32.mrf.mxu0
    %v8447 = vpop.f32.mrf.mxu0
    %8448 = vdwg.mxu0
    %8449 = vmatprep.subr.bf16.mxu0 0
    %8450 = vmatpush1.bf16.msra.mxu0 %v8256
    %8451 = vmatprep.subr.bf16.mxu0 0
    %8452 = vmatpush1.bf16.msra.mxu0 %v8255
    %8453 = vmatprep.subr.bf16.mxu0 0
    %8454 = vmatpush1.bf16.msra.mxu0 %v8254
    %8455 = vmatprep.subr.bf16.mxu0 0
    %8456 = vmatpush1.bf16.msra.mxu0 %v8253
    %8457 = vmatprep.subr.bf16.mxu0 0
    %8458 = vmatpush1.bf16.msra.mxu0 %v8252
    %8459 = vmatprep.subr.bf16.mxu0 0
    %8460 = vmatpush1.bf16.msra.mxu0 %v8251
    %8461 = vmatprep.subr.bf16.mxu0 0
    %8462 = vmatpush1.bf16.msra.mxu0 %v8250
    %8463 = vmatprep.subr.bf16.mxu0 0
    %8464 = vmatpush1.bf16.msra.mxu0 %v8249
    %8465 = vmatprep.subr.bf16.mxu0 0
    %8466 = vmatpush2.bf16.msra.mxu0 %v8264
    %8467 = vmatprep.subr.bf16.mxu0 0
    %8468 = vmatpush2.bf16.msra.mxu0 %v8263
    %8469 = vmatprep.subr.bf16.mxu0 0
    %8470 = vmatpush2.bf16.msra.mxu0 %v8262
    %8471 = vmatprep.subr.bf16.mxu0 0
    %8472 = vmatpush2.bf16.msra.mxu0 %v8261
    %8473 = vmatprep.subr.bf16.mxu0 0
    %8474 = vmatpush2.bf16.msra.mxu0 %v8260
    %8475 = vmatprep.subr.bf16.mxu0 0
    %8476 = vmatpush2.bf16.msra.mxu0 %v8259
    %8477 = vmatprep.subr.bf16.mxu0 0
    %8478 = vmatpush2.bf16.msra.mxu0 %v8258
    %8479 = vmatprep.subr.bf16.mxu0 0
    %8480 = vmatpush2.bf16.msra.mxu0 %v8257
    %8481 = vmatprep.mubr.bf16.mxu0 %v7809
    %8482 = vmatmul.mubr.bf16.gmra.mxu0 %v7808
    %v8483 = vpop.f32.mrf.mxu0
    %v8484 = vadd.f32 %v8444, %v8483
    %v8485 = vpop.f32.mrf.mxu0
    %v8486 = vpop.f32.mrf.mxu0
    %v8487 = vpop.f32.mrf.mxu0
    %8488 = vdwg.mxu0
    %8489 = vst [vmem:[#allocation13] sm:$0xff] %v8484
    // Predicated region
    $region42: #{regressor_forward.1} parent=1 // pred_check
      _
    $region43: #{regressor_forward.1} parent=1 // pred_check_branch
      %8491 = sbr.rel (0) target = $region45
    $region44: #{regressor_forward.1} parent=1 // pred_region
      %s8493 = ssub.s32 128, 32
      %8494 = vsyncadd [#allocation6], %s8493
      %s8495 = sshll.u32 [#allocation13], 4
      %s8496 = int_to_ptr.vmem [resolvable:$true] %s8495
      %8501 = dma.vmem_to_hbm [thread:$0]  %s8496, 32, %s6, [#allocation6], 32, 32, 2
    $region45: #{regressor_forward.1} parent=1 // pred_fallthru
      _
    // Predicated region
    $region46: #{regressor_forward.1} parent=1 // pred_check
      _
    $region47: #{regressor_forward.1} parent=1 // pred_check_branch
      %8503 = sbr.rel (0) target = $region49
    $region48: #{regressor_forward.1} parent=1 // pred_region
      %8504 = dma.done [#allocation6], 128
    $region49: #{regressor_forward.1} parent=1 // pred_fallthru
      _
    %8505 = vsyncpa [#allocation5], 1
    %8506 = vsyncpa [#allocation8], 1
    %8507 = vsyncpa [#allocation11], 1
    %8508 = vsyncpa [#allocation6], 1

</llo_original>
